<compile_context>
chip_gen: v7x
topology: tpu7x:2x2x1
jax: 0.10.0
libtpu: 0.0.40
codegen_flags: <defaults>
</compile_context>

<pallas_src>
import jax
import jax.numpy as jnp
from jax.experimental import pallas as pl
from jax.experimental.pallas import tpu as pltpu

# ---- small, TPU-friendly hyper-parameters (module structure preserved) ----
VOCAB = 65            # vocab_size
VOCAB_PAD = 128       # lane-dense padding for embeddings / output projection
EMB = 128             # emb_size
NUM_HEADS = 4         # num_heads
HEAD = EMB // NUM_HEADS
BLOCK_SIZE = 16       # context length (block_size)
FF = 4 * EMB
EPS = 1e-5
N_BLOCKS = 3
NEG_INF = -1e30       # large finite negative instead of -inf (robust softmax mask)


# ------------------------------- kernel ------------------------------------
def _ln_time(x, gain, bias):
    """LayerNorm1d: normalize over the TIME axis, unbiased variance (torch .var)."""
    T = x.shape[0]
    mean = jnp.mean(x, axis=0, keepdims=True)                          # (1, E)
    var = jnp.sum((x - mean) ** 2, axis=0, keepdims=True) * (1.0 / (T - 1))
    return gain * (x - mean) * jax.lax.rsqrt(var + EPS) + bias


def _gpt_kernel(idx_ref,                                   # (1, T, 1) int32 (VMEM)
                tok_ref, pos_ref,                          # embeddings
                ln1g_ref, ln1b_ref, wqkv_ref,
                ln2g_ref, ln2b_ref, w1_ref, b1_ref, w2_ref, b2_ref,
                wp_ref, bp_ref,                            # vocab projection (padded)
                o_ref):                                    # (1, T, VOCAB_PAD)
    T = BLOCK_SIZE

    # ---- token embedding gather: single vectorized one-hot @ padded table ----
    tok_ids = idx_ref[0]                                               # (T, 1) int32
    vocab_iota = jax.lax.broadcasted_iota(jnp.int32, (T, VOCAB_PAD), 1)
    onehot = (vocab_iota == tok_ids).astype(jnp.bfloat16)              # (T, VOCAB_PAD)
    x = (jnp.dot(onehot, tok_ref[...], preferred_element_type=jnp.float32)
         + pos_ref[...])                                               # (T, E) f32

    row = jax.lax.broadcasted_iota(jnp.int32, (T, T), 0)
    col = jax.lax.broadcasted_iota(jnp.int32, (T, T), 1)
    causal = (row >= col)[None]                            # (1, T, T), bcast over heads

    for l in range(N_BLOCKS):                              # static unroll over layers
        # --- LN1 + fused-QKV multi-head causal self-attention ---
        xn = _ln_time(x, ln1g_ref[l], ln1b_ref[l])                     # (T, E) f32
        qkv = jnp.dot(xn.astype(jnp.bfloat16), wqkv_ref[l],
                      preferred_element_type=jnp.float32)              # (T, 3E)
        # columns: [ Q(scale folded) | K | V ], each EMB wide, head-major inside
        q = qkv[:, :EMB].reshape(T, NUM_HEADS, HEAD).transpose(1, 0, 2)        # (H,T,D)
        k = qkv[:, EMB:2 * EMB].reshape(T, NUM_HEADS, HEAD).transpose(1, 0, 2)
        v = qkv[:, 2 * EMB:].reshape(T, NUM_HEADS, HEAD).transpose(1, 0, 2)

        s = jnp.einsum('htd,hsd->hts',
                       q.astype(jnp.bfloat16), k.astype(jnp.bfloat16),
                       preferred_element_type=jnp.float32)             # (H, T, T)
        s = jnp.where(causal, s, NEG_INF)
        m = jnp.max(s, axis=-1, keepdims=True)
        e = jnp.exp(s - m)
        p = e * pl.reciprocal(jnp.sum(e, axis=-1, keepdims=True), approx=True)
        oh = jnp.einsum('hts,hsd->htd',
                        p.astype(jnp.bfloat16), v.astype(jnp.bfloat16),
                        preferred_element_type=jnp.float32)            # (H, T, D)
        att = oh.transpose(1, 0, 2).reshape(T, EMB)        # single relayout, no concat
        x = x + att                                        # residual

        # --- LN2 + FeedForward (Linear -> ReLU -> Linear; dropout = identity) ---
        x2n = _ln_time(x, ln2g_ref[l], ln2b_ref[l])
        h1 = jnp.maximum(
            jnp.dot(x2n.astype(jnp.bfloat16), w1_ref[l],
                    preferred_element_type=jnp.float32) + b1_ref[l], 0.0)
        x = x + (jnp.dot(h1.astype(jnp.bfloat16), w2_ref[l],
                         preferred_element_type=jnp.float32) + b2_ref[l])

    # ---- vocab projection (lane-dense, padded to 128 output lanes) ----
    o_ref[0] = (jnp.dot(x.astype(jnp.bfloat16), wp_ref[...],
                        preferred_element_type=jnp.float32) + bp_ref[...])


# ------------------------------- wrapper -----------------------------------
def gpt_forward(params, idx, targets=None):
    """Matches GPTModel.forward: returns (logits, loss); loss None w/o targets."""
    B, T = idx.shape
    assert T == BLOCK_SIZE, "context length must equal block_size"

    idx3 = idx.astype(jnp.int32).reshape(B, T, 1)          # (B, T, 1) VMEM input

    weights = (params["tok_emb"], params["pos_emb"],
               params["ln1_g"], params["ln1_b"], params["wqkv"],
               params["ln2_g"], params["ln2_b"],
               params["w1"], params["b1"], params["w2"], params["b2"],
               params["wp"], params["bp"])

    def _const(ndim):
        zeros = (0,) * ndim
        return lambda b: zeros                 # constant block -> DMA'd once

    in_specs = [pl.BlockSpec((1, T, 1), lambda b: (b, 0, 0))]
    in_specs += [pl.BlockSpec(w.shape, _const(w.ndim)) for w in weights]

    out_pad = pl.pallas_call(
        _gpt_kernel,
        out_shape=jax.ShapeDtypeStruct((B, T, VOCAB_PAD), jnp.float32),
        grid_spec=pltpu.PrefetchScalarGridSpec(
            num_scalar_prefetch=0,
            grid=(B,),                          # batch split; feeds both v7x cores
            in_specs=in_specs,
            out_specs=pl.BlockSpec((1, T, VOCAB_PAD), lambda b: (b, 0, 0)),
        ),
        compiler_params=pltpu.CompilerParams(dimension_semantics=("parallel",)),
    )(idx3, *weights)

    logits = out_pad[:, :, :VOCAB]              # strip lane padding
    loss = None
    if targets is not None:                     # plain-JAX loss path (matches F.cross_entropy)
        logp = jax.nn.log_softmax(logits, axis=-1)
        loss = -jnp.mean(jnp.take_along_axis(logp, targets[..., None], axis=-1))
    return logits, loss


# ----------------------- deterministic parameter init -----------------------
def init_params(key):
    keys = iter(jax.random.split(key, 64))

    def nrm(shape, scale=0.02):
        return (scale * jax.random.normal(next(keys), shape)).astype(jnp.float32)

    attn_scale = float(EMB) ** -0.5

    def qkv_pack():
        wq = nrm((EMB, EMB)) * attn_scale       # fold attention scale into Wq
        wk = nrm((EMB, EMB))
        wv = nrm((EMB, EMB))
        return jnp.concatenate([wq, wk, wv], axis=1)       # (EMB, 3*EMB)

    tok = jnp.zeros((VOCAB_PAD, EMB), jnp.float32).at[:VOCAB].set(nrm((VOCAB, EMB)))
    wp = jnp.zeros((EMB, VOCAB_PAD), jnp.float32).at[:, :VOCAB].set(nrm((EMB, VOCAB)))
    bp = jnp.zeros((1, VOCAB_PAD), jnp.float32).at[:, :VOCAB].set(nrm((1, VOCAB)))

    params = dict(
        tok_emb=tok.astype(jnp.bfloat16),
        pos_emb=nrm((BLOCK_SIZE, EMB)),                         # f32 (added post-matmul)
        ln1_g=jnp.ones((N_BLOCKS, 1, EMB), jnp.float32),
        ln1_b=jnp.zeros((N_BLOCKS, 1, EMB), jnp.float32),
        wqkv=jnp.stack([qkv_pack() for _ in range(N_BLOCKS)]).astype(jnp.bfloat16),
        ln2_g=jnp.ones((N_BLOCKS, 1, EMB), jnp.float32),
        ln2_b=jnp.zeros((N_BLOCKS, 1, EMB), jnp.float32),
        w1=jnp.stack([nrm((EMB, FF)) for _ in range(N_BLOCKS)]).astype(jnp.bfloat16),
        b1=jnp.stack([nrm((1, FF)) for _ in range(N_BLOCKS)]),
        w2=jnp.stack([nrm((FF, EMB)) for _ in range(N_BLOCKS)]).astype(jnp.bfloat16),
        b2=jnp.stack([nrm((1, EMB)) for _ in range(N_BLOCKS)]),
        wp=wp.astype(jnp.bfloat16),
        bp=bp,
    )
    return params


# ------------------------ pure-JAX reference (check) ------------------------
def _ref_ln(x, gain, bias):
    mean = jnp.mean(x, axis=1, keepdims=True)
    var = jnp.sum((x - mean) ** 2, axis=1, keepdims=True) / (x.shape[1] - 1)
    return gain * (x - mean) / jnp.sqrt(var + EPS) + bias


def ref_forward(params, idx):
    """f32 reference using the same (bf16-stored, scale-folded) weights."""
    B, T = idx.shape
    tok = params["tok_emb"].astype(jnp.float32)
    x = jnp.take(tok, idx, axis=0) + params["pos_emb"][None]
    causal = jnp.tril(jnp.ones((T, T), bool))
    for l in range(N_BLOCKS):
        xn = _ref_ln(x, params["ln1_g"][l], params["ln1_b"][l])
        qkv = xn @ params["wqkv"][l].astype(jnp.float32)                # (B, T, 3E)
        q, k, v = jnp.split(qkv, 3, axis=-1)
        heads = []
        for h in range(NUM_HEADS):
            qh = q[..., h * HEAD:(h + 1) * HEAD]
            kh = k[..., h * HEAD:(h + 1) * HEAD]
            vh = v[..., h * HEAD:(h + 1) * HEAD]
            wei = jnp.einsum("btd,bsd->bts", qh, kh)        # scale already folded in Wq
            wei = jnp.where(causal, wei, -jnp.inf)
            wei = jax.nn.softmax(wei, axis=-1)
            heads.append(jnp.einsum("bts,bsd->btd", wei, vh))
        x = x + jnp.concatenate(heads, axis=-1)
        x2n = _ref_ln(x, params["ln2_g"][l], params["ln2_b"][l])
        h1 = jnp.maximum(x2n @ params["w1"][l].astype(jnp.float32) + params["b1"][l], 0.0)
        x = x + (h1 @ params["w2"][l].astype(jnp.float32) + params["b2"][l])
    return (x @ params["wp"].astype(jnp.float32) + params["bp"])[:, :, :VOCAB]


# ----------------------------------- main ------------------------------------
if __name__ == "__main__":
    key = jax.random.PRNGKey(0)
    pkey, dkey = jax.random.split(key)
    params = init_params(pkey)

    batch = 2
    idx = jax.random.randint(dkey, (batch, BLOCK_SIZE), 0, VOCAB, dtype=jnp.int32)

    logits, loss = gpt_forward(params, idx)
    logits = jax.block_until_ready(logits)

    assert logits.shape == (batch, BLOCK_SIZE, VOCAB)
    assert loss is None
    ref = ref_forward(params, idx)
    err = float(jnp.max(jnp.abs(logits - ref)))
    # Tolerance covers bf16 matmul operands + approximate-reciprocal softmax
    # (reference runs the same weights in full f32).
    assert jnp.allclose(logits, ref, atol=2e-2, rtol=2e-2), f"max abs err {err}"
    print("KERNEL_OK")
</pallas_src>

<mosaic_0001>
module attributes {stable_mosaic.version = 11 : i64} {
  func.func @_gpt_kernel(%arg0: i32, %arg1: memref<1x16x1xi32, #tpu.memory_space<vmem>>, %arg2: memref<128x128xbf16, #tpu.memory_space<vmem>>, %arg3: memref<16x128xf32, #tpu.memory_space<vmem>>, %arg4: memref<3x1x128xf32, #tpu.memory_space<vmem>>, %arg5: memref<3x1x128xf32, #tpu.memory_space<vmem>>, %arg6: memref<3x128x384xbf16, #tpu.memory_space<vmem>>, %arg7: memref<3x1x128xf32, #tpu.memory_space<vmem>>, %arg8: memref<3x1x128xf32, #tpu.memory_space<vmem>>, %arg9: memref<3x128x512xbf16, #tpu.memory_space<vmem>>, %arg10: memref<3x1x512xf32, #tpu.memory_space<vmem>>, %arg11: memref<3x512x128xbf16, #tpu.memory_space<vmem>>, %arg12: memref<3x1x128xf32, #tpu.memory_space<vmem>>, %arg13: memref<128x128xbf16, #tpu.memory_space<vmem>>, %arg14: memref<1x128xf32, #tpu.memory_space<vmem>>, %arg15: memref<1x16x128xf32, #tpu.memory_space<vmem>>) attributes {dimension_semantics = [#tpu.dimension_semantics<parallel>], iteration_bounds = array<i64: 2>, scalar_prefetch = 0 : i64, scratch_operands = 0 : i64, tpu.core_type = #tpu.core_type<tc>, window_params = [{transform_indices = @transform_0, window_bounds = array<i64: 1, 16, 1>}, {pipeline_mode = #tpu.pipeline_mode<synchronous>, transform_indices = @transform_1, window_bounds = array<i64: 128, 128>}, {pipeline_mode = #tpu.pipeline_mode<synchronous>, transform_indices = @transform_2, window_bounds = array<i64: 16, 128>}, {pipeline_mode = #tpu.pipeline_mode<synchronous>, transform_indices = @transform_3, window_bounds = array<i64: 3, 1, 128>}, {pipeline_mode = #tpu.pipeline_mode<synchronous>, transform_indices = @transform_4, window_bounds = array<i64: 3, 1, 128>}, {pipeline_mode = #tpu.pipeline_mode<synchronous>, transform_indices = @transform_5, window_bounds = array<i64: 3, 128, 384>}, {pipeline_mode = #tpu.pipeline_mode<synchronous>, transform_indices = @transform_6, window_bounds = array<i64: 3, 1, 128>}, {pipeline_mode = #tpu.pipeline_mode<synchronous>, transform_indices = @transform_7, window_bounds = array<i64: 3, 1, 128>}, {pipeline_mode = #tpu.pipeline_mode<synchronous>, transform_indices = @transform_8, window_bounds = array<i64: 3, 128, 512>}, {pipeline_mode = #tpu.pipeline_mode<synchronous>, transform_indices = @transform_9, window_bounds = array<i64: 3, 1, 512>}, {pipeline_mode = #tpu.pipeline_mode<synchronous>, transform_indices = @transform_10, window_bounds = array<i64: 3, 512, 128>}, {pipeline_mode = #tpu.pipeline_mode<synchronous>, transform_indices = @transform_11, window_bounds = array<i64: 3, 1, 128>}, {pipeline_mode = #tpu.pipeline_mode<synchronous>, transform_indices = @transform_12, window_bounds = array<i64: 128, 128>}, {pipeline_mode = #tpu.pipeline_mode<synchronous>, transform_indices = @transform_13, window_bounds = array<i64: 1, 128>}, {transform_indices = @transform_14, window_bounds = array<i64: 1, 16, 128>}]} {
    %c0 = arith.constant 0 : index
    %c0_0 = arith.constant 0 : index
    %c0_1 = arith.constant 0 : index
    %0 = vector.load %arg1[%c0, %c0_0, %c0_1] : memref<1x16x1xi32, #tpu.memory_space<vmem>>, vector<1x16x1xi32>
    %1 = vector.shape_cast %0 : vector<1x16x1xi32> to vector<16x1xi32>
    %2 = tpu.iota {dimensions = array<i32: 1>} : vector<16x128xi32>
    %3 = vector.broadcast %1 : vector<16x1xi32> to vector<16x128xi32>
    %4 = arith.cmpi eq, %2, %3 : vector<16x128xi32>
    %5 = arith.extui %4 : vector<16x128xi1> to vector<16x128xi32>
    %6 = arith.sitofp %5 : vector<16x128xi32> to vector<16x128xf32>
    %7 = arith.truncf %6 : vector<16x128xf32> to vector<16x128xbf16>
    %c0_2 = arith.constant 0 : index
    %c0_3 = arith.constant 0 : index
    %8 = vector.load %arg2[%c0_2, %c0_3] : memref<128x128xbf16, #tpu.memory_space<vmem>>, vector<128x128xbf16>
    %cst = arith.constant dense<0.000000e+00> : vector<16x128xf32>
    %9 = tpu.matmul %7, %8, %cst {dimension_numbers = #tpu.dot_dimension_numbers<[1], [0], [0], [1], [0, 0, 1, 1], [], []>} : vector<16x128xbf16>, vector<128x128xbf16>, vector<16x128xf32> -> vector<16x128xf32>
    %c0_4 = arith.constant 0 : index
    %c0_5 = arith.constant 0 : index
    %10 = vector.load %arg3[%c0_4, %c0_5] : memref<16x128xf32, #tpu.memory_space<vmem>>, vector<16x128xf32>
    %11 = arith.addf %9, %10 : vector<16x128xf32>
    %12 = tpu.iota {dimensions = array<i32: 0>} : vector<16x16xi32>
    %13 = tpu.iota {dimensions = array<i32: 1>} : vector<16x16xi32>
    %14 = arith.cmpi sge, %12, %13 : vector<16x16xi32>
    %15 = vector.shape_cast %14 : vector<16x16xi1> to vector<1x16x16xi1>
    %c0_6 = arith.constant 0 : index
    %c0_7 = arith.constant 0 : index
    %c0_8 = arith.constant 0 : index
    %16 = vector.load %arg4[%c0_6, %c0_7, %c0_8] : memref<3x1x128xf32, #tpu.memory_space<vmem>>, vector<1x1x128xf32>
    %17 = vector.shape_cast %16 : vector<1x1x128xf32> to vector<1x128xf32>
    %c0_9 = arith.constant 0 : index
    %c0_10 = arith.constant 0 : index
    %c0_11 = arith.constant 0 : index
    %18 = vector.load %arg5[%c0_9, %c0_10, %c0_11] : memref<3x1x128xf32, #tpu.memory_space<vmem>>, vector<1x1x128xf32>
    %19 = vector.shape_cast %18 : vector<1x1x128xf32> to vector<1x128xf32>
    %cst_12 = arith.constant dense<0.000000e+00> : vector<128xf32>
    %20 = vector.multi_reduction <add>, %11, %cst_12 [0] : vector<16x128xf32> to vector<128xf32>
    %21 = vector.shape_cast %20 : vector<128xf32> to vector<1x128xf32>
    %cst_13 = arith.constant 1.600000e+01 : f32
    %22 = vector.broadcast %cst_13 : f32 to vector<1x128xf32>
    %23 = arith.divf %21, %22 : vector<1x128xf32>
    %24 = vector.broadcast %23 : vector<1x128xf32> to vector<16x128xf32>
    %25 = arith.subf %11, %24 : vector<16x128xf32>
    %26 = arith.mulf %25, %25 : vector<16x128xf32>
    %cst_14 = arith.constant dense<0.000000e+00> : vector<128xf32>
    %27 = vector.multi_reduction <add>, %26, %cst_14 [0] : vector<16x128xf32> to vector<128xf32>
    %28 = vector.shape_cast %27 : vector<128xf32> to vector<1x128xf32>
    %cst_15 = arith.constant 0.0666666701 : f32
    %29 = vector.broadcast %cst_15 : f32 to vector<1x128xf32>
    %30 = arith.mulf %28, %29 : vector<1x128xf32>
    %31 = vector.broadcast %23 : vector<1x128xf32> to vector<16x128xf32>
    %32 = arith.subf %11, %31 : vector<16x128xf32>
    %33 = vector.broadcast %17 : vector<1x128xf32> to vector<16x128xf32>
    %34 = arith.mulf %33, %32 : vector<16x128xf32>
    %cst_16 = arith.constant 9.99999974E-6 : f32
    %35 = vector.broadcast %cst_16 : f32 to vector<1x128xf32>
    %36 = arith.addf %30, %35 : vector<1x128xf32>
    %37 = math.rsqrt %36 : vector<1x128xf32>
    %38 = vector.broadcast %37 : vector<1x128xf32> to vector<16x128xf32>
    %39 = arith.mulf %34, %38 : vector<16x128xf32>
    %40 = vector.broadcast %19 : vector<1x128xf32> to vector<16x128xf32>
    %41 = arith.addf %39, %40 : vector<16x128xf32>
    %42 = arith.truncf %41 : vector<16x128xf32> to vector<16x128xbf16>
    %c0_17 = arith.constant 0 : index
    %c0_18 = arith.constant 0 : index
    %c0_19 = arith.constant 0 : index
    %43 = vector.load %arg6[%c0_17, %c0_18, %c0_19] : memref<3x128x384xbf16, #tpu.memory_space<vmem>>, vector<1x128x384xbf16>
    %44 = vector.shape_cast %43 : vector<1x128x384xbf16> to vector<128x384xbf16>
    %cst_20 = arith.constant dense<0.000000e+00> : vector<16x384xf32>
    %45 = tpu.matmul %42, %44, %cst_20 {dimension_numbers = #tpu.dot_dimension_numbers<[1], [0], [0], [1], [0, 0, 1, 1], [], []>} : vector<16x128xbf16>, vector<128x384xbf16>, vector<16x384xf32> -> vector<16x384xf32>
    %46 = vector.extract_strided_slice %45 {offsets = [0, 0], sizes = [16, 128], strides = [1, 1]} : vector<16x384xf32> to vector<16x128xf32>
    %47 = vector.shape_cast %46 : vector<16x128xf32> to vector<16x4x32xf32>
    %48 = tpu.transpose %47, [1, 0, 2] : vector<16x4x32xf32> -> vector<4x16x32xf32>
    %49 = vector.extract_strided_slice %45 {offsets = [0, 128], sizes = [16, 128], strides = [1, 1]} : vector<16x384xf32> to vector<16x128xf32>
    %50 = vector.shape_cast %49 : vector<16x128xf32> to vector<16x4x32xf32>
    %51 = tpu.transpose %50, [1, 0, 2] : vector<16x4x32xf32> -> vector<4x16x32xf32>
    %52 = vector.extract_strided_slice %45 {offsets = [0, 256], sizes = [16, 128], strides = [1, 1]} : vector<16x384xf32> to vector<16x128xf32>
    %53 = vector.shape_cast %52 : vector<16x128xf32> to vector<16x4x32xf32>
    %54 = tpu.transpose %53, [1, 0, 2] : vector<16x4x32xf32> -> vector<4x16x32xf32>
    %55 = arith.truncf %48 : vector<4x16x32xf32> to vector<4x16x32xbf16>
    %56 = arith.truncf %51 : vector<4x16x32xf32> to vector<4x16x32xbf16>
    "tpu.trace_start"() <{level = 10 : i32, message = "htd,hsd->hts"}> : () -> ()
    %cst_21 = arith.constant dense<0.000000e+00> : vector<4x16x16xf32>
    %57 = tpu.matmul %55, %56, %cst_21 {dimension_numbers = #tpu.dot_dimension_numbers<[2], [2], [1], [1], [0, 0, 0, 1, 1, 1], [0], [0]>} : vector<4x16x32xbf16>, vector<4x16x32xbf16>, vector<4x16x16xf32> -> vector<4x16x16xf32>
    %cst_22 = arith.constant -1.000000e+30 : f32
    "tpu.trace_stop"() : () -> ()
    %58 = vector.shape_cast %15 : vector<1x16x16xi1> to vector<1x16x16xi1>
    %59 = vector.broadcast %58 : vector<1x16x16xi1> to vector<4x16x16xi1>
    %60 = vector.broadcast %cst_22 : f32 to vector<4x16x16xf32>
    %61 = arith.select %59, %57, %60 : vector<4x16x16xi1>, vector<4x16x16xf32>
    %cst_23 = arith.constant dense<0xFF800000> : vector<4x16xf32>
    %62 = vector.multi_reduction <maximumf>, %61, %cst_23 [2] : vector<4x16x16xf32> to vector<4x16xf32>
    %63 = vector.shape_cast %62 : vector<4x16xf32> to vector<4x16x1xf32>
    %64 = vector.broadcast %63 : vector<4x16x1xf32> to vector<4x16x16xf32>
    %65 = arith.subf %61, %64 : vector<4x16x16xf32>
    %66 = math.exp %65 : vector<4x16x16xf32>
    %cst_24 = arith.constant dense<0.000000e+00> : vector<4x16xf32>
    %67 = vector.multi_reduction <add>, %66, %cst_24 [2] : vector<4x16x16xf32> to vector<4x16xf32>
    %68 = vector.shape_cast %67 : vector<4x16xf32> to vector<4x16x1xf32>
    %69 = tpu.reciprocal %68 {approx = true} : vector<4x16x1xf32> -> vector<4x16x1xf32>
    %70 = vector.broadcast %69 : vector<4x16x1xf32> to vector<4x16x16xf32>
    %71 = arith.mulf %66, %70 : vector<4x16x16xf32>
    %72 = arith.truncf %71 : vector<4x16x16xf32> to vector<4x16x16xbf16>
    %73 = arith.truncf %54 : vector<4x16x32xf32> to vector<4x16x32xbf16>
    "tpu.trace_start"() <{level = 10 : i32, message = "hts,hsd->htd"}> : () -> ()
    %cst_25 = arith.constant dense<0.000000e+00> : vector<4x16x32xf32>
    %74 = tpu.matmul %72, %73, %cst_25 {dimension_numbers = #tpu.dot_dimension_numbers<[2], [1], [1], [2], [0, 0, 0, 1, 1, 2], [0], [0]>} : vector<4x16x16xbf16>, vector<4x16x32xbf16>, vector<4x16x32xf32> -> vector<4x16x32xf32>
    "tpu.trace_stop"() : () -> ()
    %75 = tpu.transpose %74, [1, 0, 2] : vector<4x16x32xf32> -> vector<16x4x32xf32>
    %76 = vector.shape_cast %75 : vector<16x4x32xf32> to vector<16x128xf32>
    %77 = arith.addf %11, %76 : vector<16x128xf32>
    %c0_26 = arith.constant 0 : index
    %c0_27 = arith.constant 0 : index
    %c0_28 = arith.constant 0 : index
    %78 = vector.load %arg7[%c0_26, %c0_27, %c0_28] : memref<3x1x128xf32, #tpu.memory_space<vmem>>, vector<1x1x128xf32>
    %79 = vector.shape_cast %78 : vector<1x1x128xf32> to vector<1x128xf32>
    %c0_29 = arith.constant 0 : index
    %c0_30 = arith.constant 0 : index
    %c0_31 = arith.constant 0 : index
    %80 = vector.load %arg8[%c0_29, %c0_30, %c0_31] : memref<3x1x128xf32, #tpu.memory_space<vmem>>, vector<1x1x128xf32>
    %81 = vector.shape_cast %80 : vector<1x1x128xf32> to vector<1x128xf32>
    %cst_32 = arith.constant dense<0.000000e+00> : vector<128xf32>
    %82 = vector.multi_reduction <add>, %77, %cst_32 [0] : vector<16x128xf32> to vector<128xf32>
    %83 = vector.shape_cast %82 : vector<128xf32> to vector<1x128xf32>
    %cst_33 = arith.constant 1.600000e+01 : f32
    %84 = vector.broadcast %cst_33 : f32 to vector<1x128xf32>
    %85 = arith.divf %83, %84 : vector<1x128xf32>
    %86 = vector.broadcast %85 : vector<1x128xf32> to vector<16x128xf32>
    %87 = arith.subf %77, %86 : vector<16x128xf32>
    %88 = arith.mulf %87, %87 : vector<16x128xf32>
    %cst_34 = arith.constant dense<0.000000e+00> : vector<128xf32>
    %89 = vector.multi_reduction <add>, %88, %cst_34 [0] : vector<16x128xf32> to vector<128xf32>
    %90 = vector.shape_cast %89 : vector<128xf32> to vector<1x128xf32>
    %cst_35 = arith.constant 0.0666666701 : f32
    %91 = vector.broadcast %cst_35 : f32 to vector<1x128xf32>
    %92 = arith.mulf %90, %91 : vector<1x128xf32>
    %93 = vector.broadcast %85 : vector<1x128xf32> to vector<16x128xf32>
    %94 = arith.subf %77, %93 : vector<16x128xf32>
    %95 = vector.broadcast %79 : vector<1x128xf32> to vector<16x128xf32>
    %96 = arith.mulf %95, %94 : vector<16x128xf32>
    %cst_36 = arith.constant 9.99999974E-6 : f32
    %97 = vector.broadcast %cst_36 : f32 to vector<1x128xf32>
    %98 = arith.addf %92, %97 : vector<1x128xf32>
    %99 = math.rsqrt %98 : vector<1x128xf32>
    %100 = vector.broadcast %99 : vector<1x128xf32> to vector<16x128xf32>
    %101 = arith.mulf %96, %100 : vector<16x128xf32>
    %102 = vector.broadcast %81 : vector<1x128xf32> to vector<16x128xf32>
    %103 = arith.addf %101, %102 : vector<16x128xf32>
    %104 = arith.truncf %103 : vector<16x128xf32> to vector<16x128xbf16>
    %c0_37 = arith.constant 0 : index
    %c0_38 = arith.constant 0 : index
    %c0_39 = arith.constant 0 : index
    %105 = vector.load %arg9[%c0_37, %c0_38, %c0_39] : memref<3x128x512xbf16, #tpu.memory_space<vmem>>, vector<1x128x512xbf16>
    %106 = vector.shape_cast %105 : vector<1x128x512xbf16> to vector<128x512xbf16>
    %cst_40 = arith.constant dense<0.000000e+00> : vector<16x512xf32>
    %107 = tpu.matmul %104, %106, %cst_40 {dimension_numbers = #tpu.dot_dimension_numbers<[1], [0], [0], [1], [0, 0, 1, 1], [], []>} : vector<16x128xbf16>, vector<128x512xbf16>, vector<16x512xf32> -> vector<16x512xf32>
    %c0_41 = arith.constant 0 : index
    %c0_42 = arith.constant 0 : index
    %c0_43 = arith.constant 0 : index
    %108 = vector.load %arg10[%c0_41, %c0_42, %c0_43] : memref<3x1x512xf32, #tpu.memory_space<vmem>>, vector<1x1x512xf32>
    %109 = vector.shape_cast %108 : vector<1x1x512xf32> to vector<1x512xf32>
    %110 = vector.broadcast %109 : vector<1x512xf32> to vector<16x512xf32>
    %111 = arith.addf %107, %110 : vector<16x512xf32>
    %cst_44 = arith.constant 0.000000e+00 : f32
    %112 = vector.broadcast %cst_44 : f32 to vector<16x512xf32>
    %113 = arith.maximumf %111, %112 : vector<16x512xf32>
    %114 = arith.truncf %113 : vector<16x512xf32> to vector<16x512xbf16>
    %c0_45 = arith.constant 0 : index
    %c0_46 = arith.constant 0 : index
    %c0_47 = arith.constant 0 : index
    %115 = vector.load %arg11[%c0_45, %c0_46, %c0_47] : memref<3x512x128xbf16, #tpu.memory_space<vmem>>, vector<1x512x128xbf16>
    %116 = vector.shape_cast %115 : vector<1x512x128xbf16> to vector<512x128xbf16>
    %cst_48 = arith.constant dense<0.000000e+00> : vector<16x128xf32>
    %117 = tpu.matmul %114, %116, %cst_48 {dimension_numbers = #tpu.dot_dimension_numbers<[1], [0], [0], [1], [0, 0, 1, 1], [], []>} : vector<16x512xbf16>, vector<512x128xbf16>, vector<16x128xf32> -> vector<16x128xf32>
    %c0_49 = arith.constant 0 : index
    %c0_50 = arith.constant 0 : index
    %c0_51 = arith.constant 0 : index
    %118 = vector.load %arg12[%c0_49, %c0_50, %c0_51] : memref<3x1x128xf32, #tpu.memory_space<vmem>>, vector<1x1x128xf32>
    %119 = vector.shape_cast %118 : vector<1x1x128xf32> to vector<1x128xf32>
    %120 = vector.broadcast %119 : vector<1x128xf32> to vector<16x128xf32>
    %121 = arith.addf %117, %120 : vector<16x128xf32>
    %122 = arith.addf %77, %121 : vector<16x128xf32>
    %c1 = arith.constant 1 : index
    %c0_52 = arith.constant 0 : index
    %c0_53 = arith.constant 0 : index
    %123 = vector.load %arg4[%c1, %c0_52, %c0_53] : memref<3x1x128xf32, #tpu.memory_space<vmem>>, vector<1x1x128xf32>
    %124 = vector.shape_cast %123 : vector<1x1x128xf32> to vector<1x128xf32>
    %c1_54 = arith.constant 1 : index
    %c0_55 = arith.constant 0 : index
    %c0_56 = arith.constant 0 : index
    %125 = vector.load %arg5[%c1_54, %c0_55, %c0_56] : memref<3x1x128xf32, #tpu.memory_space<vmem>>, vector<1x1x128xf32>
    %126 = vector.shape_cast %125 : vector<1x1x128xf32> to vector<1x128xf32>
    %cst_57 = arith.constant dense<0.000000e+00> : vector<128xf32>
    %127 = vector.multi_reduction <add>, %122, %cst_57 [0] : vector<16x128xf32> to vector<128xf32>
    %128 = vector.shape_cast %127 : vector<128xf32> to vector<1x128xf32>
    %cst_58 = arith.constant 1.600000e+01 : f32
    %129 = vector.broadcast %cst_58 : f32 to vector<1x128xf32>
    %130 = arith.divf %128, %129 : vector<1x128xf32>
    %131 = vector.broadcast %130 : vector<1x128xf32> to vector<16x128xf32>
    %132 = arith.subf %122, %131 : vector<16x128xf32>
    %133 = arith.mulf %132, %132 : vector<16x128xf32>
    %cst_59 = arith.constant dense<0.000000e+00> : vector<128xf32>
    %134 = vector.multi_reduction <add>, %133, %cst_59 [0] : vector<16x128xf32> to vector<128xf32>
    %135 = vector.shape_cast %134 : vector<128xf32> to vector<1x128xf32>
    %cst_60 = arith.constant 0.0666666701 : f32
    %136 = vector.broadcast %cst_60 : f32 to vector<1x128xf32>
    %137 = arith.mulf %135, %136 : vector<1x128xf32>
    %138 = vector.broadcast %130 : vector<1x128xf32> to vector<16x128xf32>
    %139 = arith.subf %122, %138 : vector<16x128xf32>
    %140 = vector.broadcast %124 : vector<1x128xf32> to vector<16x128xf32>
    %141 = arith.mulf %140, %139 : vector<16x128xf32>
    %cst_61 = arith.constant 9.99999974E-6 : f32
    %142 = vector.broadcast %cst_61 : f32 to vector<1x128xf32>
    %143 = arith.addf %137, %142 : vector<1x128xf32>
    %144 = math.rsqrt %143 : vector<1x128xf32>
    %145 = vector.broadcast %144 : vector<1x128xf32> to vector<16x128xf32>
    %146 = arith.mulf %141, %145 : vector<16x128xf32>
    %147 = vector.broadcast %126 : vector<1x128xf32> to vector<16x128xf32>
    %148 = arith.addf %146, %147 : vector<16x128xf32>
    %149 = arith.truncf %148 : vector<16x128xf32> to vector<16x128xbf16>
    %c1_62 = arith.constant 1 : index
    %c0_63 = arith.constant 0 : index
    %c0_64 = arith.constant 0 : index
    %150 = vector.load %arg6[%c1_62, %c0_63, %c0_64] : memref<3x128x384xbf16, #tpu.memory_space<vmem>>, vector<1x128x384xbf16>
    %151 = vector.shape_cast %150 : vector<1x128x384xbf16> to vector<128x384xbf16>
    %cst_65 = arith.constant dense<0.000000e+00> : vector<16x384xf32>
    %152 = tpu.matmul %149, %151, %cst_65 {dimension_numbers = #tpu.dot_dimension_numbers<[1], [0], [0], [1], [0, 0, 1, 1], [], []>} : vector<16x128xbf16>, vector<128x384xbf16>, vector<16x384xf32> -> vector<16x384xf32>
    %153 = vector.extract_strided_slice %152 {offsets = [0, 0], sizes = [16, 128], strides = [1, 1]} : vector<16x384xf32> to vector<16x128xf32>
    %154 = vector.shape_cast %153 : vector<16x128xf32> to vector<16x4x32xf32>
    %155 = tpu.transpose %154, [1, 0, 2] : vector<16x4x32xf32> -> vector<4x16x32xf32>
    %156 = vector.extract_strided_slice %152 {offsets = [0, 128], sizes = [16, 128], strides = [1, 1]} : vector<16x384xf32> to vector<16x128xf32>
    %157 = vector.shape_cast %156 : vector<16x128xf32> to vector<16x4x32xf32>
    %158 = tpu.transpose %157, [1, 0, 2] : vector<16x4x32xf32> -> vector<4x16x32xf32>
    %159 = vector.extract_strided_slice %152 {offsets = [0, 256], sizes = [16, 128], strides = [1, 1]} : vector<16x384xf32> to vector<16x128xf32>
    %160 = vector.shape_cast %159 : vector<16x128xf32> to vector<16x4x32xf32>
    %161 = tpu.transpose %160, [1, 0, 2] : vector<16x4x32xf32> -> vector<4x16x32xf32>
    %162 = arith.truncf %155 : vector<4x16x32xf32> to vector<4x16x32xbf16>
    %163 = arith.truncf %158 : vector<4x16x32xf32> to vector<4x16x32xbf16>
    "tpu.trace_start"() <{level = 10 : i32, message = "htd,hsd->hts"}> : () -> ()
    %cst_66 = arith.constant dense<0.000000e+00> : vector<4x16x16xf32>
    %164 = tpu.matmul %162, %163, %cst_66 {dimension_numbers = #tpu.dot_dimension_numbers<[2], [2], [1], [1], [0, 0, 0, 1, 1, 1], [0], [0]>} : vector<4x16x32xbf16>, vector<4x16x32xbf16>, vector<4x16x16xf32> -> vector<4x16x16xf32>
    %cst_67 = arith.constant -1.000000e+30 : f32
    "tpu.trace_stop"() : () -> ()
    %165 = vector.shape_cast %15 : vector<1x16x16xi1> to vector<1x16x16xi1>
    %166 = vector.broadcast %165 : vector<1x16x16xi1> to vector<4x16x16xi1>
    %167 = vector.broadcast %cst_67 : f32 to vector<4x16x16xf32>
    %168 = arith.select %166, %164, %167 : vector<4x16x16xi1>, vector<4x16x16xf32>
    %cst_68 = arith.constant dense<0xFF800000> : vector<4x16xf32>
    %169 = vector.multi_reduction <maximumf>, %168, %cst_68 [2] : vector<4x16x16xf32> to vector<4x16xf32>
    %170 = vector.shape_cast %169 : vector<4x16xf32> to vector<4x16x1xf32>
    %171 = vector.broadcast %170 : vector<4x16x1xf32> to vector<4x16x16xf32>
    %172 = arith.subf %168, %171 : vector<4x16x16xf32>
    %173 = math.exp %172 : vector<4x16x16xf32>
    %cst_69 = arith.constant dense<0.000000e+00> : vector<4x16xf32>
    %174 = vector.multi_reduction <add>, %173, %cst_69 [2] : vector<4x16x16xf32> to vector<4x16xf32>
    %175 = vector.shape_cast %174 : vector<4x16xf32> to vector<4x16x1xf32>
    %176 = tpu.reciprocal %175 {approx = true} : vector<4x16x1xf32> -> vector<4x16x1xf32>
    %177 = vector.broadcast %176 : vector<4x16x1xf32> to vector<4x16x16xf32>
    %178 = arith.mulf %173, %177 : vector<4x16x16xf32>
    %179 = arith.truncf %178 : vector<4x16x16xf32> to vector<4x16x16xbf16>
    %180 = arith.truncf %161 : vector<4x16x32xf32> to vector<4x16x32xbf16>
    "tpu.trace_start"() <{level = 10 : i32, message = "hts,hsd->htd"}> : () -> ()
    %cst_70 = arith.constant dense<0.000000e+00> : vector<4x16x32xf32>
    %181 = tpu.matmul %179, %180, %cst_70 {dimension_numbers = #tpu.dot_dimension_numbers<[2], [1], [1], [2], [0, 0, 0, 1, 1, 2], [0], [0]>} : vector<4x16x16xbf16>, vector<4x16x32xbf16>, vector<4x16x32xf32> -> vector<4x16x32xf32>
    "tpu.trace_stop"() : () -> ()
    %182 = tpu.transpose %181, [1, 0, 2] : vector<4x16x32xf32> -> vector<16x4x32xf32>
    %183 = vector.shape_cast %182 : vector<16x4x32xf32> to vector<16x128xf32>
    %184 = arith.addf %122, %183 : vector<16x128xf32>
    %c1_71 = arith.constant 1 : index
    %c0_72 = arith.constant 0 : index
    %c0_73 = arith.constant 0 : index
    %185 = vector.load %arg7[%c1_71, %c0_72, %c0_73] : memref<3x1x128xf32, #tpu.memory_space<vmem>>, vector<1x1x128xf32>
    %186 = vector.shape_cast %185 : vector<1x1x128xf32> to vector<1x128xf32>
    %c1_74 = arith.constant 1 : index
    %c0_75 = arith.constant 0 : index
    %c0_76 = arith.constant 0 : index
    %187 = vector.load %arg8[%c1_74, %c0_75, %c0_76] : memref<3x1x128xf32, #tpu.memory_space<vmem>>, vector<1x1x128xf32>
    %188 = vector.shape_cast %187 : vector<1x1x128xf32> to vector<1x128xf32>
    %cst_77 = arith.constant dense<0.000000e+00> : vector<128xf32>
    %189 = vector.multi_reduction <add>, %184, %cst_77 [0] : vector<16x128xf32> to vector<128xf32>
    %190 = vector.shape_cast %189 : vector<128xf32> to vector<1x128xf32>
    %cst_78 = arith.constant 1.600000e+01 : f32
    %191 = vector.broadcast %cst_78 : f32 to vector<1x128xf32>
    %192 = arith.divf %190, %191 : vector<1x128xf32>
    %193 = vector.broadcast %192 : vector<1x128xf32> to vector<16x128xf32>
    %194 = arith.subf %184, %193 : vector<16x128xf32>
    %195 = arith.mulf %194, %194 : vector<16x128xf32>
    %cst_79 = arith.constant dense<0.000000e+00> : vector<128xf32>
    %196 = vector.multi_reduction <add>, %195, %cst_79 [0] : vector<16x128xf32> to vector<128xf32>
    %197 = vector.shape_cast %196 : vector<128xf32> to vector<1x128xf32>
    %cst_80 = arith.constant 0.0666666701 : f32
    %198 = vector.broadcast %cst_80 : f32 to vector<1x128xf32>
    %199 = arith.mulf %197, %198 : vector<1x128xf32>
    %200 = vector.broadcast %192 : vector<1x128xf32> to vector<16x128xf32>
    %201 = arith.subf %184, %200 : vector<16x128xf32>
    %202 = vector.broadcast %186 : vector<1x128xf32> to vector<16x128xf32>
    %203 = arith.mulf %202, %201 : vector<16x128xf32>
    %cst_81 = arith.constant 9.99999974E-6 : f32
    %204 = vector.broadcast %cst_81 : f32 to vector<1x128xf32>
    %205 = arith.addf %199, %204 : vector<1x128xf32>
    %206 = math.rsqrt %205 : vector<1x128xf32>
    %207 = vector.broadcast %206 : vector<1x128xf32> to vector<16x128xf32>
    %208 = arith.mulf %203, %207 : vector<16x128xf32>
    %209 = vector.broadcast %188 : vector<1x128xf32> to vector<16x128xf32>
    %210 = arith.addf %208, %209 : vector<16x128xf32>
    %211 = arith.truncf %210 : vector<16x128xf32> to vector<16x128xbf16>
    %c1_82 = arith.constant 1 : index
    %c0_83 = arith.constant 0 : index
    %c0_84 = arith.constant 0 : index
    %212 = vector.load %arg9[%c1_82, %c0_83, %c0_84] : memref<3x128x512xbf16, #tpu.memory_space<vmem>>, vector<1x128x512xbf16>
    %213 = vector.shape_cast %212 : vector<1x128x512xbf16> to vector<128x512xbf16>
    %cst_85 = arith.constant dense<0.000000e+00> : vector<16x512xf32>
    %214 = tpu.matmul %211, %213, %cst_85 {dimension_numbers = #tpu.dot_dimension_numbers<[1], [0], [0], [1], [0, 0, 1, 1], [], []>} : vector<16x128xbf16>, vector<128x512xbf16>, vector<16x512xf32> -> vector<16x512xf32>
    %c1_86 = arith.constant 1 : index
    %c0_87 = arith.constant 0 : index
    %c0_88 = arith.constant 0 : index
    %215 = vector.load %arg10[%c1_86, %c0_87, %c0_88] : memref<3x1x512xf32, #tpu.memory_space<vmem>>, vector<1x1x512xf32>
    %216 = vector.shape_cast %215 : vector<1x1x512xf32> to vector<1x512xf32>
    %217 = vector.broadcast %216 : vector<1x512xf32> to vector<16x512xf32>
    %218 = arith.addf %214, %217 : vector<16x512xf32>
    %cst_89 = arith.constant 0.000000e+00 : f32
    %219 = vector.broadcast %cst_89 : f32 to vector<16x512xf32>
    %220 = arith.maximumf %218, %219 : vector<16x512xf32>
    %221 = arith.truncf %220 : vector<16x512xf32> to vector<16x512xbf16>
    %c1_90 = arith.constant 1 : index
    %c0_91 = arith.constant 0 : index
    %c0_92 = arith.constant 0 : index
    %222 = vector.load %arg11[%c1_90, %c0_91, %c0_92] : memref<3x512x128xbf16, #tpu.memory_space<vmem>>, vector<1x512x128xbf16>
    %223 = vector.shape_cast %222 : vector<1x512x128xbf16> to vector<512x128xbf16>
    %cst_93 = arith.constant dense<0.000000e+00> : vector<16x128xf32>
    %224 = tpu.matmul %221, %223, %cst_93 {dimension_numbers = #tpu.dot_dimension_numbers<[1], [0], [0], [1], [0, 0, 1, 1], [], []>} : vector<16x512xbf16>, vector<512x128xbf16>, vector<16x128xf32> -> vector<16x128xf32>
    %c1_94 = arith.constant 1 : index
    %c0_95 = arith.constant 0 : index
    %c0_96 = arith.constant 0 : index
    %225 = vector.load %arg12[%c1_94, %c0_95, %c0_96] : memref<3x1x128xf32, #tpu.memory_space<vmem>>, vector<1x1x128xf32>
    %226 = vector.shape_cast %225 : vector<1x1x128xf32> to vector<1x128xf32>
    %227 = vector.broadcast %226 : vector<1x128xf32> to vector<16x128xf32>
    %228 = arith.addf %224, %227 : vector<16x128xf32>
    %229 = arith.addf %184, %228 : vector<16x128xf32>
    %c2 = arith.constant 2 : index
    %c0_97 = arith.constant 0 : index
    %c0_98 = arith.constant 0 : index
    %230 = vector.load %arg4[%c2, %c0_97, %c0_98] : memref<3x1x128xf32, #tpu.memory_space<vmem>>, vector<1x1x128xf32>
    %231 = vector.shape_cast %230 : vector<1x1x128xf32> to vector<1x128xf32>
    %c2_99 = arith.constant 2 : index
    %c0_100 = arith.constant 0 : index
    %c0_101 = arith.constant 0 : index
    %232 = vector.load %arg5[%c2_99, %c0_100, %c0_101] : memref<3x1x128xf32, #tpu.memory_space<vmem>>, vector<1x1x128xf32>
    %233 = vector.shape_cast %232 : vector<1x1x128xf32> to vector<1x128xf32>
    %cst_102 = arith.constant dense<0.000000e+00> : vector<128xf32>
    %234 = vector.multi_reduction <add>, %229, %cst_102 [0] : vector<16x128xf32> to vector<128xf32>
    %235 = vector.shape_cast %234 : vector<128xf32> to vector<1x128xf32>
    %cst_103 = arith.constant 1.600000e+01 : f32
    %236 = vector.broadcast %cst_103 : f32 to vector<1x128xf32>
    %237 = arith.divf %235, %236 : vector<1x128xf32>
    %238 = vector.broadcast %237 : vector<1x128xf32> to vector<16x128xf32>
    %239 = arith.subf %229, %238 : vector<16x128xf32>
    %240 = arith.mulf %239, %239 : vector<16x128xf32>
    %cst_104 = arith.constant dense<0.000000e+00> : vector<128xf32>
    %241 = vector.multi_reduction <add>, %240, %cst_104 [0] : vector<16x128xf32> to vector<128xf32>
    %242 = vector.shape_cast %241 : vector<128xf32> to vector<1x128xf32>
    %cst_105 = arith.constant 0.0666666701 : f32
    %243 = vector.broadcast %cst_105 : f32 to vector<1x128xf32>
    %244 = arith.mulf %242, %243 : vector<1x128xf32>
    %245 = vector.broadcast %237 : vector<1x128xf32> to vector<16x128xf32>
    %246 = arith.subf %229, %245 : vector<16x128xf32>
    %247 = vector.broadcast %231 : vector<1x128xf32> to vector<16x128xf32>
    %248 = arith.mulf %247, %246 : vector<16x128xf32>
    %cst_106 = arith.constant 9.99999974E-6 : f32
    %249 = vector.broadcast %cst_106 : f32 to vector<1x128xf32>
    %250 = arith.addf %244, %249 : vector<1x128xf32>
    %251 = math.rsqrt %250 : vector<1x128xf32>
    %252 = vector.broadcast %251 : vector<1x128xf32> to vector<16x128xf32>
    %253 = arith.mulf %248, %252 : vector<16x128xf32>
    %254 = vector.broadcast %233 : vector<1x128xf32> to vector<16x128xf32>
    %255 = arith.addf %253, %254 : vector<16x128xf32>
    %256 = arith.truncf %255 : vector<16x128xf32> to vector<16x128xbf16>
    %c2_107 = arith.constant 2 : index
    %c0_108 = arith.constant 0 : index
    %c0_109 = arith.constant 0 : index
    %257 = vector.load %arg6[%c2_107, %c0_108, %c0_109] : memref<3x128x384xbf16, #tpu.memory_space<vmem>>, vector<1x128x384xbf16>
    %258 = vector.shape_cast %257 : vector<1x128x384xbf16> to vector<128x384xbf16>
    %cst_110 = arith.constant dense<0.000000e+00> : vector<16x384xf32>
    %259 = tpu.matmul %256, %258, %cst_110 {dimension_numbers = #tpu.dot_dimension_numbers<[1], [0], [0], [1], [0, 0, 1, 1], [], []>} : vector<16x128xbf16>, vector<128x384xbf16>, vector<16x384xf32> -> vector<16x384xf32>
    %260 = vector.extract_strided_slice %259 {offsets = [0, 0], sizes = [16, 128], strides = [1, 1]} : vector<16x384xf32> to vector<16x128xf32>
    %261 = vector.shape_cast %260 : vector<16x128xf32> to vector<16x4x32xf32>
    %262 = tpu.transpose %261, [1, 0, 2] : vector<16x4x32xf32> -> vector<4x16x32xf32>
    %263 = vector.extract_strided_slice %259 {offsets = [0, 128], sizes = [16, 128], strides = [1, 1]} : vector<16x384xf32> to vector<16x128xf32>
    %264 = vector.shape_cast %263 : vector<16x128xf32> to vector<16x4x32xf32>
    %265 = tpu.transpose %264, [1, 0, 2] : vector<16x4x32xf32> -> vector<4x16x32xf32>
    %266 = vector.extract_strided_slice %259 {offsets = [0, 256], sizes = [16, 128], strides = [1, 1]} : vector<16x384xf32> to vector<16x128xf32>
    %267 = vector.shape_cast %266 : vector<16x128xf32> to vector<16x4x32xf32>
    %268 = tpu.transpose %267, [1, 0, 2] : vector<16x4x32xf32> -> vector<4x16x32xf32>
    %269 = arith.truncf %262 : vector<4x16x32xf32> to vector<4x16x32xbf16>
    %270 = arith.truncf %265 : vector<4x16x32xf32> to vector<4x16x32xbf16>
    "tpu.trace_start"() <{level = 10 : i32, message = "htd,hsd->hts"}> : () -> ()
    %cst_111 = arith.constant dense<0.000000e+00> : vector<4x16x16xf32>
    %271 = tpu.matmul %269, %270, %cst_111 {dimension_numbers = #tpu.dot_dimension_numbers<[2], [2], [1], [1], [0, 0, 0, 1, 1, 1], [0], [0]>} : vector<4x16x32xbf16>, vector<4x16x32xbf16>, vector<4x16x16xf32> -> vector<4x16x16xf32>
    %cst_112 = arith.constant -1.000000e+30 : f32
    "tpu.trace_stop"() : () -> ()
    %272 = vector.shape_cast %15 : vector<1x16x16xi1> to vector<1x16x16xi1>
    %273 = vector.broadcast %272 : vector<1x16x16xi1> to vector<4x16x16xi1>
    %274 = vector.broadcast %cst_112 : f32 to vector<4x16x16xf32>
    %275 = arith.select %273, %271, %274 : vector<4x16x16xi1>, vector<4x16x16xf32>
    %cst_113 = arith.constant dense<0xFF800000> : vector<4x16xf32>
    %276 = vector.multi_reduction <maximumf>, %275, %cst_113 [2] : vector<4x16x16xf32> to vector<4x16xf32>
    %277 = vector.shape_cast %276 : vector<4x16xf32> to vector<4x16x1xf32>
    %278 = vector.broadcast %277 : vector<4x16x1xf32> to vector<4x16x16xf32>
    %279 = arith.subf %275, %278 : vector<4x16x16xf32>
    %280 = math.exp %279 : vector<4x16x16xf32>
    %cst_114 = arith.constant dense<0.000000e+00> : vector<4x16xf32>
    %281 = vector.multi_reduction <add>, %280, %cst_114 [2] : vector<4x16x16xf32> to vector<4x16xf32>
    %282 = vector.shape_cast %281 : vector<4x16xf32> to vector<4x16x1xf32>
    %283 = tpu.reciprocal %282 {approx = true} : vector<4x16x1xf32> -> vector<4x16x1xf32>
    %284 = vector.broadcast %283 : vector<4x16x1xf32> to vector<4x16x16xf32>
    %285 = arith.mulf %280, %284 : vector<4x16x16xf32>
    %286 = arith.truncf %285 : vector<4x16x16xf32> to vector<4x16x16xbf16>
    %287 = arith.truncf %268 : vector<4x16x32xf32> to vector<4x16x32xbf16>
    "tpu.trace_start"() <{level = 10 : i32, message = "hts,hsd->htd"}> : () -> ()
    %cst_115 = arith.constant dense<0.000000e+00> : vector<4x16x32xf32>
    %288 = tpu.matmul %286, %287, %cst_115 {dimension_numbers = #tpu.dot_dimension_numbers<[2], [1], [1], [2], [0, 0, 0, 1, 1, 2], [0], [0]>} : vector<4x16x16xbf16>, vector<4x16x32xbf16>, vector<4x16x32xf32> -> vector<4x16x32xf32>
    "tpu.trace_stop"() : () -> ()
    %289 = tpu.transpose %288, [1, 0, 2] : vector<4x16x32xf32> -> vector<16x4x32xf32>
    %290 = vector.shape_cast %289 : vector<16x4x32xf32> to vector<16x128xf32>
    %291 = arith.addf %229, %290 : vector<16x128xf32>
    %c2_116 = arith.constant 2 : index
    %c0_117 = arith.constant 0 : index
    %c0_118 = arith.constant 0 : index
    %292 = vector.load %arg7[%c2_116, %c0_117, %c0_118] : memref<3x1x128xf32, #tpu.memory_space<vmem>>, vector<1x1x128xf32>
    %293 = vector.shape_cast %292 : vector<1x1x128xf32> to vector<1x128xf32>
    %c2_119 = arith.constant 2 : index
    %c0_120 = arith.constant 0 : index
    %c0_121 = arith.constant 0 : index
    %294 = vector.load %arg8[%c2_119, %c0_120, %c0_121] : memref<3x1x128xf32, #tpu.memory_space<vmem>>, vector<1x1x128xf32>
    %295 = vector.shape_cast %294 : vector<1x1x128xf32> to vector<1x128xf32>
    %cst_122 = arith.constant dense<0.000000e+00> : vector<128xf32>
    %296 = vector.multi_reduction <add>, %291, %cst_122 [0] : vector<16x128xf32> to vector<128xf32>
    %297 = vector.shape_cast %296 : vector<128xf32> to vector<1x128xf32>
    %cst_123 = arith.constant 1.600000e+01 : f32
    %298 = vector.broadcast %cst_123 : f32 to vector<1x128xf32>
    %299 = arith.divf %297, %298 : vector<1x128xf32>
    %300 = vector.broadcast %299 : vector<1x128xf32> to vector<16x128xf32>
    %301 = arith.subf %291, %300 : vector<16x128xf32>
    %302 = arith.mulf %301, %301 : vector<16x128xf32>
    %cst_124 = arith.constant dense<0.000000e+00> : vector<128xf32>
    %303 = vector.multi_reduction <add>, %302, %cst_124 [0] : vector<16x128xf32> to vector<128xf32>
    %304 = vector.shape_cast %303 : vector<128xf32> to vector<1x128xf32>
    %cst_125 = arith.constant 0.0666666701 : f32
    %305 = vector.broadcast %cst_125 : f32 to vector<1x128xf32>
    %306 = arith.mulf %304, %305 : vector<1x128xf32>
    %307 = vector.broadcast %299 : vector<1x128xf32> to vector<16x128xf32>
    %308 = arith.subf %291, %307 : vector<16x128xf32>
    %309 = vector.broadcast %293 : vector<1x128xf32> to vector<16x128xf32>
    %310 = arith.mulf %309, %308 : vector<16x128xf32>
    %cst_126 = arith.constant 9.99999974E-6 : f32
    %311 = vector.broadcast %cst_126 : f32 to vector<1x128xf32>
    %312 = arith.addf %306, %311 : vector<1x128xf32>
    %313 = math.rsqrt %312 : vector<1x128xf32>
    %314 = vector.broadcast %313 : vector<1x128xf32> to vector<16x128xf32>
    %315 = arith.mulf %310, %314 : vector<16x128xf32>
    %316 = vector.broadcast %295 : vector<1x128xf32> to vector<16x128xf32>
    %317 = arith.addf %315, %316 : vector<16x128xf32>
    %318 = arith.truncf %317 : vector<16x128xf32> to vector<16x128xbf16>
    %c2_127 = arith.constant 2 : index
    %c0_128 = arith.constant 0 : index
    %c0_129 = arith.constant 0 : index
    %319 = vector.load %arg9[%c2_127, %c0_128, %c0_129] : memref<3x128x512xbf16, #tpu.memory_space<vmem>>, vector<1x128x512xbf16>
    %320 = vector.shape_cast %319 : vector<1x128x512xbf16> to vector<128x512xbf16>
    %cst_130 = arith.constant dense<0.000000e+00> : vector<16x512xf32>
    %321 = tpu.matmul %318, %320, %cst_130 {dimension_numbers = #tpu.dot_dimension_numbers<[1], [0], [0], [1], [0, 0, 1, 1], [], []>} : vector<16x128xbf16>, vector<128x512xbf16>, vector<16x512xf32> -> vector<16x512xf32>
    %c2_131 = arith.constant 2 : index
    %c0_132 = arith.constant 0 : index
    %c0_133 = arith.constant 0 : index
    %322 = vector.load %arg10[%c2_131, %c0_132, %c0_133] : memref<3x1x512xf32, #tpu.memory_space<vmem>>, vector<1x1x512xf32>
    %323 = vector.shape_cast %322 : vector<1x1x512xf32> to vector<1x512xf32>
    %324 = vector.broadcast %323 : vector<1x512xf32> to vector<16x512xf32>
    %325 = arith.addf %321, %324 : vector<16x512xf32>
    %cst_134 = arith.constant 0.000000e+00 : f32
    %326 = vector.broadcast %cst_134 : f32 to vector<16x512xf32>
    %327 = arith.maximumf %325, %326 : vector<16x512xf32>
    %328 = arith.truncf %327 : vector<16x512xf32> to vector<16x512xbf16>
    %c2_135 = arith.constant 2 : index
    %c0_136 = arith.constant 0 : index
    %c0_137 = arith.constant 0 : index
    %329 = vector.load %arg11[%c2_135, %c0_136, %c0_137] : memref<3x512x128xbf16, #tpu.memory_space<vmem>>, vector<1x512x128xbf16>
    %330 = vector.shape_cast %329 : vector<1x512x128xbf16> to vector<512x128xbf16>
    %cst_138 = arith.constant dense<0.000000e+00> : vector<16x128xf32>
    %331 = tpu.matmul %328, %330, %cst_138 {dimension_numbers = #tpu.dot_dimension_numbers<[1], [0], [0], [1], [0, 0, 1, 1], [], []>} : vector<16x512xbf16>, vector<512x128xbf16>, vector<16x128xf32> -> vector<16x128xf32>
    %c2_139 = arith.constant 2 : index
    %c0_140 = arith.constant 0 : index
    %c0_141 = arith.constant 0 : index
    %332 = vector.load %arg12[%c2_139, %c0_140, %c0_141] : memref<3x1x128xf32, #tpu.memory_space<vmem>>, vector<1x1x128xf32>
    %333 = vector.shape_cast %332 : vector<1x1x128xf32> to vector<1x128xf32>
    %334 = vector.broadcast %333 : vector<1x128xf32> to vector<16x128xf32>
    %335 = arith.addf %331, %334 : vector<16x128xf32>
    %336 = arith.addf %291, %335 : vector<16x128xf32>
    %337 = arith.truncf %336 : vector<16x128xf32> to vector<16x128xbf16>
    %c0_142 = arith.constant 0 : index
    %c0_143 = arith.constant 0 : index
    %338 = vector.load %arg13[%c0_142, %c0_143] : memref<128x128xbf16, #tpu.memory_space<vmem>>, vector<128x128xbf16>
    %cst_144 = arith.constant dense<0.000000e+00> : vector<16x128xf32>
    %339 = tpu.matmul %337, %338, %cst_144 {dimension_numbers = #tpu.dot_dimension_numbers<[1], [0], [0], [1], [0, 0, 1, 1], [], []>} : vector<16x128xbf16>, vector<128x128xbf16>, vector<16x128xf32> -> vector<16x128xf32>
    %c0_145 = arith.constant 0 : index
    %c0_146 = arith.constant 0 : index
    %340 = vector.load %arg14[%c0_145, %c0_146] : memref<1x128xf32, #tpu.memory_space<vmem>>, vector<1x128xf32>
    %341 = vector.broadcast %340 : vector<1x128xf32> to vector<16x128xf32>
    %342 = arith.addf %339, %341 : vector<16x128xf32>
    %c0_147 = arith.constant 0 : index
    %c0_148 = arith.constant 0 : index
    %c0_149 = arith.constant 0 : index
    %343 = vector.load %arg15[%c0_147, %c0_148, %c0_149] : memref<1x16x128xf32, #tpu.memory_space<vmem>>, vector<1x16x128xf32>
    %344 = vector.shape_cast %343 : vector<1x16x128xf32> to vector<16x128xf32>
    %345 = vector.shape_cast %342 : vector<16x128xf32> to vector<1x16x128xf32>
    tpu.vector_store %arg15[%c0_147, %c0_148, %c0_149], %345 {strides = array<i32>} : memref<1x16x128xf32, #tpu.memory_space<vmem>>, vector<1x16x128xf32>,
    return
  }
  func.func @transform_0(%arg0: i32) -> (i32, i32, i32) {
    %c0_i32 = arith.constant 0 : i32
    %c0_i32_0 = arith.constant 0 : i32
    %c0_i32_1 = arith.constant 0 : i32
    return %arg0, %c0_i32, %c0_i32_0 : i32, i32, i32
  }
  func.func @transform_1(%arg0: i32) -> (i32, i32) {
    %c0_i32 = arith.constant 0 : i32
    %c0_i32_0 = arith.constant 0 : i32
    %c0_i32_1 = arith.constant 0 : i32
    return %c0_i32, %c0_i32_0 : i32, i32
  }
  func.func @transform_2(%arg0: i32) -> (i32, i32) {
    %c0_i32 = arith.constant 0 : i32
    %c0_i32_0 = arith.constant 0 : i32
    %c0_i32_1 = arith.constant 0 : i32
    return %c0_i32, %c0_i32_0 : i32, i32
  }
  func.func @transform_3(%arg0: i32) -> (i32, i32, i32) {
    %c0_i32 = arith.constant 0 : i32
    %c0_i32_0 = arith.constant 0 : i32
    %c0_i32_1 = arith.constant 0 : i32
    %c0_i32_2 = arith.constant 0 : i32
    return %c0_i32, %c0_i32_0, %c0_i32_1 : i32, i32, i32
  }
  func.func @transform_4(%arg0: i32) -> (i32, i32, i32) {
    %c0_i32 = arith.constant 0 : i32
    %c0_i32_0 = arith.constant 0 : i32
    %c0_i32_1 = arith.constant 0 : i32
    %c0_i32_2 = arith.constant 0 : i32
    return %c0_i32, %c0_i32_0, %c0_i32_1 : i32, i32, i32
  }
  func.func @transform_5(%arg0: i32) -> (i32, i32, i32) {
    %c0_i32 = arith.constant 0 : i32
    %c0_i32_0 = arith.constant 0 : i32
    %c0_i32_1 = arith.constant 0 : i32
    %c0_i32_2 = arith.constant 0 : i32
    return %c0_i32, %c0_i32_0, %c0_i32_1 : i32, i32, i32
  }
  func.func @transform_6(%arg0: i32) -> (i32, i32, i32) {
    %c0_i32 = arith.constant 0 : i32
    %c0_i32_0 = arith.constant 0 : i32
    %c0_i32_1 = arith.constant 0 : i32
    %c0_i32_2 = arith.constant 0 : i32
    return %c0_i32, %c0_i32_0, %c0_i32_1 : i32, i32, i32
  }
  func.func @transform_7(%arg0: i32) -> (i32, i32, i32) {
    %c0_i32 = arith.constant 0 : i32
    %c0_i32_0 = arith.constant 0 : i32
    %c0_i32_1 = arith.constant 0 : i32
    %c0_i32_2 = arith.constant 0 : i32
    return %c0_i32, %c0_i32_0, %c0_i32_1 : i32, i32, i32
  }
  func.func @transform_8(%arg0: i32) -> (i32, i32, i32) {
    %c0_i32 = arith.constant 0 : i32
    %c0_i32_0 = arith.constant 0 : i32
    %c0_i32_1 = arith.constant 0 : i32
    %c0_i32_2 = arith.constant 0 : i32
    return %c0_i32, %c0_i32_0, %c0_i32_1 : i32, i32, i32
  }
  func.func @transform_9(%arg0: i32) -> (i32, i32, i32) {
    %c0_i32 = arith.constant 0 : i32
    %c0_i32_0 = arith.constant 0 : i32
    %c0_i32_1 = arith.constant 0 : i32
    %c0_i32_2 = arith.constant 0 : i32
    return %c0_i32, %c0_i32_0, %c0_i32_1 : i32, i32, i32
  }
  func.func @transform_10(%arg0: i32) -> (i32, i32, i32) {
    %c0_i32 = arith.constant 0 : i32
    %c0_i32_0 = arith.constant 0 : i32
    %c0_i32_1 = arith.constant 0 : i32
    %c0_i32_2 = arith.constant 0 : i32
    return %c0_i32, %c0_i32_0, %c0_i32_1 : i32, i32, i32
  }
  func.func @transform_11(%arg0: i32) -> (i32, i32, i32) {
    %c0_i32 = arith.constant 0 : i32
    %c0_i32_0 = arith.constant 0 : i32
    %c0_i32_1 = arith.constant 0 : i32
    %c0_i32_2 = arith.constant 0 : i32
    return %c0_i32, %c0_i32_0, %c0_i32_1 : i32, i32, i32
  }
  func.func @transform_12(%arg0: i32) -> (i32, i32) {
    %c0_i32 = arith.constant 0 : i32
    %c0_i32_0 = arith.constant 0 : i32
    %c0_i32_1 = arith.constant 0 : i32
    return %c0_i32, %c0_i32_0 : i32, i32
  }
  func.func @transform_13(%arg0: i32) -> (i32, i32) {
    %c0_i32 = arith.constant 0 : i32
    %c0_i32_0 = arith.constant 0 : i32
    %c0_i32_1 = arith.constant 0 : i32
    return %c0_i32, %c0_i32_0 : i32, i32
  }
  func.func @transform_14(%arg0: i32) -> (i32, i32, i32) {
    %c0_i32 = arith.constant 0 : i32
    %c0_i32_0 = arith.constant 0 : i32
    %c0_i32_1 = arith.constant 0 : i32
    return %arg0, %c0_i32, %c0_i32_0 : i32, i32, i32
  }
}

</mosaic_0001>

<llo_original>
// kernel: tpu_custom_call.1
$region0: #{tpu_custom_call.1}
  #allocation0 [shape = 'u32[]', space=smem, size = 0x4, offset = 0x4, fixed_abs, tag = 'smem constant byte address 0x4 - core index']
  #allocation1 [shape = 'u32[144,128]{1,0:T(1,128)}', space=vmem, size = 0x12000, scoped, tag = 'internal scratch']
  %s0 = inlined_call_operand.vmem [shape: s32[2,16,1], index: 0, kind: input, shape index: {}]
  %s1 = inlined_call_operand.hbm [shape: bf16[128,128], index: 1, kind: input, shape index: {}]
  %s2 = inlined_call_operand.hbm [shape: f32[16,128], index: 2, kind: input, shape index: {}]
  %s3 = inlined_call_operand.vmem [shape: f32[3,1,128], index: 3, kind: input, shape index: {}]
  %s4 = inlined_call_operand.hbm [shape: f32[3,1,128], index: 4, kind: input, shape index: {}]
  %s5 = inlined_call_operand.hbm [shape: bf16[3,128,384], index: 5, kind: input, shape index: {}]
  %s6 = inlined_call_operand.hbm [shape: f32[3,1,128], index: 6, kind: input, shape index: {}]
  %s7 = inlined_call_operand.hbm [shape: f32[3,1,128], index: 7, kind: input, shape index: {}]
  %s8 = inlined_call_operand.hbm [shape: bf16[3,128,512], index: 8, kind: input, shape index: {}]
  %s9 = inlined_call_operand.vmem [shape: f32[3,1,512], index: 9, kind: input, shape index: {}]
  %s10 = inlined_call_operand.hbm [shape: bf16[3,512,128], index: 10, kind: input, shape index: {}]
  %s11 = inlined_call_operand.hbm [shape: f32[3,1,128], index: 11, kind: input, shape index: {}]
  %s12 = inlined_call_operand.vmem [shape: bf16[128,128], index: 12, kind: input, shape index: {}]
  %s13 = inlined_call_operand.vmem [shape: f32[1,128], index: 13, kind: input, shape index: {}]
  %s14 = inlined_call_operand.hbm [shape: f32[2,16,128], index: 14, kind: output, shape index: {}]
  %s15 = sld [smem:[#allocation0]]
  $region125: #{tpu_custom_call.1} parent=0
    _
  %s17 = ssub.s32 1, %s15
  %s18 = scalar_select 0, %s17, %s15
  $region1: #{tpu_custom_call.1} parent=0
    #allocation2 [shape = 'u8[32768]{0}', space=vmem, size = 0x8000, scoped, tag = 'input window, operand 1, single buffered']
    #allocation3 [shape = 's32[2]{0}', space=sflag, size = 0x8, scoped, tag = 'scoped memory for tpu_custom_call.1']
    #allocation4 [shape = 's32[2]{0}', space=sflag, size = 0x8, scoped, tag = 'scoped memory for tpu_custom_call.1']
    #allocation5 [shape = 'u8[8192]{0}', space=vmem, size = 0x2000, scoped, tag = 'input window, operand 2, single buffered']
    #allocation6 [shape = 's32[1]{0}', space=sflag, size = 0x4, scoped, tag = 'scoped memory for tpu_custom_call.1']
    #allocation7 [shape = 'u8[1536]{0}', space=vmem, size = 0x800, scoped, tag = 'input window, operand 4, single buffered']
    #allocation8 [shape = 'u8[294912]{0}', space=vmem, size = 0x48000, scoped, tag = 'input window, operand 5, single buffered']
    #allocation9 [shape = 's32[1]{0}', space=sflag, size = 0x4, scoped, tag = 'scoped memory for tpu_custom_call.1']
    #allocation10 [shape = 'u8[1536]{0}', space=vmem, size = 0x800, scoped, tag = 'input window, operand 6, single buffered']
    #allocation11 [shape = 'u8[1536]{0}', space=vmem, size = 0x800, scoped, tag = 'input window, operand 7, single buffered']
    #allocation12 [shape = 's32[1]{0}', space=sflag, size = 0x4, scoped, tag = 'scoped memory for tpu_custom_call.1']
    #allocation13 [shape = 'u8[393216]{0}', space=vmem, size = 0x60000, scoped, tag = 'input window, operand 8, single buffered']
    #allocation14 [shape = 'u8[393216]{0}', space=vmem, size = 0x60000, scoped, tag = 'input window, operand 10, single buffered']
    #allocation15 [shape = 's32[1]{0}', space=sflag, size = 0x4, scoped, tag = 'scoped memory for tpu_custom_call.1']
    #allocation16 [shape = 'u8[1536]{0}', space=vmem, size = 0x800, scoped, tag = 'input window, operand 11, single buffered']
    #allocation17 [shape = 'u8[16384]{0}', space=vmem, size = 0x4000, scoped, tag = 'output window, operand 0']
    %19 = vsyncpa [#allocation3], 0
    %20 = vsyncpa [#allocation6], 0
    %21 = vsyncpa [#allocation9], 0
    %22 = vsyncpa [#allocation12], 0
    %23 = vsyncpa [#allocation15], 0
    %24 = vsyncpa [#allocation4], 0
    %s25 = scalar_lea.sflag [#allocation4], 1
    %26 = vsyncpa %s25, 0
    loop: start=0, step=1, limit=4
    $region2: #{tpu_custom_call.1} parent=1 // loop_pre_header
      _
    $region3: #{tpu_custom_call.1} parent=1 // loop_header
      %s28 = sphi 0, %s32
      %p29 = scmp.ge.s32.totalorder %s28, 4
      %s38 = sphi 0, %s40
      %s41 = sphi 0, %s38
      %s42 = sphi 0, %s41
      %s58 = sphi 0, %s42
      %s62 = sphi 0, %s62
      %s64 = sphi 0, %s62
      %s65 = sphi 0, %s64
      %s79 = sphi 0, %s65
      %s83 = sphi 0, %s83
      %s85 = sphi 0, %s83
      %s86 = sphi 0, %s85
      %s100 = sphi 0, %s86
      %s104 = sphi 0, %s104
      %s106 = sphi 0, %s104
      %s107 = sphi 0, %s106
      %s121 = sphi 0, %s107
      %s125 = sphi 0, %s125
      %s127 = sphi 0, %s125
      %s128 = sphi 0, %s127
      %s142 = sphi 0, %s128
      %s146 = sphi 0, %s146
      %s148 = sphi 0, %s146
      %s149 = sphi 0, %s148
      %s163 = sphi 0, %s149
      %s167 = sphi 0, %s167
      %s169 = sphi 0, %s167
      %s170 = sphi 0, %s169
      %s184 = sphi 0, %s170
      %s188 = sphi 0, %s188
      %s190 = sphi 0, %s188
      %s191 = sphi 0, %s190
      %s205 = sphi 0, %s191
      %s209 = sphi 0, %s209
      %s211 = sphi 0, %s209
      %s212 = sphi 0, %s211
      %s226 = sphi 0, %s212
      %s230 = sphi 0, %s230
      %s232 = sphi 0, %s230
      %s233 = sphi 0, %s232
      %s247 = sphi 0, %s233
      %s251 = sphi 0, %s251
      %s253 = sphi 0, %s251
      %s254 = sphi 0, %s253
      %s268 = sphi 0, %s254
      %s272 = sphi 0, %s272
      %s274 = sphi 0, %s272
      %s275 = sphi 0, %s274
      %s289 = sphi 0, %s275
      %s293 = sphi 0, %s293
      %s295 = sphi 0, %s293
      %s296 = sphi 0, %s295
      %s310 = sphi 0, %s296
      %s314 = sphi 0, %s314
      %s316 = sphi 0, %s314
      %s317 = sphi 0, %s316
      %s331 = sphi 0, %s317
      %s337 = sphi 0, %s339
      %s340 = sphi 0, %s337
      %s341 = sphi 0, %s340
      %s357 = sphi 0, %s341
    $region4: #{tpu_custom_call.1} parent=1 // loop_header_branch
      %31 = sbr.rel (%p29) target = $region8
    $region5: #{tpu_custom_call.1} parent=1 // loop_body
      %s33 = ssub.s32 %s28, 1
      %s34 = ssub.s32 %s28, 2
      %s35 = sadd.s32 %s28, 1
      %s36 = ssub.s32 %s28, %s35
      %p37 = scmp.eq.s32.totalorder %s36, 0
      %s39 = sadd.s32 %s38, 1
      %s40 = scalar_select %p37, %s38, %s39
      %p43 = pneg %p37
      %p44 = scmp.eq.s32.totalorder %s28, 1
      %p45 = por %p43, %p44
      %p46 = scmp.ne.s32.totalorder %s38, %s41
      %p47 = scmp.eq.s32.totalorder %s28, 0
      %p48 = por %p46, %p47
      %p49 = scmp.ne.s32.totalorder %s38, %s41
      %p50 = scmp.eq.s32.totalorder %s33, 1
      %p51 = por %p49, %p50
      %p52 = scmp.ne.s32.totalorder %s41, %s42
      %p53 = scmp.eq.s32.totalorder %s33, 0
      %p54 = por %p52, %p53
      %p55 = scmp.ne.s32.totalorder %s41, %s42
      %p56 = scmp.eq.s32.totalorder %s34, 1
      %p57 = por %p55, %p56
      %p59 = scmp.ne.s32.totalorder %s42, %s58
      %p60 = scmp.eq.s32.totalorder %s34, 0
      %p61 = por %p59, %p60
      %s63 = sadd.s32 %s62, 1
      %p66 = scmp.eq.s32.totalorder %s28, 1
      %p67 = scmp.ne.s32.totalorder %s62, %s64
      %p68 = scmp.eq.s32.totalorder %s28, 0
      %p69 = por %p67, %p68
      %p70 = scmp.ne.s32.totalorder %s62, %s64
      %p71 = scmp.eq.s32.totalorder %s33, 1
      %p72 = por %p70, %p71
      %p73 = scmp.ne.s32.totalorder %s64, %s65
      %p74 = scmp.eq.s32.totalorder %s33, 0
      %p75 = por %p73, %p74
      %p76 = scmp.ne.s32.totalorder %s64, %s65
      %p77 = scmp.eq.s32.totalorder %s34, 1
      %p78 = por %p76, %p77
      %p80 = scmp.ne.s32.totalorder %s65, %s79
      %p81 = scmp.eq.s32.totalorder %s34, 0
      %p82 = por %p80, %p81
      %s84 = sadd.s32 %s83, 1
      %p87 = scmp.eq.s32.totalorder %s28, 1
      %p88 = scmp.ne.s32.totalorder %s83, %s85
      %p89 = scmp.eq.s32.totalorder %s28, 0
      %p90 = por %p88, %p89
      %p91 = scmp.ne.s32.totalorder %s83, %s85
      %p92 = scmp.eq.s32.totalorder %s33, 1
      %p93 = por %p91, %p92
      %p94 = scmp.ne.s32.totalorder %s85, %s86
      %p95 = scmp.eq.s32.totalorder %s33, 0
      %p96 = por %p94, %p95
      %p97 = scmp.ne.s32.totalorder %s85, %s86
      %p98 = scmp.eq.s32.totalorder %s34, 1
      %p99 = por %p97, %p98
      %p101 = scmp.ne.s32.totalorder %s86, %s100
      %p102 = scmp.eq.s32.totalorder %s34, 0
      %p103 = por %p101, %p102
      %s105 = sadd.s32 %s104, 1
      %p108 = scmp.eq.s32.totalorder %s28, 1
      %p109 = scmp.ne.s32.totalorder %s104, %s106
      %p110 = scmp.eq.s32.totalorder %s28, 0
      %p111 = por %p109, %p110
      %p112 = scmp.ne.s32.totalorder %s104, %s106
      %p113 = scmp.eq.s32.totalorder %s33, 1
      %p114 = por %p112, %p113
      %p115 = scmp.ne.s32.totalorder %s106, %s107
      %p116 = scmp.eq.s32.totalorder %s33, 0
      %p117 = por %p115, %p116
      %p118 = scmp.ne.s32.totalorder %s106, %s107
      %p119 = scmp.eq.s32.totalorder %s34, 1
      %p120 = por %p118, %p119
      %p122 = scmp.ne.s32.totalorder %s107, %s121
      %p123 = scmp.eq.s32.totalorder %s34, 0
      %p124 = por %p122, %p123
      %s126 = sadd.s32 %s125, 1
      %p129 = scmp.eq.s32.totalorder %s28, 1
      %p130 = scmp.ne.s32.totalorder %s125, %s127
      %p131 = scmp.eq.s32.totalorder %s28, 0
      %p132 = por %p130, %p131
      %p133 = scmp.ne.s32.totalorder %s125, %s127
      %p134 = scmp.eq.s32.totalorder %s33, 1
      %p135 = por %p133, %p134
      %p136 = scmp.ne.s32.totalorder %s127, %s128
      %p137 = scmp.eq.s32.totalorder %s33, 0
      %p138 = por %p136, %p137
      %p139 = scmp.ne.s32.totalorder %s127, %s128
      %p140 = scmp.eq.s32.totalorder %s34, 1
      %p141 = por %p139, %p140
      %p143 = scmp.ne.s32.totalorder %s128, %s142
      %p144 = scmp.eq.s32.totalorder %s34, 0
      %p145 = por %p143, %p144
      %s147 = sadd.s32 %s146, 1
      %p150 = scmp.eq.s32.totalorder %s28, 1
      %p151 = scmp.ne.s32.totalorder %s146, %s148
      %p152 = scmp.eq.s32.totalorder %s28, 0
      %p153 = por %p151, %p152
      %p154 = scmp.ne.s32.totalorder %s146, %s148
      %p155 = scmp.eq.s32.totalorder %s33, 1
      %p156 = por %p154, %p155
      %p157 = scmp.ne.s32.totalorder %s148, %s149
      %p158 = scmp.eq.s32.totalorder %s33, 0
      %p159 = por %p157, %p158
      %p160 = scmp.ne.s32.totalorder %s148, %s149
      %p161 = scmp.eq.s32.totalorder %s34, 1
      %p162 = por %p160, %p161
      %p164 = scmp.ne.s32.totalorder %s149, %s163
      %p165 = scmp.eq.s32.totalorder %s34, 0
      %p166 = por %p164, %p165
      %s168 = sadd.s32 %s167, 1
      %p171 = scmp.eq.s32.totalorder %s28, 1
      %p172 = scmp.ne.s32.totalorder %s167, %s169
      %p173 = scmp.eq.s32.totalorder %s28, 0
      %p174 = por %p172, %p173
      %p175 = scmp.ne.s32.totalorder %s167, %s169
      %p176 = scmp.eq.s32.totalorder %s33, 1
      %p177 = por %p175, %p176
      %p178 = scmp.ne.s32.totalorder %s169, %s170
      %p179 = scmp.eq.s32.totalorder %s33, 0
      %p180 = por %p178, %p179
      %p181 = scmp.ne.s32.totalorder %s169, %s170
      %p182 = scmp.eq.s32.totalorder %s34, 1
      %p183 = por %p181, %p182
      %p185 = scmp.ne.s32.totalorder %s170, %s184
      %p186 = scmp.eq.s32.totalorder %s34, 0
      %p187 = por %p185, %p186
      %s189 = sadd.s32 %s188, 1
      %p192 = scmp.eq.s32.totalorder %s28, 1
      %p193 = scmp.ne.s32.totalorder %s188, %s190
      %p194 = scmp.eq.s32.totalorder %s28, 0
      %p195 = por %p193, %p194
      %p196 = scmp.ne.s32.totalorder %s188, %s190
      %p197 = scmp.eq.s32.totalorder %s33, 1
      %p198 = por %p196, %p197
      %p199 = scmp.ne.s32.totalorder %s190, %s191
      %p200 = scmp.eq.s32.totalorder %s33, 0
      %p201 = por %p199, %p200
      %p202 = scmp.ne.s32.totalorder %s190, %s191
      %p203 = scmp.eq.s32.totalorder %s34, 1
      %p204 = por %p202, %p203
      %p206 = scmp.ne.s32.totalorder %s191, %s205
      %p207 = scmp.eq.s32.totalorder %s34, 0
      %p208 = por %p206, %p207
      %s210 = sadd.s32 %s209, 1
      %p213 = scmp.eq.s32.totalorder %s28, 1
      %p214 = scmp.ne.s32.totalorder %s209, %s211
      %p215 = scmp.eq.s32.totalorder %s28, 0
      %p216 = por %p214, %p215
      %p217 = scmp.ne.s32.totalorder %s209, %s211
      %p218 = scmp.eq.s32.totalorder %s33, 1
      %p219 = por %p217, %p218
      %p220 = scmp.ne.s32.totalorder %s211, %s212
      %p221 = scmp.eq.s32.totalorder %s33, 0
      %p222 = por %p220, %p221
      %p223 = scmp.ne.s32.totalorder %s211, %s212
      %p224 = scmp.eq.s32.totalorder %s34, 1
      %p225 = por %p223, %p224
      %p227 = scmp.ne.s32.totalorder %s212, %s226
      %p228 = scmp.eq.s32.totalorder %s34, 0
      %p229 = por %p227, %p228
      %s231 = sadd.s32 %s230, 1
      %p234 = scmp.eq.s32.totalorder %s28, 1
      %p235 = scmp.ne.s32.totalorder %s230, %s232
      %p236 = scmp.eq.s32.totalorder %s28, 0
      %p237 = por %p235, %p236
      %p238 = scmp.ne.s32.totalorder %s230, %s232
      %p239 = scmp.eq.s32.totalorder %s33, 1
      %p240 = por %p238, %p239
      %p241 = scmp.ne.s32.totalorder %s232, %s233
      %p242 = scmp.eq.s32.totalorder %s33, 0
      %p243 = por %p241, %p242
      %p244 = scmp.ne.s32.totalorder %s232, %s233
      %p245 = scmp.eq.s32.totalorder %s34, 1
      %p246 = por %p244, %p245
      %p248 = scmp.ne.s32.totalorder %s233, %s247
      %p249 = scmp.eq.s32.totalorder %s34, 0
      %p250 = por %p248, %p249
      %s252 = sadd.s32 %s251, 1
      %p255 = scmp.eq.s32.totalorder %s28, 1
      %p256 = scmp.ne.s32.totalorder %s251, %s253
      %p257 = scmp.eq.s32.totalorder %s28, 0
      %p258 = por %p256, %p257
      %p259 = scmp.ne.s32.totalorder %s251, %s253
      %p260 = scmp.eq.s32.totalorder %s33, 1
      %p261 = por %p259, %p260
      %p262 = scmp.ne.s32.totalorder %s253, %s254
      %p263 = scmp.eq.s32.totalorder %s33, 0
      %p264 = por %p262, %p263
      %p265 = scmp.ne.s32.totalorder %s253, %s254
      %p266 = scmp.eq.s32.totalorder %s34, 1
      %p267 = por %p265, %p266
      %p269 = scmp.ne.s32.totalorder %s254, %s268
      %p270 = scmp.eq.s32.totalorder %s34, 0
      %p271 = por %p269, %p270
      %s273 = sadd.s32 %s272, 1
      %p276 = scmp.eq.s32.totalorder %s28, 1
      %p277 = scmp.ne.s32.totalorder %s272, %s274
      %p278 = scmp.eq.s32.totalorder %s28, 0
      %p279 = por %p277, %p278
      %p280 = scmp.ne.s32.totalorder %s272, %s274
      %p281 = scmp.eq.s32.totalorder %s33, 1
      %p282 = por %p280, %p281
      %p283 = scmp.ne.s32.totalorder %s274, %s275
      %p284 = scmp.eq.s32.totalorder %s33, 0
      %p285 = por %p283, %p284
      %p286 = scmp.ne.s32.totalorder %s274, %s275
      %p287 = scmp.eq.s32.totalorder %s34, 1
      %p288 = por %p286, %p287
      %p290 = scmp.ne.s32.totalorder %s275, %s289
      %p291 = scmp.eq.s32.totalorder %s34, 0
      %p292 = por %p290, %p291
      %s294 = sadd.s32 %s293, 1
      %p297 = scmp.eq.s32.totalorder %s28, 1
      %p298 = scmp.ne.s32.totalorder %s293, %s295
      %p299 = scmp.eq.s32.totalorder %s28, 0
      %p300 = por %p298, %p299
      %p301 = scmp.ne.s32.totalorder %s293, %s295
      %p302 = scmp.eq.s32.totalorder %s33, 1
      %p303 = por %p301, %p302
      %p304 = scmp.ne.s32.totalorder %s295, %s296
      %p305 = scmp.eq.s32.totalorder %s33, 0
      %p306 = por %p304, %p305
      %p307 = scmp.ne.s32.totalorder %s295, %s296
      %p308 = scmp.eq.s32.totalorder %s34, 1
      %p309 = por %p307, %p308
      %p311 = scmp.ne.s32.totalorder %s296, %s310
      %p312 = scmp.eq.s32.totalorder %s34, 0
      %p313 = por %p311, %p312
      %s315 = sadd.s32 %s314, 1
      %p318 = scmp.eq.s32.totalorder %s28, 1
      %p319 = scmp.ne.s32.totalorder %s314, %s316
      %p320 = scmp.eq.s32.totalorder %s28, 0
      %p321 = por %p319, %p320
      %p322 = scmp.ne.s32.totalorder %s314, %s316
      %p323 = scmp.eq.s32.totalorder %s33, 1
      %p324 = por %p322, %p323
      %p325 = scmp.ne.s32.totalorder %s316, %s317
      %p326 = scmp.eq.s32.totalorder %s33, 0
      %p327 = por %p325, %p326
      %p328 = scmp.ne.s32.totalorder %s316, %s317
      %p329 = scmp.eq.s32.totalorder %s34, 1
      %p330 = por %p328, %p329
      %p332 = scmp.ne.s32.totalorder %s317, %s331
      %p333 = scmp.eq.s32.totalorder %s34, 0
      %p334 = por %p332, %p333
      %s335 = ssub.s32 %s28, %s35
      %p336 = scmp.eq.s32.totalorder %s335, 0
      %s338 = sadd.s32 %s337, 1
      %s339 = scalar_select %p336, %s337, %s338
      %p342 = pneg %p336
      %p343 = scmp.eq.s32.totalorder %s28, 1
      %p344 = por %p342, %p343
      %p345 = scmp.ne.s32.totalorder %s337, %s340
      %p346 = scmp.eq.s32.totalorder %s28, 0
      %p347 = por %p345, %p346
      %p348 = scmp.ne.s32.totalorder %s337, %s340
      %p349 = scmp.eq.s32.totalorder %s33, 1
      %p350 = por %p348, %p349
      %p351 = scmp.ne.s32.totalorder %s340, %s341
      %p352 = scmp.eq.s32.totalorder %s33, 0
      %p353 = por %p351, %p352
      %p354 = scmp.ne.s32.totalorder %s340, %s341
      %p355 = scmp.eq.s32.totalorder %s34, 1
      %p356 = por %p354, %p355
      %p358 = scmp.ne.s32.totalorder %s341, %s357
      %p359 = scmp.eq.s32.totalorder %s34, 0
      %p360 = por %p358, %p359
      %p361 = scmp.le.s32.totalorder 1, %s28
      %p362 = scmp.lt.s32.totalorder %s28, 3
      %p363 = pnand %p361, %p362
      %p364 = pneg %p363
      // Predicated region
      $region9: #{tpu_custom_call.1} parent=5 // pred_check
        _
      $region10: #{tpu_custom_call.1} parent=5 // pred_check_branch
        %366 = sbr.rel (%p363) target = $region12
      $region11: #{tpu_custom_call.1} parent=5 // pred_region
        %s367 = ssub.s32 %s28, 1
        // Predicated region
        $region13: #{tpu_custom_call.1} parent=11 // pred_check
          %p368 = pneg %p75
        $region14: #{tpu_custom_call.1} parent=11 // pred_check_branch
          %370 = sbr.rel (%p368) target = $region16
        $region15: #{tpu_custom_call.1} parent=11 // pred_region
          %s372 = ssub.s32 1024, 1024
          %373 = vsyncadd [#allocation3], %s372
          %s374 = sshll.u32 [#allocation2], 4
          %s375 = int_to_ptr.vmem [resolvable:$true] %s374
          %380 = dma.hbm_to_vmem [thread:$0]  %s1, 1024, %s375, [#allocation3], 64, 64, 4
        $region16: #{tpu_custom_call.1} parent=11 // pred_fallthru
          _
        // Predicated region
        $region17: #{tpu_custom_call.1} parent=11 // pred_check
          %p381 = pneg %p96
        $region18: #{tpu_custom_call.1} parent=11 // pred_check_branch
          %383 = sbr.rel (%p381) target = $region20
        $region19: #{tpu_custom_call.1} parent=11 // pred_region
          %s385 = ssub.s32 256, 256
          %386 = vsyncadd [#allocation6], %s385
          %s387 = sshll.u32 [#allocation5], 4
          %s388 = int_to_ptr.vmem [resolvable:$true] %s387
          %393 = dma.hbm_to_vmem [thread:$0]  %s2, 256, %s388, [#allocation6], 128, 128, 8
        $region20: #{tpu_custom_call.1} parent=11 // pred_fallthru
          _
        // Predicated region
        $region21: #{tpu_custom_call.1} parent=11 // pred_check
          %p394 = pneg %p117
        $region22: #{tpu_custom_call.1} parent=11 // pred_check_branch
          %396 = sbr.rel (%p394) target = $region24
        $region23: #{tpu_custom_call.1} parent=11 // pred_region
          _
        $region24: #{tpu_custom_call.1} parent=11 // pred_fallthru
          _
        // Predicated region
        $region25: #{tpu_custom_call.1} parent=11 // pred_check
          %p397 = pneg %p138
        $region26: #{tpu_custom_call.1} parent=11 // pred_check_branch
          %399 = sbr.rel (%p397) target = $region28
        $region27: #{tpu_custom_call.1} parent=11 // pred_region
          %s401 = ssub.s32 48, 48
          %402 = vsyncadd [#allocation6], %s401
          %s403 = sshll.u32 [#allocation7], 4
          %s404 = int_to_ptr.vmem [resolvable:$true] %s403
          %409 = dma.hbm_to_vmem [thread:$0]  %s4, 48, %s404, [#allocation6], 16, 16, 1
        $region28: #{tpu_custom_call.1} parent=11 // pred_fallthru
          _
        // Predicated region
        $region29: #{tpu_custom_call.1} parent=11 // pred_check
          %p410 = pneg %p159
        $region30: #{tpu_custom_call.1} parent=11 // pred_check_branch
          %412 = sbr.rel (%p410) target = $region32
        $region31: #{tpu_custom_call.1} parent=11 // pred_region
          %s414 = ssub.s32 9216, 9216
          %415 = vsyncadd [#allocation9], %s414
          %s416 = sshll.u32 [#allocation8], 4
          %s417 = int_to_ptr.vmem [resolvable:$true] %s416
          %422 = dma.hbm_to_vmem [thread:$0]  %s5, 9216, %s417, [#allocation9], 192, 192, 12
        $region32: #{tpu_custom_call.1} parent=11 // pred_fallthru
          _
        // Predicated region
        $region33: #{tpu_custom_call.1} parent=11 // pred_check
          %p423 = pneg %p180
        $region34: #{tpu_custom_call.1} parent=11 // pred_check_branch
          %425 = sbr.rel (%p423) target = $region36
        $region35: #{tpu_custom_call.1} parent=11 // pred_region
          %s427 = ssub.s32 48, 48
          %428 = vsyncadd [#allocation9], %s427
          %s429 = sshll.u32 [#allocation10], 4
          %s430 = int_to_ptr.vmem [resolvable:$true] %s429
          %435 = dma.hbm_to_vmem [thread:$0]  %s6, 48, %s430, [#allocation9], 16, 16, 1
        $region36: #{tpu_custom_call.1} parent=11 // pred_fallthru
          _
        // Predicated region
        $region37: #{tpu_custom_call.1} parent=11 // pred_check
          %p436 = pneg %p201
        $region38: #{tpu_custom_call.1} parent=11 // pred_check_branch
          %438 = sbr.rel (%p436) target = $region40
        $region39: #{tpu_custom_call.1} parent=11 // pred_region
          %s440 = ssub.s32 48, 48
          %441 = vsyncadd [#allocation12], %s440
          %s442 = sshll.u32 [#allocation11], 4
          %s443 = int_to_ptr.vmem [resolvable:$true] %s442
          %448 = dma.hbm_to_vmem [thread:$0]  %s7, 48, %s443, [#allocation12], 16, 16, 1
        $region40: #{tpu_custom_call.1} parent=11 // pred_fallthru
          _
        // Predicated region
        $region41: #{tpu_custom_call.1} parent=11 // pred_check
          %p449 = pneg %p222
        $region42: #{tpu_custom_call.1} parent=11 // pred_check_branch
          %451 = sbr.rel (%p449) target = $region44
        $region43: #{tpu_custom_call.1} parent=11 // pred_region
          %s453 = ssub.s32 12288, 12288
          %454 = vsyncadd [#allocation12], %s453
          %s455 = sshll.u32 [#allocation13], 4
          %s456 = int_to_ptr.vmem [resolvable:$true] %s455
          %461 = dma.hbm_to_vmem [thread:$0]  %s8, 12288, %s456, [#allocation12], 256, 256, 16
        $region44: #{tpu_custom_call.1} parent=11 // pred_fallthru
          _
        // Predicated region
        $region45: #{tpu_custom_call.1} parent=11 // pred_check
          %p462 = pneg %p243
        $region46: #{tpu_custom_call.1} parent=11 // pred_check_branch
          %464 = sbr.rel (%p462) target = $region48
        $region47: #{tpu_custom_call.1} parent=11 // pred_region
          _
        $region48: #{tpu_custom_call.1} parent=11 // pred_fallthru
          _
        // Predicated region
        $region49: #{tpu_custom_call.1} parent=11 // pred_check
          %p465 = pneg %p264
        $region50: #{tpu_custom_call.1} parent=11 // pred_check_branch
          %467 = sbr.rel (%p465) target = $region52
        $region51: #{tpu_custom_call.1} parent=11 // pred_region
          %s469 = ssub.s32 12288, 12288
          %470 = vsyncadd [#allocation15], %s469
          %s471 = sshll.u32 [#allocation14], 4
          %s472 = int_to_ptr.vmem [resolvable:$true] %s471
          %477 = dma.hbm_to_vmem [thread:$0]  %s10, 12288, %s472, [#allocation15], 64, 64, 4
        $region52: #{tpu_custom_call.1} parent=11 // pred_fallthru
          _
        // Predicated region
        $region53: #{tpu_custom_call.1} parent=11 // pred_check
          %p478 = pneg %p285
        $region54: #{tpu_custom_call.1} parent=11 // pred_check_branch
          %480 = sbr.rel (%p478) target = $region56
        $region55: #{tpu_custom_call.1} parent=11 // pred_region
          %s482 = ssub.s32 48, 48
          %483 = vsyncadd [#allocation15], %s482
          %s484 = sshll.u32 [#allocation16], 4
          %s485 = int_to_ptr.vmem [resolvable:$true] %s484
          %490 = dma.hbm_to_vmem [thread:$0]  %s11, 48, %s485, [#allocation15], 16, 16, 1
        $region56: #{tpu_custom_call.1} parent=11 // pred_fallthru
          _
        // Predicated region
        $region57: #{tpu_custom_call.1} parent=11 // pred_check
          %p491 = pneg %p306
        $region58: #{tpu_custom_call.1} parent=11 // pred_check_branch
          %493 = sbr.rel (%p491) target = $region60
        $region59: #{tpu_custom_call.1} parent=11 // pred_region
          _
        $region60: #{tpu_custom_call.1} parent=11 // pred_fallthru
          _
        // Predicated region
        $region61: #{tpu_custom_call.1} parent=11 // pred_check
          %p494 = pneg %p327
        $region62: #{tpu_custom_call.1} parent=11 // pred_check_branch
          %496 = sbr.rel (%p494) target = $region64
        $region63: #{tpu_custom_call.1} parent=11 // pred_region
          _
        $region64: #{tpu_custom_call.1} parent=11 // pred_fallthru
          _
      $region12: #{tpu_custom_call.1} parent=5 // pred_fallthru
        _
      %p497 = scmp.lt.s32.totalorder %s28, 2
      // Predicated region
      $region65: #{tpu_custom_call.1} parent=5 // pred_check
        %p498 = pneg %p497
      $region66: #{tpu_custom_call.1} parent=5 // pred_check_branch
        %500 = sbr.rel (%p498) target = $region68
      $region67: #{tpu_custom_call.1} parent=5 // pred_region
        // Predicated region
        $region69: #{tpu_custom_call.1} parent=67 // pred_check
          %p501 = pneg %p48
        $region70: #{tpu_custom_call.1} parent=67 // pred_check_branch
          %503 = sbr.rel (%p501) target = $region72
        $region71: #{tpu_custom_call.1} parent=67 // pred_region
          %p504 = scmp.lt.s32.totalorder %s28, 1
          %s505 = scalar_select %p504, %s28, 1
          %s506 = smul.addr %s505, 2
          %s507 = smul.addr %s506, 8
          %s508 = scalar_lea.vmem %s0, %s507
        $region72: #{tpu_custom_call.1} parent=67 // pred_fallthru
          _
      $region68: #{tpu_custom_call.1} parent=5 // pred_fallthru
        _
      %p509 = scmp.le.s32.totalorder 1, %s28
      %p510 = scmp.lt.s32.totalorder %s28, 3
      %p511 = pnand %p509, %p510
      %p512 = pneg %p511
      // Predicated region
      $region73: #{tpu_custom_call.1} parent=5 // pred_check
        _
      $region74: #{tpu_custom_call.1} parent=5 // pred_check_branch
        %514 = sbr.rel (%p511) target = $region76
      $region75: #{tpu_custom_call.1} parent=5 // pred_region
        %s515 = ssub.s32 %s28, 1
        // Predicated region
        $region77: #{tpu_custom_call.1} parent=75 // pred_check
          %p516 = pneg %p75
        $region78: #{tpu_custom_call.1} parent=75 // pred_check_branch
          %518 = sbr.rel (%p516) target = $region80
        $region79: #{tpu_custom_call.1} parent=75 // pred_region
          %519 = dma.done [#allocation3], 1024
        $region80: #{tpu_custom_call.1} parent=75 // pred_fallthru
          _
        // Predicated region
        $region81: #{tpu_custom_call.1} parent=75 // pred_check
          %p520 = pneg %p96
        $region82: #{tpu_custom_call.1} parent=75 // pred_check_branch
          %522 = sbr.rel (%p520) target = $region84
        $region83: #{tpu_custom_call.1} parent=75 // pred_region
          %523 = dma.done [#allocation6], 256
        $region84: #{tpu_custom_call.1} parent=75 // pred_fallthru
          _
        // Predicated region
        $region85: #{tpu_custom_call.1} parent=75 // pred_check
          %p524 = pneg %p138
        $region86: #{tpu_custom_call.1} parent=75 // pred_check_branch
          %526 = sbr.rel (%p524) target = $region88
        $region87: #{tpu_custom_call.1} parent=75 // pred_region
          %527 = dma.done [#allocation6], 48
        $region88: #{tpu_custom_call.1} parent=75 // pred_fallthru
          _
        // Predicated region
        $region89: #{tpu_custom_call.1} parent=75 // pred_check
          %p528 = pneg %p159
        $region90: #{tpu_custom_call.1} parent=75 // pred_check_branch
          %530 = sbr.rel (%p528) target = $region92
        $region91: #{tpu_custom_call.1} parent=75 // pred_region
          %531 = dma.done [#allocation9], 9216
        $region92: #{tpu_custom_call.1} parent=75 // pred_fallthru
          _
        // Predicated region
        $region93: #{tpu_custom_call.1} parent=75 // pred_check
          %p532 = pneg %p180
        $region94: #{tpu_custom_call.1} parent=75 // pred_check_branch
          %534 = sbr.rel (%p532) target = $region96
        $region95: #{tpu_custom_call.1} parent=75 // pred_region
          %535 = dma.done [#allocation9], 48
        $region96: #{tpu_custom_call.1} parent=75 // pred_fallthru
          _
        // Predicated region
        $region97: #{tpu_custom_call.1} parent=75 // pred_check
          %p536 = pneg %p201
        $region98: #{tpu_custom_call.1} parent=75 // pred_check_branch
          %538 = sbr.rel (%p536) target = $region100
        $region99: #{tpu_custom_call.1} parent=75 // pred_region
          %539 = dma.done [#allocation12], 48
        $region100: #{tpu_custom_call.1} parent=75 // pred_fallthru
          _
        // Predicated region
        $region101: #{tpu_custom_call.1} parent=75 // pred_check
          %p540 = pneg %p222
        $region102: #{tpu_custom_call.1} parent=75 // pred_check_branch
          %542 = sbr.rel (%p540) target = $region104
        $region103: #{tpu_custom_call.1} parent=75 // pred_region
          %543 = dma.done [#allocation12], 12288
        $region104: #{tpu_custom_call.1} parent=75 // pred_fallthru
          _
        // Predicated region
        $region105: #{tpu_custom_call.1} parent=75 // pred_check
          %p544 = pneg %p264
        $region106: #{tpu_custom_call.1} parent=75 // pred_check_branch
          %546 = sbr.rel (%p544) target = $region108
        $region107: #{tpu_custom_call.1} parent=75 // pred_region
          %547 = dma.done [#allocation15], 12288
        $region108: #{tpu_custom_call.1} parent=75 // pred_fallthru
          _
        // Predicated region
        $region109: #{tpu_custom_call.1} parent=75 // pred_check
          %p548 = pneg %p285
        $region110: #{tpu_custom_call.1} parent=75 // pred_check_branch
          %550 = sbr.rel (%p548) target = $region112
        $region111: #{tpu_custom_call.1} parent=75 // pred_region
          %551 = dma.done [#allocation15], 48
        $region112: #{tpu_custom_call.1} parent=75 // pred_fallthru
          _
        %p552 = scmp.lt.s32.totalorder %s33, 1
        %s553 = scalar_select %p552, %s33, 1
        %s554 = smul.addr %s553, 2
        %s555 = smul.addr %s554, 8
        %s556 = scalar_lea.vmem %s0, %s555
        %p557 = pneg %p54
        %p558 = pneg %p51
        %p559 = pneg %p75
        %p560 = pneg %p72
        %p561 = pneg %p96
        %p562 = pneg %p93
        %p563 = pneg %p117
        %p564 = pneg %p114
        %p565 = pneg %p138
        %p566 = pneg %p135
        %p567 = pneg %p159
        %p568 = pneg %p156
        %p569 = pneg %p180
        %p570 = pneg %p177
        %p571 = pneg %p201
        %p572 = pneg %p198
        %p573 = pneg %p222
        %p574 = pneg %p219
        %p575 = pneg %p243
        %p576 = pneg %p240
        %p577 = pneg %p264
        %p578 = pneg %p261
        %p579 = pneg %p285
        %p580 = pneg %p282
        %p581 = pneg %p306
        %p582 = pneg %p303
        %p583 = pneg %p327
        %p584 = pneg %p324
        %p585 = pneg %p353
        %p586 = pneg %p350
        %s587 = sand.u32 %s340, 1
        %s588 = scalar_lea.sflag [#allocation4], %s587
        %s589 = sand.u32 %s340, 1
        %s590 = smul.addr %s589, 16
        %s591 = scalar_lea.vmem [#allocation17], %s590
        %p592 = scmp.lt.s32.totalorder %s33, 1
        %s593 = scalar_select %p592, %s33, 1
        %s594 = smul.addr %s593, 2
        %s595 = smul.addr %s594, 8
        %s596 = scalar_lea.vmem %s0, %s595
        %v598 = vld [vmem:[%s596] sm:$0xff]
        %v599 = vld [vmem:[%s596 + $0x8] sm:$0xff]
        %v600 = vlaneseq
        %v601 = vand.u32 %v600, 127
        %602 = vset.pattern.permute.xlu0 0
        %603 = vperm.xlu0 %602, %v598
        %v604 = vpop.permute.xlu0 %603
        %605 = vset.pattern.permute.xlu0 0
        %606 = vperm.xlu0 %605, %v599
        %v607 = vpop.permute.xlu0 %606
        %vm608 = vcmp.eq.s32.totalorder %v601, %v604
        %vm609 = vcmp.eq.s32.totalorder %v601, %v607
        %v610 = vsel %vm608, 1, 0
        %v611 = vsel %vm609, 1, 0
        %v612 = vcvt.s32.f32 %v610
        %v613 = vcvt.s32.f32 %v611
        %v614 = vpack.c.bf16 %v613, %v612
        %v615 = vld [vmem:[#allocation2] sm:$0xf]
        %v616 = vld [vmem:[#allocation2 + $0x4] sm:$0xf]
        %v617 = vld [vmem:[#allocation2 + $0x8] sm:$0xf]
        %v618 = vld [vmem:[#allocation2 + $0xc] sm:$0xf]
        %v619 = vld [vmem:[#allocation2 + $0x10] sm:$0xf]
        %v620 = vld [vmem:[#allocation2 + $0x14] sm:$0xf]
        %v621 = vld [vmem:[#allocation2 + $0x18] sm:$0xf]
        %v622 = vld [vmem:[#allocation2 + $0x1c] sm:$0xf]
        %v623 = vld [vmem:[#allocation2 + $0x20] sm:$0xf]
        %v624 = vld [vmem:[#allocation2 + $0x24] sm:$0xf]
        %v625 = vld [vmem:[#allocation2 + $0x28] sm:$0xf]
        %v626 = vld [vmem:[#allocation2 + $0x2c] sm:$0xf]
        %v627 = vld [vmem:[#allocation2 + $0x30] sm:$0xf]
        %v628 = vld [vmem:[#allocation2 + $0x34] sm:$0xf]
        %v629 = vld [vmem:[#allocation2 + $0x38] sm:$0xf]
        %v630 = vld [vmem:[#allocation2 + $0x3c] sm:$0xf]
        %v631 = vld [vmem:[#allocation5] sm:$0xff]
        %v632 = vld [vmem:[#allocation5 + $0x8] sm:$0xff]
        %v649 = vunpack.c.l.b16 %v615
        %v650 = vunpack.c.l.b16 %v616
        %v651 = vunpack.c.l.b16 %v617
        %v652 = vunpack.c.l.b16 %v618
        %v653 = vunpack.c.l.b16 %v619
        %v654 = vunpack.c.l.b16 %v620
        %v655 = vunpack.c.l.b16 %v621
        %v656 = vunpack.c.l.b16 %v622
        %v657 = vunpack.c.l.b16 %v623
        %v658 = vunpack.c.l.b16 %v624
        %v659 = vunpack.c.l.b16 %v625
        %v660 = vunpack.c.l.b16 %v626
        %v661 = vunpack.c.l.b16 %v627
        %v662 = vunpack.c.l.b16 %v628
        %v663 = vunpack.c.l.b16 %v629
        %v664 = vunpack.c.l.b16 %v630
        %v665 = vpack.c.b16 %v650, %v649
        %v666 = vpack.c.b16 %v652, %v651
        %v667 = vpack.c.b16 %v654, %v653
        %v668 = vpack.c.b16 %v656, %v655
        %v669 = vpack.c.b16 %v658, %v657
        %v670 = vpack.c.b16 %v660, %v659
        %v671 = vpack.c.b16 %v662, %v661
        %v672 = vpack.c.b16 %v664, %v663
        %681 = vmatprep.subr.bf16.mxu0 0
        %682 = vmatpush1.bf16.msra.mxu0 %v665
        %683 = vmatprep.subr.bf16.mxu0 0
        %684 = vmatpush1.bf16.msra.mxu0 %v666
        %685 = vmatprep.subr.bf16.mxu0 0
        %686 = vmatpush1.bf16.msra.mxu0 %v667
        %687 = vmatprep.subr.bf16.mxu0 0
        %688 = vmatpush1.bf16.msra.mxu0 %v668
        %689 = vmatprep.subr.bf16.mxu0 0
        %690 = vmatpush1.bf16.msra.mxu0 %v669
        %691 = vmatprep.subr.bf16.mxu0 0
        %692 = vmatpush1.bf16.msra.mxu0 %v670
        %693 = vmatprep.subr.bf16.mxu0 0
        %694 = vmatpush1.bf16.msra.mxu0 %v671
        %695 = vmatprep.subr.bf16.mxu0 0
        %696 = vmatpush1.bf16.msra.mxu0 %v672
        %697 = vmatprep.subr.bf16.mxu0 0
        %698 = vmatpush1.bf16.msra.mxu0 0
        %699 = vmatprep.subr.bf16.mxu0 0
        %700 = vmatpush1.bf16.msra.mxu0 0
        %701 = vmatprep.subr.bf16.mxu0 0
        %702 = vmatpush1.bf16.msra.mxu0 0
        %703 = vmatprep.subr.bf16.mxu0 0
        %704 = vmatpush1.bf16.msra.mxu0 0
        %705 = vmatprep.subr.bf16.mxu0 0
        %706 = vmatpush1.bf16.msra.mxu0 0
        %707 = vmatprep.subr.bf16.mxu0 0
        %708 = vmatpush1.bf16.msra.mxu0 0
        %709 = vmatprep.subr.bf16.mxu0 0
        %710 = vmatpush1.bf16.msra.mxu0 0
        %711 = vmatprep.subr.bf16.mxu0 0
        %712 = vmatpush1.bf16.msra.mxu0 0
        %713 = vmatprep.mubr.bf16.mxu0 0
        %714 = vmatmul.mubr.bf16.gmra.mrb[0].mxu0 %v614
        %v715 = vpop.f32.mrb[0].mxu0
        %v716 = vadd.f32 %v631, %v715
        %v717 = vpop.f32.mrb[0].mxu0
        %v718 = vpop.f32.mrb[0].mxu0
        %v719 = vadd.f32 %v632, %v718
        %v720 = vpop.f32.mrb[0].mxu0
        %721 = vdwg.mxu0
        %v722 = vlaneseq
        %v723 = vshrl.u32 %v722, 7
        %v724 = vadd.s32 %v723, 8
        %vm725 = vcmp.ge.s32.totalorder %v723, %v601
        %vm726 = vcmp.ge.s32.totalorder %v724, %v601
        %v727 = vld [vmem:[%s3] sm:$0x1]
        %v728 = vld [vmem:[#allocation7] sm:$0x1]
        %v729 = vadd.f32 %v716, %v719
        %v730 = vrot.slane %v729, 4
        %v731 = vadd.f32 %v729, %v730
        %v732 = vrot.slane %v731, 2
        %v733 = vadd.f32 %v731, %v732
        %v734 = vrot.slane %v733, 1
        %v735 = vadd.f32 %v733, %v734
        %v736 = vrcp.pop 16.0
        %v737 = vmul.f32 %v735, %v736
        %v738 = vsub.f32 %v716, %v737
        %v739 = vsub.f32 %v719, %v737
        %v740 = vmul.f32 %v738, %v738
        %v741 = vmul.f32 %v739, %v739
        %v742 = vadd.f32 %v740, %v741
        %v743 = vrot.slane %v742, 4
        %v744 = vadd.f32 %v742, %v743
        %v745 = vrot.slane %v744, 2
        %v746 = vadd.f32 %v744, %v745
        %v747 = vrot.slane %v746, 1
        %v748 = vadd.f32 %v746, %v747
        %v749 = vmul.f32 %v748, 0.06666667
        %v751 = vlaneseq
        %v752 = vshrl.u32 %v751, 7
        %v753 = vsub.s32 0, %v752
        %v754 = vrot.slane %v727, %v753
        %v756 = vmul.f32 %v754, %v738
        %v757 = vmul.f32 %v754, %v739
        %v758 = vadd.f32 %v749, 1e-05
        %v759 = vrsqrt.pop %v758
        %v760 = vmul.f32 %v756, %v759
        %v761 = vmul.f32 %v757, %v759
        %v763 = vlaneseq
        %v764 = vshrl.u32 %v763, 7
        %v765 = vsub.s32 0, %v764
        %v766 = vrot.slane %v728, %v765
        %v768 = vadd.f32 %v760, %v766
        %v769 = vadd.f32 %v761, %v766
        %v770 = vpack.c.bf16 %v769, %v768
        %v771 = vld [vmem:[#allocation8] sm:$0xff]
        %v772 = vld [vmem:[#allocation8 + $0x8] sm:$0xf]
        %v773 = vld [vmem:[#allocation8 + $0xc] sm:$0xff]
        %v774 = vld [vmem:[#allocation8 + $0x14] sm:$0xf]
        %v775 = vld [vmem:[#allocation8 + $0x18] sm:$0xff]
        %v776 = vld [vmem:[#allocation8 + $0x20] sm:$0xf]
        %v777 = vld [vmem:[#allocation8 + $0x24] sm:$0xff]
        %v778 = vld [vmem:[#allocation8 + $0x2c] sm:$0xf]
        %v779 = vld [vmem:[#allocation8 + $0x30] sm:$0xff]
        %v780 = vld [vmem:[#allocation8 + $0x38] sm:$0xf]
        %v781 = vld [vmem:[#allocation8 + $0x3c] sm:$0xff]
        %v782 = vld [vmem:[#allocation8 + $0x44] sm:$0xf]
        %v783 = vld [vmem:[#allocation8 + $0x48] sm:$0xff]
        %v784 = vld [vmem:[#allocation8 + $0x50] sm:$0xf]
        %v785 = vld [vmem:[#allocation8 + $0x54] sm:$0xff]
        %v786 = vld [vmem:[#allocation8 + $0x5c] sm:$0xf]
        %v787 = vld [vmem:[#allocation8 + $0x60] sm:$0xff]
        %v788 = vld [vmem:[#allocation8 + $0x68] sm:$0xf]
        %v789 = vld [vmem:[#allocation8 + $0x6c] sm:$0xff]
        %v790 = vld [vmem:[#allocation8 + $0x74] sm:$0xf]
        %v791 = vld [vmem:[#allocation8 + $0x78] sm:$0xff]
        %v792 = vld [vmem:[#allocation8 + $0x80] sm:$0xf]
        %v793 = vld [vmem:[#allocation8 + $0x84] sm:$0xff]
        %v794 = vld [vmem:[#allocation8 + $0x8c] sm:$0xf]
        %v795 = vld [vmem:[#allocation8 + $0x90] sm:$0xff]
        %v796 = vld [vmem:[#allocation8 + $0x98] sm:$0xf]
        %v797 = vld [vmem:[#allocation8 + $0x9c] sm:$0xff]
        %v798 = vld [vmem:[#allocation8 + $0xa4] sm:$0xf]
        %v799 = vld [vmem:[#allocation8 + $0xa8] sm:$0xff]
        %v800 = vld [vmem:[#allocation8 + $0xb0] sm:$0xf]
        %v801 = vld [vmem:[#allocation8 + $0xb4] sm:$0xff]
        %v802 = vld [vmem:[#allocation8 + $0xbc] sm:$0xf]
        %v835 = vunpack.c.l.b16 %v771
        %v836 = vunpack.c.h.b16 %v771
        %v837 = vunpack.c.l.b16 %v772
        %v838 = vunpack.c.l.b16 %v773
        %v839 = vunpack.c.h.b16 %v773
        %v840 = vunpack.c.l.b16 %v774
        %v841 = vunpack.c.l.b16 %v775
        %v842 = vunpack.c.h.b16 %v775
        %v843 = vunpack.c.l.b16 %v776
        %v844 = vunpack.c.l.b16 %v777
        %v845 = vunpack.c.h.b16 %v777
        %v846 = vunpack.c.l.b16 %v778
        %v847 = vunpack.c.l.b16 %v779
        %v848 = vunpack.c.h.b16 %v779
        %v849 = vunpack.c.l.b16 %v780
        %v850 = vunpack.c.l.b16 %v781
        %v851 = vunpack.c.h.b16 %v781
        %v852 = vunpack.c.l.b16 %v782
        %v853 = vunpack.c.l.b16 %v783
        %v854 = vunpack.c.h.b16 %v783
        %v855 = vunpack.c.l.b16 %v784
        %v856 = vunpack.c.l.b16 %v785
        %v857 = vunpack.c.h.b16 %v785
        %v858 = vunpack.c.l.b16 %v786
        %v859 = vunpack.c.l.b16 %v787
        %v860 = vunpack.c.h.b16 %v787
        %v861 = vunpack.c.l.b16 %v788
        %v862 = vunpack.c.l.b16 %v789
        %v863 = vunpack.c.h.b16 %v789
        %v864 = vunpack.c.l.b16 %v790
        %v865 = vunpack.c.l.b16 %v791
        %v866 = vunpack.c.h.b16 %v791
        %v867 = vunpack.c.l.b16 %v792
        %v868 = vunpack.c.l.b16 %v793
        %v869 = vunpack.c.h.b16 %v793
        %v870 = vunpack.c.l.b16 %v794
        %v871 = vunpack.c.l.b16 %v795
        %v872 = vunpack.c.h.b16 %v795
        %v873 = vunpack.c.l.b16 %v796
        %v874 = vunpack.c.l.b16 %v797
        %v875 = vunpack.c.h.b16 %v797
        %v876 = vunpack.c.l.b16 %v798
        %v877 = vunpack.c.l.b16 %v799
        %v878 = vunpack.c.h.b16 %v799
        %v879 = vunpack.c.l.b16 %v800
        %v880 = vunpack.c.l.b16 %v801
        %v881 = vunpack.c.h.b16 %v801
        %v882 = vunpack.c.l.b16 %v802
        %v883 = vpack.c.b16 %v838, %v835
        %v884 = vpack.c.b16 %v839, %v836
        %v885 = vpack.c.b16 %v840, %v837
        %v886 = vpack.c.b16 %v844, %v841
        %v887 = vpack.c.b16 %v845, %v842
        %v888 = vpack.c.b16 %v846, %v843
        %v889 = vpack.c.b16 %v850, %v847
        %v890 = vpack.c.b16 %v851, %v848
        %v891 = vpack.c.b16 %v852, %v849
        %v892 = vpack.c.b16 %v856, %v853
        %v893 = vpack.c.b16 %v857, %v854
        %v894 = vpack.c.b16 %v858, %v855
        %v895 = vpack.c.b16 %v862, %v859
        %v896 = vpack.c.b16 %v863, %v860
        %v897 = vpack.c.b16 %v864, %v861
        %v898 = vpack.c.b16 %v868, %v865
        %v899 = vpack.c.b16 %v869, %v866
        %v900 = vpack.c.b16 %v870, %v867
        %v901 = vpack.c.b16 %v874, %v871
        %v902 = vpack.c.b16 %v875, %v872
        %v903 = vpack.c.b16 %v876, %v873
        %v904 = vpack.c.b16 %v880, %v877
        %v905 = vpack.c.b16 %v881, %v878
        %v906 = vpack.c.b16 %v882, %v879
        %931 = vmatprep.subr.bf16.mxu0 %v884
        %932 = vmatpush1.bf16.msra.mxu0 %v883
        %933 = vmatprep.subr.bf16.mxu0 %v887
        %934 = vmatpush1.bf16.msra.mxu0 %v886
        %935 = vmatprep.subr.bf16.mxu0 %v890
        %936 = vmatpush1.bf16.msra.mxu0 %v889
        %937 = vmatprep.subr.bf16.mxu0 %v893
        %938 = vmatpush1.bf16.msra.mxu0 %v892
        %939 = vmatprep.subr.bf16.mxu0 %v896
        %940 = vmatpush1.bf16.msra.mxu0 %v895
        %941 = vmatprep.subr.bf16.mxu0 %v899
        %942 = vmatpush1.bf16.msra.mxu0 %v898
        %943 = vmatprep.subr.bf16.mxu0 %v902
        %944 = vmatpush1.bf16.msra.mxu0 %v901
        %945 = vmatprep.subr.bf16.mxu0 %v905
        %946 = vmatpush1.bf16.msra.mxu0 %v904
        %947 = vmatprep.subr.bf16.mxu0 0
        %948 = vmatpush1.bf16.msra.mxu0 0
        %949 = vmatprep.subr.bf16.mxu0 0
        %950 = vmatpush1.bf16.msra.mxu0 0
        %951 = vmatprep.subr.bf16.mxu0 0
        %952 = vmatpush1.bf16.msra.mxu0 0
        %953 = vmatprep.subr.bf16.mxu0 0
        %954 = vmatpush1.bf16.msra.mxu0 0
        %955 = vmatprep.subr.bf16.mxu0 0
        %956 = vmatpush1.bf16.msra.mxu0 0
        %957 = vmatprep.subr.bf16.mxu0 0
        %958 = vmatpush1.bf16.msra.mxu0 0
        %959 = vmatprep.subr.bf16.mxu0 0
        %960 = vmatpush1.bf16.msra.mxu0 0
        %961 = vmatprep.subr.bf16.mxu0 0
        %962 = vmatpush1.bf16.msra.mxu0 0
        %963 = vmatprep.mubr.bf16.mxu0 0
        %964 = vmatmul.mubr.bf16.gmra.mrb[0].mxu0 %v770
        %v965 = vpop.f32.mrb[0].mxu0
        %v966 = vadd.f32 0.0, %v965
        %v967 = vpop.f32.mrb[0].mxu0
        %v968 = vadd.f32 0.0, %v967
        %v969 = vpop.f32.mrb[0].mxu0
        %v970 = vadd.f32 0.0, %v969
        %v971 = vpop.f32.mrb[0].mxu0
        %v972 = vadd.f32 0.0, %v971
        %973 = vdwg.mxu0
        %974 = vmatprep.subr.bf16.mxu0 0
        %975 = vmatpush1.bf16.msra.mxu0 %v885
        %976 = vmatprep.subr.bf16.mxu0 0
        %977 = vmatpush1.bf16.msra.mxu0 %v888
        %978 = vmatprep.subr.bf16.mxu0 0
        %979 = vmatpush1.bf16.msra.mxu0 %v891
        %980 = vmatprep.subr.bf16.mxu0 0
        %981 = vmatpush1.bf16.msra.mxu0 %v894
        %982 = vmatprep.subr.bf16.mxu0 0
        %983 = vmatpush1.bf16.msra.mxu0 %v897
        %984 = vmatprep.subr.bf16.mxu0 0
        %985 = vmatpush1.bf16.msra.mxu0 %v900
        %986 = vmatprep.subr.bf16.mxu0 0
        %987 = vmatpush1.bf16.msra.mxu0 %v903
        %988 = vmatprep.subr.bf16.mxu0 0
        %989 = vmatpush1.bf16.msra.mxu0 %v906
        %990 = vmatprep.subr.bf16.mxu0 0
        %991 = vmatpush1.bf16.msra.mxu0 0
        %992 = vmatprep.subr.bf16.mxu0 0
        %993 = vmatpush1.bf16.msra.mxu0 0
        %994 = vmatprep.subr.bf16.mxu0 0
        %995 = vmatpush1.bf16.msra.mxu0 0
        %996 = vmatprep.subr.bf16.mxu0 0
        %997 = vmatpush1.bf16.msra.mxu0 0
        %998 = vmatprep.subr.bf16.mxu0 0
        %999 = vmatpush1.bf16.msra.mxu0 0
        %1000 = vmatprep.subr.bf16.mxu0 0
        %1001 = vmatpush1.bf16.msra.mxu0 0
        %1002 = vmatprep.subr.bf16.mxu0 0
        %1003 = vmatpush1.bf16.msra.mxu0 0
        %1004 = vmatprep.subr.bf16.mxu0 0
        %1005 = vmatpush1.bf16.msra.mxu0 0
        %1006 = vmatprep.mubr.bf16.mxu0 0
        %1007 = vmatmul.mubr.bf16.gmra.mrb[0].mxu0 %v770
        %v1008 = vpop.f32.mrb[0].mxu0
        %v1009 = vadd.f32 0.0, %v1008
        %v1010 = vpop.f32.mrb[0].mxu0
        %v1011 = vpop.f32.mrb[0].mxu0
        %v1012 = vadd.f32 0.0, %v1011
        %v1013 = vpop.f32.mrb[0].mxu0
        %1014 = vdwg.mxu0
        %1017 = vrot.lane.b32.xlu0 %v966, 96
        %v1018 = vpop.permute.xlu0 %1017
        %1019 = vrot.lane.b32.xlu0 %v970, 96
        %v1020 = vpop.permute.xlu0 %1019
        %1023 = vrot.lane.b32.xlu0 %v966, 64
        %v1024 = vpop.permute.xlu0 %1023
        %1025 = vrot.lane.b32.xlu0 %v970, 64
        %v1026 = vpop.permute.xlu0 %1025
        %1029 = vrot.lane.b32.xlu0 %v966, 32
        %v1030 = vpop.permute.xlu0 %1029
        %1031 = vrot.lane.b32.xlu0 %v970, 32
        %v1032 = vpop.permute.xlu0 %1031
        %v1035 = vcombine.low %v966, %v1024
        %v1036 = vcombine.high %v966, %v1024
        %v1038 = vunpack.c.l.s4 1983009808
        %v1039 = vunpack.c.0.s8 %v1038
        %v1040 = vlaneseq
        %v1041 = vshrl.u32 %v1040, 7
        %v1042 = vsub.s32 %v1039, %v1041
        %v1043 = vrot.slane %v1035, %v1042
        %v1045 = vunpack.c.l.s4 1983009808
        %v1046 = vunpack.c.0.s8 %v1045
        %v1047 = vlaneseq
        %v1048 = vshrl.u32 %v1047, 7
        %v1049 = vsub.s32 %v1046, %v1048
        %v1050 = vrot.slane %v1036, %v1049
        %v1051 = vcombine.low %v1018, %v1030
        %v1052 = vcombine.high %v1018, %v1030
        %v1054 = vunpack.c.l.s4 1983009808
        %v1055 = vunpack.c.0.s8 %v1054
        %v1056 = vlaneseq
        %v1057 = vshrl.u32 %v1056, 7
        %v1058 = vsub.s32 %v1055, %v1057
        %v1059 = vrot.slane %v1051, %v1058
        %v1061 = vunpack.c.l.s4 1983009808
        %v1062 = vunpack.c.0.s8 %v1061
        %v1063 = vlaneseq
        %v1064 = vshrl.u32 %v1063, 7
        %v1065 = vsub.s32 %v1062, %v1064
        %v1066 = vrot.slane %v1052, %v1065
        %v1067 = vcombine.low %v1043, %v1059
        %v1068 = vcombine.high %v1043, %v1059
        %v1070 = vunpack.c.l.s4 1934713408
        %v1071 = vunpack.c.0.s8 %v1070
        %v1072 = vlaneseq
        %v1073 = vshrl.u32 %v1072, 7
        %v1074 = vsub.s32 %v1071, %v1073
        %v1075 = vrot.slane %v1067, %v1074
        %v1077 = vunpack.c.l.s4 1934713408
        %v1078 = vunpack.c.0.s8 %v1077
        %v1079 = vlaneseq
        %v1080 = vshrl.u32 %v1079, 7
        %v1081 = vsub.s32 %v1078, %v1080
        %v1082 = vrot.slane %v1068, %v1081
        %v1083 = vcombine.low %v1050, %v1066
        %v1084 = vcombine.high %v1050, %v1066
        %v1086 = vunpack.c.l.s4 1934713408
        %v1087 = vunpack.c.0.s8 %v1086
        %v1088 = vlaneseq
        %v1089 = vshrl.u32 %v1088, 7
        %v1090 = vsub.s32 %v1087, %v1089
        %v1091 = vrot.slane %v1083, %v1090
        %v1093 = vunpack.c.l.s4 1934713408
        %v1094 = vunpack.c.0.s8 %v1093
        %v1095 = vlaneseq
        %v1096 = vshrl.u32 %v1095, 7
        %v1097 = vsub.s32 %v1094, %v1096
        %v1098 = vrot.slane %v1084, %v1097
        %v1099 = vcombine.high %v1075, 0.0
        %v1100 = vcombine.high %v1082, 0.0
        %v1101 = vcombine.high %v1091, 0.0
        %v1102 = vcombine.high %v1098, 0.0
        %v1103 = vcombine.low %v970, %v1026
        %v1104 = vcombine.high %v970, %v1026
        %v1106 = vunpack.c.l.s4 1983009808
        %v1107 = vunpack.c.0.s8 %v1106
        %v1108 = vlaneseq
        %v1109 = vshrl.u32 %v1108, 7
        %v1110 = vsub.s32 %v1107, %v1109
        %v1111 = vrot.slane %v1103, %v1110
        %v1113 = vunpack.c.l.s4 1983009808
        %v1114 = vunpack.c.0.s8 %v1113
        %v1115 = vlaneseq
        %v1116 = vshrl.u32 %v1115, 7
        %v1117 = vsub.s32 %v1114, %v1116
        %v1118 = vrot.slane %v1104, %v1117
        %v1119 = vcombine.low %v1020, %v1032
        %v1120 = vcombine.high %v1020, %v1032
        %v1122 = vunpack.c.l.s4 1983009808
        %v1123 = vunpack.c.0.s8 %v1122
        %v1124 = vlaneseq
        %v1125 = vshrl.u32 %v1124, 7
        %v1126 = vsub.s32 %v1123, %v1125
        %v1127 = vrot.slane %v1119, %v1126
        %v1129 = vunpack.c.l.s4 1983009808
        %v1130 = vunpack.c.0.s8 %v1129
        %v1131 = vlaneseq
        %v1132 = vshrl.u32 %v1131, 7
        %v1133 = vsub.s32 %v1130, %v1132
        %v1134 = vrot.slane %v1120, %v1133
        %v1135 = vcombine.low %v1111, %v1127
        %v1136 = vcombine.high %v1111, %v1127
        %v1138 = vunpack.c.l.s4 1934713408
        %v1139 = vunpack.c.0.s8 %v1138
        %v1140 = vlaneseq
        %v1141 = vshrl.u32 %v1140, 7
        %v1142 = vsub.s32 %v1139, %v1141
        %v1143 = vrot.slane %v1135, %v1142
        %v1145 = vunpack.c.l.s4 1934713408
        %v1146 = vunpack.c.0.s8 %v1145
        %v1147 = vlaneseq
        %v1148 = vshrl.u32 %v1147, 7
        %v1149 = vsub.s32 %v1146, %v1148
        %v1150 = vrot.slane %v1136, %v1149
        %v1151 = vcombine.low %v1118, %v1134
        %v1152 = vcombine.high %v1118, %v1134
        %v1154 = vunpack.c.l.s4 1934713408
        %v1155 = vunpack.c.0.s8 %v1154
        %v1156 = vlaneseq
        %v1157 = vshrl.u32 %v1156, 7
        %v1158 = vsub.s32 %v1155, %v1157
        %v1159 = vrot.slane %v1151, %v1158
        %v1161 = vunpack.c.l.s4 1934713408
        %v1162 = vunpack.c.0.s8 %v1161
        %v1163 = vlaneseq
        %v1164 = vshrl.u32 %v1163, 7
        %v1165 = vsub.s32 %v1162, %v1164
        %v1166 = vrot.slane %v1152, %v1165
        %v1167 = vcombine.high %v1143, 0.0
        %v1168 = vcombine.high %v1150, 0.0
        %v1169 = vcombine.high %v1159, 0.0
        %v1170 = vcombine.high %v1166, 0.0
        %v1171 = vcombine.low %v1075, %v1082
        %v1173 = vunpack.c.l.s4 1983009808
        %v1174 = vunpack.c.0.s8 %v1173
        %v1175 = vlaneseq
        %v1176 = vshrl.u32 %v1175, 7
        %v1177 = vsub.s32 %v1174, %v1176
        %v1178 = vrot.slane %v1171, %v1177
        %v1179 = vcombine.low %v1099, %v1100
        %v1181 = vunpack.c.l.s4 1983009808
        %v1182 = vunpack.c.0.s8 %v1181
        %v1183 = vlaneseq
        %v1184 = vshrl.u32 %v1183, 7
        %v1185 = vsub.s32 %v1182, %v1184
        %v1186 = vrot.slane %v1179, %v1185
        %v1187 = vcombine.low %v1091, %v1098
        %v1189 = vunpack.c.l.s4 1983009808
        %v1190 = vunpack.c.0.s8 %v1189
        %v1191 = vlaneseq
        %v1192 = vshrl.u32 %v1191, 7
        %v1193 = vsub.s32 %v1190, %v1192
        %v1194 = vrot.slane %v1187, %v1193
        %v1195 = vcombine.low %v1101, %v1102
        %v1197 = vunpack.c.l.s4 1983009808
        %v1198 = vunpack.c.0.s8 %v1197
        %v1199 = vlaneseq
        %v1200 = vshrl.u32 %v1199, 7
        %v1201 = vsub.s32 %v1198, %v1200
        %v1202 = vrot.slane %v1195, %v1201
        %v1203 = vcombine.low %v1178, %v1186
        %v1204 = vcombine.high %v1178, %v1186
        %v1206 = vunpack.c.l.s4 1934713408
        %v1207 = vunpack.c.0.s8 %v1206
        %v1208 = vlaneseq
        %v1209 = vshrl.u32 %v1208, 7
        %v1210 = vsub.s32 %v1207, %v1209
        %v1211 = vrot.slane %v1203, %v1210
        %v1213 = vunpack.c.l.s4 1934713408
        %v1214 = vunpack.c.0.s8 %v1213
        %v1215 = vlaneseq
        %v1216 = vshrl.u32 %v1215, 7
        %v1217 = vsub.s32 %v1214, %v1216
        %v1218 = vrot.slane %v1204, %v1217
        %v1219 = vcombine.low %v1194, %v1202
        %v1220 = vcombine.high %v1194, %v1202
        %v1222 = vunpack.c.l.s4 1934713408
        %v1223 = vunpack.c.0.s8 %v1222
        %v1224 = vlaneseq
        %v1225 = vshrl.u32 %v1224, 7
        %v1226 = vsub.s32 %v1223, %v1225
        %v1227 = vrot.slane %v1219, %v1226
        %v1229 = vunpack.c.l.s4 1934713408
        %v1230 = vunpack.c.0.s8 %v1229
        %v1231 = vlaneseq
        %v1232 = vshrl.u32 %v1231, 7
        %v1233 = vsub.s32 %v1230, %v1232
        %v1234 = vrot.slane %v1220, %v1233
        %v1235 = vcombine.low %v1211, %v1227
        %v1236 = vcombine.high %v1211, %v1227
        %v1237 = vcombine.low %v1218, %v1234
        %v1238 = vcombine.high %v1218, %v1234
        %v1239 = vcombine.low %v1143, %v1150
        %v1241 = vunpack.c.l.s4 1983009808
        %v1242 = vunpack.c.0.s8 %v1241
        %v1243 = vlaneseq
        %v1244 = vshrl.u32 %v1243, 7
        %v1245 = vsub.s32 %v1242, %v1244
        %v1246 = vrot.slane %v1239, %v1245
        %v1247 = vcombine.low %v1167, %v1168
        %v1249 = vunpack.c.l.s4 1983009808
        %v1250 = vunpack.c.0.s8 %v1249
        %v1251 = vlaneseq
        %v1252 = vshrl.u32 %v1251, 7
        %v1253 = vsub.s32 %v1250, %v1252
        %v1254 = vrot.slane %v1247, %v1253
        %v1255 = vcombine.low %v1159, %v1166
        %v1257 = vunpack.c.l.s4 1983009808
        %v1258 = vunpack.c.0.s8 %v1257
        %v1259 = vlaneseq
        %v1260 = vshrl.u32 %v1259, 7
        %v1261 = vsub.s32 %v1258, %v1260
        %v1262 = vrot.slane %v1255, %v1261
        %v1263 = vcombine.low %v1169, %v1170
        %v1265 = vunpack.c.l.s4 1983009808
        %v1266 = vunpack.c.0.s8 %v1265
        %v1267 = vlaneseq
        %v1268 = vshrl.u32 %v1267, 7
        %v1269 = vsub.s32 %v1266, %v1268
        %v1270 = vrot.slane %v1263, %v1269
        %v1271 = vcombine.low %v1246, %v1254
        %v1272 = vcombine.high %v1246, %v1254
        %v1274 = vunpack.c.l.s4 1934713408
        %v1275 = vunpack.c.0.s8 %v1274
        %v1276 = vlaneseq
        %v1277 = vshrl.u32 %v1276, 7
        %v1278 = vsub.s32 %v1275, %v1277
        %v1279 = vrot.slane %v1271, %v1278
        %v1281 = vunpack.c.l.s4 1934713408
        %v1282 = vunpack.c.0.s8 %v1281
        %v1283 = vlaneseq
        %v1284 = vshrl.u32 %v1283, 7
        %v1285 = vsub.s32 %v1282, %v1284
        %v1286 = vrot.slane %v1272, %v1285
        %v1287 = vcombine.low %v1262, %v1270
        %v1288 = vcombine.high %v1262, %v1270
        %v1290 = vunpack.c.l.s4 1934713408
        %v1291 = vunpack.c.0.s8 %v1290
        %v1292 = vlaneseq
        %v1293 = vshrl.u32 %v1292, 7
        %v1294 = vsub.s32 %v1291, %v1293
        %v1295 = vrot.slane %v1287, %v1294
        %v1297 = vunpack.c.l.s4 1934713408
        %v1298 = vunpack.c.0.s8 %v1297
        %v1299 = vlaneseq
        %v1300 = vshrl.u32 %v1299, 7
        %v1301 = vsub.s32 %v1298, %v1300
        %v1302 = vrot.slane %v1288, %v1301
        %v1303 = vcombine.low %v1279, %v1295
        %v1304 = vcombine.high %v1279, %v1295
        %v1305 = vcombine.low %v1286, %v1302
        %v1306 = vcombine.high %v1286, %v1302
        %1309 = vrot.lane.b32.xlu0 %v968, 96
        %v1310 = vpop.permute.xlu0 %1309
        %1311 = vrot.lane.b32.xlu0 %v972, 96
        %v1312 = vpop.permute.xlu0 %1311
        %1315 = vrot.lane.b32.xlu0 %v968, 64
        %v1316 = vpop.permute.xlu0 %1315
        %1317 = vrot.lane.b32.xlu0 %v972, 64
        %v1318 = vpop.permute.xlu0 %1317
        %1321 = vrot.lane.b32.xlu0 %v968, 32
        %v1322 = vpop.permute.xlu0 %1321
        %1323 = vrot.lane.b32.xlu0 %v972, 32
        %v1324 = vpop.permute.xlu0 %1323
        %v1327 = vcombine.low %v968, %v1316
        %v1328 = vcombine.high %v968, %v1316
        %v1330 = vunpack.c.l.s4 1983009808
        %v1331 = vunpack.c.0.s8 %v1330
        %v1332 = vlaneseq
        %v1333 = vshrl.u32 %v1332, 7
        %v1334 = vsub.s32 %v1331, %v1333
        %v1335 = vrot.slane %v1327, %v1334
        %v1337 = vunpack.c.l.s4 1983009808
        %v1338 = vunpack.c.0.s8 %v1337
        %v1339 = vlaneseq
        %v1340 = vshrl.u32 %v1339, 7
        %v1341 = vsub.s32 %v1338, %v1340
        %v1342 = vrot.slane %v1328, %v1341
        %v1343 = vcombine.low %v1310, %v1322
        %v1344 = vcombine.high %v1310, %v1322
        %v1346 = vunpack.c.l.s4 1983009808
        %v1347 = vunpack.c.0.s8 %v1346
        %v1348 = vlaneseq
        %v1349 = vshrl.u32 %v1348, 7
        %v1350 = vsub.s32 %v1347, %v1349
        %v1351 = vrot.slane %v1343, %v1350
        %v1353 = vunpack.c.l.s4 1983009808
        %v1354 = vunpack.c.0.s8 %v1353
        %v1355 = vlaneseq
        %v1356 = vshrl.u32 %v1355, 7
        %v1357 = vsub.s32 %v1354, %v1356
        %v1358 = vrot.slane %v1344, %v1357
        %v1359 = vcombine.low %v1335, %v1351
        %v1360 = vcombine.high %v1335, %v1351
        %v1362 = vunpack.c.l.s4 1934713408
        %v1363 = vunpack.c.0.s8 %v1362
        %v1364 = vlaneseq
        %v1365 = vshrl.u32 %v1364, 7
        %v1366 = vsub.s32 %v1363, %v1365
        %v1367 = vrot.slane %v1359, %v1366
        %v1369 = vunpack.c.l.s4 1934713408
        %v1370 = vunpack.c.0.s8 %v1369
        %v1371 = vlaneseq
        %v1372 = vshrl.u32 %v1371, 7
        %v1373 = vsub.s32 %v1370, %v1372
        %v1374 = vrot.slane %v1360, %v1373
        %v1375 = vcombine.low %v1342, %v1358
        %v1376 = vcombine.high %v1342, %v1358
        %v1378 = vunpack.c.l.s4 1934713408
        %v1379 = vunpack.c.0.s8 %v1378
        %v1380 = vlaneseq
        %v1381 = vshrl.u32 %v1380, 7
        %v1382 = vsub.s32 %v1379, %v1381
        %v1383 = vrot.slane %v1375, %v1382
        %v1385 = vunpack.c.l.s4 1934713408
        %v1386 = vunpack.c.0.s8 %v1385
        %v1387 = vlaneseq
        %v1388 = vshrl.u32 %v1387, 7
        %v1389 = vsub.s32 %v1386, %v1388
        %v1390 = vrot.slane %v1376, %v1389
        %v1391 = vcombine.high %v1367, 0.0
        %v1392 = vcombine.high %v1374, 0.0
        %v1393 = vcombine.high %v1383, 0.0
        %v1394 = vcombine.high %v1390, 0.0
        %v1395 = vcombine.low %v972, %v1318
        %v1396 = vcombine.high %v972, %v1318
        %v1398 = vunpack.c.l.s4 1983009808
        %v1399 = vunpack.c.0.s8 %v1398
        %v1400 = vlaneseq
        %v1401 = vshrl.u32 %v1400, 7
        %v1402 = vsub.s32 %v1399, %v1401
        %v1403 = vrot.slane %v1395, %v1402
        %v1405 = vunpack.c.l.s4 1983009808
        %v1406 = vunpack.c.0.s8 %v1405
        %v1407 = vlaneseq
        %v1408 = vshrl.u32 %v1407, 7
        %v1409 = vsub.s32 %v1406, %v1408
        %v1410 = vrot.slane %v1396, %v1409
        %v1411 = vcombine.low %v1312, %v1324
        %v1412 = vcombine.high %v1312, %v1324
        %v1414 = vunpack.c.l.s4 1983009808
        %v1415 = vunpack.c.0.s8 %v1414
        %v1416 = vlaneseq
        %v1417 = vshrl.u32 %v1416, 7
        %v1418 = vsub.s32 %v1415, %v1417
        %v1419 = vrot.slane %v1411, %v1418
        %v1421 = vunpack.c.l.s4 1983009808
        %v1422 = vunpack.c.0.s8 %v1421
        %v1423 = vlaneseq
        %v1424 = vshrl.u32 %v1423, 7
        %v1425 = vsub.s32 %v1422, %v1424
        %v1426 = vrot.slane %v1412, %v1425
        %v1427 = vcombine.low %v1403, %v1419
        %v1428 = vcombine.high %v1403, %v1419
        %v1430 = vunpack.c.l.s4 1934713408
        %v1431 = vunpack.c.0.s8 %v1430
        %v1432 = vlaneseq
        %v1433 = vshrl.u32 %v1432, 7
        %v1434 = vsub.s32 %v1431, %v1433
        %v1435 = vrot.slane %v1427, %v1434
        %v1437 = vunpack.c.l.s4 1934713408
        %v1438 = vunpack.c.0.s8 %v1437
        %v1439 = vlaneseq
        %v1440 = vshrl.u32 %v1439, 7
        %v1441 = vsub.s32 %v1438, %v1440
        %v1442 = vrot.slane %v1428, %v1441
        %v1443 = vcombine.low %v1410, %v1426
        %v1444 = vcombine.high %v1410, %v1426
        %v1446 = vunpack.c.l.s4 1934713408
        %v1447 = vunpack.c.0.s8 %v1446
        %v1448 = vlaneseq
        %v1449 = vshrl.u32 %v1448, 7
        %v1450 = vsub.s32 %v1447, %v1449
        %v1451 = vrot.slane %v1443, %v1450
        %v1453 = vunpack.c.l.s4 1934713408
        %v1454 = vunpack.c.0.s8 %v1453
        %v1455 = vlaneseq
        %v1456 = vshrl.u32 %v1455, 7
        %v1457 = vsub.s32 %v1454, %v1456
        %v1458 = vrot.slane %v1444, %v1457
        %v1459 = vcombine.high %v1435, 0.0
        %v1460 = vcombine.high %v1442, 0.0
        %v1461 = vcombine.high %v1451, 0.0
        %v1462 = vcombine.high %v1458, 0.0
        %v1463 = vcombine.low %v1367, %v1374
        %v1465 = vunpack.c.l.s4 1983009808
        %v1466 = vunpack.c.0.s8 %v1465
        %v1467 = vlaneseq
        %v1468 = vshrl.u32 %v1467, 7
        %v1469 = vsub.s32 %v1466, %v1468
        %v1470 = vrot.slane %v1463, %v1469
        %v1471 = vcombine.low %v1391, %v1392
        %v1473 = vunpack.c.l.s4 1983009808
        %v1474 = vunpack.c.0.s8 %v1473
        %v1475 = vlaneseq
        %v1476 = vshrl.u32 %v1475, 7
        %v1477 = vsub.s32 %v1474, %v1476
        %v1478 = vrot.slane %v1471, %v1477
        %v1479 = vcombine.low %v1383, %v1390
        %v1481 = vunpack.c.l.s4 1983009808
        %v1482 = vunpack.c.0.s8 %v1481
        %v1483 = vlaneseq
        %v1484 = vshrl.u32 %v1483, 7
        %v1485 = vsub.s32 %v1482, %v1484
        %v1486 = vrot.slane %v1479, %v1485
        %v1487 = vcombine.low %v1393, %v1394
        %v1489 = vunpack.c.l.s4 1983009808
        %v1490 = vunpack.c.0.s8 %v1489
        %v1491 = vlaneseq
        %v1492 = vshrl.u32 %v1491, 7
        %v1493 = vsub.s32 %v1490, %v1492
        %v1494 = vrot.slane %v1487, %v1493
        %v1495 = vcombine.low %v1470, %v1478
        %v1496 = vcombine.high %v1470, %v1478
        %v1498 = vunpack.c.l.s4 1934713408
        %v1499 = vunpack.c.0.s8 %v1498
        %v1500 = vlaneseq
        %v1501 = vshrl.u32 %v1500, 7
        %v1502 = vsub.s32 %v1499, %v1501
        %v1503 = vrot.slane %v1495, %v1502
        %v1505 = vunpack.c.l.s4 1934713408
        %v1506 = vunpack.c.0.s8 %v1505
        %v1507 = vlaneseq
        %v1508 = vshrl.u32 %v1507, 7
        %v1509 = vsub.s32 %v1506, %v1508
        %v1510 = vrot.slane %v1496, %v1509
        %v1511 = vcombine.low %v1486, %v1494
        %v1512 = vcombine.high %v1486, %v1494
        %v1514 = vunpack.c.l.s4 1934713408
        %v1515 = vunpack.c.0.s8 %v1514
        %v1516 = vlaneseq
        %v1517 = vshrl.u32 %v1516, 7
        %v1518 = vsub.s32 %v1515, %v1517
        %v1519 = vrot.slane %v1511, %v1518
        %v1521 = vunpack.c.l.s4 1934713408
        %v1522 = vunpack.c.0.s8 %v1521
        %v1523 = vlaneseq
        %v1524 = vshrl.u32 %v1523, 7
        %v1525 = vsub.s32 %v1522, %v1524
        %v1526 = vrot.slane %v1512, %v1525
        %v1527 = vcombine.low %v1503, %v1519
        %v1528 = vcombine.high %v1503, %v1519
        %v1529 = vcombine.low %v1510, %v1526
        %v1530 = vcombine.high %v1510, %v1526
        %v1531 = vcombine.low %v1435, %v1442
        %v1533 = vunpack.c.l.s4 1983009808
        %v1534 = vunpack.c.0.s8 %v1533
        %v1535 = vlaneseq
        %v1536 = vshrl.u32 %v1535, 7
        %v1537 = vsub.s32 %v1534, %v1536
        %v1538 = vrot.slane %v1531, %v1537
        %v1539 = vcombine.low %v1459, %v1460
        %v1541 = vunpack.c.l.s4 1983009808
        %v1542 = vunpack.c.0.s8 %v1541
        %v1543 = vlaneseq
        %v1544 = vshrl.u32 %v1543, 7
        %v1545 = vsub.s32 %v1542, %v1544
        %v1546 = vrot.slane %v1539, %v1545
        %v1547 = vcombine.low %v1451, %v1458
        %v1549 = vunpack.c.l.s4 1983009808
        %v1550 = vunpack.c.0.s8 %v1549
        %v1551 = vlaneseq
        %v1552 = vshrl.u32 %v1551, 7
        %v1553 = vsub.s32 %v1550, %v1552
        %v1554 = vrot.slane %v1547, %v1553
        %v1555 = vcombine.low %v1461, %v1462
        %v1557 = vunpack.c.l.s4 1983009808
        %v1558 = vunpack.c.0.s8 %v1557
        %v1559 = vlaneseq
        %v1560 = vshrl.u32 %v1559, 7
        %v1561 = vsub.s32 %v1558, %v1560
        %v1562 = vrot.slane %v1555, %v1561
        %v1563 = vcombine.low %v1538, %v1546
        %v1564 = vcombine.high %v1538, %v1546
        %v1566 = vunpack.c.l.s4 1934713408
        %v1567 = vunpack.c.0.s8 %v1566
        %v1568 = vlaneseq
        %v1569 = vshrl.u32 %v1568, 7
        %v1570 = vsub.s32 %v1567, %v1569
        %v1571 = vrot.slane %v1563, %v1570
        %v1573 = vunpack.c.l.s4 1934713408
        %v1574 = vunpack.c.0.s8 %v1573
        %v1575 = vlaneseq
        %v1576 = vshrl.u32 %v1575, 7
        %v1577 = vsub.s32 %v1574, %v1576
        %v1578 = vrot.slane %v1564, %v1577
        %v1579 = vcombine.low %v1554, %v1562
        %v1580 = vcombine.high %v1554, %v1562
        %v1582 = vunpack.c.l.s4 1934713408
        %v1583 = vunpack.c.0.s8 %v1582
        %v1584 = vlaneseq
        %v1585 = vshrl.u32 %v1584, 7
        %v1586 = vsub.s32 %v1583, %v1585
        %v1587 = vrot.slane %v1579, %v1586
        %v1589 = vunpack.c.l.s4 1934713408
        %v1590 = vunpack.c.0.s8 %v1589
        %v1591 = vlaneseq
        %v1592 = vshrl.u32 %v1591, 7
        %v1593 = vsub.s32 %v1590, %v1592
        %v1594 = vrot.slane %v1580, %v1593
        %v1595 = vcombine.low %v1571, %v1587
        %v1596 = vcombine.high %v1571, %v1587
        %v1597 = vcombine.low %v1578, %v1594
        %v1598 = vcombine.high %v1578, %v1594
        %1601 = vrot.lane.b32.xlu0 %v1009, 96
        %v1602 = vpop.permute.xlu0 %1601
        %1603 = vrot.lane.b32.xlu0 %v1012, 96
        %v1604 = vpop.permute.xlu0 %1603
        %1607 = vrot.lane.b32.xlu0 %v1009, 64
        %v1608 = vpop.permute.xlu0 %1607
        %1609 = vrot.lane.b32.xlu0 %v1012, 64
        %v1610 = vpop.permute.xlu0 %1609
        %1613 = vrot.lane.b32.xlu0 %v1009, 32
        %v1614 = vpop.permute.xlu0 %1613
        %1615 = vrot.lane.b32.xlu0 %v1012, 32
        %v1616 = vpop.permute.xlu0 %1615
        %v1619 = vcombine.low %v1009, %v1608
        %v1620 = vcombine.high %v1009, %v1608
        %v1622 = vunpack.c.l.s4 1983009808
        %v1623 = vunpack.c.0.s8 %v1622
        %v1624 = vlaneseq
        %v1625 = vshrl.u32 %v1624, 7
        %v1626 = vsub.s32 %v1623, %v1625
        %v1627 = vrot.slane %v1619, %v1626
        %v1629 = vunpack.c.l.s4 1983009808
        %v1630 = vunpack.c.0.s8 %v1629
        %v1631 = vlaneseq
        %v1632 = vshrl.u32 %v1631, 7
        %v1633 = vsub.s32 %v1630, %v1632
        %v1634 = vrot.slane %v1620, %v1633
        %v1635 = vcombine.low %v1602, %v1614
        %v1636 = vcombine.high %v1602, %v1614
        %v1638 = vunpack.c.l.s4 1983009808
        %v1639 = vunpack.c.0.s8 %v1638
        %v1640 = vlaneseq
        %v1641 = vshrl.u32 %v1640, 7
        %v1642 = vsub.s32 %v1639, %v1641
        %v1643 = vrot.slane %v1635, %v1642
        %v1645 = vunpack.c.l.s4 1983009808
        %v1646 = vunpack.c.0.s8 %v1645
        %v1647 = vlaneseq
        %v1648 = vshrl.u32 %v1647, 7
        %v1649 = vsub.s32 %v1646, %v1648
        %v1650 = vrot.slane %v1636, %v1649
        %v1651 = vcombine.low %v1627, %v1643
        %v1652 = vcombine.high %v1627, %v1643
        %v1654 = vunpack.c.l.s4 1934713408
        %v1655 = vunpack.c.0.s8 %v1654
        %v1656 = vlaneseq
        %v1657 = vshrl.u32 %v1656, 7
        %v1658 = vsub.s32 %v1655, %v1657
        %v1659 = vrot.slane %v1651, %v1658
        %v1661 = vunpack.c.l.s4 1934713408
        %v1662 = vunpack.c.0.s8 %v1661
        %v1663 = vlaneseq
        %v1664 = vshrl.u32 %v1663, 7
        %v1665 = vsub.s32 %v1662, %v1664
        %v1666 = vrot.slane %v1652, %v1665
        %v1667 = vcombine.low %v1634, %v1650
        %v1668 = vcombine.high %v1634, %v1650
        %v1670 = vunpack.c.l.s4 1934713408
        %v1671 = vunpack.c.0.s8 %v1670
        %v1672 = vlaneseq
        %v1673 = vshrl.u32 %v1672, 7
        %v1674 = vsub.s32 %v1671, %v1673
        %v1675 = vrot.slane %v1667, %v1674
        %v1677 = vunpack.c.l.s4 1934713408
        %v1678 = vunpack.c.0.s8 %v1677
        %v1679 = vlaneseq
        %v1680 = vshrl.u32 %v1679, 7
        %v1681 = vsub.s32 %v1678, %v1680
        %v1682 = vrot.slane %v1668, %v1681
        %v1683 = vcombine.high %v1659, 0.0
        %v1684 = vcombine.high %v1666, 0.0
        %v1685 = vcombine.high %v1675, 0.0
        %v1686 = vcombine.high %v1682, 0.0
        %v1687 = vcombine.low %v1012, %v1610
        %v1688 = vcombine.high %v1012, %v1610
        %v1690 = vunpack.c.l.s4 1983009808
        %v1691 = vunpack.c.0.s8 %v1690
        %v1692 = vlaneseq
        %v1693 = vshrl.u32 %v1692, 7
        %v1694 = vsub.s32 %v1691, %v1693
        %v1695 = vrot.slane %v1687, %v1694
        %v1697 = vunpack.c.l.s4 1983009808
        %v1698 = vunpack.c.0.s8 %v1697
        %v1699 = vlaneseq
        %v1700 = vshrl.u32 %v1699, 7
        %v1701 = vsub.s32 %v1698, %v1700
        %v1702 = vrot.slane %v1688, %v1701
        %v1703 = vcombine.low %v1604, %v1616
        %v1704 = vcombine.high %v1604, %v1616
        %v1706 = vunpack.c.l.s4 1983009808
        %v1707 = vunpack.c.0.s8 %v1706
        %v1708 = vlaneseq
        %v1709 = vshrl.u32 %v1708, 7
        %v1710 = vsub.s32 %v1707, %v1709
        %v1711 = vrot.slane %v1703, %v1710
        %v1713 = vunpack.c.l.s4 1983009808
        %v1714 = vunpack.c.0.s8 %v1713
        %v1715 = vlaneseq
        %v1716 = vshrl.u32 %v1715, 7
        %v1717 = vsub.s32 %v1714, %v1716
        %v1718 = vrot.slane %v1704, %v1717
        %v1719 = vcombine.low %v1695, %v1711
        %v1720 = vcombine.high %v1695, %v1711
        %v1722 = vunpack.c.l.s4 1934713408
        %v1723 = vunpack.c.0.s8 %v1722
        %v1724 = vlaneseq
        %v1725 = vshrl.u32 %v1724, 7
        %v1726 = vsub.s32 %v1723, %v1725
        %v1727 = vrot.slane %v1719, %v1726
        %v1729 = vunpack.c.l.s4 1934713408
        %v1730 = vunpack.c.0.s8 %v1729
        %v1731 = vlaneseq
        %v1732 = vshrl.u32 %v1731, 7
        %v1733 = vsub.s32 %v1730, %v1732
        %v1734 = vrot.slane %v1720, %v1733
        %v1735 = vcombine.low %v1702, %v1718
        %v1736 = vcombine.high %v1702, %v1718
        %v1738 = vunpack.c.l.s4 1934713408
        %v1739 = vunpack.c.0.s8 %v1738
        %v1740 = vlaneseq
        %v1741 = vshrl.u32 %v1740, 7
        %v1742 = vsub.s32 %v1739, %v1741
        %v1743 = vrot.slane %v1735, %v1742
        %v1745 = vunpack.c.l.s4 1934713408
        %v1746 = vunpack.c.0.s8 %v1745
        %v1747 = vlaneseq
        %v1748 = vshrl.u32 %v1747, 7
        %v1749 = vsub.s32 %v1746, %v1748
        %v1750 = vrot.slane %v1736, %v1749
        %v1751 = vcombine.high %v1727, 0.0
        %v1752 = vcombine.high %v1734, 0.0
        %v1753 = vcombine.high %v1743, 0.0
        %v1754 = vcombine.high %v1750, 0.0
        %v1755 = vcombine.low %v1659, %v1666
        %v1757 = vunpack.c.l.s4 1983009808
        %v1758 = vunpack.c.0.s8 %v1757
        %v1759 = vlaneseq
        %v1760 = vshrl.u32 %v1759, 7
        %v1761 = vsub.s32 %v1758, %v1760
        %v1762 = vrot.slane %v1755, %v1761
        %v1763 = vcombine.low %v1683, %v1684
        %v1765 = vunpack.c.l.s4 1983009808
        %v1766 = vunpack.c.0.s8 %v1765
        %v1767 = vlaneseq
        %v1768 = vshrl.u32 %v1767, 7
        %v1769 = vsub.s32 %v1766, %v1768
        %v1770 = vrot.slane %v1763, %v1769
        %v1771 = vcombine.low %v1675, %v1682
        %v1773 = vunpack.c.l.s4 1983009808
        %v1774 = vunpack.c.0.s8 %v1773
        %v1775 = vlaneseq
        %v1776 = vshrl.u32 %v1775, 7
        %v1777 = vsub.s32 %v1774, %v1776
        %v1778 = vrot.slane %v1771, %v1777
        %v1779 = vcombine.low %v1685, %v1686
        %v1781 = vunpack.c.l.s4 1983009808
        %v1782 = vunpack.c.0.s8 %v1781
        %v1783 = vlaneseq
        %v1784 = vshrl.u32 %v1783, 7
        %v1785 = vsub.s32 %v1782, %v1784
        %v1786 = vrot.slane %v1779, %v1785
        %v1787 = vcombine.low %v1762, %v1770
        %v1788 = vcombine.high %v1762, %v1770
        %v1790 = vunpack.c.l.s4 1934713408
        %v1791 = vunpack.c.0.s8 %v1790
        %v1792 = vlaneseq
        %v1793 = vshrl.u32 %v1792, 7
        %v1794 = vsub.s32 %v1791, %v1793
        %v1795 = vrot.slane %v1787, %v1794
        %v1797 = vunpack.c.l.s4 1934713408
        %v1798 = vunpack.c.0.s8 %v1797
        %v1799 = vlaneseq
        %v1800 = vshrl.u32 %v1799, 7
        %v1801 = vsub.s32 %v1798, %v1800
        %v1802 = vrot.slane %v1788, %v1801
        %v1803 = vcombine.low %v1778, %v1786
        %v1804 = vcombine.high %v1778, %v1786
        %v1806 = vunpack.c.l.s4 1934713408
        %v1807 = vunpack.c.0.s8 %v1806
        %v1808 = vlaneseq
        %v1809 = vshrl.u32 %v1808, 7
        %v1810 = vsub.s32 %v1807, %v1809
        %v1811 = vrot.slane %v1803, %v1810
        %v1813 = vunpack.c.l.s4 1934713408
        %v1814 = vunpack.c.0.s8 %v1813
        %v1815 = vlaneseq
        %v1816 = vshrl.u32 %v1815, 7
        %v1817 = vsub.s32 %v1814, %v1816
        %v1818 = vrot.slane %v1804, %v1817
        %v1819 = vcombine.low %v1795, %v1811
        %v1820 = vcombine.high %v1795, %v1811
        %v1821 = vcombine.low %v1802, %v1818
        %v1822 = vcombine.high %v1802, %v1818
        %v1823 = vcombine.low %v1727, %v1734
        %v1825 = vunpack.c.l.s4 1983009808
        %v1826 = vunpack.c.0.s8 %v1825
        %v1827 = vlaneseq
        %v1828 = vshrl.u32 %v1827, 7
        %v1829 = vsub.s32 %v1826, %v1828
        %v1830 = vrot.slane %v1823, %v1829
        %v1831 = vcombine.low %v1751, %v1752
        %v1833 = vunpack.c.l.s4 1983009808
        %v1834 = vunpack.c.0.s8 %v1833
        %v1835 = vlaneseq
        %v1836 = vshrl.u32 %v1835, 7
        %v1837 = vsub.s32 %v1834, %v1836
        %v1838 = vrot.slane %v1831, %v1837
        %v1839 = vcombine.low %v1743, %v1750
        %v1841 = vunpack.c.l.s4 1983009808
        %v1842 = vunpack.c.0.s8 %v1841
        %v1843 = vlaneseq
        %v1844 = vshrl.u32 %v1843, 7
        %v1845 = vsub.s32 %v1842, %v1844
        %v1846 = vrot.slane %v1839, %v1845
        %v1847 = vcombine.low %v1753, %v1754
        %v1849 = vunpack.c.l.s4 1983009808
        %v1850 = vunpack.c.0.s8 %v1849
        %v1851 = vlaneseq
        %v1852 = vshrl.u32 %v1851, 7
        %v1853 = vsub.s32 %v1850, %v1852
        %v1854 = vrot.slane %v1847, %v1853
        %v1855 = vcombine.low %v1830, %v1838
        %v1856 = vcombine.high %v1830, %v1838
        %v1858 = vunpack.c.l.s4 1934713408
        %v1859 = vunpack.c.0.s8 %v1858
        %v1860 = vlaneseq
        %v1861 = vshrl.u32 %v1860, 7
        %v1862 = vsub.s32 %v1859, %v1861
        %v1863 = vrot.slane %v1855, %v1862
        %v1865 = vunpack.c.l.s4 1934713408
        %v1866 = vunpack.c.0.s8 %v1865
        %v1867 = vlaneseq
        %v1868 = vshrl.u32 %v1867, 7
        %v1869 = vsub.s32 %v1866, %v1868
        %v1870 = vrot.slane %v1856, %v1869
        %v1871 = vcombine.low %v1846, %v1854
        %v1872 = vcombine.high %v1846, %v1854
        %v1874 = vunpack.c.l.s4 1934713408
        %v1875 = vunpack.c.0.s8 %v1874
        %v1876 = vlaneseq
        %v1877 = vshrl.u32 %v1876, 7
        %v1878 = vsub.s32 %v1875, %v1877
        %v1879 = vrot.slane %v1871, %v1878
        %v1881 = vunpack.c.l.s4 1934713408
        %v1882 = vunpack.c.0.s8 %v1881
        %v1883 = vlaneseq
        %v1884 = vshrl.u32 %v1883, 7
        %v1885 = vsub.s32 %v1882, %v1884
        %v1886 = vrot.slane %v1872, %v1885
        %v1887 = vcombine.low %v1863, %v1879
        %v1888 = vcombine.high %v1863, %v1879
        %v1889 = vcombine.low %v1870, %v1886
        %v1890 = vcombine.high %v1870, %v1886
        %v1891 = vpack.c.bf16 %v1303, %v1235
        %v1892 = vpack.c.bf16 %v1304, %v1236
        %v1893 = vpack.c.bf16 %v1305, %v1237
        %v1894 = vpack.c.bf16 %v1306, %v1238
        %v1895 = vpack.c.bf16 %v1595, %v1527
        %v1896 = vpack.c.bf16 %v1596, %v1528
        %v1897 = vpack.c.bf16 %v1597, %v1529
        %v1898 = vpack.c.bf16 %v1598, %v1530
        %vm1899 = vcmask 261120
        %v1901 = vsel %vm1899, %v1891, 0
        %v1904 = vsel %vm1899, %v1895, 0
        %1906 = vmatprep.subr.bf16.mxu0 0
        %1907 = vmatpush1.bf16.xpose.msra.mxu0 %v1904
        %1908 = vmatprep.subr.bf16.mxu0 0
        %1909 = vmatpush1.bf16.xpose.msra.mxu0 0
        %1910 = vmatprep.subr.bf16.mxu0 0
        %1911 = vmatpush1.bf16.xpose.msra.mxu0 0
        %1912 = vmatprep.subr.bf16.mxu0 0
        %1913 = vmatpush1.bf16.xpose.msra.mxu0 0
        %1914 = vmatprep.subr.bf16.mxu0 0
        %1915 = vmatpush1.bf16.xpose.msra.mxu0 0
        %1916 = vmatprep.subr.bf16.mxu0 0
        %1917 = vmatpush1.bf16.xpose.msra.mxu0 0
        %1918 = vmatprep.subr.bf16.mxu0 0
        %1919 = vmatpush1.bf16.xpose.msra.mxu0 0
        %1920 = vmatprep.subr.bf16.mxu0 0
        %1921 = vmatpush1.bf16.xpose.msra.mxu0 0
        %1922 = vmatprep.subr.bf16.mxu0 0
        %1923 = vmatpush1.bf16.xpose.msra.mxu0 0
        %1924 = vmatprep.subr.bf16.mxu0 0
        %1925 = vmatpush1.bf16.xpose.msra.mxu0 0
        %1926 = vmatprep.subr.bf16.mxu0 0
        %1927 = vmatpush1.bf16.xpose.msra.mxu0 0
        %1928 = vmatprep.subr.bf16.mxu0 0
        %1929 = vmatpush1.bf16.xpose.msra.mxu0 0
        %1930 = vmatprep.subr.bf16.mxu0 0
        %1931 = vmatpush1.bf16.xpose.msra.mxu0 0
        %1932 = vmatprep.subr.bf16.mxu0 0
        %1933 = vmatpush1.bf16.xpose.msra.mxu0 0
        %1934 = vmatprep.subr.bf16.mxu0 0
        %1935 = vmatpush1.bf16.xpose.msra.mxu0 0
        %1936 = vmatprep.subr.bf16.mxu0 0
        %1937 = vmatpush1.bf16.xpose.msra.mxu0 0
        %1938 = vmatprep.mubr.bf16.mxu0 0
        %1939 = vmatmul.mubr.bf16.gmra.mrb[0].mxu0 %v1901
        %v1940 = vpop.f32.mrb[0].mxu0
        %v1941 = vadd.f32 0.0, %v1940
        %v1942 = vpop.f32.mrb[0].mxu0
        %v1943 = vpop.f32.mrb[0].mxu0
        %v1944 = vadd.f32 0.0, %v1943
        %v1945 = vpop.f32.mrb[0].mxu0
        %1946 = vdwg.mxu0
        %v1948 = vsel %vm1899, %v1892, 0
        %v1951 = vsel %vm1899, %v1896, 0
        %1953 = vmatprep.subr.bf16.mxu0 0
        %1954 = vmatpush1.bf16.xpose.msra.mxu0 %v1951
        %1955 = vmatprep.subr.bf16.mxu0 0
        %1956 = vmatpush1.bf16.xpose.msra.mxu0 0
        %1957 = vmatprep.subr.bf16.mxu0 0
        %1958 = vmatpush1.bf16.xpose.msra.mxu0 0
        %1959 = vmatprep.subr.bf16.mxu0 0
        %1960 = vmatpush1.bf16.xpose.msra.mxu0 0
        %1961 = vmatprep.subr.bf16.mxu0 0
        %1962 = vmatpush1.bf16.xpose.msra.mxu0 0
        %1963 = vmatprep.subr.bf16.mxu0 0
        %1964 = vmatpush1.bf16.xpose.msra.mxu0 0
        %1965 = vmatprep.subr.bf16.mxu0 0
        %1966 = vmatpush1.bf16.xpose.msra.mxu0 0
        %1967 = vmatprep.subr.bf16.mxu0 0
        %1968 = vmatpush1.bf16.xpose.msra.mxu0 0
        %1969 = vmatprep.subr.bf16.mxu0 0
        %1970 = vmatpush1.bf16.xpose.msra.mxu0 0
        %1971 = vmatprep.subr.bf16.mxu0 0
        %1972 = vmatpush1.bf16.xpose.msra.mxu0 0
        %1973 = vmatprep.subr.bf16.mxu0 0
        %1974 = vmatpush1.bf16.xpose.msra.mxu0 0
        %1975 = vmatprep.subr.bf16.mxu0 0
        %1976 = vmatpush1.bf16.xpose.msra.mxu0 0
        %1977 = vmatprep.subr.bf16.mxu0 0
        %1978 = vmatpush1.bf16.xpose.msra.mxu0 0
        %1979 = vmatprep.subr.bf16.mxu0 0
        %1980 = vmatpush1.bf16.xpose.msra.mxu0 0
        %1981 = vmatprep.subr.bf16.mxu0 0
        %1982 = vmatpush1.bf16.xpose.msra.mxu0 0
        %1983 = vmatprep.subr.bf16.mxu0 0
        %1984 = vmatpush1.bf16.xpose.msra.mxu0 0
        %1985 = vmatprep.mubr.bf16.mxu0 0
        %1986 = vmatmul.mubr.bf16.gmra.mrb[0].mxu0 %v1948
        %v1987 = vpop.f32.mrb[0].mxu0
        %v1988 = vadd.f32 0.0, %v1987
        %v1989 = vpop.f32.mrb[0].mxu0
        %v1990 = vpop.f32.mrb[0].mxu0
        %v1991 = vadd.f32 0.0, %v1990
        %v1992 = vpop.f32.mrb[0].mxu0
        %1993 = vdwg.mxu0
        %v1995 = vsel %vm1899, %v1893, 0
        %v1998 = vsel %vm1899, %v1897, 0
        %2000 = vmatprep.subr.bf16.mxu0 0
        %2001 = vmatpush1.bf16.xpose.msra.mxu0 %v1998
        %2002 = vmatprep.subr.bf16.mxu0 0
        %2003 = vmatpush1.bf16.xpose.msra.mxu0 0
        %2004 = vmatprep.subr.bf16.mxu0 0
        %2005 = vmatpush1.bf16.xpose.msra.mxu0 0
        %2006 = vmatprep.subr.bf16.mxu0 0
        %2007 = vmatpush1.bf16.xpose.msra.mxu0 0
        %2008 = vmatprep.subr.bf16.mxu0 0
        %2009 = vmatpush1.bf16.xpose.msra.mxu0 0
        %2010 = vmatprep.subr.bf16.mxu0 0
        %2011 = vmatpush1.bf16.xpose.msra.mxu0 0
        %2012 = vmatprep.subr.bf16.mxu0 0
        %2013 = vmatpush1.bf16.xpose.msra.mxu0 0
        %2014 = vmatprep.subr.bf16.mxu0 0
        %2015 = vmatpush1.bf16.xpose.msra.mxu0 0
        %2016 = vmatprep.subr.bf16.mxu0 0
        %2017 = vmatpush1.bf16.xpose.msra.mxu0 0
        %2018 = vmatprep.subr.bf16.mxu0 0
        %2019 = vmatpush1.bf16.xpose.msra.mxu0 0
        %2020 = vmatprep.subr.bf16.mxu0 0
        %2021 = vmatpush1.bf16.xpose.msra.mxu0 0
        %2022 = vmatprep.subr.bf16.mxu0 0
        %2023 = vmatpush1.bf16.xpose.msra.mxu0 0
        %2024 = vmatprep.subr.bf16.mxu0 0
        %2025 = vmatpush1.bf16.xpose.msra.mxu0 0
        %2026 = vmatprep.subr.bf16.mxu0 0
        %2027 = vmatpush1.bf16.xpose.msra.mxu0 0
        %2028 = vmatprep.subr.bf16.mxu0 0
        %2029 = vmatpush1.bf16.xpose.msra.mxu0 0
        %2030 = vmatprep.subr.bf16.mxu0 0
        %2031 = vmatpush1.bf16.xpose.msra.mxu0 0
        %2032 = vmatprep.mubr.bf16.mxu0 0
        %2033 = vmatmul.mubr.bf16.gmra.mrb[0].mxu0 %v1995
        %v2034 = vpop.f32.mrb[0].mxu0
        %v2035 = vadd.f32 0.0, %v2034
        %v2036 = vpop.f32.mrb[0].mxu0
        %v2037 = vpop.f32.mrb[0].mxu0
        %v2038 = vadd.f32 0.0, %v2037
        %v2039 = vpop.f32.mrb[0].mxu0
        %2040 = vdwg.mxu0
        %v2042 = vsel %vm1899, %v1894, 0
        %v2045 = vsel %vm1899, %v1898, 0
        %2047 = vmatprep.subr.bf16.mxu0 0
        %2048 = vmatpush1.bf16.xpose.msra.mxu0 %v2045
        %2049 = vmatprep.subr.bf16.mxu0 0
        %2050 = vmatpush1.bf16.xpose.msra.mxu0 0
        %2051 = vmatprep.subr.bf16.mxu0 0
        %2052 = vmatpush1.bf16.xpose.msra.mxu0 0
        %2053 = vmatprep.subr.bf16.mxu0 0
        %2054 = vmatpush1.bf16.xpose.msra.mxu0 0
        %2055 = vmatprep.subr.bf16.mxu0 0
        %2056 = vmatpush1.bf16.xpose.msra.mxu0 0
        %2057 = vmatprep.subr.bf16.mxu0 0
        %2058 = vmatpush1.bf16.xpose.msra.mxu0 0
        %2059 = vmatprep.subr.bf16.mxu0 0
        %2060 = vmatpush1.bf16.xpose.msra.mxu0 0
        %2061 = vmatprep.subr.bf16.mxu0 0
        %2062 = vmatpush1.bf16.xpose.msra.mxu0 0
        %2063 = vmatprep.subr.bf16.mxu0 0
        %2064 = vmatpush1.bf16.xpose.msra.mxu0 0
        %2065 = vmatprep.subr.bf16.mxu0 0
        %2066 = vmatpush1.bf16.xpose.msra.mxu0 0
        %2067 = vmatprep.subr.bf16.mxu0 0
        %2068 = vmatpush1.bf16.xpose.msra.mxu0 0
        %2069 = vmatprep.subr.bf16.mxu0 0
        %2070 = vmatpush1.bf16.xpose.msra.mxu0 0
        %2071 = vmatprep.subr.bf16.mxu0 0
        %2072 = vmatpush1.bf16.xpose.msra.mxu0 0
        %2073 = vmatprep.subr.bf16.mxu0 0
        %2074 = vmatpush1.bf16.xpose.msra.mxu0 0
        %2075 = vmatprep.subr.bf16.mxu0 0
        %2076 = vmatpush1.bf16.xpose.msra.mxu0 0
        %2077 = vmatprep.subr.bf16.mxu0 0
        %2078 = vmatpush1.bf16.xpose.msra.mxu0 0
        %2079 = vmatprep.mubr.bf16.mxu0 0
        %2080 = vmatmul.mubr.bf16.gmra.mrb[0].mxu0 %v2042
        %v2081 = vpop.f32.mrb[0].mxu0
        %v2082 = vadd.f32 0.0, %v2081
        %v2083 = vpop.f32.mrb[0].mxu0
        %v2084 = vpop.f32.mrb[0].mxu0
        %v2085 = vadd.f32 0.0, %v2084
        %v2086 = vpop.f32.mrb[0].mxu0
        %2087 = vdwg.mxu0
        %v2088 = vsel %vm725, 1, 0
        %v2089 = vsel %vm726, 1, 0
        %vm2090 = vcmp.eq.s32.totalorder %v2088, 1
        %vm2091 = vcmp.eq.s32.totalorder %v2089, 1
        %v2092 = vsel %vm2090, %v1941, -1e+30
        %v2093 = vsel %vm2091, %v1944, -1e+30
        %v2094 = vsel %vm2090, %v1988, -1e+30
        %v2095 = vsel %vm2091, %v1991, -1e+30
        %v2096 = vsel %vm2090, %v2035, -1e+30
        %v2097 = vsel %vm2091, %v2038, -1e+30
        %v2098 = vsel %vm2090, %v2082, -1e+30
        %v2099 = vsel %vm2091, %v2085, -1e+30
        %vm2100 = vcmask 130048
        %v2101 = vsel %vm2100, %v2092, -inf
        %2102 = vmax.xlane.f32.xlu0 %v2101
        %v2103 = vpop.xlane.xlu0 %2102
        %v2104 = vsel %vm2100, %v2093, -inf
        %2105 = vmax.xlane.f32.xlu0 %v2104
        %v2106 = vpop.xlane.xlu0 %2105
        %v2107 = vsel %vm2100, %v2094, -inf
        %2108 = vmax.xlane.f32.xlu0 %v2107
        %v2109 = vpop.xlane.xlu0 %2108
        %v2110 = vsel %vm2100, %v2095, -inf
        %2111 = vmax.xlane.f32.xlu0 %v2110
        %v2112 = vpop.xlane.xlu0 %2111
        %v2113 = vsel %vm2100, %v2096, -inf
        %2114 = vmax.xlane.f32.xlu0 %v2113
        %v2115 = vpop.xlane.xlu0 %2114
        %v2116 = vsel %vm2100, %v2097, -inf
        %2117 = vmax.xlane.f32.xlu0 %v2116
        %v2118 = vpop.xlane.xlu0 %2117
        %v2119 = vsel %vm2100, %v2098, -inf
        %2120 = vmax.xlane.f32.xlu0 %v2119
        %v2121 = vpop.xlane.xlu0 %2120
        %v2122 = vsel %vm2100, %v2099, -inf
        %2123 = vmax.xlane.f32.xlu0 %v2122
        %v2124 = vpop.xlane.xlu0 %2123
        %v2125 = vsub.f32 %v2092, %v2103
        %v2126 = vsub.f32 %v2093, %v2106
        %v2127 = vsub.f32 %v2094, %v2109
        %v2128 = vsub.f32 %v2095, %v2112
        %v2129 = vsub.f32 %v2096, %v2115
        %v2130 = vsub.f32 %v2097, %v2118
        %v2131 = vsub.f32 %v2098, %v2121
        %v2132 = vsub.f32 %v2099, %v2124
        %v2133 = vmul.f32 %v2125, 1.442695
        %v2134 = vpow.pop %v2133
        %v2135 = vmul.f32 %v2126, 1.442695
        %v2136 = vpow.pop %v2135
        %v2137 = vmul.f32 %v2127, 1.442695
        %v2138 = vpow.pop %v2137
        %v2139 = vmul.f32 %v2128, 1.442695
        %v2140 = vpow.pop %v2139
        %v2141 = vmul.f32 %v2129, 1.442695
        %v2142 = vpow.pop %v2141
        %v2143 = vmul.f32 %v2130, 1.442695
        %v2144 = vpow.pop %v2143
        %v2145 = vmul.f32 %v2131, 1.442695
        %v2146 = vpow.pop %v2145
        %v2147 = vmul.f32 %v2132, 1.442695
        %v2148 = vpow.pop %v2147
        %v2149 = vsel %vm2100, %v2134, 0.0
        %2150 = vadd.xlane.f32.xlu0 %v2149
        %v2151 = vpop.xlane.xlu0 %2150
        %v2152 = vsel %vm2100, %v2136, 0.0
        %2153 = vadd.xlane.f32.xlu0 %v2152
        %v2154 = vpop.xlane.xlu0 %2153
        %v2155 = vsel %vm2100, %v2138, 0.0
        %2156 = vadd.xlane.f32.xlu0 %v2155
        %v2157 = vpop.xlane.xlu0 %2156
        %v2158 = vsel %vm2100, %v2140, 0.0
        %2159 = vadd.xlane.f32.xlu0 %v2158
        %v2160 = vpop.xlane.xlu0 %2159
        %v2161 = vsel %vm2100, %v2142, 0.0
        %2162 = vadd.xlane.f32.xlu0 %v2161
        %v2163 = vpop.xlane.xlu0 %2162
        %v2164 = vsel %vm2100, %v2144, 0.0
        %2165 = vadd.xlane.f32.xlu0 %v2164
        %v2166 = vpop.xlane.xlu0 %2165
        %v2167 = vsel %vm2100, %v2146, 0.0
        %2168 = vadd.xlane.f32.xlu0 %v2167
        %v2169 = vpop.xlane.xlu0 %2168
        %v2170 = vsel %vm2100, %v2148, 0.0
        %2171 = vadd.xlane.f32.xlu0 %v2170
        %v2172 = vpop.xlane.xlu0 %2171
        %v2173 = vrcp.pop %v2151
        %v2174 = vrcp.pop %v2154
        %v2175 = vrcp.pop %v2157
        %v2176 = vrcp.pop %v2160
        %v2177 = vrcp.pop %v2163
        %v2178 = vrcp.pop %v2166
        %v2179 = vrcp.pop %v2169
        %v2180 = vrcp.pop %v2172
        %v2181 = vmul.f32 %v2134, %v2173
        %v2182 = vmul.f32 %v2136, %v2174
        %v2183 = vmul.f32 %v2138, %v2175
        %v2184 = vmul.f32 %v2140, %v2176
        %v2185 = vmul.f32 %v2142, %v2177
        %v2186 = vmul.f32 %v2144, %v2178
        %v2187 = vmul.f32 %v2146, %v2179
        %v2188 = vmul.f32 %v2148, %v2180
        %v2189 = vpack.c.bf16 %v2182, %v2181
        %v2190 = vpack.c.bf16 %v2184, %v2183
        %v2191 = vpack.c.bf16 %v2186, %v2185
        %v2192 = vpack.c.bf16 %v2188, %v2187
        %v2193 = vpack.c.bf16 %v1887, %v1819
        %v2194 = vpack.c.bf16 %v1888, %v1820
        %v2195 = vpack.c.bf16 %v1889, %v1821
        %v2196 = vpack.c.bf16 %v1890, %v1822
        %v2198 = vsel %vm2100, %v2189, 0
        %2200 = vmatprep.subr.bf16.mxu0 0
        %2201 = vmatpush1.bf16.msra.mxu0 %v2193
        %2202 = vmatprep.subr.bf16.mxu0 0
        %2203 = vmatpush1.bf16.msra.mxu0 0
        %2204 = vmatprep.subr.bf16.mxu0 0
        %2205 = vmatpush1.bf16.msra.mxu0 0
        %2206 = vmatprep.subr.bf16.mxu0 0
        %2207 = vmatpush1.bf16.msra.mxu0 0
        %2208 = vmatprep.subr.bf16.mxu0 0
        %2209 = vmatpush1.bf16.msra.mxu0 0
        %2210 = vmatprep.subr.bf16.mxu0 0
        %2211 = vmatpush1.bf16.msra.mxu0 0
        %2212 = vmatprep.subr.bf16.mxu0 0
        %2213 = vmatpush1.bf16.msra.mxu0 0
        %2214 = vmatprep.subr.bf16.mxu0 0
        %2215 = vmatpush1.bf16.msra.mxu0 0
        %2216 = vmatprep.subr.bf16.mxu0 0
        %2217 = vmatpush1.bf16.msra.mxu0 0
        %2218 = vmatprep.subr.bf16.mxu0 0
        %2219 = vmatpush1.bf16.msra.mxu0 0
        %2220 = vmatprep.subr.bf16.mxu0 0
        %2221 = vmatpush1.bf16.msra.mxu0 0
        %2222 = vmatprep.subr.bf16.mxu0 0
        %2223 = vmatpush1.bf16.msra.mxu0 0
        %2224 = vmatprep.subr.bf16.mxu0 0
        %2225 = vmatpush1.bf16.msra.mxu0 0
        %2226 = vmatprep.subr.bf16.mxu0 0
        %2227 = vmatpush1.bf16.msra.mxu0 0
        %2228 = vmatprep.subr.bf16.mxu0 0
        %2229 = vmatpush1.bf16.msra.mxu0 0
        %2230 = vmatprep.subr.bf16.mxu0 0
        %2231 = vmatpush1.bf16.msra.mxu0 0
        %2232 = vmatprep.mubr.bf16.mxu0 0
        %2233 = vmatmul.mubr.bf16.gmra.mrb[0].mxu0 %v2198
        %v2234 = vpop.f32.mrb[0].mxu0
        %v2235 = vadd.f32 0.0, %v2234
        %v2236 = vpop.f32.mrb[0].mxu0
        %v2237 = vpop.f32.mrb[0].mxu0
        %v2238 = vadd.f32 0.0, %v2237
        %v2239 = vpop.f32.mrb[0].mxu0
        %2240 = vdwg.mxu0
        %v2242 = vsel %vm2100, %v2190, 0
        %2244 = vmatprep.subr.bf16.mxu0 0
        %2245 = vmatpush1.bf16.msra.mxu0 %v2194
        %2246 = vmatprep.subr.bf16.mxu0 0
        %2247 = vmatpush1.bf16.msra.mxu0 0
        %2248 = vmatprep.subr.bf16.mxu0 0
        %2249 = vmatpush1.bf16.msra.mxu0 0
        %2250 = vmatprep.subr.bf16.mxu0 0
        %2251 = vmatpush1.bf16.msra.mxu0 0
        %2252 = vmatprep.subr.bf16.mxu0 0
        %2253 = vmatpush1.bf16.msra.mxu0 0
        %2254 = vmatprep.subr.bf16.mxu0 0
        %2255 = vmatpush1.bf16.msra.mxu0 0
        %2256 = vmatprep.subr.bf16.mxu0 0
        %2257 = vmatpush1.bf16.msra.mxu0 0
        %2258 = vmatprep.subr.bf16.mxu0 0
        %2259 = vmatpush1.bf16.msra.mxu0 0
        %2260 = vmatprep.subr.bf16.mxu0 0
        %2261 = vmatpush1.bf16.msra.mxu0 0
        %2262 = vmatprep.subr.bf16.mxu0 0
        %2263 = vmatpush1.bf16.msra.mxu0 0
        %2264 = vmatprep.subr.bf16.mxu0 0
        %2265 = vmatpush1.bf16.msra.mxu0 0
        %2266 = vmatprep.subr.bf16.mxu0 0
        %2267 = vmatpush1.bf16.msra.mxu0 0
        %2268 = vmatprep.subr.bf16.mxu0 0
        %2269 = vmatpush1.bf16.msra.mxu0 0
        %2270 = vmatprep.subr.bf16.mxu0 0
        %2271 = vmatpush1.bf16.msra.mxu0 0
        %2272 = vmatprep.subr.bf16.mxu0 0
        %2273 = vmatpush1.bf16.msra.mxu0 0
        %2274 = vmatprep.subr.bf16.mxu0 0
        %2275 = vmatpush1.bf16.msra.mxu0 0
        %2276 = vmatprep.mubr.bf16.mxu0 0
        %2277 = vmatmul.mubr.bf16.gmra.mrb[0].mxu0 %v2242
        %v2278 = vpop.f32.mrb[0].mxu0
        %v2279 = vadd.f32 0.0, %v2278
        %v2280 = vpop.f32.mrb[0].mxu0
        %v2281 = vpop.f32.mrb[0].mxu0
        %v2282 = vadd.f32 0.0, %v2281
        %v2283 = vpop.f32.mrb[0].mxu0
        %2284 = vdwg.mxu0
        %v2286 = vsel %vm2100, %v2191, 0
        %2288 = vmatprep.subr.bf16.mxu0 0
        %2289 = vmatpush1.bf16.msra.mxu0 %v2195
        %2290 = vmatprep.subr.bf16.mxu0 0
        %2291 = vmatpush1.bf16.msra.mxu0 0
        %2292 = vmatprep.subr.bf16.mxu0 0
        %2293 = vmatpush1.bf16.msra.mxu0 0
        %2294 = vmatprep.subr.bf16.mxu0 0
        %2295 = vmatpush1.bf16.msra.mxu0 0
        %2296 = vmatprep.subr.bf16.mxu0 0
        %2297 = vmatpush1.bf16.msra.mxu0 0
        %2298 = vmatprep.subr.bf16.mxu0 0
        %2299 = vmatpush1.bf16.msra.mxu0 0
        %2300 = vmatprep.subr.bf16.mxu0 0
        %2301 = vmatpush1.bf16.msra.mxu0 0
        %2302 = vmatprep.subr.bf16.mxu0 0
        %2303 = vmatpush1.bf16.msra.mxu0 0
        %2304 = vmatprep.subr.bf16.mxu0 0
        %2305 = vmatpush1.bf16.msra.mxu0 0
        %2306 = vmatprep.subr.bf16.mxu0 0
        %2307 = vmatpush1.bf16.msra.mxu0 0
        %2308 = vmatprep.subr.bf16.mxu0 0
        %2309 = vmatpush1.bf16.msra.mxu0 0
        %2310 = vmatprep.subr.bf16.mxu0 0
        %2311 = vmatpush1.bf16.msra.mxu0 0
        %2312 = vmatprep.subr.bf16.mxu0 0
        %2313 = vmatpush1.bf16.msra.mxu0 0
        %2314 = vmatprep.subr.bf16.mxu0 0
        %2315 = vmatpush1.bf16.msra.mxu0 0
        %2316 = vmatprep.subr.bf16.mxu0 0
        %2317 = vmatpush1.bf16.msra.mxu0 0
        %2318 = vmatprep.subr.bf16.mxu0 0
        %2319 = vmatpush1.bf16.msra.mxu0 0
        %2320 = vmatprep.mubr.bf16.mxu0 0
        %2321 = vmatmul.mubr.bf16.gmra.mrb[0].mxu0 %v2286
        %v2322 = vpop.f32.mrb[0].mxu0
        %v2323 = vadd.f32 0.0, %v2322
        %v2324 = vpop.f32.mrb[0].mxu0
        %v2325 = vpop.f32.mrb[0].mxu0
        %v2326 = vadd.f32 0.0, %v2325
        %v2327 = vpop.f32.mrb[0].mxu0
        %2328 = vdwg.mxu0
        %v2330 = vsel %vm2100, %v2192, 0
        %2332 = vmatprep.subr.bf16.mxu0 0
        %2333 = vmatpush1.bf16.msra.mxu0 %v2196
        %2334 = vmatprep.subr.bf16.mxu0 0
        %2335 = vmatpush1.bf16.msra.mxu0 0
        %2336 = vmatprep.subr.bf16.mxu0 0
        %2337 = vmatpush1.bf16.msra.mxu0 0
        %2338 = vmatprep.subr.bf16.mxu0 0
        %2339 = vmatpush1.bf16.msra.mxu0 0
        %2340 = vmatprep.subr.bf16.mxu0 0
        %2341 = vmatpush1.bf16.msra.mxu0 0
        %2342 = vmatprep.subr.bf16.mxu0 0
        %2343 = vmatpush1.bf16.msra.mxu0 0
        %2344 = vmatprep.subr.bf16.mxu0 0
        %2345 = vmatpush1.bf16.msra.mxu0 0
        %2346 = vmatprep.subr.bf16.mxu0 0
        %2347 = vmatpush1.bf16.msra.mxu0 0
        %2348 = vmatprep.subr.bf16.mxu0 0
        %2349 = vmatpush1.bf16.msra.mxu0 0
        %2350 = vmatprep.subr.bf16.mxu0 0
        %2351 = vmatpush1.bf16.msra.mxu0 0
        %2352 = vmatprep.subr.bf16.mxu0 0
        %2353 = vmatpush1.bf16.msra.mxu0 0
        %2354 = vmatprep.subr.bf16.mxu0 0
        %2355 = vmatpush1.bf16.msra.mxu0 0
        %2356 = vmatprep.subr.bf16.mxu0 0
        %2357 = vmatpush1.bf16.msra.mxu0 0
        %2358 = vmatprep.subr.bf16.mxu0 0
        %2359 = vmatpush1.bf16.msra.mxu0 0
        %2360 = vmatprep.subr.bf16.mxu0 0
        %2361 = vmatpush1.bf16.msra.mxu0 0
        %2362 = vmatprep.subr.bf16.mxu0 0
        %2363 = vmatpush1.bf16.msra.mxu0 0
        %2364 = vmatprep.mubr.bf16.mxu0 0
        %2365 = vmatmul.mubr.bf16.gmra.mrb[0].mxu0 %v2330
        %v2366 = vpop.f32.mrb[0].mxu0
        %v2367 = vadd.f32 0.0, %v2366
        %v2368 = vpop.f32.mrb[0].mxu0
        %v2369 = vpop.f32.mrb[0].mxu0
        %v2370 = vadd.f32 0.0, %v2369
        %v2371 = vpop.f32.mrb[0].mxu0
        %2372 = vdwg.mxu0
        %v2373 = vcombine.low %v2235, %v2323
        %v2374 = vcombine.high %v2235, %v2323
        %v2376 = vunpack.c.l.s4 1983009808
        %v2377 = vunpack.c.0.s8 %v2376
        %v2378 = vlaneseq
        %v2379 = vshrl.u32 %v2378, 7
        %v2380 = vsub.s32 %v2377, %v2379
        %v2381 = vrot.slane %v2373, %v2380
        %v2383 = vunpack.c.l.s4 1983009808
        %v2384 = vunpack.c.0.s8 %v2383
        %v2385 = vlaneseq
        %v2386 = vshrl.u32 %v2385, 7
        %v2387 = vsub.s32 %v2384, %v2386
        %v2388 = vrot.slane %v2374, %v2387
        %v2389 = vcombine.low %v2279, %v2367
        %v2390 = vcombine.high %v2279, %v2367
        %v2392 = vunpack.c.l.s4 1983009808
        %v2393 = vunpack.c.0.s8 %v2392
        %v2394 = vlaneseq
        %v2395 = vshrl.u32 %v2394, 7
        %v2396 = vsub.s32 %v2393, %v2395
        %v2397 = vrot.slane %v2389, %v2396
        %v2399 = vunpack.c.l.s4 1983009808
        %v2400 = vunpack.c.0.s8 %v2399
        %v2401 = vlaneseq
        %v2402 = vshrl.u32 %v2401, 7
        %v2403 = vsub.s32 %v2400, %v2402
        %v2404 = vrot.slane %v2390, %v2403
        %v2405 = vcombine.low %v2381, %v2397
        %v2406 = vcombine.high %v2381, %v2397
        %v2408 = vunpack.c.l.s4 1934713408
        %v2409 = vunpack.c.0.s8 %v2408
        %v2410 = vlaneseq
        %v2411 = vshrl.u32 %v2410, 7
        %v2412 = vsub.s32 %v2409, %v2411
        %v2413 = vrot.slane %v2405, %v2412
        %v2415 = vunpack.c.l.s4 1934713408
        %v2416 = vunpack.c.0.s8 %v2415
        %v2417 = vlaneseq
        %v2418 = vshrl.u32 %v2417, 7
        %v2419 = vsub.s32 %v2416, %v2418
        %v2420 = vrot.slane %v2406, %v2419
        %v2421 = vcombine.low %v2388, %v2404
        %v2422 = vcombine.high %v2388, %v2404
        %v2424 = vunpack.c.l.s4 1934713408
        %v2425 = vunpack.c.0.s8 %v2424
        %v2426 = vlaneseq
        %v2427 = vshrl.u32 %v2426, 7
        %v2428 = vsub.s32 %v2425, %v2427
        %v2429 = vrot.slane %v2421, %v2428
        %v2431 = vunpack.c.l.s4 1934713408
        %v2432 = vunpack.c.0.s8 %v2431
        %v2433 = vlaneseq
        %v2434 = vshrl.u32 %v2433, 7
        %v2435 = vsub.s32 %v2432, %v2434
        %v2436 = vrot.slane %v2422, %v2435
        %v2437 = vcombine.high %v2413, 0.0
        %v2438 = vcombine.high %v2420, 0.0
        %v2439 = vcombine.high %v2429, 0.0
        %v2440 = vcombine.high %v2436, 0.0
        %v2441 = vcombine.low %v2238, %v2326
        %v2442 = vcombine.high %v2238, %v2326
        %v2444 = vunpack.c.l.s4 1983009808
        %v2445 = vunpack.c.0.s8 %v2444
        %v2446 = vlaneseq
        %v2447 = vshrl.u32 %v2446, 7
        %v2448 = vsub.s32 %v2445, %v2447
        %v2449 = vrot.slane %v2441, %v2448
        %v2451 = vunpack.c.l.s4 1983009808
        %v2452 = vunpack.c.0.s8 %v2451
        %v2453 = vlaneseq
        %v2454 = vshrl.u32 %v2453, 7
        %v2455 = vsub.s32 %v2452, %v2454
        %v2456 = vrot.slane %v2442, %v2455
        %v2457 = vcombine.low %v2282, %v2370
        %v2458 = vcombine.high %v2282, %v2370
        %v2460 = vunpack.c.l.s4 1983009808
        %v2461 = vunpack.c.0.s8 %v2460
        %v2462 = vlaneseq
        %v2463 = vshrl.u32 %v2462, 7
        %v2464 = vsub.s32 %v2461, %v2463
        %v2465 = vrot.slane %v2457, %v2464
        %v2467 = vunpack.c.l.s4 1983009808
        %v2468 = vunpack.c.0.s8 %v2467
        %v2469 = vlaneseq
        %v2470 = vshrl.u32 %v2469, 7
        %v2471 = vsub.s32 %v2468, %v2470
        %v2472 = vrot.slane %v2458, %v2471
        %v2473 = vcombine.low %v2449, %v2465
        %v2474 = vcombine.high %v2449, %v2465
        %v2476 = vunpack.c.l.s4 1934713408
        %v2477 = vunpack.c.0.s8 %v2476
        %v2478 = vlaneseq
        %v2479 = vshrl.u32 %v2478, 7
        %v2480 = vsub.s32 %v2477, %v2479
        %v2481 = vrot.slane %v2473, %v2480
        %v2483 = vunpack.c.l.s4 1934713408
        %v2484 = vunpack.c.0.s8 %v2483
        %v2485 = vlaneseq
        %v2486 = vshrl.u32 %v2485, 7
        %v2487 = vsub.s32 %v2484, %v2486
        %v2488 = vrot.slane %v2474, %v2487
        %v2489 = vcombine.low %v2456, %v2472
        %v2490 = vcombine.high %v2456, %v2472
        %v2492 = vunpack.c.l.s4 1934713408
        %v2493 = vunpack.c.0.s8 %v2492
        %v2494 = vlaneseq
        %v2495 = vshrl.u32 %v2494, 7
        %v2496 = vsub.s32 %v2493, %v2495
        %v2497 = vrot.slane %v2489, %v2496
        %v2499 = vunpack.c.l.s4 1934713408
        %v2500 = vunpack.c.0.s8 %v2499
        %v2501 = vlaneseq
        %v2502 = vshrl.u32 %v2501, 7
        %v2503 = vsub.s32 %v2500, %v2502
        %v2504 = vrot.slane %v2490, %v2503
        %v2505 = vcombine.high %v2481, 0.0
        %v2506 = vcombine.high %v2488, 0.0
        %v2507 = vcombine.high %v2497, 0.0
        %v2508 = vcombine.high %v2504, 0.0
        %v2509 = vcombine.low %v2413, %v2420
        %v2511 = vunpack.c.l.s4 1983009808
        %v2512 = vunpack.c.0.s8 %v2511
        %v2513 = vlaneseq
        %v2514 = vshrl.u32 %v2513, 7
        %v2515 = vsub.s32 %v2512, %v2514
        %v2516 = vrot.slane %v2509, %v2515
        %v2517 = vcombine.low %v2437, %v2438
        %v2519 = vunpack.c.l.s4 1983009808
        %v2520 = vunpack.c.0.s8 %v2519
        %v2521 = vlaneseq
        %v2522 = vshrl.u32 %v2521, 7
        %v2523 = vsub.s32 %v2520, %v2522
        %v2524 = vrot.slane %v2517, %v2523
        %v2525 = vcombine.low %v2429, %v2436
        %v2527 = vunpack.c.l.s4 1983009808
        %v2528 = vunpack.c.0.s8 %v2527
        %v2529 = vlaneseq
        %v2530 = vshrl.u32 %v2529, 7
        %v2531 = vsub.s32 %v2528, %v2530
        %v2532 = vrot.slane %v2525, %v2531
        %v2533 = vcombine.low %v2439, %v2440
        %v2535 = vunpack.c.l.s4 1983009808
        %v2536 = vunpack.c.0.s8 %v2535
        %v2537 = vlaneseq
        %v2538 = vshrl.u32 %v2537, 7
        %v2539 = vsub.s32 %v2536, %v2538
        %v2540 = vrot.slane %v2533, %v2539
        %v2541 = vcombine.low %v2516, %v2524
        %v2542 = vcombine.high %v2516, %v2524
        %v2544 = vunpack.c.l.s4 1934713408
        %v2545 = vunpack.c.0.s8 %v2544
        %v2546 = vlaneseq
        %v2547 = vshrl.u32 %v2546, 7
        %v2548 = vsub.s32 %v2545, %v2547
        %v2549 = vrot.slane %v2541, %v2548
        %v2551 = vunpack.c.l.s4 1934713408
        %v2552 = vunpack.c.0.s8 %v2551
        %v2553 = vlaneseq
        %v2554 = vshrl.u32 %v2553, 7
        %v2555 = vsub.s32 %v2552, %v2554
        %v2556 = vrot.slane %v2542, %v2555
        %v2557 = vcombine.low %v2532, %v2540
        %v2558 = vcombine.high %v2532, %v2540
        %v2560 = vunpack.c.l.s4 1934713408
        %v2561 = vunpack.c.0.s8 %v2560
        %v2562 = vlaneseq
        %v2563 = vshrl.u32 %v2562, 7
        %v2564 = vsub.s32 %v2561, %v2563
        %v2565 = vrot.slane %v2557, %v2564
        %v2567 = vunpack.c.l.s4 1934713408
        %v2568 = vunpack.c.0.s8 %v2567
        %v2569 = vlaneseq
        %v2570 = vshrl.u32 %v2569, 7
        %v2571 = vsub.s32 %v2568, %v2570
        %v2572 = vrot.slane %v2558, %v2571
        %v2573 = vcombine.low %v2549, %v2565
        %v2574 = vcombine.high %v2549, %v2565
        %v2575 = vcombine.low %v2556, %v2572
        %v2576 = vcombine.high %v2556, %v2572
        %v2577 = vcombine.low %v2481, %v2488
        %v2579 = vunpack.c.l.s4 1983009808
        %v2580 = vunpack.c.0.s8 %v2579
        %v2581 = vlaneseq
        %v2582 = vshrl.u32 %v2581, 7
        %v2583 = vsub.s32 %v2580, %v2582
        %v2584 = vrot.slane %v2577, %v2583
        %v2585 = vcombine.low %v2505, %v2506
        %v2587 = vunpack.c.l.s4 1983009808
        %v2588 = vunpack.c.0.s8 %v2587
        %v2589 = vlaneseq
        %v2590 = vshrl.u32 %v2589, 7
        %v2591 = vsub.s32 %v2588, %v2590
        %v2592 = vrot.slane %v2585, %v2591
        %v2593 = vcombine.low %v2497, %v2504
        %v2595 = vunpack.c.l.s4 1983009808
        %v2596 = vunpack.c.0.s8 %v2595
        %v2597 = vlaneseq
        %v2598 = vshrl.u32 %v2597, 7
        %v2599 = vsub.s32 %v2596, %v2598
        %v2600 = vrot.slane %v2593, %v2599
        %v2601 = vcombine.low %v2507, %v2508
        %v2603 = vunpack.c.l.s4 1983009808
        %v2604 = vunpack.c.0.s8 %v2603
        %v2605 = vlaneseq
        %v2606 = vshrl.u32 %v2605, 7
        %v2607 = vsub.s32 %v2604, %v2606
        %v2608 = vrot.slane %v2601, %v2607
        %v2609 = vcombine.low %v2584, %v2592
        %v2610 = vcombine.high %v2584, %v2592
        %v2612 = vunpack.c.l.s4 1934713408
        %v2613 = vunpack.c.0.s8 %v2612
        %v2614 = vlaneseq
        %v2615 = vshrl.u32 %v2614, 7
        %v2616 = vsub.s32 %v2613, %v2615
        %v2617 = vrot.slane %v2609, %v2616
        %v2619 = vunpack.c.l.s4 1934713408
        %v2620 = vunpack.c.0.s8 %v2619
        %v2621 = vlaneseq
        %v2622 = vshrl.u32 %v2621, 7
        %v2623 = vsub.s32 %v2620, %v2622
        %v2624 = vrot.slane %v2610, %v2623
        %v2625 = vcombine.low %v2600, %v2608
        %v2626 = vcombine.high %v2600, %v2608
        %v2628 = vunpack.c.l.s4 1934713408
        %v2629 = vunpack.c.0.s8 %v2628
        %v2630 = vlaneseq
        %v2631 = vshrl.u32 %v2630, 7
        %v2632 = vsub.s32 %v2629, %v2631
        %v2633 = vrot.slane %v2625, %v2632
        %v2635 = vunpack.c.l.s4 1934713408
        %v2636 = vunpack.c.0.s8 %v2635
        %v2637 = vlaneseq
        %v2638 = vshrl.u32 %v2637, 7
        %v2639 = vsub.s32 %v2636, %v2638
        %v2640 = vrot.slane %v2626, %v2639
        %v2641 = vcombine.low %v2617, %v2633
        %v2642 = vcombine.high %v2617, %v2633
        %v2643 = vcombine.low %v2624, %v2640
        %v2644 = vcombine.high %v2624, %v2640
        %2647 = vrot.lane.b32.xlu0 %v2574, 32
        %v2648 = vpop.permute.xlu0 %2647
        %2649 = vrot.lane.b32.xlu0 %v2642, 32
        %v2650 = vpop.permute.xlu0 %2649
        %2655 = vrot.lane.b32.xlu0 %v2575, 64
        %v2656 = vpop.permute.xlu0 %2655
        %2657 = vrot.lane.b32.xlu0 %v2643, 64
        %v2658 = vpop.permute.xlu0 %2657
        %2663 = vrot.lane.b32.xlu0 %v2576, 96
        %v2664 = vpop.permute.xlu0 %2663
        %2665 = vrot.lane.b32.xlu0 %v2644, 96
        %v2666 = vpop.permute.xlu0 %2665
        %v2669 = vsel %vm1899, %v2573, %v2648
        %v2670 = vsel %vm1899, %v2641, %v2650
        %vm2671 = vcmask 523264
        %v2672 = vsel %vm2671, %v2669, %v2656
        %v2673 = vsel %vm2671, %v2670, %v2658
        %vm2674 = vcmask 785408
        %v2675 = vsel %vm2674, %v2672, %v2664
        %v2676 = vsel %vm2674, %v2673, %v2666
        %v2677 = vadd.f32 %v716, %v2675
        %v2678 = vadd.f32 %v719, %v2676
        %v2679 = vld [vmem:[#allocation10] sm:$0x1]
        %v2680 = vld [vmem:[#allocation11] sm:$0x1]
        %v2681 = vadd.f32 %v2677, %v2678
        %v2682 = vrot.slane %v2681, 4
        %v2683 = vadd.f32 %v2681, %v2682
        %v2684 = vrot.slane %v2683, 2
        %v2685 = vadd.f32 %v2683, %v2684
        %v2686 = vrot.slane %v2685, 1
        %v2687 = vadd.f32 %v2685, %v2686
        %v2688 = vmul.f32 %v2687, %v736
        %v2689 = vsub.f32 %v2677, %v2688
        %v2690 = vsub.f32 %v2678, %v2688
        %v2691 = vmul.f32 %v2689, %v2689
        %v2692 = vmul.f32 %v2690, %v2690
        %v2693 = vadd.f32 %v2691, %v2692
        %v2694 = vrot.slane %v2693, 4
        %v2695 = vadd.f32 %v2693, %v2694
        %v2696 = vrot.slane %v2695, 2
        %v2697 = vadd.f32 %v2695, %v2696
        %v2698 = vrot.slane %v2697, 1
        %v2699 = vadd.f32 %v2697, %v2698
        %v2700 = vmul.f32 %v2699, 0.06666667
        %v2702 = vlaneseq
        %v2703 = vshrl.u32 %v2702, 7
        %v2704 = vsub.s32 0, %v2703
        %v2705 = vrot.slane %v2679, %v2704
        %v2707 = vmul.f32 %v2705, %v2689
        %v2708 = vmul.f32 %v2705, %v2690
        %v2709 = vadd.f32 %v2700, 1e-05
        %v2710 = vrsqrt.pop %v2709
        %v2711 = vmul.f32 %v2707, %v2710
        %v2712 = vmul.f32 %v2708, %v2710
        %v2714 = vlaneseq
        %v2715 = vshrl.u32 %v2714, 7
        %v2716 = vsub.s32 0, %v2715
        %v2717 = vrot.slane %v2680, %v2716
        %v2719 = vadd.f32 %v2711, %v2717
        %v2720 = vadd.f32 %v2712, %v2717
        %v2721 = vpack.c.bf16 %v2720, %v2719
        %v2722 = vld [vmem:[#allocation13] sm:$0xff]
        %v2723 = vld [vmem:[#allocation13 + $0x8] sm:$0xff]
        %v2724 = vld [vmem:[#allocation13 + $0x10] sm:$0xff]
        %v2725 = vld [vmem:[#allocation13 + $0x18] sm:$0xff]
        %v2726 = vld [vmem:[#allocation13 + $0x20] sm:$0xff]
        %v2727 = vld [vmem:[#allocation13 + $0x28] sm:$0xff]
        %v2728 = vld [vmem:[#allocation13 + $0x30] sm:$0xff]
        %v2729 = vld [vmem:[#allocation13 + $0x38] sm:$0xff]
        %v2730 = vld [vmem:[#allocation13 + $0x40] sm:$0xff]
        %v2731 = vld [vmem:[#allocation13 + $0x48] sm:$0xff]
        %v2732 = vld [vmem:[#allocation13 + $0x50] sm:$0xff]
        %v2733 = vld [vmem:[#allocation13 + $0x58] sm:$0xff]
        %v2734 = vld [vmem:[#allocation13 + $0x60] sm:$0xff]
        %v2735 = vld [vmem:[#allocation13 + $0x68] sm:$0xff]
        %v2736 = vld [vmem:[#allocation13 + $0x70] sm:$0xff]
        %v2737 = vld [vmem:[#allocation13 + $0x78] sm:$0xff]
        %v2738 = vld [vmem:[#allocation13 + $0x80] sm:$0xff]
        %v2739 = vld [vmem:[#allocation13 + $0x88] sm:$0xff]
        %v2740 = vld [vmem:[#allocation13 + $0x90] sm:$0xff]
        %v2741 = vld [vmem:[#allocation13 + $0x98] sm:$0xff]
        %v2742 = vld [vmem:[#allocation13 + $0xa0] sm:$0xff]
        %v2743 = vld [vmem:[#allocation13 + $0xa8] sm:$0xff]
        %v2744 = vld [vmem:[#allocation13 + $0xb0] sm:$0xff]
        %v2745 = vld [vmem:[#allocation13 + $0xb8] sm:$0xff]
        %v2746 = vld [vmem:[#allocation13 + $0xc0] sm:$0xff]
        %v2747 = vld [vmem:[#allocation13 + $0xc8] sm:$0xff]
        %v2748 = vld [vmem:[#allocation13 + $0xd0] sm:$0xff]
        %v2749 = vld [vmem:[#allocation13 + $0xd8] sm:$0xff]
        %v2750 = vld [vmem:[#allocation13 + $0xe0] sm:$0xff]
        %v2751 = vld [vmem:[#allocation13 + $0xe8] sm:$0xff]
        %v2752 = vld [vmem:[#allocation13 + $0xf0] sm:$0xff]
        %v2753 = vld [vmem:[#allocation13 + $0xf8] sm:$0xff]
        %v2754 = vld [vmem:[%s9] sm:$0xf]
        %v2756 = vlaneseq
        %v2757 = vshrl.u32 %v2756, 7
        %v2758 = vsub.s32 0, %v2757
        %v2759 = vrot.slane %v2754, %v2758
        %v2760 = vlaneseq
        %v2761 = vshrl.u32 %v2760, 7
        %v2762 = vsub.s32 1, %v2761
        %v2763 = vrot.slane %v2754, %v2762
        %v2764 = vlaneseq
        %v2765 = vshrl.u32 %v2764, 7
        %v2766 = vsub.s32 2, %v2765
        %v2767 = vrot.slane %v2754, %v2766
        %v2768 = vlaneseq
        %v2769 = vshrl.u32 %v2768, 7
        %v2770 = vsub.s32 3, %v2769
        %v2771 = vrot.slane %v2754, %v2770
        %v2808 = vunpack.c.l.b16 %v2722
        %v2809 = vunpack.c.h.b16 %v2722
        %v2810 = vunpack.c.l.b16 %v2723
        %v2811 = vunpack.c.h.b16 %v2723
        %v2812 = vunpack.c.l.b16 %v2724
        %v2813 = vunpack.c.h.b16 %v2724
        %v2814 = vunpack.c.l.b16 %v2725
        %v2815 = vunpack.c.h.b16 %v2725
        %v2816 = vunpack.c.l.b16 %v2726
        %v2817 = vunpack.c.h.b16 %v2726
        %v2818 = vunpack.c.l.b16 %v2727
        %v2819 = vunpack.c.h.b16 %v2727
        %v2820 = vunpack.c.l.b16 %v2728
        %v2821 = vunpack.c.h.b16 %v2728
        %v2822 = vunpack.c.l.b16 %v2729
        %v2823 = vunpack.c.h.b16 %v2729
        %v2824 = vunpack.c.l.b16 %v2730
        %v2825 = vunpack.c.h.b16 %v2730
        %v2826 = vunpack.c.l.b16 %v2731
        %v2827 = vunpack.c.h.b16 %v2731
        %v2828 = vunpack.c.l.b16 %v2732
        %v2829 = vunpack.c.h.b16 %v2732
        %v2830 = vunpack.c.l.b16 %v2733
        %v2831 = vunpack.c.h.b16 %v2733
        %v2832 = vunpack.c.l.b16 %v2734
        %v2833 = vunpack.c.h.b16 %v2734
        %v2834 = vunpack.c.l.b16 %v2735
        %v2835 = vunpack.c.h.b16 %v2735
        %v2836 = vunpack.c.l.b16 %v2736
        %v2837 = vunpack.c.h.b16 %v2736
        %v2838 = vunpack.c.l.b16 %v2737
        %v2839 = vunpack.c.h.b16 %v2737
        %v2840 = vunpack.c.l.b16 %v2738
        %v2841 = vunpack.c.h.b16 %v2738
        %v2842 = vunpack.c.l.b16 %v2739
        %v2843 = vunpack.c.h.b16 %v2739
        %v2844 = vunpack.c.l.b16 %v2740
        %v2845 = vunpack.c.h.b16 %v2740
        %v2846 = vunpack.c.l.b16 %v2741
        %v2847 = vunpack.c.h.b16 %v2741
        %v2848 = vunpack.c.l.b16 %v2742
        %v2849 = vunpack.c.h.b16 %v2742
        %v2850 = vunpack.c.l.b16 %v2743
        %v2851 = vunpack.c.h.b16 %v2743
        %v2852 = vunpack.c.l.b16 %v2744
        %v2853 = vunpack.c.h.b16 %v2744
        %v2854 = vunpack.c.l.b16 %v2745
        %v2855 = vunpack.c.h.b16 %v2745
        %v2856 = vunpack.c.l.b16 %v2746
        %v2857 = vunpack.c.h.b16 %v2746
        %v2858 = vunpack.c.l.b16 %v2747
        %v2859 = vunpack.c.h.b16 %v2747
        %v2860 = vunpack.c.l.b16 %v2748
        %v2861 = vunpack.c.h.b16 %v2748
        %v2862 = vunpack.c.l.b16 %v2749
        %v2863 = vunpack.c.h.b16 %v2749
        %v2864 = vunpack.c.l.b16 %v2750
        %v2865 = vunpack.c.h.b16 %v2750
        %v2866 = vunpack.c.l.b16 %v2751
        %v2867 = vunpack.c.h.b16 %v2751
        %v2868 = vunpack.c.l.b16 %v2752
        %v2869 = vunpack.c.h.b16 %v2752
        %v2870 = vunpack.c.l.b16 %v2753
        %v2871 = vunpack.c.h.b16 %v2753
        %v2872 = vpack.c.b16 %v2812, %v2808
        %v2873 = vpack.c.b16 %v2813, %v2809
        %v2874 = vpack.c.b16 %v2814, %v2810
        %v2875 = vpack.c.b16 %v2815, %v2811
        %v2876 = vpack.c.b16 %v2820, %v2816
        %v2877 = vpack.c.b16 %v2821, %v2817
        %v2878 = vpack.c.b16 %v2822, %v2818
        %v2879 = vpack.c.b16 %v2823, %v2819
        %v2880 = vpack.c.b16 %v2828, %v2824
        %v2881 = vpack.c.b16 %v2829, %v2825
        %v2882 = vpack.c.b16 %v2830, %v2826
        %v2883 = vpack.c.b16 %v2831, %v2827
        %v2884 = vpack.c.b16 %v2836, %v2832
        %v2885 = vpack.c.b16 %v2837, %v2833
        %v2886 = vpack.c.b16 %v2838, %v2834
        %v2887 = vpack.c.b16 %v2839, %v2835
        %v2888 = vpack.c.b16 %v2844, %v2840
        %v2889 = vpack.c.b16 %v2845, %v2841
        %v2890 = vpack.c.b16 %v2846, %v2842
        %v2891 = vpack.c.b16 %v2847, %v2843
        %v2892 = vpack.c.b16 %v2852, %v2848
        %v2893 = vpack.c.b16 %v2853, %v2849
        %v2894 = vpack.c.b16 %v2854, %v2850
        %v2895 = vpack.c.b16 %v2855, %v2851
        %v2896 = vpack.c.b16 %v2860, %v2856
        %v2897 = vpack.c.b16 %v2861, %v2857
        %v2898 = vpack.c.b16 %v2862, %v2858
        %v2899 = vpack.c.b16 %v2863, %v2859
        %v2900 = vpack.c.b16 %v2868, %v2864
        %v2901 = vpack.c.b16 %v2869, %v2865
        %v2902 = vpack.c.b16 %v2870, %v2866
        %v2903 = vpack.c.b16 %v2871, %v2867
        %2936 = vmatprep.subr.bf16.mxu0 %v2873
        %2937 = vmatpush1.bf16.msra.mxu0 %v2872
        %2938 = vmatprep.subr.bf16.mxu0 %v2877
        %2939 = vmatpush1.bf16.msra.mxu0 %v2876
        %2940 = vmatprep.subr.bf16.mxu0 %v2881
        %2941 = vmatpush1.bf16.msra.mxu0 %v2880
        %2942 = vmatprep.subr.bf16.mxu0 %v2885
        %2943 = vmatpush1.bf16.msra.mxu0 %v2884
        %2944 = vmatprep.subr.bf16.mxu0 %v2889
        %2945 = vmatpush1.bf16.msra.mxu0 %v2888
        %2946 = vmatprep.subr.bf16.mxu0 %v2893
        %2947 = vmatpush1.bf16.msra.mxu0 %v2892
        %2948 = vmatprep.subr.bf16.mxu0 %v2897
        %2949 = vmatpush1.bf16.msra.mxu0 %v2896
        %2950 = vmatprep.subr.bf16.mxu0 %v2901
        %2951 = vmatpush1.bf16.msra.mxu0 %v2900
        %2952 = vmatprep.subr.bf16.mxu0 0
        %2953 = vmatpush1.bf16.msra.mxu0 0
        %2954 = vmatprep.subr.bf16.mxu0 0
        %2955 = vmatpush1.bf16.msra.mxu0 0
        %2956 = vmatprep.subr.bf16.mxu0 0
        %2957 = vmatpush1.bf16.msra.mxu0 0
        %2958 = vmatprep.subr.bf16.mxu0 0
        %2959 = vmatpush1.bf16.msra.mxu0 0
        %2960 = vmatprep.subr.bf16.mxu0 0
        %2961 = vmatpush1.bf16.msra.mxu0 0
        %2962 = vmatprep.subr.bf16.mxu0 0
        %2963 = vmatpush1.bf16.msra.mxu0 0
        %2964 = vmatprep.subr.bf16.mxu0 0
        %2965 = vmatpush1.bf16.msra.mxu0 0
        %2966 = vmatprep.subr.bf16.mxu0 0
        %2967 = vmatpush1.bf16.msra.mxu0 0
        %2968 = vmatprep.mubr.bf16.mxu0 0
        %2969 = vmatmul.mubr.bf16.gmra.mrb[0].mxu0 %v2721
        %v2970 = vpop.f32.mrb[0].mxu0
        %v2971 = vadd.f32 %v2759, %v2970
        %v2972 = vpop.f32.mrb[0].mxu0
        %v2973 = vadd.f32 %v2763, %v2972
        %v2974 = vpop.f32.mrb[0].mxu0
        %v2975 = vadd.f32 %v2759, %v2974
        %v2976 = vpop.f32.mrb[0].mxu0
        %v2977 = vadd.f32 %v2763, %v2976
        %2978 = vdwg.mxu0
        %2979 = vmatprep.subr.bf16.mxu0 %v2875
        %2980 = vmatpush1.bf16.msra.mxu0 %v2874
        %2981 = vmatprep.subr.bf16.mxu0 %v2879
        %2982 = vmatpush1.bf16.msra.mxu0 %v2878
        %2983 = vmatprep.subr.bf16.mxu0 %v2883
        %2984 = vmatpush1.bf16.msra.mxu0 %v2882
        %2985 = vmatprep.subr.bf16.mxu0 %v2887
        %2986 = vmatpush1.bf16.msra.mxu0 %v2886
        %2987 = vmatprep.subr.bf16.mxu0 %v2891
        %2988 = vmatpush1.bf16.msra.mxu0 %v2890
        %2989 = vmatprep.subr.bf16.mxu0 %v2895
        %2990 = vmatpush1.bf16.msra.mxu0 %v2894
        %2991 = vmatprep.subr.bf16.mxu0 %v2899
        %2992 = vmatpush1.bf16.msra.mxu0 %v2898
        %2993 = vmatprep.subr.bf16.mxu0 %v2903
        %2994 = vmatpush1.bf16.msra.mxu0 %v2902
        %2995 = vmatprep.subr.bf16.mxu0 0
        %2996 = vmatpush1.bf16.msra.mxu0 0
        %2997 = vmatprep.subr.bf16.mxu0 0
        %2998 = vmatpush1.bf16.msra.mxu0 0
        %2999 = vmatprep.subr.bf16.mxu0 0
        %3000 = vmatpush1.bf16.msra.mxu0 0
        %3001 = vmatprep.subr.bf16.mxu0 0
        %3002 = vmatpush1.bf16.msra.mxu0 0
        %3003 = vmatprep.subr.bf16.mxu0 0
        %3004 = vmatpush1.bf16.msra.mxu0 0
        %3005 = vmatprep.subr.bf16.mxu0 0
        %3006 = vmatpush1.bf16.msra.mxu0 0
        %3007 = vmatprep.subr.bf16.mxu0 0
        %3008 = vmatpush1.bf16.msra.mxu0 0
        %3009 = vmatprep.subr.bf16.mxu0 0
        %3010 = vmatpush1.bf16.msra.mxu0 0
        %3011 = vmatprep.mubr.bf16.mxu0 0
        %3012 = vmatmul.mubr.bf16.gmra.mrb[0].mxu0 %v2721
        %v3013 = vpop.f32.mrb[0].mxu0
        %v3014 = vadd.f32 %v2767, %v3013
        %v3015 = vpop.f32.mrb[0].mxu0
        %v3016 = vadd.f32 %v2771, %v3015
        %v3017 = vpop.f32.mrb[0].mxu0
        %v3018 = vadd.f32 %v2767, %v3017
        %v3019 = vpop.f32.mrb[0].mxu0
        %v3020 = vadd.f32 %v2771, %v3019
        %3021 = vdwg.mxu0
        %v3022 = vmax.f32 %v2971, 0.0
        %v3023 = vmax.f32 %v2973, 0.0
        %v3024 = vmax.f32 %v3014, 0.0
        %v3025 = vmax.f32 %v3016, 0.0
        %v3026 = vmax.f32 %v2975, 0.0
        %v3027 = vmax.f32 %v2977, 0.0
        %v3028 = vmax.f32 %v3018, 0.0
        %v3029 = vmax.f32 %v3020, 0.0
        %v3030 = vpack.c.bf16 %v3026, %v3022
        %v3031 = vpack.c.bf16 %v3027, %v3023
        %v3032 = vpack.c.bf16 %v3028, %v3024
        %v3033 = vpack.c.bf16 %v3029, %v3025
        %v3034 = vld [vmem:[#allocation14] sm:$0xf]
        %v3035 = vld [vmem:[#allocation14 + $0x4] sm:$0xf]
        %v3036 = vld [vmem:[#allocation14 + $0x8] sm:$0xf]
        %v3037 = vld [vmem:[#allocation14 + $0xc] sm:$0xf]
        %v3038 = vld [vmem:[#allocation14 + $0x10] sm:$0xf]
        %v3039 = vld [vmem:[#allocation14 + $0x14] sm:$0xf]
        %v3040 = vld [vmem:[#allocation14 + $0x18] sm:$0xf]
        %v3041 = vld [vmem:[#allocation14 + $0x1c] sm:$0xf]
        %v3042 = vld [vmem:[#allocation14 + $0x20] sm:$0xf]
        %v3043 = vld [vmem:[#allocation14 + $0x24] sm:$0xf]
        %v3044 = vld [vmem:[#allocation14 + $0x28] sm:$0xf]
        %v3045 = vld [vmem:[#allocation14 + $0x2c] sm:$0xf]
        %v3046 = vld [vmem:[#allocation14 + $0x30] sm:$0xf]
        %v3047 = vld [vmem:[#allocation14 + $0x34] sm:$0xf]
        %v3048 = vld [vmem:[#allocation14 + $0x38] sm:$0xf]
        %v3049 = vld [vmem:[#allocation14 + $0x3c] sm:$0xf]
        %v3050 = vld [vmem:[#allocation14 + $0x40] sm:$0xf]
        %v3051 = vld [vmem:[#allocation14 + $0x44] sm:$0xf]
        %v3052 = vld [vmem:[#allocation14 + $0x48] sm:$0xf]
        %v3053 = vld [vmem:[#allocation14 + $0x4c] sm:$0xf]
        %v3054 = vld [vmem:[#allocation14 + $0x50] sm:$0xf]
        %v3055 = vld [vmem:[#allocation14 + $0x54] sm:$0xf]
        %v3056 = vld [vmem:[#allocation14 + $0x58] sm:$0xf]
        %v3057 = vld [vmem:[#allocation14 + $0x5c] sm:$0xf]
        %v3058 = vld [vmem:[#allocation14 + $0x60] sm:$0xf]
        %v3059 = vld [vmem:[#allocation14 + $0x64] sm:$0xf]
        %v3060 = vld [vmem:[#allocation14 + $0x68] sm:$0xf]
        %v3061 = vld [vmem:[#allocation14 + $0x6c] sm:$0xf]
        %v3062 = vld [vmem:[#allocation14 + $0x70] sm:$0xf]
        %v3063 = vld [vmem:[#allocation14 + $0x74] sm:$0xf]
        %v3064 = vld [vmem:[#allocation14 + $0x78] sm:$0xf]
        %v3065 = vld [vmem:[#allocation14 + $0x7c] sm:$0xf]
        %v3066 = vld [vmem:[#allocation14 + $0x80] sm:$0xf]
        %v3067 = vld [vmem:[#allocation14 + $0x84] sm:$0xf]
        %v3068 = vld [vmem:[#allocation14 + $0x88] sm:$0xf]
        %v3069 = vld [vmem:[#allocation14 + $0x8c] sm:$0xf]
        %v3070 = vld [vmem:[#allocation14 + $0x90] sm:$0xf]
        %v3071 = vld [vmem:[#allocation14 + $0x94] sm:$0xf]
        %v3072 = vld [vmem:[#allocation14 + $0x98] sm:$0xf]
        %v3073 = vld [vmem:[#allocation14 + $0x9c] sm:$0xf]
        %v3074 = vld [vmem:[#allocation14 + $0xa0] sm:$0xf]
        %v3075 = vld [vmem:[#allocation14 + $0xa4] sm:$0xf]
        %v3076 = vld [vmem:[#allocation14 + $0xa8] sm:$0xf]
        %v3077 = vld [vmem:[#allocation14 + $0xac] sm:$0xf]
        %v3078 = vld [vmem:[#allocation14 + $0xb0] sm:$0xf]
        %v3079 = vld [vmem:[#allocation14 + $0xb4] sm:$0xf]
        %v3080 = vld [vmem:[#allocation14 + $0xb8] sm:$0xf]
        %v3081 = vld [vmem:[#allocation14 + $0xbc] sm:$0xf]
        %v3082 = vld [vmem:[#allocation14 + $0xc0] sm:$0xf]
        %v3083 = vld [vmem:[#allocation14 + $0xc4] sm:$0xf]
        %v3084 = vld [vmem:[#allocation14 + $0xc8] sm:$0xf]
        %v3085 = vld [vmem:[#allocation14 + $0xcc] sm:$0xf]
        %v3086 = vld [vmem:[#allocation14 + $0xd0] sm:$0xf]
        %v3087 = vld [vmem:[#allocation14 + $0xd4] sm:$0xf]
        %v3088 = vld [vmem:[#allocation14 + $0xd8] sm:$0xf]
        %v3089 = vld [vmem:[#allocation14 + $0xdc] sm:$0xf]
        %v3090 = vld [vmem:[#allocation14 + $0xe0] sm:$0xf]
        %v3091 = vld [vmem:[#allocation14 + $0xe4] sm:$0xf]
        %v3092 = vld [vmem:[#allocation14 + $0xe8] sm:$0xf]
        %v3093 = vld [vmem:[#allocation14 + $0xec] sm:$0xf]
        %v3094 = vld [vmem:[#allocation14 + $0xf0] sm:$0xf]
        %v3095 = vld [vmem:[#allocation14 + $0xf4] sm:$0xf]
        %v3096 = vld [vmem:[#allocation14 + $0xf8] sm:$0xf]
        %v3097 = vld [vmem:[#allocation14 + $0xfc] sm:$0xf]
        %v3098 = vld [vmem:[#allocation16] sm:$0x1]
        %v3100 = vlaneseq
        %v3101 = vshrl.u32 %v3100, 7
        %v3102 = vsub.s32 0, %v3101
        %v3103 = vrot.slane %v3098, %v3102
        %v3169 = vunpack.c.l.b16 %v3034
        %v3170 = vunpack.c.l.b16 %v3035
        %v3171 = vunpack.c.l.b16 %v3036
        %v3172 = vunpack.c.l.b16 %v3037
        %v3173 = vunpack.c.l.b16 %v3038
        %v3174 = vunpack.c.l.b16 %v3039
        %v3175 = vunpack.c.l.b16 %v3040
        %v3176 = vunpack.c.l.b16 %v3041
        %v3177 = vunpack.c.l.b16 %v3042
        %v3178 = vunpack.c.l.b16 %v3043
        %v3179 = vunpack.c.l.b16 %v3044
        %v3180 = vunpack.c.l.b16 %v3045
        %v3181 = vunpack.c.l.b16 %v3046
        %v3182 = vunpack.c.l.b16 %v3047
        %v3183 = vunpack.c.l.b16 %v3048
        %v3184 = vunpack.c.l.b16 %v3049
        %v3185 = vunpack.c.l.b16 %v3050
        %v3186 = vunpack.c.l.b16 %v3051
        %v3187 = vunpack.c.l.b16 %v3052
        %v3188 = vunpack.c.l.b16 %v3053
        %v3189 = vunpack.c.l.b16 %v3054
        %v3190 = vunpack.c.l.b16 %v3055
        %v3191 = vunpack.c.l.b16 %v3056
        %v3192 = vunpack.c.l.b16 %v3057
        %v3193 = vunpack.c.l.b16 %v3058
        %v3194 = vunpack.c.l.b16 %v3059
        %v3195 = vunpack.c.l.b16 %v3060
        %v3196 = vunpack.c.l.b16 %v3061
        %v3197 = vunpack.c.l.b16 %v3062
        %v3198 = vunpack.c.l.b16 %v3063
        %v3199 = vunpack.c.l.b16 %v3064
        %v3200 = vunpack.c.l.b16 %v3065
        %v3201 = vunpack.c.l.b16 %v3066
        %v3202 = vunpack.c.l.b16 %v3067
        %v3203 = vunpack.c.l.b16 %v3068
        %v3204 = vunpack.c.l.b16 %v3069
        %v3205 = vunpack.c.l.b16 %v3070
        %v3206 = vunpack.c.l.b16 %v3071
        %v3207 = vunpack.c.l.b16 %v3072
        %v3208 = vunpack.c.l.b16 %v3073
        %v3209 = vunpack.c.l.b16 %v3074
        %v3210 = vunpack.c.l.b16 %v3075
        %v3211 = vunpack.c.l.b16 %v3076
        %v3212 = vunpack.c.l.b16 %v3077
        %v3213 = vunpack.c.l.b16 %v3078
        %v3214 = vunpack.c.l.b16 %v3079
        %v3215 = vunpack.c.l.b16 %v3080
        %v3216 = vunpack.c.l.b16 %v3081
        %v3217 = vunpack.c.l.b16 %v3082
        %v3218 = vunpack.c.l.b16 %v3083
        %v3219 = vunpack.c.l.b16 %v3084
        %v3220 = vunpack.c.l.b16 %v3085
        %v3221 = vunpack.c.l.b16 %v3086
        %v3222 = vunpack.c.l.b16 %v3087
        %v3223 = vunpack.c.l.b16 %v3088
        %v3224 = vunpack.c.l.b16 %v3089
        %v3225 = vunpack.c.l.b16 %v3090
        %v3226 = vunpack.c.l.b16 %v3091
        %v3227 = vunpack.c.l.b16 %v3092
        %v3228 = vunpack.c.l.b16 %v3093
        %v3229 = vunpack.c.l.b16 %v3094
        %v3230 = vunpack.c.l.b16 %v3095
        %v3231 = vunpack.c.l.b16 %v3096
        %v3232 = vunpack.c.l.b16 %v3097
        %v3233 = vpack.c.b16 %v3170, %v3169
        %v3234 = vpack.c.b16 %v3172, %v3171
        %v3235 = vpack.c.b16 %v3174, %v3173
        %v3236 = vpack.c.b16 %v3176, %v3175
        %v3237 = vpack.c.b16 %v3178, %v3177
        %v3238 = vpack.c.b16 %v3180, %v3179
        %v3239 = vpack.c.b16 %v3182, %v3181
        %v3240 = vpack.c.b16 %v3184, %v3183
        %v3241 = vpack.c.b16 %v3186, %v3185
        %v3242 = vpack.c.b16 %v3188, %v3187
        %v3243 = vpack.c.b16 %v3190, %v3189
        %v3244 = vpack.c.b16 %v3192, %v3191
        %v3245 = vpack.c.b16 %v3194, %v3193
        %v3246 = vpack.c.b16 %v3196, %v3195
        %v3247 = vpack.c.b16 %v3198, %v3197
        %v3248 = vpack.c.b16 %v3200, %v3199
        %v3249 = vpack.c.b16 %v3202, %v3201
        %v3250 = vpack.c.b16 %v3204, %v3203
        %v3251 = vpack.c.b16 %v3206, %v3205
        %v3252 = vpack.c.b16 %v3208, %v3207
        %v3253 = vpack.c.b16 %v3210, %v3209
        %v3254 = vpack.c.b16 %v3212, %v3211
        %v3255 = vpack.c.b16 %v3214, %v3213
        %v3256 = vpack.c.b16 %v3216, %v3215
        %v3257 = vpack.c.b16 %v3218, %v3217
        %v3258 = vpack.c.b16 %v3220, %v3219
        %v3259 = vpack.c.b16 %v3222, %v3221
        %v3260 = vpack.c.b16 %v3224, %v3223
        %v3261 = vpack.c.b16 %v3226, %v3225
        %v3262 = vpack.c.b16 %v3228, %v3227
        %v3263 = vpack.c.b16 %v3230, %v3229
        %v3264 = vpack.c.b16 %v3232, %v3231
        %3297 = vmatprep.subr.bf16.mxu0 0
        %3298 = vmatpush1.bf16.msra.mxu0 %v3233
        %3299 = vmatprep.subr.bf16.mxu0 0
        %3300 = vmatpush1.bf16.msra.mxu0 %v3234
        %3301 = vmatprep.subr.bf16.mxu0 0
        %3302 = vmatpush1.bf16.msra.mxu0 %v3235
        %3303 = vmatprep.subr.bf16.mxu0 0
        %3304 = vmatpush1.bf16.msra.mxu0 %v3236
        %3305 = vmatprep.subr.bf16.mxu0 0
        %3306 = vmatpush1.bf16.msra.mxu0 %v3237
        %3307 = vmatprep.subr.bf16.mxu0 0
        %3308 = vmatpush1.bf16.msra.mxu0 %v3238
        %3309 = vmatprep.subr.bf16.mxu0 0
        %3310 = vmatpush1.bf16.msra.mxu0 %v3239
        %3311 = vmatprep.subr.bf16.mxu0 0
        %3312 = vmatpush1.bf16.msra.mxu0 %v3240
        %3313 = vmatprep.subr.bf16.mxu0 0
        %3314 = vmatpush1.bf16.msra.mxu0 %v3241
        %3315 = vmatprep.subr.bf16.mxu0 0
        %3316 = vmatpush1.bf16.msra.mxu0 %v3242
        %3317 = vmatprep.subr.bf16.mxu0 0
        %3318 = vmatpush1.bf16.msra.mxu0 %v3243
        %3319 = vmatprep.subr.bf16.mxu0 0
        %3320 = vmatpush1.bf16.msra.mxu0 %v3244
        %3321 = vmatprep.subr.bf16.mxu0 0
        %3322 = vmatpush1.bf16.msra.mxu0 %v3245
        %3323 = vmatprep.subr.bf16.mxu0 0
        %3324 = vmatpush1.bf16.msra.mxu0 %v3246
        %3325 = vmatprep.subr.bf16.mxu0 0
        %3326 = vmatpush1.bf16.msra.mxu0 %v3247
        %3327 = vmatprep.subr.bf16.mxu0 0
        %3328 = vmatpush1.bf16.msra.mxu0 %v3248
        %3329 = vmatprep.mubr.bf16.mxu0 %v3031
        %3330 = vmatmul.mubr.bf16.gmra.mrb[0].mxu0 %v3030
        %v3331 = vpop.f32.mrb[0].mxu0
        %v3332 = vadd.f32 %v3103, %v3331
        %v3333 = vpop.f32.mrb[0].mxu0
        %v3334 = vpop.f32.mrb[0].mxu0
        %v3335 = vadd.f32 %v3103, %v3334
        %v3336 = vpop.f32.mrb[0].mxu0
        %3337 = vdwg.mxu0
        %3338 = vmatprep.subr.bf16.mxu0 0
        %3339 = vmatpush1.bf16.msra.mxu0 %v3249
        %3340 = vmatprep.subr.bf16.mxu0 0
        %3341 = vmatpush1.bf16.msra.mxu0 %v3250
        %3342 = vmatprep.subr.bf16.mxu0 0
        %3343 = vmatpush1.bf16.msra.mxu0 %v3251
        %3344 = vmatprep.subr.bf16.mxu0 0
        %3345 = vmatpush1.bf16.msra.mxu0 %v3252
        %3346 = vmatprep.subr.bf16.mxu0 0
        %3347 = vmatpush1.bf16.msra.mxu0 %v3253
        %3348 = vmatprep.subr.bf16.mxu0 0
        %3349 = vmatpush1.bf16.msra.mxu0 %v3254
        %3350 = vmatprep.subr.bf16.mxu0 0
        %3351 = vmatpush1.bf16.msra.mxu0 %v3255
        %3352 = vmatprep.subr.bf16.mxu0 0
        %3353 = vmatpush1.bf16.msra.mxu0 %v3256
        %3354 = vmatprep.subr.bf16.mxu0 0
        %3355 = vmatpush1.bf16.msra.mxu0 %v3257
        %3356 = vmatprep.subr.bf16.mxu0 0
        %3357 = vmatpush1.bf16.msra.mxu0 %v3258
        %3358 = vmatprep.subr.bf16.mxu0 0
        %3359 = vmatpush1.bf16.msra.mxu0 %v3259
        %3360 = vmatprep.subr.bf16.mxu0 0
        %3361 = vmatpush1.bf16.msra.mxu0 %v3260
        %3362 = vmatprep.subr.bf16.mxu0 0
        %3363 = vmatpush1.bf16.msra.mxu0 %v3261
        %3364 = vmatprep.subr.bf16.mxu0 0
        %3365 = vmatpush1.bf16.msra.mxu0 %v3262
        %3366 = vmatprep.subr.bf16.mxu0 0
        %3367 = vmatpush1.bf16.msra.mxu0 %v3263
        %3368 = vmatprep.subr.bf16.mxu0 0
        %3369 = vmatpush1.bf16.msra.mxu0 %v3264
        %3370 = vmatprep.mubr.bf16.mxu0 %v3033
        %3371 = vmatmul.mubr.bf16.gmra.mrb[0].mxu0 %v3032
        %v3372 = vpop.f32.mrb[0].mxu0
        %v3373 = vadd.f32 %v3332, %v3372
        %v3374 = vpop.f32.mrb[0].mxu0
        %v3375 = vpop.f32.mrb[0].mxu0
        %v3376 = vadd.f32 %v3335, %v3375
        %v3377 = vpop.f32.mrb[0].mxu0
        %3378 = vdwg.mxu0
        %v3379 = vadd.f32 %v2677, %v3373
        %v3380 = vadd.f32 %v2678, %v3376
        %s3381 = scalar_lea.vmem %s3, 1
        %v3382 = vld [vmem:[%s3381] sm:$0x1]
        %s3383 = scalar_lea.vmem [#allocation7], 1
        %v3384 = vld [vmem:[%s3383] sm:$0x1]
        %v3385 = vadd.f32 %v3379, %v3380
        %v3386 = vrot.slane %v3385, 4
        %v3387 = vadd.f32 %v3385, %v3386
        %v3388 = vrot.slane %v3387, 2
        %v3389 = vadd.f32 %v3387, %v3388
        %v3390 = vrot.slane %v3389, 1
        %v3391 = vadd.f32 %v3389, %v3390
        %v3392 = vmul.f32 %v3391, %v736
        %v3393 = vsub.f32 %v3379, %v3392
        %v3394 = vsub.f32 %v3380, %v3392
        %v3395 = vmul.f32 %v3393, %v3393
        %v3396 = vmul.f32 %v3394, %v3394
        %v3397 = vadd.f32 %v3395, %v3396
        %v3398 = vrot.slane %v3397, 4
        %v3399 = vadd.f32 %v3397, %v3398
        %v3400 = vrot.slane %v3399, 2
        %v3401 = vadd.f32 %v3399, %v3400
        %v3402 = vrot.slane %v3401, 1
        %v3403 = vadd.f32 %v3401, %v3402
        %v3404 = vmul.f32 %v3403, 0.06666667
        %v3406 = vlaneseq
        %v3407 = vshrl.u32 %v3406, 7
        %v3408 = vsub.s32 0, %v3407
        %v3409 = vrot.slane %v3382, %v3408
        %v3411 = vmul.f32 %v3409, %v3393
        %v3412 = vmul.f32 %v3409, %v3394
        %v3413 = vadd.f32 %v3404, 1e-05
        %v3414 = vrsqrt.pop %v3413
        %v3415 = vmul.f32 %v3411, %v3414
        %v3416 = vmul.f32 %v3412, %v3414
        %v3418 = vlaneseq
        %v3419 = vshrl.u32 %v3418, 7
        %v3420 = vsub.s32 0, %v3419
        %v3421 = vrot.slane %v3384, %v3420
        %v3423 = vadd.f32 %v3415, %v3421
        %v3424 = vadd.f32 %v3416, %v3421
        %v3425 = vpack.c.bf16 %v3424, %v3423
        %s3426 = scalar_lea.vmem [#allocation8], 192
        %v3427 = vld [vmem:[%s3426] sm:$0xff]
        %v3428 = vld [vmem:[%s3426 + $0x8] sm:$0xf]
        %v3429 = vld [vmem:[%s3426 + $0xc] sm:$0xff]
        %v3430 = vld [vmem:[%s3426 + $0x14] sm:$0xf]
        %v3431 = vld [vmem:[%s3426 + $0x18] sm:$0xff]
        %v3432 = vld [vmem:[%s3426 + $0x20] sm:$0xf]
        %v3433 = vld [vmem:[%s3426 + $0x24] sm:$0xff]
        %v3434 = vld [vmem:[%s3426 + $0x2c] sm:$0xf]
        %v3435 = vld [vmem:[%s3426 + $0x30] sm:$0xff]
        %v3436 = vld [vmem:[%s3426 + $0x38] sm:$0xf]
        %v3437 = vld [vmem:[%s3426 + $0x3c] sm:$0xff]
        %v3438 = vld [vmem:[%s3426 + $0x44] sm:$0xf]
        %v3439 = vld [vmem:[%s3426 + $0x48] sm:$0xff]
        %v3440 = vld [vmem:[%s3426 + $0x50] sm:$0xf]
        %v3441 = vld [vmem:[%s3426 + $0x54] sm:$0xff]
        %v3442 = vld [vmem:[%s3426 + $0x5c] sm:$0xf]
        %v3443 = vld [vmem:[%s3426 + $0x60] sm:$0xff]
        %v3444 = vld [vmem:[%s3426 + $0x68] sm:$0xf]
        %v3445 = vld [vmem:[%s3426 + $0x6c] sm:$0xff]
        %v3446 = vld [vmem:[%s3426 + $0x74] sm:$0xf]
        %v3447 = vld [vmem:[%s3426 + $0x78] sm:$0xff]
        %v3448 = vld [vmem:[%s3426 + $0x80] sm:$0xf]
        %v3449 = vld [vmem:[%s3426 + $0x84] sm:$0xff]
        %v3450 = vld [vmem:[%s3426 + $0x8c] sm:$0xf]
        %v3451 = vld [vmem:[%s3426 + $0x90] sm:$0xff]
        %v3452 = vld [vmem:[%s3426 + $0x98] sm:$0xf]
        %v3453 = vld [vmem:[%s3426 + $0x9c] sm:$0xff]
        %v3454 = vld [vmem:[%s3426 + $0xa4] sm:$0xf]
        %v3455 = vld [vmem:[%s3426 + $0xa8] sm:$0xff]
        %v3456 = vld [vmem:[%s3426 + $0xb0] sm:$0xf]
        %v3457 = vld [vmem:[%s3426 + $0xb4] sm:$0xff]
        %v3458 = vld [vmem:[%s3426 + $0xbc] sm:$0xf]
        %v3491 = vunpack.c.l.b16 %v3427
        %v3492 = vunpack.c.h.b16 %v3427
        %v3493 = vunpack.c.l.b16 %v3428
        %v3494 = vunpack.c.l.b16 %v3429
        %v3495 = vunpack.c.h.b16 %v3429
        %v3496 = vunpack.c.l.b16 %v3430
        %v3497 = vunpack.c.l.b16 %v3431
        %v3498 = vunpack.c.h.b16 %v3431
        %v3499 = vunpack.c.l.b16 %v3432
        %v3500 = vunpack.c.l.b16 %v3433
        %v3501 = vunpack.c.h.b16 %v3433
        %v3502 = vunpack.c.l.b16 %v3434
        %v3503 = vunpack.c.l.b16 %v3435
        %v3504 = vunpack.c.h.b16 %v3435
        %v3505 = vunpack.c.l.b16 %v3436
        %v3506 = vunpack.c.l.b16 %v3437
        %v3507 = vunpack.c.h.b16 %v3437
        %v3508 = vunpack.c.l.b16 %v3438
        %v3509 = vunpack.c.l.b16 %v3439
        %v3510 = vunpack.c.h.b16 %v3439
        %v3511 = vunpack.c.l.b16 %v3440
        %v3512 = vunpack.c.l.b16 %v3441
        %v3513 = vunpack.c.h.b16 %v3441
        %v3514 = vunpack.c.l.b16 %v3442
        %v3515 = vunpack.c.l.b16 %v3443
        %v3516 = vunpack.c.h.b16 %v3443
        %v3517 = vunpack.c.l.b16 %v3444
        %v3518 = vunpack.c.l.b16 %v3445
        %v3519 = vunpack.c.h.b16 %v3445
        %v3520 = vunpack.c.l.b16 %v3446
        %v3521 = vunpack.c.l.b16 %v3447
        %v3522 = vunpack.c.h.b16 %v3447
        %v3523 = vunpack.c.l.b16 %v3448
        %v3524 = vunpack.c.l.b16 %v3449
        %v3525 = vunpack.c.h.b16 %v3449
        %v3526 = vunpack.c.l.b16 %v3450
        %v3527 = vunpack.c.l.b16 %v3451
        %v3528 = vunpack.c.h.b16 %v3451
        %v3529 = vunpack.c.l.b16 %v3452
        %v3530 = vunpack.c.l.b16 %v3453
        %v3531 = vunpack.c.h.b16 %v3453
        %v3532 = vunpack.c.l.b16 %v3454
        %v3533 = vunpack.c.l.b16 %v3455
        %v3534 = vunpack.c.h.b16 %v3455
        %v3535 = vunpack.c.l.b16 %v3456
        %v3536 = vunpack.c.l.b16 %v3457
        %v3537 = vunpack.c.h.b16 %v3457
        %v3538 = vunpack.c.l.b16 %v3458
        %v3539 = vpack.c.b16 %v3494, %v3491
        %v3540 = vpack.c.b16 %v3495, %v3492
        %v3541 = vpack.c.b16 %v3496, %v3493
        %v3542 = vpack.c.b16 %v3500, %v3497
        %v3543 = vpack.c.b16 %v3501, %v3498
        %v3544 = vpack.c.b16 %v3502, %v3499
        %v3545 = vpack.c.b16 %v3506, %v3503
        %v3546 = vpack.c.b16 %v3507, %v3504
        %v3547 = vpack.c.b16 %v3508, %v3505
        %v3548 = vpack.c.b16 %v3512, %v3509
        %v3549 = vpack.c.b16 %v3513, %v3510
        %v3550 = vpack.c.b16 %v3514, %v3511
        %v3551 = vpack.c.b16 %v3518, %v3515
        %v3552 = vpack.c.b16 %v3519, %v3516
        %v3553 = vpack.c.b16 %v3520, %v3517
        %v3554 = vpack.c.b16 %v3524, %v3521
        %v3555 = vpack.c.b16 %v3525, %v3522
        %v3556 = vpack.c.b16 %v3526, %v3523
        %v3557 = vpack.c.b16 %v3530, %v3527
        %v3558 = vpack.c.b16 %v3531, %v3528
        %v3559 = vpack.c.b16 %v3532, %v3529
        %v3560 = vpack.c.b16 %v3536, %v3533
        %v3561 = vpack.c.b16 %v3537, %v3534
        %v3562 = vpack.c.b16 %v3538, %v3535
        %3587 = vmatprep.subr.bf16.mxu0 %v3540
        %3588 = vmatpush1.bf16.msra.mxu0 %v3539
        %3589 = vmatprep.subr.bf16.mxu0 %v3543
        %3590 = vmatpush1.bf16.msra.mxu0 %v3542
        %3591 = vmatprep.subr.bf16.mxu0 %v3546
        %3592 = vmatpush1.bf16.msra.mxu0 %v3545
        %3593 = vmatprep.subr.bf16.mxu0 %v3549
        %3594 = vmatpush1.bf16.msra.mxu0 %v3548
        %3595 = vmatprep.subr.bf16.mxu0 %v3552
        %3596 = vmatpush1.bf16.msra.mxu0 %v3551
        %3597 = vmatprep.subr.bf16.mxu0 %v3555
        %3598 = vmatpush1.bf16.msra.mxu0 %v3554
        %3599 = vmatprep.subr.bf16.mxu0 %v3558
        %3600 = vmatpush1.bf16.msra.mxu0 %v3557
        %3601 = vmatprep.subr.bf16.mxu0 %v3561
        %3602 = vmatpush1.bf16.msra.mxu0 %v3560
        %3603 = vmatprep.subr.bf16.mxu0 0
        %3604 = vmatpush1.bf16.msra.mxu0 0
        %3605 = vmatprep.subr.bf16.mxu0 0
        %3606 = vmatpush1.bf16.msra.mxu0 0
        %3607 = vmatprep.subr.bf16.mxu0 0
        %3608 = vmatpush1.bf16.msra.mxu0 0
        %3609 = vmatprep.subr.bf16.mxu0 0
        %3610 = vmatpush1.bf16.msra.mxu0 0
        %3611 = vmatprep.subr.bf16.mxu0 0
        %3612 = vmatpush1.bf16.msra.mxu0 0
        %3613 = vmatprep.subr.bf16.mxu0 0
        %3614 = vmatpush1.bf16.msra.mxu0 0
        %3615 = vmatprep.subr.bf16.mxu0 0
        %3616 = vmatpush1.bf16.msra.mxu0 0
        %3617 = vmatprep.subr.bf16.mxu0 0
        %3618 = vmatpush1.bf16.msra.mxu0 0
        %3619 = vmatprep.mubr.bf16.mxu0 0
        %3620 = vmatmul.mubr.bf16.gmra.mrb[0].mxu0 %v3425
        %v3621 = vpop.f32.mrb[0].mxu0
        %v3622 = vadd.f32 0.0, %v3621
        %v3623 = vpop.f32.mrb[0].mxu0
        %v3624 = vadd.f32 0.0, %v3623
        %v3625 = vpop.f32.mrb[0].mxu0
        %v3626 = vadd.f32 0.0, %v3625
        %v3627 = vpop.f32.mrb[0].mxu0
        %v3628 = vadd.f32 0.0, %v3627
        %3629 = vdwg.mxu0
        %3630 = vmatprep.subr.bf16.mxu0 0
        %3631 = vmatpush1.bf16.msra.mxu0 %v3541
        %3632 = vmatprep.subr.bf16.mxu0 0
        %3633 = vmatpush1.bf16.msra.mxu0 %v3544
        %3634 = vmatprep.subr.bf16.mxu0 0
        %3635 = vmatpush1.bf16.msra.mxu0 %v3547
        %3636 = vmatprep.subr.bf16.mxu0 0
        %3637 = vmatpush1.bf16.msra.mxu0 %v3550
        %3638 = vmatprep.subr.bf16.mxu0 0
        %3639 = vmatpush1.bf16.msra.mxu0 %v3553
        %3640 = vmatprep.subr.bf16.mxu0 0
        %3641 = vmatpush1.bf16.msra.mxu0 %v3556
        %3642 = vmatprep.subr.bf16.mxu0 0
        %3643 = vmatpush1.bf16.msra.mxu0 %v3559
        %3644 = vmatprep.subr.bf16.mxu0 0
        %3645 = vmatpush1.bf16.msra.mxu0 %v3562
        %3646 = vmatprep.subr.bf16.mxu0 0
        %3647 = vmatpush1.bf16.msra.mxu0 0
        %3648 = vmatprep.subr.bf16.mxu0 0
        %3649 = vmatpush1.bf16.msra.mxu0 0
        %3650 = vmatprep.subr.bf16.mxu0 0
        %3651 = vmatpush1.bf16.msra.mxu0 0
        %3652 = vmatprep.subr.bf16.mxu0 0
        %3653 = vmatpush1.bf16.msra.mxu0 0
        %3654 = vmatprep.subr.bf16.mxu0 0
        %3655 = vmatpush1.bf16.msra.mxu0 0
        %3656 = vmatprep.subr.bf16.mxu0 0
        %3657 = vmatpush1.bf16.msra.mxu0 0
        %3658 = vmatprep.subr.bf16.mxu0 0
        %3659 = vmatpush1.bf16.msra.mxu0 0
        %3660 = vmatprep.subr.bf16.mxu0 0
        %3661 = vmatpush1.bf16.msra.mxu0 0
        %3662 = vmatprep.mubr.bf16.mxu0 0
        %3663 = vmatmul.mubr.bf16.gmra.mrb[0].mxu0 %v3425
        %v3664 = vpop.f32.mrb[0].mxu0
        %v3665 = vadd.f32 0.0, %v3664
        %v3666 = vpop.f32.mrb[0].mxu0
        %v3667 = vpop.f32.mrb[0].mxu0
        %v3668 = vadd.f32 0.0, %v3667
        %v3669 = vpop.f32.mrb[0].mxu0
        %3670 = vdwg.mxu0
        %3673 = vrot.lane.b32.xlu0 %v3622, 96
        %v3674 = vpop.permute.xlu0 %3673
        %3675 = vrot.lane.b32.xlu0 %v3626, 96
        %v3676 = vpop.permute.xlu0 %3675
        %3679 = vrot.lane.b32.xlu0 %v3622, 64
        %v3680 = vpop.permute.xlu0 %3679
        %3681 = vrot.lane.b32.xlu0 %v3626, 64
        %v3682 = vpop.permute.xlu0 %3681
        %3685 = vrot.lane.b32.xlu0 %v3622, 32
        %v3686 = vpop.permute.xlu0 %3685
        %3687 = vrot.lane.b32.xlu0 %v3626, 32
        %v3688 = vpop.permute.xlu0 %3687
        %v3691 = vcombine.low %v3622, %v3680
        %v3692 = vcombine.high %v3622, %v3680
        %v3694 = vunpack.c.l.s4 1983009808
        %v3695 = vunpack.c.0.s8 %v3694
        %v3696 = vlaneseq
        %v3697 = vshrl.u32 %v3696, 7
        %v3698 = vsub.s32 %v3695, %v3697
        %v3699 = vrot.slane %v3691, %v3698
        %v3701 = vunpack.c.l.s4 1983009808
        %v3702 = vunpack.c.0.s8 %v3701
        %v3703 = vlaneseq
        %v3704 = vshrl.u32 %v3703, 7
        %v3705 = vsub.s32 %v3702, %v3704
        %v3706 = vrot.slane %v3692, %v3705
        %v3707 = vcombine.low %v3674, %v3686
        %v3708 = vcombine.high %v3674, %v3686
        %v3710 = vunpack.c.l.s4 1983009808
        %v3711 = vunpack.c.0.s8 %v3710
        %v3712 = vlaneseq
        %v3713 = vshrl.u32 %v3712, 7
        %v3714 = vsub.s32 %v3711, %v3713
        %v3715 = vrot.slane %v3707, %v3714
        %v3717 = vunpack.c.l.s4 1983009808
        %v3718 = vunpack.c.0.s8 %v3717
        %v3719 = vlaneseq
        %v3720 = vshrl.u32 %v3719, 7
        %v3721 = vsub.s32 %v3718, %v3720
        %v3722 = vrot.slane %v3708, %v3721
        %v3723 = vcombine.low %v3699, %v3715
        %v3724 = vcombine.high %v3699, %v3715
        %v3726 = vunpack.c.l.s4 1934713408
        %v3727 = vunpack.c.0.s8 %v3726
        %v3728 = vlaneseq
        %v3729 = vshrl.u32 %v3728, 7
        %v3730 = vsub.s32 %v3727, %v3729
        %v3731 = vrot.slane %v3723, %v3730
        %v3733 = vunpack.c.l.s4 1934713408
        %v3734 = vunpack.c.0.s8 %v3733
        %v3735 = vlaneseq
        %v3736 = vshrl.u32 %v3735, 7
        %v3737 = vsub.s32 %v3734, %v3736
        %v3738 = vrot.slane %v3724, %v3737
        %v3739 = vcombine.low %v3706, %v3722
        %v3740 = vcombine.high %v3706, %v3722
        %v3742 = vunpack.c.l.s4 1934713408
        %v3743 = vunpack.c.0.s8 %v3742
        %v3744 = vlaneseq
        %v3745 = vshrl.u32 %v3744, 7
        %v3746 = vsub.s32 %v3743, %v3745
        %v3747 = vrot.slane %v3739, %v3746
        %v3749 = vunpack.c.l.s4 1934713408
        %v3750 = vunpack.c.0.s8 %v3749
        %v3751 = vlaneseq
        %v3752 = vshrl.u32 %v3751, 7
        %v3753 = vsub.s32 %v3750, %v3752
        %v3754 = vrot.slane %v3740, %v3753
        %v3755 = vcombine.high %v3731, 0.0
        %v3756 = vcombine.high %v3738, 0.0
        %v3757 = vcombine.high %v3747, 0.0
        %v3758 = vcombine.high %v3754, 0.0
        %v3759 = vcombine.low %v3626, %v3682
        %v3760 = vcombine.high %v3626, %v3682
        %v3762 = vunpack.c.l.s4 1983009808
        %v3763 = vunpack.c.0.s8 %v3762
        %v3764 = vlaneseq
        %v3765 = vshrl.u32 %v3764, 7
        %v3766 = vsub.s32 %v3763, %v3765
        %v3767 = vrot.slane %v3759, %v3766
        %v3769 = vunpack.c.l.s4 1983009808
        %v3770 = vunpack.c.0.s8 %v3769
        %v3771 = vlaneseq
        %v3772 = vshrl.u32 %v3771, 7
        %v3773 = vsub.s32 %v3770, %v3772
        %v3774 = vrot.slane %v3760, %v3773
        %v3775 = vcombine.low %v3676, %v3688
        %v3776 = vcombine.high %v3676, %v3688
        %v3778 = vunpack.c.l.s4 1983009808
        %v3779 = vunpack.c.0.s8 %v3778
        %v3780 = vlaneseq
        %v3781 = vshrl.u32 %v3780, 7
        %v3782 = vsub.s32 %v3779, %v3781
        %v3783 = vrot.slane %v3775, %v3782
        %v3785 = vunpack.c.l.s4 1983009808
        %v3786 = vunpack.c.0.s8 %v3785
        %v3787 = vlaneseq
        %v3788 = vshrl.u32 %v3787, 7
        %v3789 = vsub.s32 %v3786, %v3788
        %v3790 = vrot.slane %v3776, %v3789
        %v3791 = vcombine.low %v3767, %v3783
        %v3792 = vcombine.high %v3767, %v3783
        %v3794 = vunpack.c.l.s4 1934713408
        %v3795 = vunpack.c.0.s8 %v3794
        %v3796 = vlaneseq
        %v3797 = vshrl.u32 %v3796, 7
        %v3798 = vsub.s32 %v3795, %v3797
        %v3799 = vrot.slane %v3791, %v3798
        %v3801 = vunpack.c.l.s4 1934713408
        %v3802 = vunpack.c.0.s8 %v3801
        %v3803 = vlaneseq
        %v3804 = vshrl.u32 %v3803, 7
        %v3805 = vsub.s32 %v3802, %v3804
        %v3806 = vrot.slane %v3792, %v3805
        %v3807 = vcombine.low %v3774, %v3790
        %v3808 = vcombine.high %v3774, %v3790
        %v3810 = vunpack.c.l.s4 1934713408
        %v3811 = vunpack.c.0.s8 %v3810
        %v3812 = vlaneseq
        %v3813 = vshrl.u32 %v3812, 7
        %v3814 = vsub.s32 %v3811, %v3813
        %v3815 = vrot.slane %v3807, %v3814
        %v3817 = vunpack.c.l.s4 1934713408
        %v3818 = vunpack.c.0.s8 %v3817
        %v3819 = vlaneseq
        %v3820 = vshrl.u32 %v3819, 7
        %v3821 = vsub.s32 %v3818, %v3820
        %v3822 = vrot.slane %v3808, %v3821
        %v3823 = vcombine.high %v3799, 0.0
        %v3824 = vcombine.high %v3806, 0.0
        %v3825 = vcombine.high %v3815, 0.0
        %v3826 = vcombine.high %v3822, 0.0
        %v3827 = vcombine.low %v3731, %v3738
        %v3829 = vunpack.c.l.s4 1983009808
        %v3830 = vunpack.c.0.s8 %v3829
        %v3831 = vlaneseq
        %v3832 = vshrl.u32 %v3831, 7
        %v3833 = vsub.s32 %v3830, %v3832
        %v3834 = vrot.slane %v3827, %v3833
        %v3835 = vcombine.low %v3755, %v3756
        %v3837 = vunpack.c.l.s4 1983009808
        %v3838 = vunpack.c.0.s8 %v3837
        %v3839 = vlaneseq
        %v3840 = vshrl.u32 %v3839, 7
        %v3841 = vsub.s32 %v3838, %v3840
        %v3842 = vrot.slane %v3835, %v3841
        %v3843 = vcombine.low %v3747, %v3754
        %v3845 = vunpack.c.l.s4 1983009808
        %v3846 = vunpack.c.0.s8 %v3845
        %v3847 = vlaneseq
        %v3848 = vshrl.u32 %v3847, 7
        %v3849 = vsub.s32 %v3846, %v3848
        %v3850 = vrot.slane %v3843, %v3849
        %v3851 = vcombine.low %v3757, %v3758
        %v3853 = vunpack.c.l.s4 1983009808
        %v3854 = vunpack.c.0.s8 %v3853
        %v3855 = vlaneseq
        %v3856 = vshrl.u32 %v3855, 7
        %v3857 = vsub.s32 %v3854, %v3856
        %v3858 = vrot.slane %v3851, %v3857
        %v3859 = vcombine.low %v3834, %v3842
        %v3860 = vcombine.high %v3834, %v3842
        %v3862 = vunpack.c.l.s4 1934713408
        %v3863 = vunpack.c.0.s8 %v3862
        %v3864 = vlaneseq
        %v3865 = vshrl.u32 %v3864, 7
        %v3866 = vsub.s32 %v3863, %v3865
        %v3867 = vrot.slane %v3859, %v3866
        %v3869 = vunpack.c.l.s4 1934713408
        %v3870 = vunpack.c.0.s8 %v3869
        %v3871 = vlaneseq
        %v3872 = vshrl.u32 %v3871, 7
        %v3873 = vsub.s32 %v3870, %v3872
        %v3874 = vrot.slane %v3860, %v3873
        %v3875 = vcombine.low %v3850, %v3858
        %v3876 = vcombine.high %v3850, %v3858
        %v3878 = vunpack.c.l.s4 1934713408
        %v3879 = vunpack.c.0.s8 %v3878
        %v3880 = vlaneseq
        %v3881 = vshrl.u32 %v3880, 7
        %v3882 = vsub.s32 %v3879, %v3881
        %v3883 = vrot.slane %v3875, %v3882
        %v3885 = vunpack.c.l.s4 1934713408
        %v3886 = vunpack.c.0.s8 %v3885
        %v3887 = vlaneseq
        %v3888 = vshrl.u32 %v3887, 7
        %v3889 = vsub.s32 %v3886, %v3888
        %v3890 = vrot.slane %v3876, %v3889
        %v3891 = vcombine.low %v3867, %v3883
        %v3892 = vcombine.high %v3867, %v3883
        %v3893 = vcombine.low %v3874, %v3890
        %v3894 = vcombine.high %v3874, %v3890
        %v3895 = vcombine.low %v3799, %v3806
        %v3897 = vunpack.c.l.s4 1983009808
        %v3898 = vunpack.c.0.s8 %v3897
        %v3899 = vlaneseq
        %v3900 = vshrl.u32 %v3899, 7
        %v3901 = vsub.s32 %v3898, %v3900
        %v3902 = vrot.slane %v3895, %v3901
        %v3903 = vcombine.low %v3823, %v3824
        %v3905 = vunpack.c.l.s4 1983009808
        %v3906 = vunpack.c.0.s8 %v3905
        %v3907 = vlaneseq
        %v3908 = vshrl.u32 %v3907, 7
        %v3909 = vsub.s32 %v3906, %v3908
        %v3910 = vrot.slane %v3903, %v3909
        %v3911 = vcombine.low %v3815, %v3822
        %v3913 = vunpack.c.l.s4 1983009808
        %v3914 = vunpack.c.0.s8 %v3913
        %v3915 = vlaneseq
        %v3916 = vshrl.u32 %v3915, 7
        %v3917 = vsub.s32 %v3914, %v3916
        %v3918 = vrot.slane %v3911, %v3917
        %v3919 = vcombine.low %v3825, %v3826
        %v3921 = vunpack.c.l.s4 1983009808
        %v3922 = vunpack.c.0.s8 %v3921
        %v3923 = vlaneseq
        %v3924 = vshrl.u32 %v3923, 7
        %v3925 = vsub.s32 %v3922, %v3924
        %v3926 = vrot.slane %v3919, %v3925
        %v3927 = vcombine.low %v3902, %v3910
        %v3928 = vcombine.high %v3902, %v3910
        %v3930 = vunpack.c.l.s4 1934713408
        %v3931 = vunpack.c.0.s8 %v3930
        %v3932 = vlaneseq
        %v3933 = vshrl.u32 %v3932, 7
        %v3934 = vsub.s32 %v3931, %v3933
        %v3935 = vrot.slane %v3927, %v3934
        %v3937 = vunpack.c.l.s4 1934713408
        %v3938 = vunpack.c.0.s8 %v3937
        %v3939 = vlaneseq
        %v3940 = vshrl.u32 %v3939, 7
        %v3941 = vsub.s32 %v3938, %v3940
        %v3942 = vrot.slane %v3928, %v3941
        %v3943 = vcombine.low %v3918, %v3926
        %v3944 = vcombine.high %v3918, %v3926
        %v3946 = vunpack.c.l.s4 1934713408
        %v3947 = vunpack.c.0.s8 %v3946
        %v3948 = vlaneseq
        %v3949 = vshrl.u32 %v3948, 7
        %v3950 = vsub.s32 %v3947, %v3949
        %v3951 = vrot.slane %v3943, %v3950
        %v3953 = vunpack.c.l.s4 1934713408
        %v3954 = vunpack.c.0.s8 %v3953
        %v3955 = vlaneseq
        %v3956 = vshrl.u32 %v3955, 7
        %v3957 = vsub.s32 %v3954, %v3956
        %v3958 = vrot.slane %v3944, %v3957
        %v3959 = vcombine.low %v3935, %v3951
        %v3960 = vcombine.high %v3935, %v3951
        %v3961 = vcombine.low %v3942, %v3958
        %v3962 = vcombine.high %v3942, %v3958
        %3965 = vrot.lane.b32.xlu0 %v3624, 96
        %v3966 = vpop.permute.xlu0 %3965
        %3967 = vrot.lane.b32.xlu0 %v3628, 96
        %v3968 = vpop.permute.xlu0 %3967
        %3971 = vrot.lane.b32.xlu0 %v3624, 64
        %v3972 = vpop.permute.xlu0 %3971
        %3973 = vrot.lane.b32.xlu0 %v3628, 64
        %v3974 = vpop.permute.xlu0 %3973
        %3977 = vrot.lane.b32.xlu0 %v3624, 32
        %v3978 = vpop.permute.xlu0 %3977
        %3979 = vrot.lane.b32.xlu0 %v3628, 32
        %v3980 = vpop.permute.xlu0 %3979
        %v3983 = vcombine.low %v3624, %v3972
        %v3984 = vcombine.high %v3624, %v3972
        %v3986 = vunpack.c.l.s4 1983009808
        %v3987 = vunpack.c.0.s8 %v3986
        %v3988 = vlaneseq
        %v3989 = vshrl.u32 %v3988, 7
        %v3990 = vsub.s32 %v3987, %v3989
        %v3991 = vrot.slane %v3983, %v3990
        %v3993 = vunpack.c.l.s4 1983009808
        %v3994 = vunpack.c.0.s8 %v3993
        %v3995 = vlaneseq
        %v3996 = vshrl.u32 %v3995, 7
        %v3997 = vsub.s32 %v3994, %v3996
        %v3998 = vrot.slane %v3984, %v3997
        %v3999 = vcombine.low %v3966, %v3978
        %v4000 = vcombine.high %v3966, %v3978
        %v4002 = vunpack.c.l.s4 1983009808
        %v4003 = vunpack.c.0.s8 %v4002
        %v4004 = vlaneseq
        %v4005 = vshrl.u32 %v4004, 7
        %v4006 = vsub.s32 %v4003, %v4005
        %v4007 = vrot.slane %v3999, %v4006
        %v4009 = vunpack.c.l.s4 1983009808
        %v4010 = vunpack.c.0.s8 %v4009
        %v4011 = vlaneseq
        %v4012 = vshrl.u32 %v4011, 7
        %v4013 = vsub.s32 %v4010, %v4012
        %v4014 = vrot.slane %v4000, %v4013
        %v4015 = vcombine.low %v3991, %v4007
        %v4016 = vcombine.high %v3991, %v4007
        %v4018 = vunpack.c.l.s4 1934713408
        %v4019 = vunpack.c.0.s8 %v4018
        %v4020 = vlaneseq
        %v4021 = vshrl.u32 %v4020, 7
        %v4022 = vsub.s32 %v4019, %v4021
        %v4023 = vrot.slane %v4015, %v4022
        %v4025 = vunpack.c.l.s4 1934713408
        %v4026 = vunpack.c.0.s8 %v4025
        %v4027 = vlaneseq
        %v4028 = vshrl.u32 %v4027, 7
        %v4029 = vsub.s32 %v4026, %v4028
        %v4030 = vrot.slane %v4016, %v4029
        %v4031 = vcombine.low %v3998, %v4014
        %v4032 = vcombine.high %v3998, %v4014
        %v4034 = vunpack.c.l.s4 1934713408
        %v4035 = vunpack.c.0.s8 %v4034
        %v4036 = vlaneseq
        %v4037 = vshrl.u32 %v4036, 7
        %v4038 = vsub.s32 %v4035, %v4037
        %v4039 = vrot.slane %v4031, %v4038
        %v4041 = vunpack.c.l.s4 1934713408
        %v4042 = vunpack.c.0.s8 %v4041
        %v4043 = vlaneseq
        %v4044 = vshrl.u32 %v4043, 7
        %v4045 = vsub.s32 %v4042, %v4044
        %v4046 = vrot.slane %v4032, %v4045
        %v4047 = vcombine.high %v4023, 0.0
        %v4048 = vcombine.high %v4030, 0.0
        %v4049 = vcombine.high %v4039, 0.0
        %v4050 = vcombine.high %v4046, 0.0
        %v4051 = vcombine.low %v3628, %v3974
        %v4052 = vcombine.high %v3628, %v3974
        %v4054 = vunpack.c.l.s4 1983009808
        %v4055 = vunpack.c.0.s8 %v4054
        %v4056 = vlaneseq
        %v4057 = vshrl.u32 %v4056, 7
        %v4058 = vsub.s32 %v4055, %v4057
        %v4059 = vrot.slane %v4051, %v4058
        %v4061 = vunpack.c.l.s4 1983009808
        %v4062 = vunpack.c.0.s8 %v4061
        %v4063 = vlaneseq
        %v4064 = vshrl.u32 %v4063, 7
        %v4065 = vsub.s32 %v4062, %v4064
        %v4066 = vrot.slane %v4052, %v4065
        %v4067 = vcombine.low %v3968, %v3980
        %v4068 = vcombine.high %v3968, %v3980
        %v4070 = vunpack.c.l.s4 1983009808
        %v4071 = vunpack.c.0.s8 %v4070
        %v4072 = vlaneseq
        %v4073 = vshrl.u32 %v4072, 7
        %v4074 = vsub.s32 %v4071, %v4073
        %v4075 = vrot.slane %v4067, %v4074
        %v4077 = vunpack.c.l.s4 1983009808
        %v4078 = vunpack.c.0.s8 %v4077
        %v4079 = vlaneseq
        %v4080 = vshrl.u32 %v4079, 7
        %v4081 = vsub.s32 %v4078, %v4080
        %v4082 = vrot.slane %v4068, %v4081
        %v4083 = vcombine.low %v4059, %v4075
        %v4084 = vcombine.high %v4059, %v4075
        %v4086 = vunpack.c.l.s4 1934713408
        %v4087 = vunpack.c.0.s8 %v4086
        %v4088 = vlaneseq
        %v4089 = vshrl.u32 %v4088, 7
        %v4090 = vsub.s32 %v4087, %v4089
        %v4091 = vrot.slane %v4083, %v4090
        %v4093 = vunpack.c.l.s4 1934713408
        %v4094 = vunpack.c.0.s8 %v4093
        %v4095 = vlaneseq
        %v4096 = vshrl.u32 %v4095, 7
        %v4097 = vsub.s32 %v4094, %v4096
        %v4098 = vrot.slane %v4084, %v4097
        %v4099 = vcombine.low %v4066, %v4082
        %v4100 = vcombine.high %v4066, %v4082
        %v4102 = vunpack.c.l.s4 1934713408
        %v4103 = vunpack.c.0.s8 %v4102
        %v4104 = vlaneseq
        %v4105 = vshrl.u32 %v4104, 7
        %v4106 = vsub.s32 %v4103, %v4105
        %v4107 = vrot.slane %v4099, %v4106
        %v4109 = vunpack.c.l.s4 1934713408
        %v4110 = vunpack.c.0.s8 %v4109
        %v4111 = vlaneseq
        %v4112 = vshrl.u32 %v4111, 7
        %v4113 = vsub.s32 %v4110, %v4112
        %v4114 = vrot.slane %v4100, %v4113
        %v4115 = vcombine.high %v4091, 0.0
        %v4116 = vcombine.high %v4098, 0.0
        %v4117 = vcombine.high %v4107, 0.0
        %v4118 = vcombine.high %v4114, 0.0
        %v4119 = vcombine.low %v4023, %v4030
        %v4121 = vunpack.c.l.s4 1983009808
        %v4122 = vunpack.c.0.s8 %v4121
        %v4123 = vlaneseq
        %v4124 = vshrl.u32 %v4123, 7
        %v4125 = vsub.s32 %v4122, %v4124
        %v4126 = vrot.slane %v4119, %v4125
        %v4127 = vcombine.low %v4047, %v4048
        %v4129 = vunpack.c.l.s4 1983009808
        %v4130 = vunpack.c.0.s8 %v4129
        %v4131 = vlaneseq
        %v4132 = vshrl.u32 %v4131, 7
        %v4133 = vsub.s32 %v4130, %v4132
        %v4134 = vrot.slane %v4127, %v4133
        %v4135 = vcombine.low %v4039, %v4046
        %v4137 = vunpack.c.l.s4 1983009808
        %v4138 = vunpack.c.0.s8 %v4137
        %v4139 = vlaneseq
        %v4140 = vshrl.u32 %v4139, 7
        %v4141 = vsub.s32 %v4138, %v4140
        %v4142 = vrot.slane %v4135, %v4141
        %v4143 = vcombine.low %v4049, %v4050
        %v4145 = vunpack.c.l.s4 1983009808
        %v4146 = vunpack.c.0.s8 %v4145
        %v4147 = vlaneseq
        %v4148 = vshrl.u32 %v4147, 7
        %v4149 = vsub.s32 %v4146, %v4148
        %v4150 = vrot.slane %v4143, %v4149
        %v4151 = vcombine.low %v4126, %v4134
        %v4152 = vcombine.high %v4126, %v4134
        %v4154 = vunpack.c.l.s4 1934713408
        %v4155 = vunpack.c.0.s8 %v4154
        %v4156 = vlaneseq
        %v4157 = vshrl.u32 %v4156, 7
        %v4158 = vsub.s32 %v4155, %v4157
        %v4159 = vrot.slane %v4151, %v4158
        %v4161 = vunpack.c.l.s4 1934713408
        %v4162 = vunpack.c.0.s8 %v4161
        %v4163 = vlaneseq
        %v4164 = vshrl.u32 %v4163, 7
        %v4165 = vsub.s32 %v4162, %v4164
        %v4166 = vrot.slane %v4152, %v4165
        %v4167 = vcombine.low %v4142, %v4150
        %v4168 = vcombine.high %v4142, %v4150
        %v4170 = vunpack.c.l.s4 1934713408
        %v4171 = vunpack.c.0.s8 %v4170
        %v4172 = vlaneseq
        %v4173 = vshrl.u32 %v4172, 7
        %v4174 = vsub.s32 %v4171, %v4173
        %v4175 = vrot.slane %v4167, %v4174
        %v4177 = vunpack.c.l.s4 1934713408
        %v4178 = vunpack.c.0.s8 %v4177
        %v4179 = vlaneseq
        %v4180 = vshrl.u32 %v4179, 7
        %v4181 = vsub.s32 %v4178, %v4180
        %v4182 = vrot.slane %v4168, %v4181
        %v4183 = vcombine.low %v4159, %v4175
        %v4184 = vcombine.high %v4159, %v4175
        %v4185 = vcombine.low %v4166, %v4182
        %v4186 = vcombine.high %v4166, %v4182
        %v4187 = vcombine.low %v4091, %v4098
        %v4189 = vunpack.c.l.s4 1983009808
        %v4190 = vunpack.c.0.s8 %v4189
        %v4191 = vlaneseq
        %v4192 = vshrl.u32 %v4191, 7
        %v4193 = vsub.s32 %v4190, %v4192
        %v4194 = vrot.slane %v4187, %v4193
        %v4195 = vcombine.low %v4115, %v4116
        %v4197 = vunpack.c.l.s4 1983009808
        %v4198 = vunpack.c.0.s8 %v4197
        %v4199 = vlaneseq
        %v4200 = vshrl.u32 %v4199, 7
        %v4201 = vsub.s32 %v4198, %v4200
        %v4202 = vrot.slane %v4195, %v4201
        %v4203 = vcombine.low %v4107, %v4114
        %v4205 = vunpack.c.l.s4 1983009808
        %v4206 = vunpack.c.0.s8 %v4205
        %v4207 = vlaneseq
        %v4208 = vshrl.u32 %v4207, 7
        %v4209 = vsub.s32 %v4206, %v4208
        %v4210 = vrot.slane %v4203, %v4209
        %v4211 = vcombine.low %v4117, %v4118
        %v4213 = vunpack.c.l.s4 1983009808
        %v4214 = vunpack.c.0.s8 %v4213
        %v4215 = vlaneseq
        %v4216 = vshrl.u32 %v4215, 7
        %v4217 = vsub.s32 %v4214, %v4216
        %v4218 = vrot.slane %v4211, %v4217
        %v4219 = vcombine.low %v4194, %v4202
        %v4220 = vcombine.high %v4194, %v4202
        %v4222 = vunpack.c.l.s4 1934713408
        %v4223 = vunpack.c.0.s8 %v4222
        %v4224 = vlaneseq
        %v4225 = vshrl.u32 %v4224, 7
        %v4226 = vsub.s32 %v4223, %v4225
        %v4227 = vrot.slane %v4219, %v4226
        %v4229 = vunpack.c.l.s4 1934713408
        %v4230 = vunpack.c.0.s8 %v4229
        %v4231 = vlaneseq
        %v4232 = vshrl.u32 %v4231, 7
        %v4233 = vsub.s32 %v4230, %v4232
        %v4234 = vrot.slane %v4220, %v4233
        %v4235 = vcombine.low %v4210, %v4218
        %v4236 = vcombine.high %v4210, %v4218
        %v4238 = vunpack.c.l.s4 1934713408
        %v4239 = vunpack.c.0.s8 %v4238
        %v4240 = vlaneseq
        %v4241 = vshrl.u32 %v4240, 7
        %v4242 = vsub.s32 %v4239, %v4241
        %v4243 = vrot.slane %v4235, %v4242
        %v4245 = vunpack.c.l.s4 1934713408
        %v4246 = vunpack.c.0.s8 %v4245
        %v4247 = vlaneseq
        %v4248 = vshrl.u32 %v4247, 7
        %v4249 = vsub.s32 %v4246, %v4248
        %v4250 = vrot.slane %v4236, %v4249
        %v4251 = vcombine.low %v4227, %v4243
        %v4252 = vcombine.high %v4227, %v4243
        %v4253 = vcombine.low %v4234, %v4250
        %v4254 = vcombine.high %v4234, %v4250
        %4257 = vrot.lane.b32.xlu0 %v3665, 96
        %v4258 = vpop.permute.xlu0 %4257
        %4259 = vrot.lane.b32.xlu0 %v3668, 96
        %v4260 = vpop.permute.xlu0 %4259
        %4263 = vrot.lane.b32.xlu0 %v3665, 64
        %v4264 = vpop.permute.xlu0 %4263
        %4265 = vrot.lane.b32.xlu0 %v3668, 64
        %v4266 = vpop.permute.xlu0 %4265
        %4269 = vrot.lane.b32.xlu0 %v3665, 32
        %v4270 = vpop.permute.xlu0 %4269
        %4271 = vrot.lane.b32.xlu0 %v3668, 32
        %v4272 = vpop.permute.xlu0 %4271
        %v4275 = vcombine.low %v3665, %v4264
        %v4276 = vcombine.high %v3665, %v4264
        %v4278 = vunpack.c.l.s4 1983009808
        %v4279 = vunpack.c.0.s8 %v4278
        %v4280 = vlaneseq
        %v4281 = vshrl.u32 %v4280, 7
        %v4282 = vsub.s32 %v4279, %v4281
        %v4283 = vrot.slane %v4275, %v4282
        %v4285 = vunpack.c.l.s4 1983009808
        %v4286 = vunpack.c.0.s8 %v4285
        %v4287 = vlaneseq
        %v4288 = vshrl.u32 %v4287, 7
        %v4289 = vsub.s32 %v4286, %v4288
        %v4290 = vrot.slane %v4276, %v4289
        %v4291 = vcombine.low %v4258, %v4270
        %v4292 = vcombine.high %v4258, %v4270
        %v4294 = vunpack.c.l.s4 1983009808
        %v4295 = vunpack.c.0.s8 %v4294
        %v4296 = vlaneseq
        %v4297 = vshrl.u32 %v4296, 7
        %v4298 = vsub.s32 %v4295, %v4297
        %v4299 = vrot.slane %v4291, %v4298
        %v4301 = vunpack.c.l.s4 1983009808
        %v4302 = vunpack.c.0.s8 %v4301
        %v4303 = vlaneseq
        %v4304 = vshrl.u32 %v4303, 7
        %v4305 = vsub.s32 %v4302, %v4304
        %v4306 = vrot.slane %v4292, %v4305
        %v4307 = vcombine.low %v4283, %v4299
        %v4308 = vcombine.high %v4283, %v4299
        %v4310 = vunpack.c.l.s4 1934713408
        %v4311 = vunpack.c.0.s8 %v4310
        %v4312 = vlaneseq
        %v4313 = vshrl.u32 %v4312, 7
        %v4314 = vsub.s32 %v4311, %v4313
        %v4315 = vrot.slane %v4307, %v4314
        %v4317 = vunpack.c.l.s4 1934713408
        %v4318 = vunpack.c.0.s8 %v4317
        %v4319 = vlaneseq
        %v4320 = vshrl.u32 %v4319, 7
        %v4321 = vsub.s32 %v4318, %v4320
        %v4322 = vrot.slane %v4308, %v4321
        %v4323 = vcombine.low %v4290, %v4306
        %v4324 = vcombine.high %v4290, %v4306
        %v4326 = vunpack.c.l.s4 1934713408
        %v4327 = vunpack.c.0.s8 %v4326
        %v4328 = vlaneseq
        %v4329 = vshrl.u32 %v4328, 7
        %v4330 = vsub.s32 %v4327, %v4329
        %v4331 = vrot.slane %v4323, %v4330
        %v4333 = vunpack.c.l.s4 1934713408
        %v4334 = vunpack.c.0.s8 %v4333
        %v4335 = vlaneseq
        %v4336 = vshrl.u32 %v4335, 7
        %v4337 = vsub.s32 %v4334, %v4336
        %v4338 = vrot.slane %v4324, %v4337
        %v4339 = vcombine.high %v4315, 0.0
        %v4340 = vcombine.high %v4322, 0.0
        %v4341 = vcombine.high %v4331, 0.0
        %v4342 = vcombine.high %v4338, 0.0
        %v4343 = vcombine.low %v3668, %v4266
        %v4344 = vcombine.high %v3668, %v4266
        %v4346 = vunpack.c.l.s4 1983009808
        %v4347 = vunpack.c.0.s8 %v4346
        %v4348 = vlaneseq
        %v4349 = vshrl.u32 %v4348, 7
        %v4350 = vsub.s32 %v4347, %v4349
        %v4351 = vrot.slane %v4343, %v4350
        %v4353 = vunpack.c.l.s4 1983009808
        %v4354 = vunpack.c.0.s8 %v4353
        %v4355 = vlaneseq
        %v4356 = vshrl.u32 %v4355, 7
        %v4357 = vsub.s32 %v4354, %v4356
        %v4358 = vrot.slane %v4344, %v4357
        %v4359 = vcombine.low %v4260, %v4272
        %v4360 = vcombine.high %v4260, %v4272
        %v4362 = vunpack.c.l.s4 1983009808
        %v4363 = vunpack.c.0.s8 %v4362
        %v4364 = vlaneseq
        %v4365 = vshrl.u32 %v4364, 7
        %v4366 = vsub.s32 %v4363, %v4365
        %v4367 = vrot.slane %v4359, %v4366
        %v4369 = vunpack.c.l.s4 1983009808
        %v4370 = vunpack.c.0.s8 %v4369
        %v4371 = vlaneseq
        %v4372 = vshrl.u32 %v4371, 7
        %v4373 = vsub.s32 %v4370, %v4372
        %v4374 = vrot.slane %v4360, %v4373
        %v4375 = vcombine.low %v4351, %v4367
        %v4376 = vcombine.high %v4351, %v4367
        %v4378 = vunpack.c.l.s4 1934713408
        %v4379 = vunpack.c.0.s8 %v4378
        %v4380 = vlaneseq
        %v4381 = vshrl.u32 %v4380, 7
        %v4382 = vsub.s32 %v4379, %v4381
        %v4383 = vrot.slane %v4375, %v4382
        %v4385 = vunpack.c.l.s4 1934713408
        %v4386 = vunpack.c.0.s8 %v4385
        %v4387 = vlaneseq
        %v4388 = vshrl.u32 %v4387, 7
        %v4389 = vsub.s32 %v4386, %v4388
        %v4390 = vrot.slane %v4376, %v4389
        %v4391 = vcombine.low %v4358, %v4374
        %v4392 = vcombine.high %v4358, %v4374
        %v4394 = vunpack.c.l.s4 1934713408
        %v4395 = vunpack.c.0.s8 %v4394
        %v4396 = vlaneseq
        %v4397 = vshrl.u32 %v4396, 7
        %v4398 = vsub.s32 %v4395, %v4397
        %v4399 = vrot.slane %v4391, %v4398
        %v4401 = vunpack.c.l.s4 1934713408
        %v4402 = vunpack.c.0.s8 %v4401
        %v4403 = vlaneseq
        %v4404 = vshrl.u32 %v4403, 7
        %v4405 = vsub.s32 %v4402, %v4404
        %v4406 = vrot.slane %v4392, %v4405
        %v4407 = vcombine.high %v4383, 0.0
        %v4408 = vcombine.high %v4390, 0.0
        %v4409 = vcombine.high %v4399, 0.0
        %v4410 = vcombine.high %v4406, 0.0
        %v4411 = vcombine.low %v4315, %v4322
        %v4413 = vunpack.c.l.s4 1983009808
        %v4414 = vunpack.c.0.s8 %v4413
        %v4415 = vlaneseq
        %v4416 = vshrl.u32 %v4415, 7
        %v4417 = vsub.s32 %v4414, %v4416
        %v4418 = vrot.slane %v4411, %v4417
        %v4419 = vcombine.low %v4339, %v4340
        %v4421 = vunpack.c.l.s4 1983009808
        %v4422 = vunpack.c.0.s8 %v4421
        %v4423 = vlaneseq
        %v4424 = vshrl.u32 %v4423, 7
        %v4425 = vsub.s32 %v4422, %v4424
        %v4426 = vrot.slane %v4419, %v4425
        %v4427 = vcombine.low %v4331, %v4338
        %v4429 = vunpack.c.l.s4 1983009808
        %v4430 = vunpack.c.0.s8 %v4429
        %v4431 = vlaneseq
        %v4432 = vshrl.u32 %v4431, 7
        %v4433 = vsub.s32 %v4430, %v4432
        %v4434 = vrot.slane %v4427, %v4433
        %v4435 = vcombine.low %v4341, %v4342
        %v4437 = vunpack.c.l.s4 1983009808
        %v4438 = vunpack.c.0.s8 %v4437
        %v4439 = vlaneseq
        %v4440 = vshrl.u32 %v4439, 7
        %v4441 = vsub.s32 %v4438, %v4440
        %v4442 = vrot.slane %v4435, %v4441
        %v4443 = vcombine.low %v4418, %v4426
        %v4444 = vcombine.high %v4418, %v4426
        %v4446 = vunpack.c.l.s4 1934713408
        %v4447 = vunpack.c.0.s8 %v4446
        %v4448 = vlaneseq
        %v4449 = vshrl.u32 %v4448, 7
        %v4450 = vsub.s32 %v4447, %v4449
        %v4451 = vrot.slane %v4443, %v4450
        %v4453 = vunpack.c.l.s4 1934713408
        %v4454 = vunpack.c.0.s8 %v4453
        %v4455 = vlaneseq
        %v4456 = vshrl.u32 %v4455, 7
        %v4457 = vsub.s32 %v4454, %v4456
        %v4458 = vrot.slane %v4444, %v4457
        %v4459 = vcombine.low %v4434, %v4442
        %v4460 = vcombine.high %v4434, %v4442
        %v4462 = vunpack.c.l.s4 1934713408
        %v4463 = vunpack.c.0.s8 %v4462
        %v4464 = vlaneseq
        %v4465 = vshrl.u32 %v4464, 7
        %v4466 = vsub.s32 %v4463, %v4465
        %v4467 = vrot.slane %v4459, %v4466
        %v4469 = vunpack.c.l.s4 1934713408
        %v4470 = vunpack.c.0.s8 %v4469
        %v4471 = vlaneseq
        %v4472 = vshrl.u32 %v4471, 7
        %v4473 = vsub.s32 %v4470, %v4472
        %v4474 = vrot.slane %v4460, %v4473
        %v4475 = vcombine.low %v4451, %v4467
        %v4476 = vcombine.high %v4451, %v4467
        %v4477 = vcombine.low %v4458, %v4474
        %v4478 = vcombine.high %v4458, %v4474
        %v4479 = vcombine.low %v4383, %v4390
        %v4481 = vunpack.c.l.s4 1983009808
        %v4482 = vunpack.c.0.s8 %v4481
        %v4483 = vlaneseq
        %v4484 = vshrl.u32 %v4483, 7
        %v4485 = vsub.s32 %v4482, %v4484
        %v4486 = vrot.slane %v4479, %v4485
        %v4487 = vcombine.low %v4407, %v4408
        %v4489 = vunpack.c.l.s4 1983009808
        %v4490 = vunpack.c.0.s8 %v4489
        %v4491 = vlaneseq
        %v4492 = vshrl.u32 %v4491, 7
        %v4493 = vsub.s32 %v4490, %v4492
        %v4494 = vrot.slane %v4487, %v4493
        %v4495 = vcombine.low %v4399, %v4406
        %v4497 = vunpack.c.l.s4 1983009808
        %v4498 = vunpack.c.0.s8 %v4497
        %v4499 = vlaneseq
        %v4500 = vshrl.u32 %v4499, 7
        %v4501 = vsub.s32 %v4498, %v4500
        %v4502 = vrot.slane %v4495, %v4501
        %v4503 = vcombine.low %v4409, %v4410
        %v4505 = vunpack.c.l.s4 1983009808
        %v4506 = vunpack.c.0.s8 %v4505
        %v4507 = vlaneseq
        %v4508 = vshrl.u32 %v4507, 7
        %v4509 = vsub.s32 %v4506, %v4508
        %v4510 = vrot.slane %v4503, %v4509
        %v4511 = vcombine.low %v4486, %v4494
        %v4512 = vcombine.high %v4486, %v4494
        %v4514 = vunpack.c.l.s4 1934713408
        %v4515 = vunpack.c.0.s8 %v4514
        %v4516 = vlaneseq
        %v4517 = vshrl.u32 %v4516, 7
        %v4518 = vsub.s32 %v4515, %v4517
        %v4519 = vrot.slane %v4511, %v4518
        %v4521 = vunpack.c.l.s4 1934713408
        %v4522 = vunpack.c.0.s8 %v4521
        %v4523 = vlaneseq
        %v4524 = vshrl.u32 %v4523, 7
        %v4525 = vsub.s32 %v4522, %v4524
        %v4526 = vrot.slane %v4512, %v4525
        %v4527 = vcombine.low %v4502, %v4510
        %v4528 = vcombine.high %v4502, %v4510
        %v4530 = vunpack.c.l.s4 1934713408
        %v4531 = vunpack.c.0.s8 %v4530
        %v4532 = vlaneseq
        %v4533 = vshrl.u32 %v4532, 7
        %v4534 = vsub.s32 %v4531, %v4533
        %v4535 = vrot.slane %v4527, %v4534
        %v4537 = vunpack.c.l.s4 1934713408
        %v4538 = vunpack.c.0.s8 %v4537
        %v4539 = vlaneseq
        %v4540 = vshrl.u32 %v4539, 7
        %v4541 = vsub.s32 %v4538, %v4540
        %v4542 = vrot.slane %v4528, %v4541
        %v4543 = vcombine.low %v4519, %v4535
        %v4544 = vcombine.high %v4519, %v4535
        %v4545 = vcombine.low %v4526, %v4542
        %v4546 = vcombine.high %v4526, %v4542
        %v4547 = vpack.c.bf16 %v3959, %v3891
        %v4548 = vpack.c.bf16 %v3960, %v3892
        %v4549 = vpack.c.bf16 %v3961, %v3893
        %v4550 = vpack.c.bf16 %v3962, %v3894
        %v4551 = vpack.c.bf16 %v4251, %v4183
        %v4552 = vpack.c.bf16 %v4252, %v4184
        %v4553 = vpack.c.bf16 %v4253, %v4185
        %v4554 = vpack.c.bf16 %v4254, %v4186
        %v4556 = vsel %vm1899, %v4547, 0
        %v4559 = vsel %vm1899, %v4551, 0
        %4561 = vmatprep.subr.bf16.mxu0 0
        %4562 = vmatpush1.bf16.xpose.msra.mxu0 %v4559
        %4563 = vmatprep.subr.bf16.mxu0 0
        %4564 = vmatpush1.bf16.xpose.msra.mxu0 0
        %4565 = vmatprep.subr.bf16.mxu0 0
        %4566 = vmatpush1.bf16.xpose.msra.mxu0 0
        %4567 = vmatprep.subr.bf16.mxu0 0
        %4568 = vmatpush1.bf16.xpose.msra.mxu0 0
        %4569 = vmatprep.subr.bf16.mxu0 0
        %4570 = vmatpush1.bf16.xpose.msra.mxu0 0
        %4571 = vmatprep.subr.bf16.mxu0 0
        %4572 = vmatpush1.bf16.xpose.msra.mxu0 0
        %4573 = vmatprep.subr.bf16.mxu0 0
        %4574 = vmatpush1.bf16.xpose.msra.mxu0 0
        %4575 = vmatprep.subr.bf16.mxu0 0
        %4576 = vmatpush1.bf16.xpose.msra.mxu0 0
        %4577 = vmatprep.subr.bf16.mxu0 0
        %4578 = vmatpush1.bf16.xpose.msra.mxu0 0
        %4579 = vmatprep.subr.bf16.mxu0 0
        %4580 = vmatpush1.bf16.xpose.msra.mxu0 0
        %4581 = vmatprep.subr.bf16.mxu0 0
        %4582 = vmatpush1.bf16.xpose.msra.mxu0 0
        %4583 = vmatprep.subr.bf16.mxu0 0
        %4584 = vmatpush1.bf16.xpose.msra.mxu0 0
        %4585 = vmatprep.subr.bf16.mxu0 0
        %4586 = vmatpush1.bf16.xpose.msra.mxu0 0
        %4587 = vmatprep.subr.bf16.mxu0 0
        %4588 = vmatpush1.bf16.xpose.msra.mxu0 0
        %4589 = vmatprep.subr.bf16.mxu0 0
        %4590 = vmatpush1.bf16.xpose.msra.mxu0 0
        %4591 = vmatprep.subr.bf16.mxu0 0
        %4592 = vmatpush1.bf16.xpose.msra.mxu0 0
        %4593 = vmatprep.mubr.bf16.mxu0 0
        %4594 = vmatmul.mubr.bf16.gmra.mrb[0].mxu0 %v4556
        %v4595 = vpop.f32.mrb[0].mxu0
        %v4596 = vadd.f32 0.0, %v4595
        %v4597 = vpop.f32.mrb[0].mxu0
        %v4598 = vpop.f32.mrb[0].mxu0
        %v4599 = vadd.f32 0.0, %v4598
        %v4600 = vpop.f32.mrb[0].mxu0
        %4601 = vdwg.mxu0
        %v4603 = vsel %vm1899, %v4548, 0
        %v4606 = vsel %vm1899, %v4552, 0
        %4608 = vmatprep.subr.bf16.mxu0 0
        %4609 = vmatpush1.bf16.xpose.msra.mxu0 %v4606
        %4610 = vmatprep.subr.bf16.mxu0 0
        %4611 = vmatpush1.bf16.xpose.msra.mxu0 0
        %4612 = vmatprep.subr.bf16.mxu0 0
        %4613 = vmatpush1.bf16.xpose.msra.mxu0 0
        %4614 = vmatprep.subr.bf16.mxu0 0
        %4615 = vmatpush1.bf16.xpose.msra.mxu0 0
        %4616 = vmatprep.subr.bf16.mxu0 0
        %4617 = vmatpush1.bf16.xpose.msra.mxu0 0
        %4618 = vmatprep.subr.bf16.mxu0 0
        %4619 = vmatpush1.bf16.xpose.msra.mxu0 0
        %4620 = vmatprep.subr.bf16.mxu0 0
        %4621 = vmatpush1.bf16.xpose.msra.mxu0 0
        %4622 = vmatprep.subr.bf16.mxu0 0
        %4623 = vmatpush1.bf16.xpose.msra.mxu0 0
        %4624 = vmatprep.subr.bf16.mxu0 0
        %4625 = vmatpush1.bf16.xpose.msra.mxu0 0
        %4626 = vmatprep.subr.bf16.mxu0 0
        %4627 = vmatpush1.bf16.xpose.msra.mxu0 0
        %4628 = vmatprep.subr.bf16.mxu0 0
        %4629 = vmatpush1.bf16.xpose.msra.mxu0 0
        %4630 = vmatprep.subr.bf16.mxu0 0
        %4631 = vmatpush1.bf16.xpose.msra.mxu0 0
        %4632 = vmatprep.subr.bf16.mxu0 0
        %4633 = vmatpush1.bf16.xpose.msra.mxu0 0
        %4634 = vmatprep.subr.bf16.mxu0 0
        %4635 = vmatpush1.bf16.xpose.msra.mxu0 0
        %4636 = vmatprep.subr.bf16.mxu0 0
        %4637 = vmatpush1.bf16.xpose.msra.mxu0 0
        %4638 = vmatprep.subr.bf16.mxu0 0
        %4639 = vmatpush1.bf16.xpose.msra.mxu0 0
        %4640 = vmatprep.mubr.bf16.mxu0 0
        %4641 = vmatmul.mubr.bf16.gmra.mrb[0].mxu0 %v4603
        %v4642 = vpop.f32.mrb[0].mxu0
        %v4643 = vadd.f32 0.0, %v4642
        %v4644 = vpop.f32.mrb[0].mxu0
        %v4645 = vpop.f32.mrb[0].mxu0
        %v4646 = vadd.f32 0.0, %v4645
        %v4647 = vpop.f32.mrb[0].mxu0
        %4648 = vdwg.mxu0
        %v4650 = vsel %vm1899, %v4549, 0
        %v4653 = vsel %vm1899, %v4553, 0
        %4655 = vmatprep.subr.bf16.mxu0 0
        %4656 = vmatpush1.bf16.xpose.msra.mxu0 %v4653
        %4657 = vmatprep.subr.bf16.mxu0 0
        %4658 = vmatpush1.bf16.xpose.msra.mxu0 0
        %4659 = vmatprep.subr.bf16.mxu0 0
        %4660 = vmatpush1.bf16.xpose.msra.mxu0 0
        %4661 = vmatprep.subr.bf16.mxu0 0
        %4662 = vmatpush1.bf16.xpose.msra.mxu0 0
        %4663 = vmatprep.subr.bf16.mxu0 0
        %4664 = vmatpush1.bf16.xpose.msra.mxu0 0
        %4665 = vmatprep.subr.bf16.mxu0 0
        %4666 = vmatpush1.bf16.xpose.msra.mxu0 0
        %4667 = vmatprep.subr.bf16.mxu0 0
        %4668 = vmatpush1.bf16.xpose.msra.mxu0 0
        %4669 = vmatprep.subr.bf16.mxu0 0
        %4670 = vmatpush1.bf16.xpose.msra.mxu0 0
        %4671 = vmatprep.subr.bf16.mxu0 0
        %4672 = vmatpush1.bf16.xpose.msra.mxu0 0
        %4673 = vmatprep.subr.bf16.mxu0 0
        %4674 = vmatpush1.bf16.xpose.msra.mxu0 0
        %4675 = vmatprep.subr.bf16.mxu0 0
        %4676 = vmatpush1.bf16.xpose.msra.mxu0 0
        %4677 = vmatprep.subr.bf16.mxu0 0
        %4678 = vmatpush1.bf16.xpose.msra.mxu0 0
        %4679 = vmatprep.subr.bf16.mxu0 0
        %4680 = vmatpush1.bf16.xpose.msra.mxu0 0
        %4681 = vmatprep.subr.bf16.mxu0 0
        %4682 = vmatpush1.bf16.xpose.msra.mxu0 0
        %4683 = vmatprep.subr.bf16.mxu0 0
        %4684 = vmatpush1.bf16.xpose.msra.mxu0 0
        %4685 = vmatprep.subr.bf16.mxu0 0
        %4686 = vmatpush1.bf16.xpose.msra.mxu0 0
        %4687 = vmatprep.mubr.bf16.mxu0 0
        %4688 = vmatmul.mubr.bf16.gmra.mrb[0].mxu0 %v4650
        %v4689 = vpop.f32.mrb[0].mxu0
        %v4690 = vadd.f32 0.0, %v4689
        %v4691 = vpop.f32.mrb[0].mxu0
        %v4692 = vpop.f32.mrb[0].mxu0
        %v4693 = vadd.f32 0.0, %v4692
        %v4694 = vpop.f32.mrb[0].mxu0
        %4695 = vdwg.mxu0
        %v4697 = vsel %vm1899, %v4550, 0
        %v4700 = vsel %vm1899, %v4554, 0
        %4702 = vmatprep.subr.bf16.mxu0 0
        %4703 = vmatpush1.bf16.xpose.msra.mxu0 %v4700
        %4704 = vmatprep.subr.bf16.mxu0 0
        %4705 = vmatpush1.bf16.xpose.msra.mxu0 0
        %4706 = vmatprep.subr.bf16.mxu0 0
        %4707 = vmatpush1.bf16.xpose.msra.mxu0 0
        %4708 = vmatprep.subr.bf16.mxu0 0
        %4709 = vmatpush1.bf16.xpose.msra.mxu0 0
        %4710 = vmatprep.subr.bf16.mxu0 0
        %4711 = vmatpush1.bf16.xpose.msra.mxu0 0
        %4712 = vmatprep.subr.bf16.mxu0 0
        %4713 = vmatpush1.bf16.xpose.msra.mxu0 0
        %4714 = vmatprep.subr.bf16.mxu0 0
        %4715 = vmatpush1.bf16.xpose.msra.mxu0 0
        %4716 = vmatprep.subr.bf16.mxu0 0
        %4717 = vmatpush1.bf16.xpose.msra.mxu0 0
        %4718 = vmatprep.subr.bf16.mxu0 0
        %4719 = vmatpush1.bf16.xpose.msra.mxu0 0
        %4720 = vmatprep.subr.bf16.mxu0 0
        %4721 = vmatpush1.bf16.xpose.msra.mxu0 0
        %4722 = vmatprep.subr.bf16.mxu0 0
        %4723 = vmatpush1.bf16.xpose.msra.mxu0 0
        %4724 = vmatprep.subr.bf16.mxu0 0
        %4725 = vmatpush1.bf16.xpose.msra.mxu0 0
        %4726 = vmatprep.subr.bf16.mxu0 0
        %4727 = vmatpush1.bf16.xpose.msra.mxu0 0
        %4728 = vmatprep.subr.bf16.mxu0 0
        %4729 = vmatpush1.bf16.xpose.msra.mxu0 0
        %4730 = vmatprep.subr.bf16.mxu0 0
        %4731 = vmatpush1.bf16.xpose.msra.mxu0 0
        %4732 = vmatprep.subr.bf16.mxu0 0
        %4733 = vmatpush1.bf16.xpose.msra.mxu0 0
        %4734 = vmatprep.mubr.bf16.mxu0 0
        %4735 = vmatmul.mubr.bf16.gmra.mrb[0].mxu0 %v4697
        %v4736 = vpop.f32.mrb[0].mxu0
        %v4737 = vadd.f32 0.0, %v4736
        %v4738 = vpop.f32.mrb[0].mxu0
        %v4739 = vpop.f32.mrb[0].mxu0
        %v4740 = vadd.f32 0.0, %v4739
        %v4741 = vpop.f32.mrb[0].mxu0
        %4742 = vdwg.mxu0
        %v4743 = vsel %vm2090, %v4596, -1e+30
        %v4744 = vsel %vm2091, %v4599, -1e+30
        %v4745 = vsel %vm2090, %v4643, -1e+30
        %v4746 = vsel %vm2091, %v4646, -1e+30
        %v4747 = vsel %vm2090, %v4690, -1e+30
        %v4748 = vsel %vm2091, %v4693, -1e+30
        %v4749 = vsel %vm2090, %v4737, -1e+30
        %v4750 = vsel %vm2091, %v4740, -1e+30
        %v4751 = vsel %vm2100, %v4743, -inf
        %4752 = vmax.xlane.f32.xlu0 %v4751
        %v4753 = vpop.xlane.xlu0 %4752
        %v4754 = vsel %vm2100, %v4744, -inf
        %4755 = vmax.xlane.f32.xlu0 %v4754
        %v4756 = vpop.xlane.xlu0 %4755
        %v4757 = vsel %vm2100, %v4745, -inf
        %4758 = vmax.xlane.f32.xlu0 %v4757
        %v4759 = vpop.xlane.xlu0 %4758
        %v4760 = vsel %vm2100, %v4746, -inf
        %4761 = vmax.xlane.f32.xlu0 %v4760
        %v4762 = vpop.xlane.xlu0 %4761
        %v4763 = vsel %vm2100, %v4747, -inf
        %4764 = vmax.xlane.f32.xlu0 %v4763
        %v4765 = vpop.xlane.xlu0 %4764
        %v4766 = vsel %vm2100, %v4748, -inf
        %4767 = vmax.xlane.f32.xlu0 %v4766
        %v4768 = vpop.xlane.xlu0 %4767
        %v4769 = vsel %vm2100, %v4749, -inf
        %4770 = vmax.xlane.f32.xlu0 %v4769
        %v4771 = vpop.xlane.xlu0 %4770
        %v4772 = vsel %vm2100, %v4750, -inf
        %4773 = vmax.xlane.f32.xlu0 %v4772
        %v4774 = vpop.xlane.xlu0 %4773
        %v4775 = vsub.f32 %v4743, %v4753
        %v4776 = vsub.f32 %v4744, %v4756
        %v4777 = vsub.f32 %v4745, %v4759
        %v4778 = vsub.f32 %v4746, %v4762
        %v4779 = vsub.f32 %v4747, %v4765
        %v4780 = vsub.f32 %v4748, %v4768
        %v4781 = vsub.f32 %v4749, %v4771
        %v4782 = vsub.f32 %v4750, %v4774
        %v4783 = vmul.f32 %v4775, 1.442695
        %v4784 = vpow.pop %v4783
        %v4785 = vmul.f32 %v4776, 1.442695
        %v4786 = vpow.pop %v4785
        %v4787 = vmul.f32 %v4777, 1.442695
        %v4788 = vpow.pop %v4787
        %v4789 = vmul.f32 %v4778, 1.442695
        %v4790 = vpow.pop %v4789
        %v4791 = vmul.f32 %v4779, 1.442695
        %v4792 = vpow.pop %v4791
        %v4793 = vmul.f32 %v4780, 1.442695
        %v4794 = vpow.pop %v4793
        %v4795 = vmul.f32 %v4781, 1.442695
        %v4796 = vpow.pop %v4795
        %v4797 = vmul.f32 %v4782, 1.442695
        %v4798 = vpow.pop %v4797
        %v4799 = vsel %vm2100, %v4784, 0.0
        %4800 = vadd.xlane.f32.xlu0 %v4799
        %v4801 = vpop.xlane.xlu0 %4800
        %v4802 = vsel %vm2100, %v4786, 0.0
        %4803 = vadd.xlane.f32.xlu0 %v4802
        %v4804 = vpop.xlane.xlu0 %4803
        %v4805 = vsel %vm2100, %v4788, 0.0
        %4806 = vadd.xlane.f32.xlu0 %v4805
        %v4807 = vpop.xlane.xlu0 %4806
        %v4808 = vsel %vm2100, %v4790, 0.0
        %4809 = vadd.xlane.f32.xlu0 %v4808
        %v4810 = vpop.xlane.xlu0 %4809
        %v4811 = vsel %vm2100, %v4792, 0.0
        %4812 = vadd.xlane.f32.xlu0 %v4811
        %v4813 = vpop.xlane.xlu0 %4812
        %v4814 = vsel %vm2100, %v4794, 0.0
        %4815 = vadd.xlane.f32.xlu0 %v4814
        %v4816 = vpop.xlane.xlu0 %4815
        %v4817 = vsel %vm2100, %v4796, 0.0
        %4818 = vadd.xlane.f32.xlu0 %v4817
        %v4819 = vpop.xlane.xlu0 %4818
        %v4820 = vsel %vm2100, %v4798, 0.0
        %4821 = vadd.xlane.f32.xlu0 %v4820
        %v4822 = vpop.xlane.xlu0 %4821
        %v4823 = vrcp.pop %v4801
        %v4824 = vrcp.pop %v4804
        %v4825 = vrcp.pop %v4807
        %v4826 = vrcp.pop %v4810
        %v4827 = vrcp.pop %v4813
        %v4828 = vrcp.pop %v4816
        %v4829 = vrcp.pop %v4819
        %v4830 = vrcp.pop %v4822
        %v4831 = vmul.f32 %v4784, %v4823
        %v4832 = vmul.f32 %v4786, %v4824
        %v4833 = vmul.f32 %v4788, %v4825
        %v4834 = vmul.f32 %v4790, %v4826
        %v4835 = vmul.f32 %v4792, %v4827
        %v4836 = vmul.f32 %v4794, %v4828
        %v4837 = vmul.f32 %v4796, %v4829
        %v4838 = vmul.f32 %v4798, %v4830
        %v4839 = vpack.c.bf16 %v4832, %v4831
        %v4840 = vpack.c.bf16 %v4834, %v4833
        %v4841 = vpack.c.bf16 %v4836, %v4835
        %v4842 = vpack.c.bf16 %v4838, %v4837
        %v4843 = vpack.c.bf16 %v4543, %v4475
        %v4844 = vpack.c.bf16 %v4544, %v4476
        %v4845 = vpack.c.bf16 %v4545, %v4477
        %v4846 = vpack.c.bf16 %v4546, %v4478
        %v4848 = vsel %vm2100, %v4839, 0
        %4850 = vmatprep.subr.bf16.mxu0 0
        %4851 = vmatpush1.bf16.msra.mxu0 %v4843
        %4852 = vmatprep.subr.bf16.mxu0 0
        %4853 = vmatpush1.bf16.msra.mxu0 0
        %4854 = vmatprep.subr.bf16.mxu0 0
        %4855 = vmatpush1.bf16.msra.mxu0 0
        %4856 = vmatprep.subr.bf16.mxu0 0
        %4857 = vmatpush1.bf16.msra.mxu0 0
        %4858 = vmatprep.subr.bf16.mxu0 0
        %4859 = vmatpush1.bf16.msra.mxu0 0
        %4860 = vmatprep.subr.bf16.mxu0 0
        %4861 = vmatpush1.bf16.msra.mxu0 0
        %4862 = vmatprep.subr.bf16.mxu0 0
        %4863 = vmatpush1.bf16.msra.mxu0 0
        %4864 = vmatprep.subr.bf16.mxu0 0
        %4865 = vmatpush1.bf16.msra.mxu0 0
        %4866 = vmatprep.subr.bf16.mxu0 0
        %4867 = vmatpush1.bf16.msra.mxu0 0
        %4868 = vmatprep.subr.bf16.mxu0 0
        %4869 = vmatpush1.bf16.msra.mxu0 0
        %4870 = vmatprep.subr.bf16.mxu0 0
        %4871 = vmatpush1.bf16.msra.mxu0 0
        %4872 = vmatprep.subr.bf16.mxu0 0
        %4873 = vmatpush1.bf16.msra.mxu0 0
        %4874 = vmatprep.subr.bf16.mxu0 0
        %4875 = vmatpush1.bf16.msra.mxu0 0
        %4876 = vmatprep.subr.bf16.mxu0 0
        %4877 = vmatpush1.bf16.msra.mxu0 0
        %4878 = vmatprep.subr.bf16.mxu0 0
        %4879 = vmatpush1.bf16.msra.mxu0 0
        %4880 = vmatprep.subr.bf16.mxu0 0
        %4881 = vmatpush1.bf16.msra.mxu0 0
        %4882 = vmatprep.mubr.bf16.mxu0 0
        %4883 = vmatmul.mubr.bf16.gmra.mrb[0].mxu0 %v4848
        %v4884 = vpop.f32.mrb[0].mxu0
        %v4885 = vadd.f32 0.0, %v4884
        %v4886 = vpop.f32.mrb[0].mxu0
        %v4887 = vpop.f32.mrb[0].mxu0
        %v4888 = vadd.f32 0.0, %v4887
        %v4889 = vpop.f32.mrb[0].mxu0
        %4890 = vdwg.mxu0
        %v4892 = vsel %vm2100, %v4840, 0
        %4894 = vmatprep.subr.bf16.mxu0 0
        %4895 = vmatpush1.bf16.msra.mxu0 %v4844
        %4896 = vmatprep.subr.bf16.mxu0 0
        %4897 = vmatpush1.bf16.msra.mxu0 0
        %4898 = vmatprep.subr.bf16.mxu0 0
        %4899 = vmatpush1.bf16.msra.mxu0 0
        %4900 = vmatprep.subr.bf16.mxu0 0
        %4901 = vmatpush1.bf16.msra.mxu0 0
        %4902 = vmatprep.subr.bf16.mxu0 0
        %4903 = vmatpush1.bf16.msra.mxu0 0
        %4904 = vmatprep.subr.bf16.mxu0 0
        %4905 = vmatpush1.bf16.msra.mxu0 0
        %4906 = vmatprep.subr.bf16.mxu0 0
        %4907 = vmatpush1.bf16.msra.mxu0 0
        %4908 = vmatprep.subr.bf16.mxu0 0
        %4909 = vmatpush1.bf16.msra.mxu0 0
        %4910 = vmatprep.subr.bf16.mxu0 0
        %4911 = vmatpush1.bf16.msra.mxu0 0
        %4912 = vmatprep.subr.bf16.mxu0 0
        %4913 = vmatpush1.bf16.msra.mxu0 0
        %4914 = vmatprep.subr.bf16.mxu0 0
        %4915 = vmatpush1.bf16.msra.mxu0 0
        %4916 = vmatprep.subr.bf16.mxu0 0
        %4917 = vmatpush1.bf16.msra.mxu0 0
        %4918 = vmatprep.subr.bf16.mxu0 0
        %4919 = vmatpush1.bf16.msra.mxu0 0
        %4920 = vmatprep.subr.bf16.mxu0 0
        %4921 = vmatpush1.bf16.msra.mxu0 0
        %4922 = vmatprep.subr.bf16.mxu0 0
        %4923 = vmatpush1.bf16.msra.mxu0 0
        %4924 = vmatprep.subr.bf16.mxu0 0
        %4925 = vmatpush1.bf16.msra.mxu0 0
        %4926 = vmatprep.mubr.bf16.mxu0 0
        %4927 = vmatmul.mubr.bf16.gmra.mrb[0].mxu0 %v4892
        %v4928 = vpop.f32.mrb[0].mxu0
        %v4929 = vadd.f32 0.0, %v4928
        %v4930 = vpop.f32.mrb[0].mxu0
        %v4931 = vpop.f32.mrb[0].mxu0
        %v4932 = vadd.f32 0.0, %v4931
        %v4933 = vpop.f32.mrb[0].mxu0
        %4934 = vdwg.mxu0
        %v4936 = vsel %vm2100, %v4841, 0
        %4938 = vmatprep.subr.bf16.mxu0 0
        %4939 = vmatpush1.bf16.msra.mxu0 %v4845
        %4940 = vmatprep.subr.bf16.mxu0 0
        %4941 = vmatpush1.bf16.msra.mxu0 0
        %4942 = vmatprep.subr.bf16.mxu0 0
        %4943 = vmatpush1.bf16.msra.mxu0 0
        %4944 = vmatprep.subr.bf16.mxu0 0
        %4945 = vmatpush1.bf16.msra.mxu0 0
        %4946 = vmatprep.subr.bf16.mxu0 0
        %4947 = vmatpush1.bf16.msra.mxu0 0
        %4948 = vmatprep.subr.bf16.mxu0 0
        %4949 = vmatpush1.bf16.msra.mxu0 0
        %4950 = vmatprep.subr.bf16.mxu0 0
        %4951 = vmatpush1.bf16.msra.mxu0 0
        %4952 = vmatprep.subr.bf16.mxu0 0
        %4953 = vmatpush1.bf16.msra.mxu0 0
        %4954 = vmatprep.subr.bf16.mxu0 0
        %4955 = vmatpush1.bf16.msra.mxu0 0
        %4956 = vmatprep.subr.bf16.mxu0 0
        %4957 = vmatpush1.bf16.msra.mxu0 0
        %4958 = vmatprep.subr.bf16.mxu0 0
        %4959 = vmatpush1.bf16.msra.mxu0 0
        %4960 = vmatprep.subr.bf16.mxu0 0
        %4961 = vmatpush1.bf16.msra.mxu0 0
        %4962 = vmatprep.subr.bf16.mxu0 0
        %4963 = vmatpush1.bf16.msra.mxu0 0
        %4964 = vmatprep.subr.bf16.mxu0 0
        %4965 = vmatpush1.bf16.msra.mxu0 0
        %4966 = vmatprep.subr.bf16.mxu0 0
        %4967 = vmatpush1.bf16.msra.mxu0 0
        %4968 = vmatprep.subr.bf16.mxu0 0
        %4969 = vmatpush1.bf16.msra.mxu0 0
        %4970 = vmatprep.mubr.bf16.mxu0 0
        %4971 = vmatmul.mubr.bf16.gmra.mrb[0].mxu0 %v4936
        %v4972 = vpop.f32.mrb[0].mxu0
        %v4973 = vadd.f32 0.0, %v4972
        %v4974 = vpop.f32.mrb[0].mxu0
        %v4975 = vpop.f32.mrb[0].mxu0
        %v4976 = vadd.f32 0.0, %v4975
        %v4977 = vpop.f32.mrb[0].mxu0
        %4978 = vdwg.mxu0
        %v4980 = vsel %vm2100, %v4842, 0
        %4982 = vmatprep.subr.bf16.mxu0 0
        %4983 = vmatpush1.bf16.msra.mxu0 %v4846
        %4984 = vmatprep.subr.bf16.mxu0 0
        %4985 = vmatpush1.bf16.msra.mxu0 0
        %4986 = vmatprep.subr.bf16.mxu0 0
        %4987 = vmatpush1.bf16.msra.mxu0 0
        %4988 = vmatprep.subr.bf16.mxu0 0
        %4989 = vmatpush1.bf16.msra.mxu0 0
        %4990 = vmatprep.subr.bf16.mxu0 0
        %4991 = vmatpush1.bf16.msra.mxu0 0
        %4992 = vmatprep.subr.bf16.mxu0 0
        %4993 = vmatpush1.bf16.msra.mxu0 0
        %4994 = vmatprep.subr.bf16.mxu0 0
        %4995 = vmatpush1.bf16.msra.mxu0 0
        %4996 = vmatprep.subr.bf16.mxu0 0
        %4997 = vmatpush1.bf16.msra.mxu0 0
        %4998 = vmatprep.subr.bf16.mxu0 0
        %4999 = vmatpush1.bf16.msra.mxu0 0
        %5000 = vmatprep.subr.bf16.mxu0 0
        %5001 = vmatpush1.bf16.msra.mxu0 0
        %5002 = vmatprep.subr.bf16.mxu0 0
        %5003 = vmatpush1.bf16.msra.mxu0 0
        %5004 = vmatprep.subr.bf16.mxu0 0
        %5005 = vmatpush1.bf16.msra.mxu0 0
        %5006 = vmatprep.subr.bf16.mxu0 0
        %5007 = vmatpush1.bf16.msra.mxu0 0
        %5008 = vmatprep.subr.bf16.mxu0 0
        %5009 = vmatpush1.bf16.msra.mxu0 0
        %5010 = vmatprep.subr.bf16.mxu0 0
        %5011 = vmatpush1.bf16.msra.mxu0 0
        %5012 = vmatprep.subr.bf16.mxu0 0
        %5013 = vmatpush1.bf16.msra.mxu0 0
        %5014 = vmatprep.mubr.bf16.mxu0 0
        %5015 = vmatmul.mubr.bf16.gmra.mrb[0].mxu0 %v4980
        %v5016 = vpop.f32.mrb[0].mxu0
        %v5017 = vadd.f32 0.0, %v5016
        %v5018 = vpop.f32.mrb[0].mxu0
        %v5019 = vpop.f32.mrb[0].mxu0
        %v5020 = vadd.f32 0.0, %v5019
        %v5021 = vpop.f32.mrb[0].mxu0
        %5022 = vdwg.mxu0
        %v5023 = vcombine.low %v4885, %v4973
        %v5024 = vcombine.high %v4885, %v4973
        %v5026 = vunpack.c.l.s4 1983009808
        %v5027 = vunpack.c.0.s8 %v5026
        %v5028 = vlaneseq
        %v5029 = vshrl.u32 %v5028, 7
        %v5030 = vsub.s32 %v5027, %v5029
        %v5031 = vrot.slane %v5023, %v5030
        %v5033 = vunpack.c.l.s4 1983009808
        %v5034 = vunpack.c.0.s8 %v5033
        %v5035 = vlaneseq
        %v5036 = vshrl.u32 %v5035, 7
        %v5037 = vsub.s32 %v5034, %v5036
        %v5038 = vrot.slane %v5024, %v5037
        %v5039 = vcombine.low %v4929, %v5017
        %v5040 = vcombine.high %v4929, %v5017
        %v5042 = vunpack.c.l.s4 1983009808
        %v5043 = vunpack.c.0.s8 %v5042
        %v5044 = vlaneseq
        %v5045 = vshrl.u32 %v5044, 7
        %v5046 = vsub.s32 %v5043, %v5045
        %v5047 = vrot.slane %v5039, %v5046
        %v5049 = vunpack.c.l.s4 1983009808
        %v5050 = vunpack.c.0.s8 %v5049
        %v5051 = vlaneseq
        %v5052 = vshrl.u32 %v5051, 7
        %v5053 = vsub.s32 %v5050, %v5052
        %v5054 = vrot.slane %v5040, %v5053
        %v5055 = vcombine.low %v5031, %v5047
        %v5056 = vcombine.high %v5031, %v5047
        %v5058 = vunpack.c.l.s4 1934713408
        %v5059 = vunpack.c.0.s8 %v5058
        %v5060 = vlaneseq
        %v5061 = vshrl.u32 %v5060, 7
        %v5062 = vsub.s32 %v5059, %v5061
        %v5063 = vrot.slane %v5055, %v5062
        %v5065 = vunpack.c.l.s4 1934713408
        %v5066 = vunpack.c.0.s8 %v5065
        %v5067 = vlaneseq
        %v5068 = vshrl.u32 %v5067, 7
        %v5069 = vsub.s32 %v5066, %v5068
        %v5070 = vrot.slane %v5056, %v5069
        %v5071 = vcombine.low %v5038, %v5054
        %v5072 = vcombine.high %v5038, %v5054
        %v5074 = vunpack.c.l.s4 1934713408
        %v5075 = vunpack.c.0.s8 %v5074
        %v5076 = vlaneseq
        %v5077 = vshrl.u32 %v5076, 7
        %v5078 = vsub.s32 %v5075, %v5077
        %v5079 = vrot.slane %v5071, %v5078
        %v5081 = vunpack.c.l.s4 1934713408
        %v5082 = vunpack.c.0.s8 %v5081
        %v5083 = vlaneseq
        %v5084 = vshrl.u32 %v5083, 7
        %v5085 = vsub.s32 %v5082, %v5084
        %v5086 = vrot.slane %v5072, %v5085
        %v5087 = vcombine.high %v5063, 0.0
        %v5088 = vcombine.high %v5070, 0.0
        %v5089 = vcombine.high %v5079, 0.0
        %v5090 = vcombine.high %v5086, 0.0
        %v5091 = vcombine.low %v4888, %v4976
        %v5092 = vcombine.high %v4888, %v4976
        %v5094 = vunpack.c.l.s4 1983009808
        %v5095 = vunpack.c.0.s8 %v5094
        %v5096 = vlaneseq
        %v5097 = vshrl.u32 %v5096, 7
        %v5098 = vsub.s32 %v5095, %v5097
        %v5099 = vrot.slane %v5091, %v5098
        %v5101 = vunpack.c.l.s4 1983009808
        %v5102 = vunpack.c.0.s8 %v5101
        %v5103 = vlaneseq
        %v5104 = vshrl.u32 %v5103, 7
        %v5105 = vsub.s32 %v5102, %v5104
        %v5106 = vrot.slane %v5092, %v5105
        %v5107 = vcombine.low %v4932, %v5020
        %v5108 = vcombine.high %v4932, %v5020
        %v5110 = vunpack.c.l.s4 1983009808
        %v5111 = vunpack.c.0.s8 %v5110
        %v5112 = vlaneseq
        %v5113 = vshrl.u32 %v5112, 7
        %v5114 = vsub.s32 %v5111, %v5113
        %v5115 = vrot.slane %v5107, %v5114
        %v5117 = vunpack.c.l.s4 1983009808
        %v5118 = vunpack.c.0.s8 %v5117
        %v5119 = vlaneseq
        %v5120 = vshrl.u32 %v5119, 7
        %v5121 = vsub.s32 %v5118, %v5120
        %v5122 = vrot.slane %v5108, %v5121
        %v5123 = vcombine.low %v5099, %v5115
        %v5124 = vcombine.high %v5099, %v5115
        %v5126 = vunpack.c.l.s4 1934713408
        %v5127 = vunpack.c.0.s8 %v5126
        %v5128 = vlaneseq
        %v5129 = vshrl.u32 %v5128, 7
        %v5130 = vsub.s32 %v5127, %v5129
        %v5131 = vrot.slane %v5123, %v5130
        %v5133 = vunpack.c.l.s4 1934713408
        %v5134 = vunpack.c.0.s8 %v5133
        %v5135 = vlaneseq
        %v5136 = vshrl.u32 %v5135, 7
        %v5137 = vsub.s32 %v5134, %v5136
        %v5138 = vrot.slane %v5124, %v5137
        %v5139 = vcombine.low %v5106, %v5122
        %v5140 = vcombine.high %v5106, %v5122
        %v5142 = vunpack.c.l.s4 1934713408
        %v5143 = vunpack.c.0.s8 %v5142
        %v5144 = vlaneseq
        %v5145 = vshrl.u32 %v5144, 7
        %v5146 = vsub.s32 %v5143, %v5145
        %v5147 = vrot.slane %v5139, %v5146
        %v5149 = vunpack.c.l.s4 1934713408
        %v5150 = vunpack.c.0.s8 %v5149
        %v5151 = vlaneseq
        %v5152 = vshrl.u32 %v5151, 7
        %v5153 = vsub.s32 %v5150, %v5152
        %v5154 = vrot.slane %v5140, %v5153
        %v5155 = vcombine.high %v5131, 0.0
        %v5156 = vcombine.high %v5138, 0.0
        %v5157 = vcombine.high %v5147, 0.0
        %v5158 = vcombine.high %v5154, 0.0
        %v5159 = vcombine.low %v5063, %v5070
        %v5161 = vunpack.c.l.s4 1983009808
        %v5162 = vunpack.c.0.s8 %v5161
        %v5163 = vlaneseq
        %v5164 = vshrl.u32 %v5163, 7
        %v5165 = vsub.s32 %v5162, %v5164
        %v5166 = vrot.slane %v5159, %v5165
        %v5167 = vcombine.low %v5087, %v5088
        %v5169 = vunpack.c.l.s4 1983009808
        %v5170 = vunpack.c.0.s8 %v5169
        %v5171 = vlaneseq
        %v5172 = vshrl.u32 %v5171, 7
        %v5173 = vsub.s32 %v5170, %v5172
        %v5174 = vrot.slane %v5167, %v5173
        %v5175 = vcombine.low %v5079, %v5086
        %v5177 = vunpack.c.l.s4 1983009808
        %v5178 = vunpack.c.0.s8 %v5177
        %v5179 = vlaneseq
        %v5180 = vshrl.u32 %v5179, 7
        %v5181 = vsub.s32 %v5178, %v5180
        %v5182 = vrot.slane %v5175, %v5181
        %v5183 = vcombine.low %v5089, %v5090
        %v5185 = vunpack.c.l.s4 1983009808
        %v5186 = vunpack.c.0.s8 %v5185
        %v5187 = vlaneseq
        %v5188 = vshrl.u32 %v5187, 7
        %v5189 = vsub.s32 %v5186, %v5188
        %v5190 = vrot.slane %v5183, %v5189
        %v5191 = vcombine.low %v5166, %v5174
        %v5192 = vcombine.high %v5166, %v5174
        %v5194 = vunpack.c.l.s4 1934713408
        %v5195 = vunpack.c.0.s8 %v5194
        %v5196 = vlaneseq
        %v5197 = vshrl.u32 %v5196, 7
        %v5198 = vsub.s32 %v5195, %v5197
        %v5199 = vrot.slane %v5191, %v5198
        %v5201 = vunpack.c.l.s4 1934713408
        %v5202 = vunpack.c.0.s8 %v5201
        %v5203 = vlaneseq
        %v5204 = vshrl.u32 %v5203, 7
        %v5205 = vsub.s32 %v5202, %v5204
        %v5206 = vrot.slane %v5192, %v5205
        %v5207 = vcombine.low %v5182, %v5190
        %v5208 = vcombine.high %v5182, %v5190
        %v5210 = vunpack.c.l.s4 1934713408
        %v5211 = vunpack.c.0.s8 %v5210
        %v5212 = vlaneseq
        %v5213 = vshrl.u32 %v5212, 7
        %v5214 = vsub.s32 %v5211, %v5213
        %v5215 = vrot.slane %v5207, %v5214
        %v5217 = vunpack.c.l.s4 1934713408
        %v5218 = vunpack.c.0.s8 %v5217
        %v5219 = vlaneseq
        %v5220 = vshrl.u32 %v5219, 7
        %v5221 = vsub.s32 %v5218, %v5220
        %v5222 = vrot.slane %v5208, %v5221
        %v5223 = vcombine.low %v5199, %v5215
        %v5224 = vcombine.high %v5199, %v5215
        %v5225 = vcombine.low %v5206, %v5222
        %v5226 = vcombine.high %v5206, %v5222
        %v5227 = vcombine.low %v5131, %v5138
        %v5229 = vunpack.c.l.s4 1983009808
        %v5230 = vunpack.c.0.s8 %v5229
        %v5231 = vlaneseq
        %v5232 = vshrl.u32 %v5231, 7
        %v5233 = vsub.s32 %v5230, %v5232
        %v5234 = vrot.slane %v5227, %v5233
        %v5235 = vcombine.low %v5155, %v5156
        %v5237 = vunpack.c.l.s4 1983009808
        %v5238 = vunpack.c.0.s8 %v5237
        %v5239 = vlaneseq
        %v5240 = vshrl.u32 %v5239, 7
        %v5241 = vsub.s32 %v5238, %v5240
        %v5242 = vrot.slane %v5235, %v5241
        %v5243 = vcombine.low %v5147, %v5154
        %v5245 = vunpack.c.l.s4 1983009808
        %v5246 = vunpack.c.0.s8 %v5245
        %v5247 = vlaneseq
        %v5248 = vshrl.u32 %v5247, 7
        %v5249 = vsub.s32 %v5246, %v5248
        %v5250 = vrot.slane %v5243, %v5249
        %v5251 = vcombine.low %v5157, %v5158
        %v5253 = vunpack.c.l.s4 1983009808
        %v5254 = vunpack.c.0.s8 %v5253
        %v5255 = vlaneseq
        %v5256 = vshrl.u32 %v5255, 7
        %v5257 = vsub.s32 %v5254, %v5256
        %v5258 = vrot.slane %v5251, %v5257
        %v5259 = vcombine.low %v5234, %v5242
        %v5260 = vcombine.high %v5234, %v5242
        %v5262 = vunpack.c.l.s4 1934713408
        %v5263 = vunpack.c.0.s8 %v5262
        %v5264 = vlaneseq
        %v5265 = vshrl.u32 %v5264, 7
        %v5266 = vsub.s32 %v5263, %v5265
        %v5267 = vrot.slane %v5259, %v5266
        %v5269 = vunpack.c.l.s4 1934713408
        %v5270 = vunpack.c.0.s8 %v5269
        %v5271 = vlaneseq
        %v5272 = vshrl.u32 %v5271, 7
        %v5273 = vsub.s32 %v5270, %v5272
        %v5274 = vrot.slane %v5260, %v5273
        %v5275 = vcombine.low %v5250, %v5258
        %v5276 = vcombine.high %v5250, %v5258
        %v5278 = vunpack.c.l.s4 1934713408
        %v5279 = vunpack.c.0.s8 %v5278
        %v5280 = vlaneseq
        %v5281 = vshrl.u32 %v5280, 7
        %v5282 = vsub.s32 %v5279, %v5281
        %v5283 = vrot.slane %v5275, %v5282
        %v5285 = vunpack.c.l.s4 1934713408
        %v5286 = vunpack.c.0.s8 %v5285
        %v5287 = vlaneseq
        %v5288 = vshrl.u32 %v5287, 7
        %v5289 = vsub.s32 %v5286, %v5288
        %v5290 = vrot.slane %v5276, %v5289
        %v5291 = vcombine.low %v5267, %v5283
        %v5292 = vcombine.high %v5267, %v5283
        %v5293 = vcombine.low %v5274, %v5290
        %v5294 = vcombine.high %v5274, %v5290
        %5297 = vrot.lane.b32.xlu0 %v5224, 32
        %v5298 = vpop.permute.xlu0 %5297
        %5299 = vrot.lane.b32.xlu0 %v5292, 32
        %v5300 = vpop.permute.xlu0 %5299
        %5305 = vrot.lane.b32.xlu0 %v5225, 64
        %v5306 = vpop.permute.xlu0 %5305
        %5307 = vrot.lane.b32.xlu0 %v5293, 64
        %v5308 = vpop.permute.xlu0 %5307
        %5313 = vrot.lane.b32.xlu0 %v5226, 96
        %v5314 = vpop.permute.xlu0 %5313
        %5315 = vrot.lane.b32.xlu0 %v5294, 96
        %v5316 = vpop.permute.xlu0 %5315
        %v5319 = vsel %vm1899, %v5223, %v5298
        %v5320 = vsel %vm1899, %v5291, %v5300
        %v5321 = vsel %vm2671, %v5319, %v5306
        %v5322 = vsel %vm2671, %v5320, %v5308
        %v5323 = vsel %vm2674, %v5321, %v5314
        %v5324 = vsel %vm2674, %v5322, %v5316
        %v5325 = vadd.f32 %v3379, %v5323
        %v5326 = vadd.f32 %v3380, %v5324
        %s5327 = scalar_lea.vmem [#allocation10], 1
        %v5328 = vld [vmem:[%s5327] sm:$0x1]
        %s5329 = scalar_lea.vmem [#allocation11], 1
        %v5330 = vld [vmem:[%s5329] sm:$0x1]
        %v5331 = vadd.f32 %v5325, %v5326
        %v5332 = vrot.slane %v5331, 4
        %v5333 = vadd.f32 %v5331, %v5332
        %v5334 = vrot.slane %v5333, 2
        %v5335 = vadd.f32 %v5333, %v5334
        %v5336 = vrot.slane %v5335, 1
        %v5337 = vadd.f32 %v5335, %v5336
        %v5338 = vmul.f32 %v5337, %v736
        %v5339 = vsub.f32 %v5325, %v5338
        %v5340 = vsub.f32 %v5326, %v5338
        %v5341 = vmul.f32 %v5339, %v5339
        %v5342 = vmul.f32 %v5340, %v5340
        %v5343 = vadd.f32 %v5341, %v5342
        %v5344 = vrot.slane %v5343, 4
        %v5345 = vadd.f32 %v5343, %v5344
        %v5346 = vrot.slane %v5345, 2
        %v5347 = vadd.f32 %v5345, %v5346
        %v5348 = vrot.slane %v5347, 1
        %v5349 = vadd.f32 %v5347, %v5348
        %v5350 = vmul.f32 %v5349, 0.06666667
        %v5352 = vlaneseq
        %v5353 = vshrl.u32 %v5352, 7
        %v5354 = vsub.s32 0, %v5353
        %v5355 = vrot.slane %v5328, %v5354
        %v5357 = vmul.f32 %v5355, %v5339
        %v5358 = vmul.f32 %v5355, %v5340
        %v5359 = vadd.f32 %v5350, 1e-05
        %v5360 = vrsqrt.pop %v5359
        %v5361 = vmul.f32 %v5357, %v5360
        %v5362 = vmul.f32 %v5358, %v5360
        %v5364 = vlaneseq
        %v5365 = vshrl.u32 %v5364, 7
        %v5366 = vsub.s32 0, %v5365
        %v5367 = vrot.slane %v5330, %v5366
        %v5369 = vadd.f32 %v5361, %v5367
        %v5370 = vadd.f32 %v5362, %v5367
        %v5371 = vpack.c.bf16 %v5370, %v5369
        %s5372 = scalar_lea.vmem [#allocation13], 256
        %v5373 = vld [vmem:[%s5372] sm:$0xff]
        %v5374 = vld [vmem:[%s5372 + $0x8] sm:$0xff]
        %v5375 = vld [vmem:[%s5372 + $0x10] sm:$0xff]
        %v5376 = vld [vmem:[%s5372 + $0x18] sm:$0xff]
        %v5377 = vld [vmem:[%s5372 + $0x20] sm:$0xff]
        %v5378 = vld [vmem:[%s5372 + $0x28] sm:$0xff]
        %v5379 = vld [vmem:[%s5372 + $0x30] sm:$0xff]
        %v5380 = vld [vmem:[%s5372 + $0x38] sm:$0xff]
        %v5381 = vld [vmem:[%s5372 + $0x40] sm:$0xff]
        %v5382 = vld [vmem:[%s5372 + $0x48] sm:$0xff]
        %v5383 = vld [vmem:[%s5372 + $0x50] sm:$0xff]
        %v5384 = vld [vmem:[%s5372 + $0x58] sm:$0xff]
        %v5385 = vld [vmem:[%s5372 + $0x60] sm:$0xff]
        %v5386 = vld [vmem:[%s5372 + $0x68] sm:$0xff]
        %v5387 = vld [vmem:[%s5372 + $0x70] sm:$0xff]
        %v5388 = vld [vmem:[%s5372 + $0x78] sm:$0xff]
        %v5389 = vld [vmem:[%s5372 + $0x80] sm:$0xff]
        %v5390 = vld [vmem:[%s5372 + $0x88] sm:$0xff]
        %v5391 = vld [vmem:[%s5372 + $0x90] sm:$0xff]
        %v5392 = vld [vmem:[%s5372 + $0x98] sm:$0xff]
        %v5393 = vld [vmem:[%s5372 + $0xa0] sm:$0xff]
        %v5394 = vld [vmem:[%s5372 + $0xa8] sm:$0xff]
        %v5395 = vld [vmem:[%s5372 + $0xb0] sm:$0xff]
        %v5396 = vld [vmem:[%s5372 + $0xb8] sm:$0xff]
        %v5397 = vld [vmem:[%s5372 + $0xc0] sm:$0xff]
        %v5398 = vld [vmem:[%s5372 + $0xc8] sm:$0xff]
        %v5399 = vld [vmem:[%s5372 + $0xd0] sm:$0xff]
        %v5400 = vld [vmem:[%s5372 + $0xd8] sm:$0xff]
        %v5401 = vld [vmem:[%s5372 + $0xe0] sm:$0xff]
        %v5402 = vld [vmem:[%s5372 + $0xe8] sm:$0xff]
        %v5403 = vld [vmem:[%s5372 + $0xf0] sm:$0xff]
        %v5404 = vld [vmem:[%s5372 + $0xf8] sm:$0xff]
        %s5405 = scalar_lea.vmem %s9, 4
        %v5406 = vld [vmem:[%s5405] sm:$0xf]
        %v5408 = vlaneseq
        %v5409 = vshrl.u32 %v5408, 7
        %v5410 = vsub.s32 0, %v5409
        %v5411 = vrot.slane %v5406, %v5410
        %v5412 = vlaneseq
        %v5413 = vshrl.u32 %v5412, 7
        %v5414 = vsub.s32 1, %v5413
        %v5415 = vrot.slane %v5406, %v5414
        %v5416 = vlaneseq
        %v5417 = vshrl.u32 %v5416, 7
        %v5418 = vsub.s32 2, %v5417
        %v5419 = vrot.slane %v5406, %v5418
        %v5420 = vlaneseq
        %v5421 = vshrl.u32 %v5420, 7
        %v5422 = vsub.s32 3, %v5421
        %v5423 = vrot.slane %v5406, %v5422
        %v5460 = vunpack.c.l.b16 %v5373
        %v5461 = vunpack.c.h.b16 %v5373
        %v5462 = vunpack.c.l.b16 %v5374
        %v5463 = vunpack.c.h.b16 %v5374
        %v5464 = vunpack.c.l.b16 %v5375
        %v5465 = vunpack.c.h.b16 %v5375
        %v5466 = vunpack.c.l.b16 %v5376
        %v5467 = vunpack.c.h.b16 %v5376
        %v5468 = vunpack.c.l.b16 %v5377
        %v5469 = vunpack.c.h.b16 %v5377
        %v5470 = vunpack.c.l.b16 %v5378
        %v5471 = vunpack.c.h.b16 %v5378
        %v5472 = vunpack.c.l.b16 %v5379
        %v5473 = vunpack.c.h.b16 %v5379
        %v5474 = vunpack.c.l.b16 %v5380
        %v5475 = vunpack.c.h.b16 %v5380
        %v5476 = vunpack.c.l.b16 %v5381
        %v5477 = vunpack.c.h.b16 %v5381
        %v5478 = vunpack.c.l.b16 %v5382
        %v5479 = vunpack.c.h.b16 %v5382
        %v5480 = vunpack.c.l.b16 %v5383
        %v5481 = vunpack.c.h.b16 %v5383
        %v5482 = vunpack.c.l.b16 %v5384
        %v5483 = vunpack.c.h.b16 %v5384
        %v5484 = vunpack.c.l.b16 %v5385
        %v5485 = vunpack.c.h.b16 %v5385
        %v5486 = vunpack.c.l.b16 %v5386
        %v5487 = vunpack.c.h.b16 %v5386
        %v5488 = vunpack.c.l.b16 %v5387
        %v5489 = vunpack.c.h.b16 %v5387
        %v5490 = vunpack.c.l.b16 %v5388
        %v5491 = vunpack.c.h.b16 %v5388
        %v5492 = vunpack.c.l.b16 %v5389
        %v5493 = vunpack.c.h.b16 %v5389
        %v5494 = vunpack.c.l.b16 %v5390
        %v5495 = vunpack.c.h.b16 %v5390
        %v5496 = vunpack.c.l.b16 %v5391
        %v5497 = vunpack.c.h.b16 %v5391
        %v5498 = vunpack.c.l.b16 %v5392
        %v5499 = vunpack.c.h.b16 %v5392
        %v5500 = vunpack.c.l.b16 %v5393
        %v5501 = vunpack.c.h.b16 %v5393
        %v5502 = vunpack.c.l.b16 %v5394
        %v5503 = vunpack.c.h.b16 %v5394
        %v5504 = vunpack.c.l.b16 %v5395
        %v5505 = vunpack.c.h.b16 %v5395
        %v5506 = vunpack.c.l.b16 %v5396
        %v5507 = vunpack.c.h.b16 %v5396
        %v5508 = vunpack.c.l.b16 %v5397
        %v5509 = vunpack.c.h.b16 %v5397
        %v5510 = vunpack.c.l.b16 %v5398
        %v5511 = vunpack.c.h.b16 %v5398
        %v5512 = vunpack.c.l.b16 %v5399
        %v5513 = vunpack.c.h.b16 %v5399
        %v5514 = vunpack.c.l.b16 %v5400
        %v5515 = vunpack.c.h.b16 %v5400
        %v5516 = vunpack.c.l.b16 %v5401
        %v5517 = vunpack.c.h.b16 %v5401
        %v5518 = vunpack.c.l.b16 %v5402
        %v5519 = vunpack.c.h.b16 %v5402
        %v5520 = vunpack.c.l.b16 %v5403
        %v5521 = vunpack.c.h.b16 %v5403
        %v5522 = vunpack.c.l.b16 %v5404
        %v5523 = vunpack.c.h.b16 %v5404
        %v5524 = vpack.c.b16 %v5464, %v5460
        %v5525 = vpack.c.b16 %v5465, %v5461
        %v5526 = vpack.c.b16 %v5466, %v5462
        %v5527 = vpack.c.b16 %v5467, %v5463
        %v5528 = vpack.c.b16 %v5472, %v5468
        %v5529 = vpack.c.b16 %v5473, %v5469
        %v5530 = vpack.c.b16 %v5474, %v5470
        %v5531 = vpack.c.b16 %v5475, %v5471
        %v5532 = vpack.c.b16 %v5480, %v5476
        %v5533 = vpack.c.b16 %v5481, %v5477
        %v5534 = vpack.c.b16 %v5482, %v5478
        %v5535 = vpack.c.b16 %v5483, %v5479
        %v5536 = vpack.c.b16 %v5488, %v5484
        %v5537 = vpack.c.b16 %v5489, %v5485
        %v5538 = vpack.c.b16 %v5490, %v5486
        %v5539 = vpack.c.b16 %v5491, %v5487
        %v5540 = vpack.c.b16 %v5496, %v5492
        %v5541 = vpack.c.b16 %v5497, %v5493
        %v5542 = vpack.c.b16 %v5498, %v5494
        %v5543 = vpack.c.b16 %v5499, %v5495
        %v5544 = vpack.c.b16 %v5504, %v5500
        %v5545 = vpack.c.b16 %v5505, %v5501
        %v5546 = vpack.c.b16 %v5506, %v5502
        %v5547 = vpack.c.b16 %v5507, %v5503
        %v5548 = vpack.c.b16 %v5512, %v5508
        %v5549 = vpack.c.b16 %v5513, %v5509
        %v5550 = vpack.c.b16 %v5514, %v5510
        %v5551 = vpack.c.b16 %v5515, %v5511
        %v5552 = vpack.c.b16 %v5520, %v5516
        %v5553 = vpack.c.b16 %v5521, %v5517
        %v5554 = vpack.c.b16 %v5522, %v5518
        %v5555 = vpack.c.b16 %v5523, %v5519
        %5588 = vmatprep.subr.bf16.mxu0 %v5525
        %5589 = vmatpush1.bf16.msra.mxu0 %v5524
        %5590 = vmatprep.subr.bf16.mxu0 %v5529
        %5591 = vmatpush1.bf16.msra.mxu0 %v5528
        %5592 = vmatprep.subr.bf16.mxu0 %v5533
        %5593 = vmatpush1.bf16.msra.mxu0 %v5532
        %5594 = vmatprep.subr.bf16.mxu0 %v5537
        %5595 = vmatpush1.bf16.msra.mxu0 %v5536
        %5596 = vmatprep.subr.bf16.mxu0 %v5541
        %5597 = vmatpush1.bf16.msra.mxu0 %v5540
        %5598 = vmatprep.subr.bf16.mxu0 %v5545
        %5599 = vmatpush1.bf16.msra.mxu0 %v5544
        %5600 = vmatprep.subr.bf16.mxu0 %v5549
        %5601 = vmatpush1.bf16.msra.mxu0 %v5548
        %5602 = vmatprep.subr.bf16.mxu0 %v5553
        %5603 = vmatpush1.bf16.msra.mxu0 %v5552
        %5604 = vmatprep.subr.bf16.mxu0 0
        %5605 = vmatpush1.bf16.msra.mxu0 0
        %5606 = vmatprep.subr.bf16.mxu0 0
        %5607 = vmatpush1.bf16.msra.mxu0 0
        %5608 = vmatprep.subr.bf16.mxu0 0
        %5609 = vmatpush1.bf16.msra.mxu0 0
        %5610 = vmatprep.subr.bf16.mxu0 0
        %5611 = vmatpush1.bf16.msra.mxu0 0
        %5612 = vmatprep.subr.bf16.mxu0 0
        %5613 = vmatpush1.bf16.msra.mxu0 0
        %5614 = vmatprep.subr.bf16.mxu0 0
        %5615 = vmatpush1.bf16.msra.mxu0 0
        %5616 = vmatprep.subr.bf16.mxu0 0
        %5617 = vmatpush1.bf16.msra.mxu0 0
        %5618 = vmatprep.subr.bf16.mxu0 0
        %5619 = vmatpush1.bf16.msra.mxu0 0
        %5620 = vmatprep.mubr.bf16.mxu0 0
        %5621 = vmatmul.mubr.bf16.gmra.mrb[0].mxu0 %v5371
        %v5622 = vpop.f32.mrb[0].mxu0
        %v5623 = vadd.f32 %v5411, %v5622
        %v5624 = vpop.f32.mrb[0].mxu0
        %v5625 = vadd.f32 %v5415, %v5624
        %v5626 = vpop.f32.mrb[0].mxu0
        %v5627 = vadd.f32 %v5411, %v5626
        %v5628 = vpop.f32.mrb[0].mxu0
        %v5629 = vadd.f32 %v5415, %v5628
        %5630 = vdwg.mxu0
        %5631 = vmatprep.subr.bf16.mxu0 %v5527
        %5632 = vmatpush1.bf16.msra.mxu0 %v5526
        %5633 = vmatprep.subr.bf16.mxu0 %v5531
        %5634 = vmatpush1.bf16.msra.mxu0 %v5530
        %5635 = vmatprep.subr.bf16.mxu0 %v5535
        %5636 = vmatpush1.bf16.msra.mxu0 %v5534
        %5637 = vmatprep.subr.bf16.mxu0 %v5539
        %5638 = vmatpush1.bf16.msra.mxu0 %v5538
        %5639 = vmatprep.subr.bf16.mxu0 %v5543
        %5640 = vmatpush1.bf16.msra.mxu0 %v5542
        %5641 = vmatprep.subr.bf16.mxu0 %v5547
        %5642 = vmatpush1.bf16.msra.mxu0 %v5546
        %5643 = vmatprep.subr.bf16.mxu0 %v5551
        %5644 = vmatpush1.bf16.msra.mxu0 %v5550
        %5645 = vmatprep.subr.bf16.mxu0 %v5555
        %5646 = vmatpush1.bf16.msra.mxu0 %v5554
        %5647 = vmatprep.subr.bf16.mxu0 0
        %5648 = vmatpush1.bf16.msra.mxu0 0
        %5649 = vmatprep.subr.bf16.mxu0 0
        %5650 = vmatpush1.bf16.msra.mxu0 0
        %5651 = vmatprep.subr.bf16.mxu0 0
        %5652 = vmatpush1.bf16.msra.mxu0 0
        %5653 = vmatprep.subr.bf16.mxu0 0
        %5654 = vmatpush1.bf16.msra.mxu0 0
        %5655 = vmatprep.subr.bf16.mxu0 0
        %5656 = vmatpush1.bf16.msra.mxu0 0
        %5657 = vmatprep.subr.bf16.mxu0 0
        %5658 = vmatpush1.bf16.msra.mxu0 0
        %5659 = vmatprep.subr.bf16.mxu0 0
        %5660 = vmatpush1.bf16.msra.mxu0 0
        %5661 = vmatprep.subr.bf16.mxu0 0
        %5662 = vmatpush1.bf16.msra.mxu0 0
        %5663 = vmatprep.mubr.bf16.mxu0 0
        %5664 = vmatmul.mubr.bf16.gmra.mrb[0].mxu0 %v5371
        %v5665 = vpop.f32.mrb[0].mxu0
        %v5666 = vadd.f32 %v5419, %v5665
        %v5667 = vpop.f32.mrb[0].mxu0
        %v5668 = vadd.f32 %v5423, %v5667
        %v5669 = vpop.f32.mrb[0].mxu0
        %v5670 = vadd.f32 %v5419, %v5669
        %v5671 = vpop.f32.mrb[0].mxu0
        %v5672 = vadd.f32 %v5423, %v5671
        %5673 = vdwg.mxu0
        %v5674 = vmax.f32 %v5623, 0.0
        %v5675 = vmax.f32 %v5625, 0.0
        %v5676 = vmax.f32 %v5666, 0.0
        %v5677 = vmax.f32 %v5668, 0.0
        %v5678 = vmax.f32 %v5627, 0.0
        %v5679 = vmax.f32 %v5629, 0.0
        %v5680 = vmax.f32 %v5670, 0.0
        %v5681 = vmax.f32 %v5672, 0.0
        %v5682 = vpack.c.bf16 %v5678, %v5674
        %v5683 = vpack.c.bf16 %v5679, %v5675
        %v5684 = vpack.c.bf16 %v5680, %v5676
        %v5685 = vpack.c.bf16 %v5681, %v5677
        %s5686 = scalar_lea.vmem [#allocation14], 256
        %v5687 = vld [vmem:[%s5686] sm:$0xf]
        %v5688 = vld [vmem:[%s5686 + $0x4] sm:$0xf]
        %v5689 = vld [vmem:[%s5686 + $0x8] sm:$0xf]
        %v5690 = vld [vmem:[%s5686 + $0xc] sm:$0xf]
        %v5691 = vld [vmem:[%s5686 + $0x10] sm:$0xf]
        %v5692 = vld [vmem:[%s5686 + $0x14] sm:$0xf]
        %v5693 = vld [vmem:[%s5686 + $0x18] sm:$0xf]
        %v5694 = vld [vmem:[%s5686 + $0x1c] sm:$0xf]
        %v5695 = vld [vmem:[%s5686 + $0x20] sm:$0xf]
        %v5696 = vld [vmem:[%s5686 + $0x24] sm:$0xf]
        %v5697 = vld [vmem:[%s5686 + $0x28] sm:$0xf]
        %v5698 = vld [vmem:[%s5686 + $0x2c] sm:$0xf]
        %v5699 = vld [vmem:[%s5686 + $0x30] sm:$0xf]
        %v5700 = vld [vmem:[%s5686 + $0x34] sm:$0xf]
        %v5701 = vld [vmem:[%s5686 + $0x38] sm:$0xf]
        %v5702 = vld [vmem:[%s5686 + $0x3c] sm:$0xf]
        %v5703 = vld [vmem:[%s5686 + $0x40] sm:$0xf]
        %v5704 = vld [vmem:[%s5686 + $0x44] sm:$0xf]
        %v5705 = vld [vmem:[%s5686 + $0x48] sm:$0xf]
        %v5706 = vld [vmem:[%s5686 + $0x4c] sm:$0xf]
        %v5707 = vld [vmem:[%s5686 + $0x50] sm:$0xf]
        %v5708 = vld [vmem:[%s5686 + $0x54] sm:$0xf]
        %v5709 = vld [vmem:[%s5686 + $0x58] sm:$0xf]
        %v5710 = vld [vmem:[%s5686 + $0x5c] sm:$0xf]
        %v5711 = vld [vmem:[%s5686 + $0x60] sm:$0xf]
        %v5712 = vld [vmem:[%s5686 + $0x64] sm:$0xf]
        %v5713 = vld [vmem:[%s5686 + $0x68] sm:$0xf]
        %v5714 = vld [vmem:[%s5686 + $0x6c] sm:$0xf]
        %v5715 = vld [vmem:[%s5686 + $0x70] sm:$0xf]
        %v5716 = vld [vmem:[%s5686 + $0x74] sm:$0xf]
        %v5717 = vld [vmem:[%s5686 + $0x78] sm:$0xf]
        %v5718 = vld [vmem:[%s5686 + $0x7c] sm:$0xf]
        %v5719 = vld [vmem:[%s5686 + $0x80] sm:$0xf]
        %v5720 = vld [vmem:[%s5686 + $0x84] sm:$0xf]
        %v5721 = vld [vmem:[%s5686 + $0x88] sm:$0xf]
        %v5722 = vld [vmem:[%s5686 + $0x8c] sm:$0xf]
        %v5723 = vld [vmem:[%s5686 + $0x90] sm:$0xf]
        %v5724 = vld [vmem:[%s5686 + $0x94] sm:$0xf]
        %v5725 = vld [vmem:[%s5686 + $0x98] sm:$0xf]
        %v5726 = vld [vmem:[%s5686 + $0x9c] sm:$0xf]
        %v5727 = vld [vmem:[%s5686 + $0xa0] sm:$0xf]
        %v5728 = vld [vmem:[%s5686 + $0xa4] sm:$0xf]
        %v5729 = vld [vmem:[%s5686 + $0xa8] sm:$0xf]
        %v5730 = vld [vmem:[%s5686 + $0xac] sm:$0xf]
        %v5731 = vld [vmem:[%s5686 + $0xb0] sm:$0xf]
        %v5732 = vld [vmem:[%s5686 + $0xb4] sm:$0xf]
        %v5733 = vld [vmem:[%s5686 + $0xb8] sm:$0xf]
        %v5734 = vld [vmem:[%s5686 + $0xbc] sm:$0xf]
        %v5735 = vld [vmem:[%s5686 + $0xc0] sm:$0xf]
        %v5736 = vld [vmem:[%s5686 + $0xc4] sm:$0xf]
        %v5737 = vld [vmem:[%s5686 + $0xc8] sm:$0xf]
        %v5738 = vld [vmem:[%s5686 + $0xcc] sm:$0xf]
        %v5739 = vld [vmem:[%s5686 + $0xd0] sm:$0xf]
        %v5740 = vld [vmem:[%s5686 + $0xd4] sm:$0xf]
        %v5741 = vld [vmem:[%s5686 + $0xd8] sm:$0xf]
        %v5742 = vld [vmem:[%s5686 + $0xdc] sm:$0xf]
        %v5743 = vld [vmem:[%s5686 + $0xe0] sm:$0xf]
        %v5744 = vld [vmem:[%s5686 + $0xe4] sm:$0xf]
        %v5745 = vld [vmem:[%s5686 + $0xe8] sm:$0xf]
        %v5746 = vld [vmem:[%s5686 + $0xec] sm:$0xf]
        %v5747 = vld [vmem:[%s5686 + $0xf0] sm:$0xf]
        %v5748 = vld [vmem:[%s5686 + $0xf4] sm:$0xf]
        %v5749 = vld [vmem:[%s5686 + $0xf8] sm:$0xf]
        %v5750 = vld [vmem:[%s5686 + $0xfc] sm:$0xf]
        %s5751 = scalar_lea.vmem [#allocation16], 1
        %v5752 = vld [vmem:[%s5751] sm:$0x1]
        %v5754 = vlaneseq
        %v5755 = vshrl.u32 %v5754, 7
        %v5756 = vsub.s32 0, %v5755
        %v5757 = vrot.slane %v5752, %v5756
        %v5823 = vunpack.c.l.b16 %v5687
        %v5824 = vunpack.c.l.b16 %v5688
        %v5825 = vunpack.c.l.b16 %v5689
        %v5826 = vunpack.c.l.b16 %v5690
        %v5827 = vunpack.c.l.b16 %v5691
        %v5828 = vunpack.c.l.b16 %v5692
        %v5829 = vunpack.c.l.b16 %v5693
        %v5830 = vunpack.c.l.b16 %v5694
        %v5831 = vunpack.c.l.b16 %v5695
        %v5832 = vunpack.c.l.b16 %v5696
        %v5833 = vunpack.c.l.b16 %v5697
        %v5834 = vunpack.c.l.b16 %v5698
        %v5835 = vunpack.c.l.b16 %v5699
        %v5836 = vunpack.c.l.b16 %v5700
        %v5837 = vunpack.c.l.b16 %v5701
        %v5838 = vunpack.c.l.b16 %v5702
        %v5839 = vunpack.c.l.b16 %v5703
        %v5840 = vunpack.c.l.b16 %v5704
        %v5841 = vunpack.c.l.b16 %v5705
        %v5842 = vunpack.c.l.b16 %v5706
        %v5843 = vunpack.c.l.b16 %v5707
        %v5844 = vunpack.c.l.b16 %v5708
        %v5845 = vunpack.c.l.b16 %v5709
        %v5846 = vunpack.c.l.b16 %v5710
        %v5847 = vunpack.c.l.b16 %v5711
        %v5848 = vunpack.c.l.b16 %v5712
        %v5849 = vunpack.c.l.b16 %v5713
        %v5850 = vunpack.c.l.b16 %v5714
        %v5851 = vunpack.c.l.b16 %v5715
        %v5852 = vunpack.c.l.b16 %v5716
        %v5853 = vunpack.c.l.b16 %v5717
        %v5854 = vunpack.c.l.b16 %v5718
        %v5855 = vunpack.c.l.b16 %v5719
        %v5856 = vunpack.c.l.b16 %v5720
        %v5857 = vunpack.c.l.b16 %v5721
        %v5858 = vunpack.c.l.b16 %v5722
        %v5859 = vunpack.c.l.b16 %v5723
        %v5860 = vunpack.c.l.b16 %v5724
        %v5861 = vunpack.c.l.b16 %v5725
        %v5862 = vunpack.c.l.b16 %v5726
        %v5863 = vunpack.c.l.b16 %v5727
        %v5864 = vunpack.c.l.b16 %v5728
        %v5865 = vunpack.c.l.b16 %v5729
        %v5866 = vunpack.c.l.b16 %v5730
        %v5867 = vunpack.c.l.b16 %v5731
        %v5868 = vunpack.c.l.b16 %v5732
        %v5869 = vunpack.c.l.b16 %v5733
        %v5870 = vunpack.c.l.b16 %v5734
        %v5871 = vunpack.c.l.b16 %v5735
        %v5872 = vunpack.c.l.b16 %v5736
        %v5873 = vunpack.c.l.b16 %v5737
        %v5874 = vunpack.c.l.b16 %v5738
        %v5875 = vunpack.c.l.b16 %v5739
        %v5876 = vunpack.c.l.b16 %v5740
        %v5877 = vunpack.c.l.b16 %v5741
        %v5878 = vunpack.c.l.b16 %v5742
        %v5879 = vunpack.c.l.b16 %v5743
        %v5880 = vunpack.c.l.b16 %v5744
        %v5881 = vunpack.c.l.b16 %v5745
        %v5882 = vunpack.c.l.b16 %v5746
        %v5883 = vunpack.c.l.b16 %v5747
        %v5884 = vunpack.c.l.b16 %v5748
        %v5885 = vunpack.c.l.b16 %v5749
        %v5886 = vunpack.c.l.b16 %v5750
        %v5887 = vpack.c.b16 %v5824, %v5823
        %v5888 = vpack.c.b16 %v5826, %v5825
        %v5889 = vpack.c.b16 %v5828, %v5827
        %v5890 = vpack.c.b16 %v5830, %v5829
        %v5891 = vpack.c.b16 %v5832, %v5831
        %v5892 = vpack.c.b16 %v5834, %v5833
        %v5893 = vpack.c.b16 %v5836, %v5835
        %v5894 = vpack.c.b16 %v5838, %v5837
        %v5895 = vpack.c.b16 %v5840, %v5839
        %v5896 = vpack.c.b16 %v5842, %v5841
        %v5897 = vpack.c.b16 %v5844, %v5843
        %v5898 = vpack.c.b16 %v5846, %v5845
        %v5899 = vpack.c.b16 %v5848, %v5847
        %v5900 = vpack.c.b16 %v5850, %v5849
        %v5901 = vpack.c.b16 %v5852, %v5851
        %v5902 = vpack.c.b16 %v5854, %v5853
        %v5903 = vpack.c.b16 %v5856, %v5855
        %v5904 = vpack.c.b16 %v5858, %v5857
        %v5905 = vpack.c.b16 %v5860, %v5859
        %v5906 = vpack.c.b16 %v5862, %v5861
        %v5907 = vpack.c.b16 %v5864, %v5863
        %v5908 = vpack.c.b16 %v5866, %v5865
        %v5909 = vpack.c.b16 %v5868, %v5867
        %v5910 = vpack.c.b16 %v5870, %v5869
        %v5911 = vpack.c.b16 %v5872, %v5871
        %v5912 = vpack.c.b16 %v5874, %v5873
        %v5913 = vpack.c.b16 %v5876, %v5875
        %v5914 = vpack.c.b16 %v5878, %v5877
        %v5915 = vpack.c.b16 %v5880, %v5879
        %v5916 = vpack.c.b16 %v5882, %v5881
        %v5917 = vpack.c.b16 %v5884, %v5883
        %v5918 = vpack.c.b16 %v5886, %v5885
        %5951 = vmatprep.subr.bf16.mxu0 0
        %5952 = vmatpush1.bf16.msra.mxu0 %v5887
        %5953 = vmatprep.subr.bf16.mxu0 0
        %5954 = vmatpush1.bf16.msra.mxu0 %v5888
        %5955 = vmatprep.subr.bf16.mxu0 0
        %5956 = vmatpush1.bf16.msra.mxu0 %v5889
        %5957 = vmatprep.subr.bf16.mxu0 0
        %5958 = vmatpush1.bf16.msra.mxu0 %v5890
        %5959 = vmatprep.subr.bf16.mxu0 0
        %5960 = vmatpush1.bf16.msra.mxu0 %v5891
        %5961 = vmatprep.subr.bf16.mxu0 0
        %5962 = vmatpush1.bf16.msra.mxu0 %v5892
        %5963 = vmatprep.subr.bf16.mxu0 0
        %5964 = vmatpush1.bf16.msra.mxu0 %v5893
        %5965 = vmatprep.subr.bf16.mxu0 0
        %5966 = vmatpush1.bf16.msra.mxu0 %v5894
        %5967 = vmatprep.subr.bf16.mxu0 0
        %5968 = vmatpush1.bf16.msra.mxu0 %v5895
        %5969 = vmatprep.subr.bf16.mxu0 0
        %5970 = vmatpush1.bf16.msra.mxu0 %v5896
        %5971 = vmatprep.subr.bf16.mxu0 0
        %5972 = vmatpush1.bf16.msra.mxu0 %v5897
        %5973 = vmatprep.subr.bf16.mxu0 0
        %5974 = vmatpush1.bf16.msra.mxu0 %v5898
        %5975 = vmatprep.subr.bf16.mxu0 0
        %5976 = vmatpush1.bf16.msra.mxu0 %v5899
        %5977 = vmatprep.subr.bf16.mxu0 0
        %5978 = vmatpush1.bf16.msra.mxu0 %v5900
        %5979 = vmatprep.subr.bf16.mxu0 0
        %5980 = vmatpush1.bf16.msra.mxu0 %v5901
        %5981 = vmatprep.subr.bf16.mxu0 0
        %5982 = vmatpush1.bf16.msra.mxu0 %v5902
        %5983 = vmatprep.mubr.bf16.mxu0 %v5683
        %5984 = vmatmul.mubr.bf16.gmra.mrb[0].mxu0 %v5682
        %v5985 = vpop.f32.mrb[0].mxu0
        %v5986 = vadd.f32 %v5757, %v5985
        %v5987 = vpop.f32.mrb[0].mxu0
        %v5988 = vpop.f32.mrb[0].mxu0
        %v5989 = vadd.f32 %v5757, %v5988
        %v5990 = vpop.f32.mrb[0].mxu0
        %5991 = vdwg.mxu0
        %5992 = vmatprep.subr.bf16.mxu0 0
        %5993 = vmatpush1.bf16.msra.mxu0 %v5903
        %5994 = vmatprep.subr.bf16.mxu0 0
        %5995 = vmatpush1.bf16.msra.mxu0 %v5904
        %5996 = vmatprep.subr.bf16.mxu0 0
        %5997 = vmatpush1.bf16.msra.mxu0 %v5905
        %5998 = vmatprep.subr.bf16.mxu0 0
        %5999 = vmatpush1.bf16.msra.mxu0 %v5906
        %6000 = vmatprep.subr.bf16.mxu0 0
        %6001 = vmatpush1.bf16.msra.mxu0 %v5907
        %6002 = vmatprep.subr.bf16.mxu0 0
        %6003 = vmatpush1.bf16.msra.mxu0 %v5908
        %6004 = vmatprep.subr.bf16.mxu0 0
        %6005 = vmatpush1.bf16.msra.mxu0 %v5909
        %6006 = vmatprep.subr.bf16.mxu0 0
        %6007 = vmatpush1.bf16.msra.mxu0 %v5910
        %6008 = vmatprep.subr.bf16.mxu0 0
        %6009 = vmatpush1.bf16.msra.mxu0 %v5911
        %6010 = vmatprep.subr.bf16.mxu0 0
        %6011 = vmatpush1.bf16.msra.mxu0 %v5912
        %6012 = vmatprep.subr.bf16.mxu0 0
        %6013 = vmatpush1.bf16.msra.mxu0 %v5913
        %6014 = vmatprep.subr.bf16.mxu0 0
        %6015 = vmatpush1.bf16.msra.mxu0 %v5914
        %6016 = vmatprep.subr.bf16.mxu0 0
        %6017 = vmatpush1.bf16.msra.mxu0 %v5915
        %6018 = vmatprep.subr.bf16.mxu0 0
        %6019 = vmatpush1.bf16.msra.mxu0 %v5916
        %6020 = vmatprep.subr.bf16.mxu0 0
        %6021 = vmatpush1.bf16.msra.mxu0 %v5917
        %6022 = vmatprep.subr.bf16.mxu0 0
        %6023 = vmatpush1.bf16.msra.mxu0 %v5918
        %6024 = vmatprep.mubr.bf16.mxu0 %v5685
        %6025 = vmatmul.mubr.bf16.gmra.mrb[0].mxu0 %v5684
        %v6026 = vpop.f32.mrb[0].mxu0
        %v6027 = vadd.f32 %v5986, %v6026
        %v6028 = vpop.f32.mrb[0].mxu0
        %v6029 = vpop.f32.mrb[0].mxu0
        %v6030 = vadd.f32 %v5989, %v6029
        %v6031 = vpop.f32.mrb[0].mxu0
        %6032 = vdwg.mxu0
        %v6033 = vadd.f32 %v5325, %v6027
        %v6034 = vadd.f32 %v5326, %v6030
        %s6035 = scalar_lea.vmem %s3, 2
        %v6036 = vld [vmem:[%s6035] sm:$0x1]
        %s6037 = scalar_lea.vmem [#allocation7], 2
        %v6038 = vld [vmem:[%s6037] sm:$0x1]
        %v6039 = vadd.f32 %v6033, %v6034
        %v6040 = vrot.slane %v6039, 4
        %v6041 = vadd.f32 %v6039, %v6040
        %v6042 = vrot.slane %v6041, 2
        %v6043 = vadd.f32 %v6041, %v6042
        %v6044 = vrot.slane %v6043, 1
        %v6045 = vadd.f32 %v6043, %v6044
        %v6046 = vmul.f32 %v6045, %v736
        %v6047 = vsub.f32 %v6033, %v6046
        %v6048 = vsub.f32 %v6034, %v6046
        %v6049 = vmul.f32 %v6047, %v6047
        %v6050 = vmul.f32 %v6048, %v6048
        %v6051 = vadd.f32 %v6049, %v6050
        %v6052 = vrot.slane %v6051, 4
        %v6053 = vadd.f32 %v6051, %v6052
        %v6054 = vrot.slane %v6053, 2
        %v6055 = vadd.f32 %v6053, %v6054
        %v6056 = vrot.slane %v6055, 1
        %v6057 = vadd.f32 %v6055, %v6056
        %v6058 = vmul.f32 %v6057, 0.06666667
        %v6060 = vlaneseq
        %v6061 = vshrl.u32 %v6060, 7
        %v6062 = vsub.s32 0, %v6061
        %v6063 = vrot.slane %v6036, %v6062
        %v6065 = vmul.f32 %v6063, %v6047
        %v6066 = vmul.f32 %v6063, %v6048
        %v6067 = vadd.f32 %v6058, 1e-05
        %v6068 = vrsqrt.pop %v6067
        %v6069 = vmul.f32 %v6065, %v6068
        %v6070 = vmul.f32 %v6066, %v6068
        %v6072 = vlaneseq
        %v6073 = vshrl.u32 %v6072, 7
        %v6074 = vsub.s32 0, %v6073
        %v6075 = vrot.slane %v6038, %v6074
        %v6077 = vadd.f32 %v6069, %v6075
        %v6078 = vadd.f32 %v6070, %v6075
        %v6079 = vpack.c.bf16 %v6078, %v6077
        %s6080 = scalar_lea.vmem [#allocation8], 384
        %v6081 = vld [vmem:[%s6080] sm:$0xff]
        %v6082 = vld [vmem:[%s6080 + $0x8] sm:$0xf]
        %v6083 = vld [vmem:[%s6080 + $0xc] sm:$0xff]
        %v6084 = vld [vmem:[%s6080 + $0x14] sm:$0xf]
        %v6085 = vld [vmem:[%s6080 + $0x18] sm:$0xff]
        %v6086 = vld [vmem:[%s6080 + $0x20] sm:$0xf]
        %v6087 = vld [vmem:[%s6080 + $0x24] sm:$0xff]
        %v6088 = vld [vmem:[%s6080 + $0x2c] sm:$0xf]
        %v6089 = vld [vmem:[%s6080 + $0x30] sm:$0xff]
        %v6090 = vld [vmem:[%s6080 + $0x38] sm:$0xf]
        %v6091 = vld [vmem:[%s6080 + $0x3c] sm:$0xff]
        %v6092 = vld [vmem:[%s6080 + $0x44] sm:$0xf]
        %v6093 = vld [vmem:[%s6080 + $0x48] sm:$0xff]
        %v6094 = vld [vmem:[%s6080 + $0x50] sm:$0xf]
        %v6095 = vld [vmem:[%s6080 + $0x54] sm:$0xff]
        %v6096 = vld [vmem:[%s6080 + $0x5c] sm:$0xf]
        %v6097 = vld [vmem:[%s6080 + $0x60] sm:$0xff]
        %v6098 = vld [vmem:[%s6080 + $0x68] sm:$0xf]
        %v6099 = vld [vmem:[%s6080 + $0x6c] sm:$0xff]
        %v6100 = vld [vmem:[%s6080 + $0x74] sm:$0xf]
        %v6101 = vld [vmem:[%s6080 + $0x78] sm:$0xff]
        %v6102 = vld [vmem:[%s6080 + $0x80] sm:$0xf]
        %v6103 = vld [vmem:[%s6080 + $0x84] sm:$0xff]
        %v6104 = vld [vmem:[%s6080 + $0x8c] sm:$0xf]
        %v6105 = vld [vmem:[%s6080 + $0x90] sm:$0xff]
        %v6106 = vld [vmem:[%s6080 + $0x98] sm:$0xf]
        %v6107 = vld [vmem:[%s6080 + $0x9c] sm:$0xff]
        %v6108 = vld [vmem:[%s6080 + $0xa4] sm:$0xf]
        %v6109 = vld [vmem:[%s6080 + $0xa8] sm:$0xff]
        %v6110 = vld [vmem:[%s6080 + $0xb0] sm:$0xf]
        %v6111 = vld [vmem:[%s6080 + $0xb4] sm:$0xff]
        %v6112 = vld [vmem:[%s6080 + $0xbc] sm:$0xf]
        %v6145 = vunpack.c.l.b16 %v6081
        %v6146 = vunpack.c.h.b16 %v6081
        %v6147 = vunpack.c.l.b16 %v6082
        %v6148 = vunpack.c.l.b16 %v6083
        %v6149 = vunpack.c.h.b16 %v6083
        %v6150 = vunpack.c.l.b16 %v6084
        %v6151 = vunpack.c.l.b16 %v6085
        %v6152 = vunpack.c.h.b16 %v6085
        %v6153 = vunpack.c.l.b16 %v6086
        %v6154 = vunpack.c.l.b16 %v6087
        %v6155 = vunpack.c.h.b16 %v6087
        %v6156 = vunpack.c.l.b16 %v6088
        %v6157 = vunpack.c.l.b16 %v6089
        %v6158 = vunpack.c.h.b16 %v6089
        %v6159 = vunpack.c.l.b16 %v6090
        %v6160 = vunpack.c.l.b16 %v6091
        %v6161 = vunpack.c.h.b16 %v6091
        %v6162 = vunpack.c.l.b16 %v6092
        %v6163 = vunpack.c.l.b16 %v6093
        %v6164 = vunpack.c.h.b16 %v6093
        %v6165 = vunpack.c.l.b16 %v6094
        %v6166 = vunpack.c.l.b16 %v6095
        %v6167 = vunpack.c.h.b16 %v6095
        %v6168 = vunpack.c.l.b16 %v6096
        %v6169 = vunpack.c.l.b16 %v6097
        %v6170 = vunpack.c.h.b16 %v6097
        %v6171 = vunpack.c.l.b16 %v6098
        %v6172 = vunpack.c.l.b16 %v6099
        %v6173 = vunpack.c.h.b16 %v6099
        %v6174 = vunpack.c.l.b16 %v6100
        %v6175 = vunpack.c.l.b16 %v6101
        %v6176 = vunpack.c.h.b16 %v6101
        %v6177 = vunpack.c.l.b16 %v6102
        %v6178 = vunpack.c.l.b16 %v6103
        %v6179 = vunpack.c.h.b16 %v6103
        %v6180 = vunpack.c.l.b16 %v6104
        %v6181 = vunpack.c.l.b16 %v6105
        %v6182 = vunpack.c.h.b16 %v6105
        %v6183 = vunpack.c.l.b16 %v6106
        %v6184 = vunpack.c.l.b16 %v6107
        %v6185 = vunpack.c.h.b16 %v6107
        %v6186 = vunpack.c.l.b16 %v6108
        %v6187 = vunpack.c.l.b16 %v6109
        %v6188 = vunpack.c.h.b16 %v6109
        %v6189 = vunpack.c.l.b16 %v6110
        %v6190 = vunpack.c.l.b16 %v6111
        %v6191 = vunpack.c.h.b16 %v6111
        %v6192 = vunpack.c.l.b16 %v6112
        %v6193 = vpack.c.b16 %v6148, %v6145
        %v6194 = vpack.c.b16 %v6149, %v6146
        %v6195 = vpack.c.b16 %v6150, %v6147
        %v6196 = vpack.c.b16 %v6154, %v6151
        %v6197 = vpack.c.b16 %v6155, %v6152
        %v6198 = vpack.c.b16 %v6156, %v6153
        %v6199 = vpack.c.b16 %v6160, %v6157
        %v6200 = vpack.c.b16 %v6161, %v6158
        %v6201 = vpack.c.b16 %v6162, %v6159
        %v6202 = vpack.c.b16 %v6166, %v6163
        %v6203 = vpack.c.b16 %v6167, %v6164
        %v6204 = vpack.c.b16 %v6168, %v6165
        %v6205 = vpack.c.b16 %v6172, %v6169
        %v6206 = vpack.c.b16 %v6173, %v6170
        %v6207 = vpack.c.b16 %v6174, %v6171
        %v6208 = vpack.c.b16 %v6178, %v6175
        %v6209 = vpack.c.b16 %v6179, %v6176
        %v6210 = vpack.c.b16 %v6180, %v6177
        %v6211 = vpack.c.b16 %v6184, %v6181
        %v6212 = vpack.c.b16 %v6185, %v6182
        %v6213 = vpack.c.b16 %v6186, %v6183
        %v6214 = vpack.c.b16 %v6190, %v6187
        %v6215 = vpack.c.b16 %v6191, %v6188
        %v6216 = vpack.c.b16 %v6192, %v6189
        %6241 = vmatprep.subr.bf16.mxu0 %v6194
        %6242 = vmatpush1.bf16.msra.mxu0 %v6193
        %6243 = vmatprep.subr.bf16.mxu0 %v6197
        %6244 = vmatpush1.bf16.msra.mxu0 %v6196
        %6245 = vmatprep.subr.bf16.mxu0 %v6200
        %6246 = vmatpush1.bf16.msra.mxu0 %v6199
        %6247 = vmatprep.subr.bf16.mxu0 %v6203
        %6248 = vmatpush1.bf16.msra.mxu0 %v6202
        %6249 = vmatprep.subr.bf16.mxu0 %v6206
        %6250 = vmatpush1.bf16.msra.mxu0 %v6205
        %6251 = vmatprep.subr.bf16.mxu0 %v6209
        %6252 = vmatpush1.bf16.msra.mxu0 %v6208
        %6253 = vmatprep.subr.bf16.mxu0 %v6212
        %6254 = vmatpush1.bf16.msra.mxu0 %v6211
        %6255 = vmatprep.subr.bf16.mxu0 %v6215
        %6256 = vmatpush1.bf16.msra.mxu0 %v6214
        %6257 = vmatprep.subr.bf16.mxu0 0
        %6258 = vmatpush1.bf16.msra.mxu0 0
        %6259 = vmatprep.subr.bf16.mxu0 0
        %6260 = vmatpush1.bf16.msra.mxu0 0
        %6261 = vmatprep.subr.bf16.mxu0 0
        %6262 = vmatpush1.bf16.msra.mxu0 0
        %6263 = vmatprep.subr.bf16.mxu0 0
        %6264 = vmatpush1.bf16.msra.mxu0 0
        %6265 = vmatprep.subr.bf16.mxu0 0
        %6266 = vmatpush1.bf16.msra.mxu0 0
        %6267 = vmatprep.subr.bf16.mxu0 0
        %6268 = vmatpush1.bf16.msra.mxu0 0
        %6269 = vmatprep.subr.bf16.mxu0 0
        %6270 = vmatpush1.bf16.msra.mxu0 0
        %6271 = vmatprep.subr.bf16.mxu0 0
        %6272 = vmatpush1.bf16.msra.mxu0 0
        %6273 = vmatprep.mubr.bf16.mxu0 0
        %6274 = vmatmul.mubr.bf16.gmra.mrb[0].mxu0 %v6079
        %v6275 = vpop.f32.mrb[0].mxu0
        %v6276 = vadd.f32 0.0, %v6275
        %v6277 = vpop.f32.mrb[0].mxu0
        %v6278 = vadd.f32 0.0, %v6277
        %v6279 = vpop.f32.mrb[0].mxu0
        %v6280 = vadd.f32 0.0, %v6279
        %v6281 = vpop.f32.mrb[0].mxu0
        %v6282 = vadd.f32 0.0, %v6281
        %6283 = vdwg.mxu0
        %6284 = vmatprep.subr.bf16.mxu0 0
        %6285 = vmatpush1.bf16.msra.mxu0 %v6195
        %6286 = vmatprep.subr.bf16.mxu0 0
        %6287 = vmatpush1.bf16.msra.mxu0 %v6198
        %6288 = vmatprep.subr.bf16.mxu0 0
        %6289 = vmatpush1.bf16.msra.mxu0 %v6201
        %6290 = vmatprep.subr.bf16.mxu0 0
        %6291 = vmatpush1.bf16.msra.mxu0 %v6204
        %6292 = vmatprep.subr.bf16.mxu0 0
        %6293 = vmatpush1.bf16.msra.mxu0 %v6207
        %6294 = vmatprep.subr.bf16.mxu0 0
        %6295 = vmatpush1.bf16.msra.mxu0 %v6210
        %6296 = vmatprep.subr.bf16.mxu0 0
        %6297 = vmatpush1.bf16.msra.mxu0 %v6213
        %6298 = vmatprep.subr.bf16.mxu0 0
        %6299 = vmatpush1.bf16.msra.mxu0 %v6216
        %6300 = vmatprep.subr.bf16.mxu0 0
        %6301 = vmatpush1.bf16.msra.mxu0 0
        %6302 = vmatprep.subr.bf16.mxu0 0
        %6303 = vmatpush1.bf16.msra.mxu0 0
        %6304 = vmatprep.subr.bf16.mxu0 0
        %6305 = vmatpush1.bf16.msra.mxu0 0
        %6306 = vmatprep.subr.bf16.mxu0 0
        %6307 = vmatpush1.bf16.msra.mxu0 0
        %6308 = vmatprep.subr.bf16.mxu0 0
        %6309 = vmatpush1.bf16.msra.mxu0 0
        %6310 = vmatprep.subr.bf16.mxu0 0
        %6311 = vmatpush1.bf16.msra.mxu0 0
        %6312 = vmatprep.subr.bf16.mxu0 0
        %6313 = vmatpush1.bf16.msra.mxu0 0
        %6314 = vmatprep.subr.bf16.mxu0 0
        %6315 = vmatpush1.bf16.msra.mxu0 0
        %6316 = vmatprep.mubr.bf16.mxu0 0
        %6317 = vmatmul.mubr.bf16.gmra.mrb[0].mxu0 %v6079
        %v6318 = vpop.f32.mrb[0].mxu0
        %v6319 = vadd.f32 0.0, %v6318
        %v6320 = vpop.f32.mrb[0].mxu0
        %v6321 = vpop.f32.mrb[0].mxu0
        %v6322 = vadd.f32 0.0, %v6321
        %v6323 = vpop.f32.mrb[0].mxu0
        %6324 = vdwg.mxu0
        %6327 = vrot.lane.b32.xlu0 %v6276, 96
        %v6328 = vpop.permute.xlu0 %6327
        %6329 = vrot.lane.b32.xlu0 %v6280, 96
        %v6330 = vpop.permute.xlu0 %6329
        %6333 = vrot.lane.b32.xlu0 %v6276, 64
        %v6334 = vpop.permute.xlu0 %6333
        %6335 = vrot.lane.b32.xlu0 %v6280, 64
        %v6336 = vpop.permute.xlu0 %6335
        %6339 = vrot.lane.b32.xlu0 %v6276, 32
        %v6340 = vpop.permute.xlu0 %6339
        %6341 = vrot.lane.b32.xlu0 %v6280, 32
        %v6342 = vpop.permute.xlu0 %6341
        %v6345 = vcombine.low %v6276, %v6334
        %v6346 = vcombine.high %v6276, %v6334
        %v6348 = vunpack.c.l.s4 1983009808
        %v6349 = vunpack.c.0.s8 %v6348
        %v6350 = vlaneseq
        %v6351 = vshrl.u32 %v6350, 7
        %v6352 = vsub.s32 %v6349, %v6351
        %v6353 = vrot.slane %v6345, %v6352
        %v6355 = vunpack.c.l.s4 1983009808
        %v6356 = vunpack.c.0.s8 %v6355
        %v6357 = vlaneseq
        %v6358 = vshrl.u32 %v6357, 7
        %v6359 = vsub.s32 %v6356, %v6358
        %v6360 = vrot.slane %v6346, %v6359
        %v6361 = vcombine.low %v6328, %v6340
        %v6362 = vcombine.high %v6328, %v6340
        %v6364 = vunpack.c.l.s4 1983009808
        %v6365 = vunpack.c.0.s8 %v6364
        %v6366 = vlaneseq
        %v6367 = vshrl.u32 %v6366, 7
        %v6368 = vsub.s32 %v6365, %v6367
        %v6369 = vrot.slane %v6361, %v6368
        %v6371 = vunpack.c.l.s4 1983009808
        %v6372 = vunpack.c.0.s8 %v6371
        %v6373 = vlaneseq
        %v6374 = vshrl.u32 %v6373, 7
        %v6375 = vsub.s32 %v6372, %v6374
        %v6376 = vrot.slane %v6362, %v6375
        %v6377 = vcombine.low %v6353, %v6369
        %v6378 = vcombine.high %v6353, %v6369
        %v6380 = vunpack.c.l.s4 1934713408
        %v6381 = vunpack.c.0.s8 %v6380
        %v6382 = vlaneseq
        %v6383 = vshrl.u32 %v6382, 7
        %v6384 = vsub.s32 %v6381, %v6383
        %v6385 = vrot.slane %v6377, %v6384
        %v6387 = vunpack.c.l.s4 1934713408
        %v6388 = vunpack.c.0.s8 %v6387
        %v6389 = vlaneseq
        %v6390 = vshrl.u32 %v6389, 7
        %v6391 = vsub.s32 %v6388, %v6390
        %v6392 = vrot.slane %v6378, %v6391
        %v6393 = vcombine.low %v6360, %v6376
        %v6394 = vcombine.high %v6360, %v6376
        %v6396 = vunpack.c.l.s4 1934713408
        %v6397 = vunpack.c.0.s8 %v6396
        %v6398 = vlaneseq
        %v6399 = vshrl.u32 %v6398, 7
        %v6400 = vsub.s32 %v6397, %v6399
        %v6401 = vrot.slane %v6393, %v6400
        %v6403 = vunpack.c.l.s4 1934713408
        %v6404 = vunpack.c.0.s8 %v6403
        %v6405 = vlaneseq
        %v6406 = vshrl.u32 %v6405, 7
        %v6407 = vsub.s32 %v6404, %v6406
        %v6408 = vrot.slane %v6394, %v6407
        %v6409 = vcombine.high %v6385, 0.0
        %v6410 = vcombine.high %v6392, 0.0
        %v6411 = vcombine.high %v6401, 0.0
        %v6412 = vcombine.high %v6408, 0.0
        %v6413 = vcombine.low %v6280, %v6336
        %v6414 = vcombine.high %v6280, %v6336
        %v6416 = vunpack.c.l.s4 1983009808
        %v6417 = vunpack.c.0.s8 %v6416
        %v6418 = vlaneseq
        %v6419 = vshrl.u32 %v6418, 7
        %v6420 = vsub.s32 %v6417, %v6419
        %v6421 = vrot.slane %v6413, %v6420
        %v6423 = vunpack.c.l.s4 1983009808
        %v6424 = vunpack.c.0.s8 %v6423
        %v6425 = vlaneseq
        %v6426 = vshrl.u32 %v6425, 7
        %v6427 = vsub.s32 %v6424, %v6426
        %v6428 = vrot.slane %v6414, %v6427
        %v6429 = vcombine.low %v6330, %v6342
        %v6430 = vcombine.high %v6330, %v6342
        %v6432 = vunpack.c.l.s4 1983009808
        %v6433 = vunpack.c.0.s8 %v6432
        %v6434 = vlaneseq
        %v6435 = vshrl.u32 %v6434, 7
        %v6436 = vsub.s32 %v6433, %v6435
        %v6437 = vrot.slane %v6429, %v6436
        %v6439 = vunpack.c.l.s4 1983009808
        %v6440 = vunpack.c.0.s8 %v6439
        %v6441 = vlaneseq
        %v6442 = vshrl.u32 %v6441, 7
        %v6443 = vsub.s32 %v6440, %v6442
        %v6444 = vrot.slane %v6430, %v6443
        %v6445 = vcombine.low %v6421, %v6437
        %v6446 = vcombine.high %v6421, %v6437
        %v6448 = vunpack.c.l.s4 1934713408
        %v6449 = vunpack.c.0.s8 %v6448
        %v6450 = vlaneseq
        %v6451 = vshrl.u32 %v6450, 7
        %v6452 = vsub.s32 %v6449, %v6451
        %v6453 = vrot.slane %v6445, %v6452
        %v6455 = vunpack.c.l.s4 1934713408
        %v6456 = vunpack.c.0.s8 %v6455
        %v6457 = vlaneseq
        %v6458 = vshrl.u32 %v6457, 7
        %v6459 = vsub.s32 %v6456, %v6458
        %v6460 = vrot.slane %v6446, %v6459
        %v6461 = vcombine.low %v6428, %v6444
        %v6462 = vcombine.high %v6428, %v6444
        %v6464 = vunpack.c.l.s4 1934713408
        %v6465 = vunpack.c.0.s8 %v6464
        %v6466 = vlaneseq
        %v6467 = vshrl.u32 %v6466, 7
        %v6468 = vsub.s32 %v6465, %v6467
        %v6469 = vrot.slane %v6461, %v6468
        %v6471 = vunpack.c.l.s4 1934713408
        %v6472 = vunpack.c.0.s8 %v6471
        %v6473 = vlaneseq
        %v6474 = vshrl.u32 %v6473, 7
        %v6475 = vsub.s32 %v6472, %v6474
        %v6476 = vrot.slane %v6462, %v6475
        %v6477 = vcombine.high %v6453, 0.0
        %v6478 = vcombine.high %v6460, 0.0
        %v6479 = vcombine.high %v6469, 0.0
        %v6480 = vcombine.high %v6476, 0.0
        %v6481 = vcombine.low %v6385, %v6392
        %v6483 = vunpack.c.l.s4 1983009808
        %v6484 = vunpack.c.0.s8 %v6483
        %v6485 = vlaneseq
        %v6486 = vshrl.u32 %v6485, 7
        %v6487 = vsub.s32 %v6484, %v6486
        %v6488 = vrot.slane %v6481, %v6487
        %v6489 = vcombine.low %v6409, %v6410
        %v6491 = vunpack.c.l.s4 1983009808
        %v6492 = vunpack.c.0.s8 %v6491
        %v6493 = vlaneseq
        %v6494 = vshrl.u32 %v6493, 7
        %v6495 = vsub.s32 %v6492, %v6494
        %v6496 = vrot.slane %v6489, %v6495
        %v6497 = vcombine.low %v6401, %v6408
        %v6499 = vunpack.c.l.s4 1983009808
        %v6500 = vunpack.c.0.s8 %v6499
        %v6501 = vlaneseq
        %v6502 = vshrl.u32 %v6501, 7
        %v6503 = vsub.s32 %v6500, %v6502
        %v6504 = vrot.slane %v6497, %v6503
        %v6505 = vcombine.low %v6411, %v6412
        %v6507 = vunpack.c.l.s4 1983009808
        %v6508 = vunpack.c.0.s8 %v6507
        %v6509 = vlaneseq
        %v6510 = vshrl.u32 %v6509, 7
        %v6511 = vsub.s32 %v6508, %v6510
        %v6512 = vrot.slane %v6505, %v6511
        %v6513 = vcombine.low %v6488, %v6496
        %v6514 = vcombine.high %v6488, %v6496
        %v6516 = vunpack.c.l.s4 1934713408
        %v6517 = vunpack.c.0.s8 %v6516
        %v6518 = vlaneseq
        %v6519 = vshrl.u32 %v6518, 7
        %v6520 = vsub.s32 %v6517, %v6519
        %v6521 = vrot.slane %v6513, %v6520
        %v6523 = vunpack.c.l.s4 1934713408
        %v6524 = vunpack.c.0.s8 %v6523
        %v6525 = vlaneseq
        %v6526 = vshrl.u32 %v6525, 7
        %v6527 = vsub.s32 %v6524, %v6526
        %v6528 = vrot.slane %v6514, %v6527
        %v6529 = vcombine.low %v6504, %v6512
        %v6530 = vcombine.high %v6504, %v6512
        %v6532 = vunpack.c.l.s4 1934713408
        %v6533 = vunpack.c.0.s8 %v6532
        %v6534 = vlaneseq
        %v6535 = vshrl.u32 %v6534, 7
        %v6536 = vsub.s32 %v6533, %v6535
        %v6537 = vrot.slane %v6529, %v6536
        %v6539 = vunpack.c.l.s4 1934713408
        %v6540 = vunpack.c.0.s8 %v6539
        %v6541 = vlaneseq
        %v6542 = vshrl.u32 %v6541, 7
        %v6543 = vsub.s32 %v6540, %v6542
        %v6544 = vrot.slane %v6530, %v6543
        %v6545 = vcombine.low %v6521, %v6537
        %v6546 = vcombine.high %v6521, %v6537
        %v6547 = vcombine.low %v6528, %v6544
        %v6548 = vcombine.high %v6528, %v6544
        %v6549 = vcombine.low %v6453, %v6460
        %v6551 = vunpack.c.l.s4 1983009808
        %v6552 = vunpack.c.0.s8 %v6551
        %v6553 = vlaneseq
        %v6554 = vshrl.u32 %v6553, 7
        %v6555 = vsub.s32 %v6552, %v6554
        %v6556 = vrot.slane %v6549, %v6555
        %v6557 = vcombine.low %v6477, %v6478
        %v6559 = vunpack.c.l.s4 1983009808
        %v6560 = vunpack.c.0.s8 %v6559
        %v6561 = vlaneseq
        %v6562 = vshrl.u32 %v6561, 7
        %v6563 = vsub.s32 %v6560, %v6562
        %v6564 = vrot.slane %v6557, %v6563
        %v6565 = vcombine.low %v6469, %v6476
        %v6567 = vunpack.c.l.s4 1983009808
        %v6568 = vunpack.c.0.s8 %v6567
        %v6569 = vlaneseq
        %v6570 = vshrl.u32 %v6569, 7
        %v6571 = vsub.s32 %v6568, %v6570
        %v6572 = vrot.slane %v6565, %v6571
        %v6573 = vcombine.low %v6479, %v6480
        %v6575 = vunpack.c.l.s4 1983009808
        %v6576 = vunpack.c.0.s8 %v6575
        %v6577 = vlaneseq
        %v6578 = vshrl.u32 %v6577, 7
        %v6579 = vsub.s32 %v6576, %v6578
        %v6580 = vrot.slane %v6573, %v6579
        %v6581 = vcombine.low %v6556, %v6564
        %v6582 = vcombine.high %v6556, %v6564
        %v6584 = vunpack.c.l.s4 1934713408
        %v6585 = vunpack.c.0.s8 %v6584
        %v6586 = vlaneseq
        %v6587 = vshrl.u32 %v6586, 7
        %v6588 = vsub.s32 %v6585, %v6587
        %v6589 = vrot.slane %v6581, %v6588
        %v6591 = vunpack.c.l.s4 1934713408
        %v6592 = vunpack.c.0.s8 %v6591
        %v6593 = vlaneseq
        %v6594 = vshrl.u32 %v6593, 7
        %v6595 = vsub.s32 %v6592, %v6594
        %v6596 = vrot.slane %v6582, %v6595
        %v6597 = vcombine.low %v6572, %v6580
        %v6598 = vcombine.high %v6572, %v6580
        %v6600 = vunpack.c.l.s4 1934713408
        %v6601 = vunpack.c.0.s8 %v6600
        %v6602 = vlaneseq
        %v6603 = vshrl.u32 %v6602, 7
        %v6604 = vsub.s32 %v6601, %v6603
        %v6605 = vrot.slane %v6597, %v6604
        %v6607 = vunpack.c.l.s4 1934713408
        %v6608 = vunpack.c.0.s8 %v6607
        %v6609 = vlaneseq
        %v6610 = vshrl.u32 %v6609, 7
        %v6611 = vsub.s32 %v6608, %v6610
        %v6612 = vrot.slane %v6598, %v6611
        %v6613 = vcombine.low %v6589, %v6605
        %v6614 = vcombine.high %v6589, %v6605
        %v6615 = vcombine.low %v6596, %v6612
        %v6616 = vcombine.high %v6596, %v6612
        %6619 = vrot.lane.b32.xlu0 %v6278, 96
        %v6620 = vpop.permute.xlu0 %6619
        %6621 = vrot.lane.b32.xlu0 %v6282, 96
        %v6622 = vpop.permute.xlu0 %6621
        %6625 = vrot.lane.b32.xlu0 %v6278, 64
        %v6626 = vpop.permute.xlu0 %6625
        %6627 = vrot.lane.b32.xlu0 %v6282, 64
        %v6628 = vpop.permute.xlu0 %6627
        %6631 = vrot.lane.b32.xlu0 %v6278, 32
        %v6632 = vpop.permute.xlu0 %6631
        %6633 = vrot.lane.b32.xlu0 %v6282, 32
        %v6634 = vpop.permute.xlu0 %6633
        %v6637 = vcombine.low %v6278, %v6626
        %v6638 = vcombine.high %v6278, %v6626
        %v6640 = vunpack.c.l.s4 1983009808
        %v6641 = vunpack.c.0.s8 %v6640
        %v6642 = vlaneseq
        %v6643 = vshrl.u32 %v6642, 7
        %v6644 = vsub.s32 %v6641, %v6643
        %v6645 = vrot.slane %v6637, %v6644
        %v6647 = vunpack.c.l.s4 1983009808
        %v6648 = vunpack.c.0.s8 %v6647
        %v6649 = vlaneseq
        %v6650 = vshrl.u32 %v6649, 7
        %v6651 = vsub.s32 %v6648, %v6650
        %v6652 = vrot.slane %v6638, %v6651
        %v6653 = vcombine.low %v6620, %v6632
        %v6654 = vcombine.high %v6620, %v6632
        %v6656 = vunpack.c.l.s4 1983009808
        %v6657 = vunpack.c.0.s8 %v6656
        %v6658 = vlaneseq
        %v6659 = vshrl.u32 %v6658, 7
        %v6660 = vsub.s32 %v6657, %v6659
        %v6661 = vrot.slane %v6653, %v6660
        %v6663 = vunpack.c.l.s4 1983009808
        %v6664 = vunpack.c.0.s8 %v6663
        %v6665 = vlaneseq
        %v6666 = vshrl.u32 %v6665, 7
        %v6667 = vsub.s32 %v6664, %v6666
        %v6668 = vrot.slane %v6654, %v6667
        %v6669 = vcombine.low %v6645, %v6661
        %v6670 = vcombine.high %v6645, %v6661
        %v6672 = vunpack.c.l.s4 1934713408
        %v6673 = vunpack.c.0.s8 %v6672
        %v6674 = vlaneseq
        %v6675 = vshrl.u32 %v6674, 7
        %v6676 = vsub.s32 %v6673, %v6675
        %v6677 = vrot.slane %v6669, %v6676
        %v6679 = vunpack.c.l.s4 1934713408
        %v6680 = vunpack.c.0.s8 %v6679
        %v6681 = vlaneseq
        %v6682 = vshrl.u32 %v6681, 7
        %v6683 = vsub.s32 %v6680, %v6682
        %v6684 = vrot.slane %v6670, %v6683
        %v6685 = vcombine.low %v6652, %v6668
        %v6686 = vcombine.high %v6652, %v6668
        %v6688 = vunpack.c.l.s4 1934713408
        %v6689 = vunpack.c.0.s8 %v6688
        %v6690 = vlaneseq
        %v6691 = vshrl.u32 %v6690, 7
        %v6692 = vsub.s32 %v6689, %v6691
        %v6693 = vrot.slane %v6685, %v6692
        %v6695 = vunpack.c.l.s4 1934713408
        %v6696 = vunpack.c.0.s8 %v6695
        %v6697 = vlaneseq
        %v6698 = vshrl.u32 %v6697, 7
        %v6699 = vsub.s32 %v6696, %v6698
        %v6700 = vrot.slane %v6686, %v6699
        %v6701 = vcombine.high %v6677, 0.0
        %v6702 = vcombine.high %v6684, 0.0
        %v6703 = vcombine.high %v6693, 0.0
        %v6704 = vcombine.high %v6700, 0.0
        %v6705 = vcombine.low %v6282, %v6628
        %v6706 = vcombine.high %v6282, %v6628
        %v6708 = vunpack.c.l.s4 1983009808
        %v6709 = vunpack.c.0.s8 %v6708
        %v6710 = vlaneseq
        %v6711 = vshrl.u32 %v6710, 7
        %v6712 = vsub.s32 %v6709, %v6711
        %v6713 = vrot.slane %v6705, %v6712
        %v6715 = vunpack.c.l.s4 1983009808
        %v6716 = vunpack.c.0.s8 %v6715
        %v6717 = vlaneseq
        %v6718 = vshrl.u32 %v6717, 7
        %v6719 = vsub.s32 %v6716, %v6718
        %v6720 = vrot.slane %v6706, %v6719
        %v6721 = vcombine.low %v6622, %v6634
        %v6722 = vcombine.high %v6622, %v6634
        %v6724 = vunpack.c.l.s4 1983009808
        %v6725 = vunpack.c.0.s8 %v6724
        %v6726 = vlaneseq
        %v6727 = vshrl.u32 %v6726, 7
        %v6728 = vsub.s32 %v6725, %v6727
        %v6729 = vrot.slane %v6721, %v6728
        %v6731 = vunpack.c.l.s4 1983009808
        %v6732 = vunpack.c.0.s8 %v6731
        %v6733 = vlaneseq
        %v6734 = vshrl.u32 %v6733, 7
        %v6735 = vsub.s32 %v6732, %v6734
        %v6736 = vrot.slane %v6722, %v6735
        %v6737 = vcombine.low %v6713, %v6729
        %v6738 = vcombine.high %v6713, %v6729
        %v6740 = vunpack.c.l.s4 1934713408
        %v6741 = vunpack.c.0.s8 %v6740
        %v6742 = vlaneseq
        %v6743 = vshrl.u32 %v6742, 7
        %v6744 = vsub.s32 %v6741, %v6743
        %v6745 = vrot.slane %v6737, %v6744
        %v6747 = vunpack.c.l.s4 1934713408
        %v6748 = vunpack.c.0.s8 %v6747
        %v6749 = vlaneseq
        %v6750 = vshrl.u32 %v6749, 7
        %v6751 = vsub.s32 %v6748, %v6750
        %v6752 = vrot.slane %v6738, %v6751
        %v6753 = vcombine.low %v6720, %v6736
        %v6754 = vcombine.high %v6720, %v6736
        %v6756 = vunpack.c.l.s4 1934713408
        %v6757 = vunpack.c.0.s8 %v6756
        %v6758 = vlaneseq
        %v6759 = vshrl.u32 %v6758, 7
        %v6760 = vsub.s32 %v6757, %v6759
        %v6761 = vrot.slane %v6753, %v6760
        %v6763 = vunpack.c.l.s4 1934713408
        %v6764 = vunpack.c.0.s8 %v6763
        %v6765 = vlaneseq
        %v6766 = vshrl.u32 %v6765, 7
        %v6767 = vsub.s32 %v6764, %v6766
        %v6768 = vrot.slane %v6754, %v6767
        %v6769 = vcombine.high %v6745, 0.0
        %v6770 = vcombine.high %v6752, 0.0
        %v6771 = vcombine.high %v6761, 0.0
        %v6772 = vcombine.high %v6768, 0.0
        %v6773 = vcombine.low %v6677, %v6684
        %v6775 = vunpack.c.l.s4 1983009808
        %v6776 = vunpack.c.0.s8 %v6775
        %v6777 = vlaneseq
        %v6778 = vshrl.u32 %v6777, 7
        %v6779 = vsub.s32 %v6776, %v6778
        %v6780 = vrot.slane %v6773, %v6779
        %v6781 = vcombine.low %v6701, %v6702
        %v6783 = vunpack.c.l.s4 1983009808
        %v6784 = vunpack.c.0.s8 %v6783
        %v6785 = vlaneseq
        %v6786 = vshrl.u32 %v6785, 7
        %v6787 = vsub.s32 %v6784, %v6786
        %v6788 = vrot.slane %v6781, %v6787
        %v6789 = vcombine.low %v6693, %v6700
        %v6791 = vunpack.c.l.s4 1983009808
        %v6792 = vunpack.c.0.s8 %v6791
        %v6793 = vlaneseq
        %v6794 = vshrl.u32 %v6793, 7
        %v6795 = vsub.s32 %v6792, %v6794
        %v6796 = vrot.slane %v6789, %v6795
        %v6797 = vcombine.low %v6703, %v6704
        %v6799 = vunpack.c.l.s4 1983009808
        %v6800 = vunpack.c.0.s8 %v6799
        %v6801 = vlaneseq
        %v6802 = vshrl.u32 %v6801, 7
        %v6803 = vsub.s32 %v6800, %v6802
        %v6804 = vrot.slane %v6797, %v6803
        %v6805 = vcombine.low %v6780, %v6788
        %v6806 = vcombine.high %v6780, %v6788
        %v6808 = vunpack.c.l.s4 1934713408
        %v6809 = vunpack.c.0.s8 %v6808
        %v6810 = vlaneseq
        %v6811 = vshrl.u32 %v6810, 7
        %v6812 = vsub.s32 %v6809, %v6811
        %v6813 = vrot.slane %v6805, %v6812
        %v6815 = vunpack.c.l.s4 1934713408
        %v6816 = vunpack.c.0.s8 %v6815
        %v6817 = vlaneseq
        %v6818 = vshrl.u32 %v6817, 7
        %v6819 = vsub.s32 %v6816, %v6818
        %v6820 = vrot.slane %v6806, %v6819
        %v6821 = vcombine.low %v6796, %v6804
        %v6822 = vcombine.high %v6796, %v6804
        %v6824 = vunpack.c.l.s4 1934713408
        %v6825 = vunpack.c.0.s8 %v6824
        %v6826 = vlaneseq
        %v6827 = vshrl.u32 %v6826, 7
        %v6828 = vsub.s32 %v6825, %v6827
        %v6829 = vrot.slane %v6821, %v6828
        %v6831 = vunpack.c.l.s4 1934713408
        %v6832 = vunpack.c.0.s8 %v6831
        %v6833 = vlaneseq
        %v6834 = vshrl.u32 %v6833, 7
        %v6835 = vsub.s32 %v6832, %v6834
        %v6836 = vrot.slane %v6822, %v6835
        %v6837 = vcombine.low %v6813, %v6829
        %v6838 = vcombine.high %v6813, %v6829
        %v6839 = vcombine.low %v6820, %v6836
        %v6840 = vcombine.high %v6820, %v6836
        %v6841 = vcombine.low %v6745, %v6752
        %v6843 = vunpack.c.l.s4 1983009808
        %v6844 = vunpack.c.0.s8 %v6843
        %v6845 = vlaneseq
        %v6846 = vshrl.u32 %v6845, 7
        %v6847 = vsub.s32 %v6844, %v6846
        %v6848 = vrot.slane %v6841, %v6847
        %v6849 = vcombine.low %v6769, %v6770
        %v6851 = vunpack.c.l.s4 1983009808
        %v6852 = vunpack.c.0.s8 %v6851
        %v6853 = vlaneseq
        %v6854 = vshrl.u32 %v6853, 7
        %v6855 = vsub.s32 %v6852, %v6854
        %v6856 = vrot.slane %v6849, %v6855
        %v6857 = vcombine.low %v6761, %v6768
        %v6859 = vunpack.c.l.s4 1983009808
        %v6860 = vunpack.c.0.s8 %v6859
        %v6861 = vlaneseq
        %v6862 = vshrl.u32 %v6861, 7
        %v6863 = vsub.s32 %v6860, %v6862
        %v6864 = vrot.slane %v6857, %v6863
        %v6865 = vcombine.low %v6771, %v6772
        %v6867 = vunpack.c.l.s4 1983009808
        %v6868 = vunpack.c.0.s8 %v6867
        %v6869 = vlaneseq
        %v6870 = vshrl.u32 %v6869, 7
        %v6871 = vsub.s32 %v6868, %v6870
        %v6872 = vrot.slane %v6865, %v6871
        %v6873 = vcombine.low %v6848, %v6856
        %v6874 = vcombine.high %v6848, %v6856
        %v6876 = vunpack.c.l.s4 1934713408
        %v6877 = vunpack.c.0.s8 %v6876
        %v6878 = vlaneseq
        %v6879 = vshrl.u32 %v6878, 7
        %v6880 = vsub.s32 %v6877, %v6879
        %v6881 = vrot.slane %v6873, %v6880
        %v6883 = vunpack.c.l.s4 1934713408
        %v6884 = vunpack.c.0.s8 %v6883
        %v6885 = vlaneseq
        %v6886 = vshrl.u32 %v6885, 7
        %v6887 = vsub.s32 %v6884, %v6886
        %v6888 = vrot.slane %v6874, %v6887
        %v6889 = vcombine.low %v6864, %v6872
        %v6890 = vcombine.high %v6864, %v6872
        %v6892 = vunpack.c.l.s4 1934713408
        %v6893 = vunpack.c.0.s8 %v6892
        %v6894 = vlaneseq
        %v6895 = vshrl.u32 %v6894, 7
        %v6896 = vsub.s32 %v6893, %v6895
        %v6897 = vrot.slane %v6889, %v6896
        %v6899 = vunpack.c.l.s4 1934713408
        %v6900 = vunpack.c.0.s8 %v6899
        %v6901 = vlaneseq
        %v6902 = vshrl.u32 %v6901, 7
        %v6903 = vsub.s32 %v6900, %v6902
        %v6904 = vrot.slane %v6890, %v6903
        %v6905 = vcombine.low %v6881, %v6897
        %v6906 = vcombine.high %v6881, %v6897
        %v6907 = vcombine.low %v6888, %v6904
        %v6908 = vcombine.high %v6888, %v6904
        %6911 = vrot.lane.b32.xlu0 %v6319, 96
        %v6912 = vpop.permute.xlu0 %6911
        %6913 = vrot.lane.b32.xlu0 %v6322, 96
        %v6914 = vpop.permute.xlu0 %6913
        %6917 = vrot.lane.b32.xlu0 %v6319, 64
        %v6918 = vpop.permute.xlu0 %6917
        %6919 = vrot.lane.b32.xlu0 %v6322, 64
        %v6920 = vpop.permute.xlu0 %6919
        %6923 = vrot.lane.b32.xlu0 %v6319, 32
        %v6924 = vpop.permute.xlu0 %6923
        %6925 = vrot.lane.b32.xlu0 %v6322, 32
        %v6926 = vpop.permute.xlu0 %6925
        %v6929 = vcombine.low %v6319, %v6918
        %v6930 = vcombine.high %v6319, %v6918
        %v6932 = vunpack.c.l.s4 1983009808
        %v6933 = vunpack.c.0.s8 %v6932
        %v6934 = vlaneseq
        %v6935 = vshrl.u32 %v6934, 7
        %v6936 = vsub.s32 %v6933, %v6935
        %v6937 = vrot.slane %v6929, %v6936
        %v6939 = vunpack.c.l.s4 1983009808
        %v6940 = vunpack.c.0.s8 %v6939
        %v6941 = vlaneseq
        %v6942 = vshrl.u32 %v6941, 7
        %v6943 = vsub.s32 %v6940, %v6942
        %v6944 = vrot.slane %v6930, %v6943
        %v6945 = vcombine.low %v6912, %v6924
        %v6946 = vcombine.high %v6912, %v6924
        %v6948 = vunpack.c.l.s4 1983009808
        %v6949 = vunpack.c.0.s8 %v6948
        %v6950 = vlaneseq
        %v6951 = vshrl.u32 %v6950, 7
        %v6952 = vsub.s32 %v6949, %v6951
        %v6953 = vrot.slane %v6945, %v6952
        %v6955 = vunpack.c.l.s4 1983009808
        %v6956 = vunpack.c.0.s8 %v6955
        %v6957 = vlaneseq
        %v6958 = vshrl.u32 %v6957, 7
        %v6959 = vsub.s32 %v6956, %v6958
        %v6960 = vrot.slane %v6946, %v6959
        %v6961 = vcombine.low %v6937, %v6953
        %v6962 = vcombine.high %v6937, %v6953
        %v6964 = vunpack.c.l.s4 1934713408
        %v6965 = vunpack.c.0.s8 %v6964
        %v6966 = vlaneseq
        %v6967 = vshrl.u32 %v6966, 7
        %v6968 = vsub.s32 %v6965, %v6967
        %v6969 = vrot.slane %v6961, %v6968
        %v6971 = vunpack.c.l.s4 1934713408
        %v6972 = vunpack.c.0.s8 %v6971
        %v6973 = vlaneseq
        %v6974 = vshrl.u32 %v6973, 7
        %v6975 = vsub.s32 %v6972, %v6974
        %v6976 = vrot.slane %v6962, %v6975
        %v6977 = vcombine.low %v6944, %v6960
        %v6978 = vcombine.high %v6944, %v6960
        %v6980 = vunpack.c.l.s4 1934713408
        %v6981 = vunpack.c.0.s8 %v6980
        %v6982 = vlaneseq
        %v6983 = vshrl.u32 %v6982, 7
        %v6984 = vsub.s32 %v6981, %v6983
        %v6985 = vrot.slane %v6977, %v6984
        %v6987 = vunpack.c.l.s4 1934713408
        %v6988 = vunpack.c.0.s8 %v6987
        %v6989 = vlaneseq
        %v6990 = vshrl.u32 %v6989, 7
        %v6991 = vsub.s32 %v6988, %v6990
        %v6992 = vrot.slane %v6978, %v6991
        %v6993 = vcombine.high %v6969, 0.0
        %v6994 = vcombine.high %v6976, 0.0
        %v6995 = vcombine.high %v6985, 0.0
        %v6996 = vcombine.high %v6992, 0.0
        %v6997 = vcombine.low %v6322, %v6920
        %v6998 = vcombine.high %v6322, %v6920
        %v7000 = vunpack.c.l.s4 1983009808
        %v7001 = vunpack.c.0.s8 %v7000
        %v7002 = vlaneseq
        %v7003 = vshrl.u32 %v7002, 7
        %v7004 = vsub.s32 %v7001, %v7003
        %v7005 = vrot.slane %v6997, %v7004
        %v7007 = vunpack.c.l.s4 1983009808
        %v7008 = vunpack.c.0.s8 %v7007
        %v7009 = vlaneseq
        %v7010 = vshrl.u32 %v7009, 7
        %v7011 = vsub.s32 %v7008, %v7010
        %v7012 = vrot.slane %v6998, %v7011
        %v7013 = vcombine.low %v6914, %v6926
        %v7014 = vcombine.high %v6914, %v6926
        %v7016 = vunpack.c.l.s4 1983009808
        %v7017 = vunpack.c.0.s8 %v7016
        %v7018 = vlaneseq
        %v7019 = vshrl.u32 %v7018, 7
        %v7020 = vsub.s32 %v7017, %v7019
        %v7021 = vrot.slane %v7013, %v7020
        %v7023 = vunpack.c.l.s4 1983009808
        %v7024 = vunpack.c.0.s8 %v7023
        %v7025 = vlaneseq
        %v7026 = vshrl.u32 %v7025, 7
        %v7027 = vsub.s32 %v7024, %v7026
        %v7028 = vrot.slane %v7014, %v7027
        %v7029 = vcombine.low %v7005, %v7021
        %v7030 = vcombine.high %v7005, %v7021
        %v7032 = vunpack.c.l.s4 1934713408
        %v7033 = vunpack.c.0.s8 %v7032
        %v7034 = vlaneseq
        %v7035 = vshrl.u32 %v7034, 7
        %v7036 = vsub.s32 %v7033, %v7035
        %v7037 = vrot.slane %v7029, %v7036
        %v7039 = vunpack.c.l.s4 1934713408
        %v7040 = vunpack.c.0.s8 %v7039
        %v7041 = vlaneseq
        %v7042 = vshrl.u32 %v7041, 7
        %v7043 = vsub.s32 %v7040, %v7042
        %v7044 = vrot.slane %v7030, %v7043
        %v7045 = vcombine.low %v7012, %v7028
        %v7046 = vcombine.high %v7012, %v7028
        %v7048 = vunpack.c.l.s4 1934713408
        %v7049 = vunpack.c.0.s8 %v7048
        %v7050 = vlaneseq
        %v7051 = vshrl.u32 %v7050, 7
        %v7052 = vsub.s32 %v7049, %v7051
        %v7053 = vrot.slane %v7045, %v7052
        %v7055 = vunpack.c.l.s4 1934713408
        %v7056 = vunpack.c.0.s8 %v7055
        %v7057 = vlaneseq
        %v7058 = vshrl.u32 %v7057, 7
        %v7059 = vsub.s32 %v7056, %v7058
        %v7060 = vrot.slane %v7046, %v7059
        %v7061 = vcombine.high %v7037, 0.0
        %v7062 = vcombine.high %v7044, 0.0
        %v7063 = vcombine.high %v7053, 0.0
        %v7064 = vcombine.high %v7060, 0.0
        %v7065 = vcombine.low %v6969, %v6976
        %v7067 = vunpack.c.l.s4 1983009808
        %v7068 = vunpack.c.0.s8 %v7067
        %v7069 = vlaneseq
        %v7070 = vshrl.u32 %v7069, 7
        %v7071 = vsub.s32 %v7068, %v7070
        %v7072 = vrot.slane %v7065, %v7071
        %v7073 = vcombine.low %v6993, %v6994
        %v7075 = vunpack.c.l.s4 1983009808
        %v7076 = vunpack.c.0.s8 %v7075
        %v7077 = vlaneseq
        %v7078 = vshrl.u32 %v7077, 7
        %v7079 = vsub.s32 %v7076, %v7078
        %v7080 = vrot.slane %v7073, %v7079
        %v7081 = vcombine.low %v6985, %v6992
        %v7083 = vunpack.c.l.s4 1983009808
        %v7084 = vunpack.c.0.s8 %v7083
        %v7085 = vlaneseq
        %v7086 = vshrl.u32 %v7085, 7
        %v7087 = vsub.s32 %v7084, %v7086
        %v7088 = vrot.slane %v7081, %v7087
        %v7089 = vcombine.low %v6995, %v6996
        %v7091 = vunpack.c.l.s4 1983009808
        %v7092 = vunpack.c.0.s8 %v7091
        %v7093 = vlaneseq
        %v7094 = vshrl.u32 %v7093, 7
        %v7095 = vsub.s32 %v7092, %v7094
        %v7096 = vrot.slane %v7089, %v7095
        %v7097 = vcombine.low %v7072, %v7080
        %v7098 = vcombine.high %v7072, %v7080
        %v7100 = vunpack.c.l.s4 1934713408
        %v7101 = vunpack.c.0.s8 %v7100
        %v7102 = vlaneseq
        %v7103 = vshrl.u32 %v7102, 7
        %v7104 = vsub.s32 %v7101, %v7103
        %v7105 = vrot.slane %v7097, %v7104
        %v7107 = vunpack.c.l.s4 1934713408
        %v7108 = vunpack.c.0.s8 %v7107
        %v7109 = vlaneseq
        %v7110 = vshrl.u32 %v7109, 7
        %v7111 = vsub.s32 %v7108, %v7110
        %v7112 = vrot.slane %v7098, %v7111
        %v7113 = vcombine.low %v7088, %v7096
        %v7114 = vcombine.high %v7088, %v7096
        %v7116 = vunpack.c.l.s4 1934713408
        %v7117 = vunpack.c.0.s8 %v7116
        %v7118 = vlaneseq
        %v7119 = vshrl.u32 %v7118, 7
        %v7120 = vsub.s32 %v7117, %v7119
        %v7121 = vrot.slane %v7113, %v7120
        %v7123 = vunpack.c.l.s4 1934713408
        %v7124 = vunpack.c.0.s8 %v7123
        %v7125 = vlaneseq
        %v7126 = vshrl.u32 %v7125, 7
        %v7127 = vsub.s32 %v7124, %v7126
        %v7128 = vrot.slane %v7114, %v7127
        %v7129 = vcombine.low %v7105, %v7121
        %v7130 = vcombine.high %v7105, %v7121
        %v7131 = vcombine.low %v7112, %v7128
        %v7132 = vcombine.high %v7112, %v7128
        %v7133 = vcombine.low %v7037, %v7044
        %v7135 = vunpack.c.l.s4 1983009808
        %v7136 = vunpack.c.0.s8 %v7135
        %v7137 = vlaneseq
        %v7138 = vshrl.u32 %v7137, 7
        %v7139 = vsub.s32 %v7136, %v7138
        %v7140 = vrot.slane %v7133, %v7139
        %v7141 = vcombine.low %v7061, %v7062
        %v7143 = vunpack.c.l.s4 1983009808
        %v7144 = vunpack.c.0.s8 %v7143
        %v7145 = vlaneseq
        %v7146 = vshrl.u32 %v7145, 7
        %v7147 = vsub.s32 %v7144, %v7146
        %v7148 = vrot.slane %v7141, %v7147
        %v7149 = vcombine.low %v7053, %v7060
        %v7151 = vunpack.c.l.s4 1983009808
        %v7152 = vunpack.c.0.s8 %v7151
        %v7153 = vlaneseq
        %v7154 = vshrl.u32 %v7153, 7
        %v7155 = vsub.s32 %v7152, %v7154
        %v7156 = vrot.slane %v7149, %v7155
        %v7157 = vcombine.low %v7063, %v7064
        %v7159 = vunpack.c.l.s4 1983009808
        %v7160 = vunpack.c.0.s8 %v7159
        %v7161 = vlaneseq
        %v7162 = vshrl.u32 %v7161, 7
        %v7163 = vsub.s32 %v7160, %v7162
        %v7164 = vrot.slane %v7157, %v7163
        %v7165 = vcombine.low %v7140, %v7148
        %v7166 = vcombine.high %v7140, %v7148
        %v7168 = vunpack.c.l.s4 1934713408
        %v7169 = vunpack.c.0.s8 %v7168
        %v7170 = vlaneseq
        %v7171 = vshrl.u32 %v7170, 7
        %v7172 = vsub.s32 %v7169, %v7171
        %v7173 = vrot.slane %v7165, %v7172
        %v7175 = vunpack.c.l.s4 1934713408
        %v7176 = vunpack.c.0.s8 %v7175
        %v7177 = vlaneseq
        %v7178 = vshrl.u32 %v7177, 7
        %v7179 = vsub.s32 %v7176, %v7178
        %v7180 = vrot.slane %v7166, %v7179
        %v7181 = vcombine.low %v7156, %v7164
        %v7182 = vcombine.high %v7156, %v7164
        %v7184 = vunpack.c.l.s4 1934713408
        %v7185 = vunpack.c.0.s8 %v7184
        %v7186 = vlaneseq
        %v7187 = vshrl.u32 %v7186, 7
        %v7188 = vsub.s32 %v7185, %v7187
        %v7189 = vrot.slane %v7181, %v7188
        %v7191 = vunpack.c.l.s4 1934713408
        %v7192 = vunpack.c.0.s8 %v7191
        %v7193 = vlaneseq
        %v7194 = vshrl.u32 %v7193, 7
        %v7195 = vsub.s32 %v7192, %v7194
        %v7196 = vrot.slane %v7182, %v7195
        %v7197 = vcombine.low %v7173, %v7189
        %v7198 = vcombine.high %v7173, %v7189
        %v7199 = vcombine.low %v7180, %v7196
        %v7200 = vcombine.high %v7180, %v7196
        %v7201 = vpack.c.bf16 %v6613, %v6545
        %v7202 = vpack.c.bf16 %v6614, %v6546
        %v7203 = vpack.c.bf16 %v6615, %v6547
        %v7204 = vpack.c.bf16 %v6616, %v6548
        %v7205 = vpack.c.bf16 %v6905, %v6837
        %v7206 = vpack.c.bf16 %v6906, %v6838
        %v7207 = vpack.c.bf16 %v6907, %v6839
        %v7208 = vpack.c.bf16 %v6908, %v6840
        %v7210 = vsel %vm1899, %v7201, 0
        %v7213 = vsel %vm1899, %v7205, 0
        %7215 = vmatprep.subr.bf16.mxu0 0
        %7216 = vmatpush1.bf16.xpose.msra.mxu0 %v7213
        %7217 = vmatprep.subr.bf16.mxu0 0
        %7218 = vmatpush1.bf16.xpose.msra.mxu0 0
        %7219 = vmatprep.subr.bf16.mxu0 0
        %7220 = vmatpush1.bf16.xpose.msra.mxu0 0
        %7221 = vmatprep.subr.bf16.mxu0 0
        %7222 = vmatpush1.bf16.xpose.msra.mxu0 0
        %7223 = vmatprep.subr.bf16.mxu0 0
        %7224 = vmatpush1.bf16.xpose.msra.mxu0 0
        %7225 = vmatprep.subr.bf16.mxu0 0
        %7226 = vmatpush1.bf16.xpose.msra.mxu0 0
        %7227 = vmatprep.subr.bf16.mxu0 0
        %7228 = vmatpush1.bf16.xpose.msra.mxu0 0
        %7229 = vmatprep.subr.bf16.mxu0 0
        %7230 = vmatpush1.bf16.xpose.msra.mxu0 0
        %7231 = vmatprep.subr.bf16.mxu0 0
        %7232 = vmatpush1.bf16.xpose.msra.mxu0 0
        %7233 = vmatprep.subr.bf16.mxu0 0
        %7234 = vmatpush1.bf16.xpose.msra.mxu0 0
        %7235 = vmatprep.subr.bf16.mxu0 0
        %7236 = vmatpush1.bf16.xpose.msra.mxu0 0
        %7237 = vmatprep.subr.bf16.mxu0 0
        %7238 = vmatpush1.bf16.xpose.msra.mxu0 0
        %7239 = vmatprep.subr.bf16.mxu0 0
        %7240 = vmatpush1.bf16.xpose.msra.mxu0 0
        %7241 = vmatprep.subr.bf16.mxu0 0
        %7242 = vmatpush1.bf16.xpose.msra.mxu0 0
        %7243 = vmatprep.subr.bf16.mxu0 0
        %7244 = vmatpush1.bf16.xpose.msra.mxu0 0
        %7245 = vmatprep.subr.bf16.mxu0 0
        %7246 = vmatpush1.bf16.xpose.msra.mxu0 0
        %7247 = vmatprep.mubr.bf16.mxu0 0
        %7248 = vmatmul.mubr.bf16.gmra.mrb[0].mxu0 %v7210
        %v7249 = vpop.f32.mrb[0].mxu0
        %v7250 = vadd.f32 0.0, %v7249
        %v7251 = vpop.f32.mrb[0].mxu0
        %v7252 = vpop.f32.mrb[0].mxu0
        %v7253 = vadd.f32 0.0, %v7252
        %v7254 = vpop.f32.mrb[0].mxu0
        %7255 = vdwg.mxu0
        %v7257 = vsel %vm1899, %v7202, 0
        %v7260 = vsel %vm1899, %v7206, 0
        %7262 = vmatprep.subr.bf16.mxu0 0
        %7263 = vmatpush1.bf16.xpose.msra.mxu0 %v7260
        %7264 = vmatprep.subr.bf16.mxu0 0
        %7265 = vmatpush1.bf16.xpose.msra.mxu0 0
        %7266 = vmatprep.subr.bf16.mxu0 0
        %7267 = vmatpush1.bf16.xpose.msra.mxu0 0
        %7268 = vmatprep.subr.bf16.mxu0 0
        %7269 = vmatpush1.bf16.xpose.msra.mxu0 0
        %7270 = vmatprep.subr.bf16.mxu0 0
        %7271 = vmatpush1.bf16.xpose.msra.mxu0 0
        %7272 = vmatprep.subr.bf16.mxu0 0
        %7273 = vmatpush1.bf16.xpose.msra.mxu0 0
        %7274 = vmatprep.subr.bf16.mxu0 0
        %7275 = vmatpush1.bf16.xpose.msra.mxu0 0
        %7276 = vmatprep.subr.bf16.mxu0 0
        %7277 = vmatpush1.bf16.xpose.msra.mxu0 0
        %7278 = vmatprep.subr.bf16.mxu0 0
        %7279 = vmatpush1.bf16.xpose.msra.mxu0 0
        %7280 = vmatprep.subr.bf16.mxu0 0
        %7281 = vmatpush1.bf16.xpose.msra.mxu0 0
        %7282 = vmatprep.subr.bf16.mxu0 0
        %7283 = vmatpush1.bf16.xpose.msra.mxu0 0
        %7284 = vmatprep.subr.bf16.mxu0 0
        %7285 = vmatpush1.bf16.xpose.msra.mxu0 0
        %7286 = vmatprep.subr.bf16.mxu0 0
        %7287 = vmatpush1.bf16.xpose.msra.mxu0 0
        %7288 = vmatprep.subr.bf16.mxu0 0
        %7289 = vmatpush1.bf16.xpose.msra.mxu0 0
        %7290 = vmatprep.subr.bf16.mxu0 0
        %7291 = vmatpush1.bf16.xpose.msra.mxu0 0
        %7292 = vmatprep.subr.bf16.mxu0 0
        %7293 = vmatpush1.bf16.xpose.msra.mxu0 0
        %7294 = vmatprep.mubr.bf16.mxu0 0
        %7295 = vmatmul.mubr.bf16.gmra.mrb[0].mxu0 %v7257
        %v7296 = vpop.f32.mrb[0].mxu0
        %v7297 = vadd.f32 0.0, %v7296
        %v7298 = vpop.f32.mrb[0].mxu0
        %v7299 = vpop.f32.mrb[0].mxu0
        %v7300 = vadd.f32 0.0, %v7299
        %v7301 = vpop.f32.mrb[0].mxu0
        %7302 = vdwg.mxu0
        %v7304 = vsel %vm1899, %v7203, 0
        %v7307 = vsel %vm1899, %v7207, 0
        %7309 = vmatprep.subr.bf16.mxu0 0
        %7310 = vmatpush1.bf16.xpose.msra.mxu0 %v7307
        %7311 = vmatprep.subr.bf16.mxu0 0
        %7312 = vmatpush1.bf16.xpose.msra.mxu0 0
        %7313 = vmatprep.subr.bf16.mxu0 0
        %7314 = vmatpush1.bf16.xpose.msra.mxu0 0
        %7315 = vmatprep.subr.bf16.mxu0 0
        %7316 = vmatpush1.bf16.xpose.msra.mxu0 0
        %7317 = vmatprep.subr.bf16.mxu0 0
        %7318 = vmatpush1.bf16.xpose.msra.mxu0 0
        %7319 = vmatprep.subr.bf16.mxu0 0
        %7320 = vmatpush1.bf16.xpose.msra.mxu0 0
        %7321 = vmatprep.subr.bf16.mxu0 0
        %7322 = vmatpush1.bf16.xpose.msra.mxu0 0
        %7323 = vmatprep.subr.bf16.mxu0 0
        %7324 = vmatpush1.bf16.xpose.msra.mxu0 0
        %7325 = vmatprep.subr.bf16.mxu0 0
        %7326 = vmatpush1.bf16.xpose.msra.mxu0 0
        %7327 = vmatprep.subr.bf16.mxu0 0
        %7328 = vmatpush1.bf16.xpose.msra.mxu0 0
        %7329 = vmatprep.subr.bf16.mxu0 0
        %7330 = vmatpush1.bf16.xpose.msra.mxu0 0
        %7331 = vmatprep.subr.bf16.mxu0 0
        %7332 = vmatpush1.bf16.xpose.msra.mxu0 0
        %7333 = vmatprep.subr.bf16.mxu0 0
        %7334 = vmatpush1.bf16.xpose.msra.mxu0 0
        %7335 = vmatprep.subr.bf16.mxu0 0
        %7336 = vmatpush1.bf16.xpose.msra.mxu0 0
        %7337 = vmatprep.subr.bf16.mxu0 0
        %7338 = vmatpush1.bf16.xpose.msra.mxu0 0
        %7339 = vmatprep.subr.bf16.mxu0 0
        %7340 = vmatpush1.bf16.xpose.msra.mxu0 0
        %7341 = vmatprep.mubr.bf16.mxu0 0
        %7342 = vmatmul.mubr.bf16.gmra.mrb[0].mxu0 %v7304
        %v7343 = vpop.f32.mrb[0].mxu0
        %v7344 = vadd.f32 0.0, %v7343
        %v7345 = vpop.f32.mrb[0].mxu0
        %v7346 = vpop.f32.mrb[0].mxu0
        %v7347 = vadd.f32 0.0, %v7346
        %v7348 = vpop.f32.mrb[0].mxu0
        %7349 = vdwg.mxu0
        %v7351 = vsel %vm1899, %v7204, 0
        %v7354 = vsel %vm1899, %v7208, 0
        %7356 = vmatprep.subr.bf16.mxu0 0
        %7357 = vmatpush1.bf16.xpose.msra.mxu0 %v7354
        %7358 = vmatprep.subr.bf16.mxu0 0
        %7359 = vmatpush1.bf16.xpose.msra.mxu0 0
        %7360 = vmatprep.subr.bf16.mxu0 0
        %7361 = vmatpush1.bf16.xpose.msra.mxu0 0
        %7362 = vmatprep.subr.bf16.mxu0 0
        %7363 = vmatpush1.bf16.xpose.msra.mxu0 0
        %7364 = vmatprep.subr.bf16.mxu0 0
        %7365 = vmatpush1.bf16.xpose.msra.mxu0 0
        %7366 = vmatprep.subr.bf16.mxu0 0
        %7367 = vmatpush1.bf16.xpose.msra.mxu0 0
        %7368 = vmatprep.subr.bf16.mxu0 0
        %7369 = vmatpush1.bf16.xpose.msra.mxu0 0
        %7370 = vmatprep.subr.bf16.mxu0 0
        %7371 = vmatpush1.bf16.xpose.msra.mxu0 0
        %7372 = vmatprep.subr.bf16.mxu0 0
        %7373 = vmatpush1.bf16.xpose.msra.mxu0 0
        %7374 = vmatprep.subr.bf16.mxu0 0
        %7375 = vmatpush1.bf16.xpose.msra.mxu0 0
        %7376 = vmatprep.subr.bf16.mxu0 0
        %7377 = vmatpush1.bf16.xpose.msra.mxu0 0
        %7378 = vmatprep.subr.bf16.mxu0 0
        %7379 = vmatpush1.bf16.xpose.msra.mxu0 0
        %7380 = vmatprep.subr.bf16.mxu0 0
        %7381 = vmatpush1.bf16.xpose.msra.mxu0 0
        %7382 = vmatprep.subr.bf16.mxu0 0
        %7383 = vmatpush1.bf16.xpose.msra.mxu0 0
        %7384 = vmatprep.subr.bf16.mxu0 0
        %7385 = vmatpush1.bf16.xpose.msra.mxu0 0
        %7386 = vmatprep.subr.bf16.mxu0 0
        %7387 = vmatpush1.bf16.xpose.msra.mxu0 0
        %7388 = vmatprep.mubr.bf16.mxu0 0
        %7389 = vmatmul.mubr.bf16.gmra.mrb[0].mxu0 %v7351
        %v7390 = vpop.f32.mrb[0].mxu0
        %v7391 = vadd.f32 0.0, %v7390
        %v7392 = vpop.f32.mrb[0].mxu0
        %v7393 = vpop.f32.mrb[0].mxu0
        %v7394 = vadd.f32 0.0, %v7393
        %v7395 = vpop.f32.mrb[0].mxu0
        %7396 = vdwg.mxu0
        %v7397 = vsel %vm2090, %v7250, -1e+30
        %v7398 = vsel %vm2091, %v7253, -1e+30
        %v7399 = vsel %vm2090, %v7297, -1e+30
        %v7400 = vsel %vm2091, %v7300, -1e+30
        %v7401 = vsel %vm2090, %v7344, -1e+30
        %v7402 = vsel %vm2091, %v7347, -1e+30
        %v7403 = vsel %vm2090, %v7391, -1e+30
        %v7404 = vsel %vm2091, %v7394, -1e+30
        %v7405 = vsel %vm2100, %v7397, -inf
        %7406 = vmax.xlane.f32.xlu0 %v7405
        %v7407 = vpop.xlane.xlu0 %7406
        %v7408 = vsel %vm2100, %v7398, -inf
        %7409 = vmax.xlane.f32.xlu0 %v7408
        %v7410 = vpop.xlane.xlu0 %7409
        %v7411 = vsel %vm2100, %v7399, -inf
        %7412 = vmax.xlane.f32.xlu0 %v7411
        %v7413 = vpop.xlane.xlu0 %7412
        %v7414 = vsel %vm2100, %v7400, -inf
        %7415 = vmax.xlane.f32.xlu0 %v7414
        %v7416 = vpop.xlane.xlu0 %7415
        %v7417 = vsel %vm2100, %v7401, -inf
        %7418 = vmax.xlane.f32.xlu0 %v7417
        %v7419 = vpop.xlane.xlu0 %7418
        %v7420 = vsel %vm2100, %v7402, -inf
        %7421 = vmax.xlane.f32.xlu0 %v7420
        %v7422 = vpop.xlane.xlu0 %7421
        %v7423 = vsel %vm2100, %v7403, -inf
        %7424 = vmax.xlane.f32.xlu0 %v7423
        %v7425 = vpop.xlane.xlu0 %7424
        %v7426 = vsel %vm2100, %v7404, -inf
        %7427 = vmax.xlane.f32.xlu0 %v7426
        %v7428 = vpop.xlane.xlu0 %7427
        %v7429 = vsub.f32 %v7397, %v7407
        %v7430 = vsub.f32 %v7398, %v7410
        %v7431 = vsub.f32 %v7399, %v7413
        %v7432 = vsub.f32 %v7400, %v7416
        %v7433 = vsub.f32 %v7401, %v7419
        %v7434 = vsub.f32 %v7402, %v7422
        %v7435 = vsub.f32 %v7403, %v7425
        %v7436 = vsub.f32 %v7404, %v7428
        %v7437 = vmul.f32 %v7429, 1.442695
        %v7438 = vpow.pop %v7437
        %v7439 = vmul.f32 %v7430, 1.442695
        %v7440 = vpow.pop %v7439
        %v7441 = vmul.f32 %v7431, 1.442695
        %v7442 = vpow.pop %v7441
        %v7443 = vmul.f32 %v7432, 1.442695
        %v7444 = vpow.pop %v7443
        %v7445 = vmul.f32 %v7433, 1.442695
        %v7446 = vpow.pop %v7445
        %v7447 = vmul.f32 %v7434, 1.442695
        %v7448 = vpow.pop %v7447
        %v7449 = vmul.f32 %v7435, 1.442695
        %v7450 = vpow.pop %v7449
        %v7451 = vmul.f32 %v7436, 1.442695
        %v7452 = vpow.pop %v7451
        %v7453 = vsel %vm2100, %v7438, 0.0
        %7454 = vadd.xlane.f32.xlu0 %v7453
        %v7455 = vpop.xlane.xlu0 %7454
        %v7456 = vsel %vm2100, %v7440, 0.0
        %7457 = vadd.xlane.f32.xlu0 %v7456
        %v7458 = vpop.xlane.xlu0 %7457
        %v7459 = vsel %vm2100, %v7442, 0.0
        %7460 = vadd.xlane.f32.xlu0 %v7459
        %v7461 = vpop.xlane.xlu0 %7460
        %v7462 = vsel %vm2100, %v7444, 0.0
        %7463 = vadd.xlane.f32.xlu0 %v7462
        %v7464 = vpop.xlane.xlu0 %7463
        %v7465 = vsel %vm2100, %v7446, 0.0
        %7466 = vadd.xlane.f32.xlu0 %v7465
        %v7467 = vpop.xlane.xlu0 %7466
        %v7468 = vsel %vm2100, %v7448, 0.0
        %7469 = vadd.xlane.f32.xlu0 %v7468
        %v7470 = vpop.xlane.xlu0 %7469
        %v7471 = vsel %vm2100, %v7450, 0.0
        %7472 = vadd.xlane.f32.xlu0 %v7471
        %v7473 = vpop.xlane.xlu0 %7472
        %v7474 = vsel %vm2100, %v7452, 0.0
        %7475 = vadd.xlane.f32.xlu0 %v7474
        %v7476 = vpop.xlane.xlu0 %7475
        %v7477 = vrcp.pop %v7455
        %v7478 = vrcp.pop %v7458
        %v7479 = vrcp.pop %v7461
        %v7480 = vrcp.pop %v7464
        %v7481 = vrcp.pop %v7467
        %v7482 = vrcp.pop %v7470
        %v7483 = vrcp.pop %v7473
        %v7484 = vrcp.pop %v7476
        %v7485 = vmul.f32 %v7438, %v7477
        %v7486 = vmul.f32 %v7440, %v7478
        %v7487 = vmul.f32 %v7442, %v7479
        %v7488 = vmul.f32 %v7444, %v7480
        %v7489 = vmul.f32 %v7446, %v7481
        %v7490 = vmul.f32 %v7448, %v7482
        %v7491 = vmul.f32 %v7450, %v7483
        %v7492 = vmul.f32 %v7452, %v7484
        %v7493 = vpack.c.bf16 %v7486, %v7485
        %v7494 = vpack.c.bf16 %v7488, %v7487
        %v7495 = vpack.c.bf16 %v7490, %v7489
        %v7496 = vpack.c.bf16 %v7492, %v7491
        %v7497 = vpack.c.bf16 %v7197, %v7129
        %v7498 = vpack.c.bf16 %v7198, %v7130
        %v7499 = vpack.c.bf16 %v7199, %v7131
        %v7500 = vpack.c.bf16 %v7200, %v7132
        %v7502 = vsel %vm2100, %v7493, 0
        %7504 = vmatprep.subr.bf16.mxu0 0
        %7505 = vmatpush1.bf16.msra.mxu0 %v7497
        %7506 = vmatprep.subr.bf16.mxu0 0
        %7507 = vmatpush1.bf16.msra.mxu0 0
        %7508 = vmatprep.subr.bf16.mxu0 0
        %7509 = vmatpush1.bf16.msra.mxu0 0
        %7510 = vmatprep.subr.bf16.mxu0 0
        %7511 = vmatpush1.bf16.msra.mxu0 0
        %7512 = vmatprep.subr.bf16.mxu0 0
        %7513 = vmatpush1.bf16.msra.mxu0 0
        %7514 = vmatprep.subr.bf16.mxu0 0
        %7515 = vmatpush1.bf16.msra.mxu0 0
        %7516 = vmatprep.subr.bf16.mxu0 0
        %7517 = vmatpush1.bf16.msra.mxu0 0
        %7518 = vmatprep.subr.bf16.mxu0 0
        %7519 = vmatpush1.bf16.msra.mxu0 0
        %7520 = vmatprep.subr.bf16.mxu0 0
        %7521 = vmatpush1.bf16.msra.mxu0 0
        %7522 = vmatprep.subr.bf16.mxu0 0
        %7523 = vmatpush1.bf16.msra.mxu0 0
        %7524 = vmatprep.subr.bf16.mxu0 0
        %7525 = vmatpush1.bf16.msra.mxu0 0
        %7526 = vmatprep.subr.bf16.mxu0 0
        %7527 = vmatpush1.bf16.msra.mxu0 0
        %7528 = vmatprep.subr.bf16.mxu0 0
        %7529 = vmatpush1.bf16.msra.mxu0 0
        %7530 = vmatprep.subr.bf16.mxu0 0
        %7531 = vmatpush1.bf16.msra.mxu0 0
        %7532 = vmatprep.subr.bf16.mxu0 0
        %7533 = vmatpush1.bf16.msra.mxu0 0
        %7534 = vmatprep.subr.bf16.mxu0 0
        %7535 = vmatpush1.bf16.msra.mxu0 0
        %7536 = vmatprep.mubr.bf16.mxu0 0
        %7537 = vmatmul.mubr.bf16.gmra.mrb[0].mxu0 %v7502
        %v7538 = vpop.f32.mrb[0].mxu0
        %v7539 = vadd.f32 0.0, %v7538
        %v7540 = vpop.f32.mrb[0].mxu0
        %v7541 = vpop.f32.mrb[0].mxu0
        %v7542 = vadd.f32 0.0, %v7541
        %v7543 = vpop.f32.mrb[0].mxu0
        %7544 = vdwg.mxu0
        %v7546 = vsel %vm2100, %v7494, 0
        %7548 = vmatprep.subr.bf16.mxu0 0
        %7549 = vmatpush1.bf16.msra.mxu0 %v7498
        %7550 = vmatprep.subr.bf16.mxu0 0
        %7551 = vmatpush1.bf16.msra.mxu0 0
        %7552 = vmatprep.subr.bf16.mxu0 0
        %7553 = vmatpush1.bf16.msra.mxu0 0
        %7554 = vmatprep.subr.bf16.mxu0 0
        %7555 = vmatpush1.bf16.msra.mxu0 0
        %7556 = vmatprep.subr.bf16.mxu0 0
        %7557 = vmatpush1.bf16.msra.mxu0 0
        %7558 = vmatprep.subr.bf16.mxu0 0
        %7559 = vmatpush1.bf16.msra.mxu0 0
        %7560 = vmatprep.subr.bf16.mxu0 0
        %7561 = vmatpush1.bf16.msra.mxu0 0
        %7562 = vmatprep.subr.bf16.mxu0 0
        %7563 = vmatpush1.bf16.msra.mxu0 0
        %7564 = vmatprep.subr.bf16.mxu0 0
        %7565 = vmatpush1.bf16.msra.mxu0 0
        %7566 = vmatprep.subr.bf16.mxu0 0
        %7567 = vmatpush1.bf16.msra.mxu0 0
        %7568 = vmatprep.subr.bf16.mxu0 0
        %7569 = vmatpush1.bf16.msra.mxu0 0
        %7570 = vmatprep.subr.bf16.mxu0 0
        %7571 = vmatpush1.bf16.msra.mxu0 0
        %7572 = vmatprep.subr.bf16.mxu0 0
        %7573 = vmatpush1.bf16.msra.mxu0 0
        %7574 = vmatprep.subr.bf16.mxu0 0
        %7575 = vmatpush1.bf16.msra.mxu0 0
        %7576 = vmatprep.subr.bf16.mxu0 0
        %7577 = vmatpush1.bf16.msra.mxu0 0
        %7578 = vmatprep.subr.bf16.mxu0 0
        %7579 = vmatpush1.bf16.msra.mxu0 0
        %7580 = vmatprep.mubr.bf16.mxu0 0
        %7581 = vmatmul.mubr.bf16.gmra.mrb[0].mxu0 %v7546
        %v7582 = vpop.f32.mrb[0].mxu0
        %v7583 = vadd.f32 0.0, %v7582
        %v7584 = vpop.f32.mrb[0].mxu0
        %v7585 = vpop.f32.mrb[0].mxu0
        %v7586 = vadd.f32 0.0, %v7585
        %v7587 = vpop.f32.mrb[0].mxu0
        %7588 = vdwg.mxu0
        %v7590 = vsel %vm2100, %v7495, 0
        %7592 = vmatprep.subr.bf16.mxu0 0
        %7593 = vmatpush1.bf16.msra.mxu0 %v7499
        %7594 = vmatprep.subr.bf16.mxu0 0
        %7595 = vmatpush1.bf16.msra.mxu0 0
        %7596 = vmatprep.subr.bf16.mxu0 0
        %7597 = vmatpush1.bf16.msra.mxu0 0
        %7598 = vmatprep.subr.bf16.mxu0 0
        %7599 = vmatpush1.bf16.msra.mxu0 0
        %7600 = vmatprep.subr.bf16.mxu0 0
        %7601 = vmatpush1.bf16.msra.mxu0 0
        %7602 = vmatprep.subr.bf16.mxu0 0
        %7603 = vmatpush1.bf16.msra.mxu0 0
        %7604 = vmatprep.subr.bf16.mxu0 0
        %7605 = vmatpush1.bf16.msra.mxu0 0
        %7606 = vmatprep.subr.bf16.mxu0 0
        %7607 = vmatpush1.bf16.msra.mxu0 0
        %7608 = vmatprep.subr.bf16.mxu0 0
        %7609 = vmatpush1.bf16.msra.mxu0 0
        %7610 = vmatprep.subr.bf16.mxu0 0
        %7611 = vmatpush1.bf16.msra.mxu0 0
        %7612 = vmatprep.subr.bf16.mxu0 0
        %7613 = vmatpush1.bf16.msra.mxu0 0
        %7614 = vmatprep.subr.bf16.mxu0 0
        %7615 = vmatpush1.bf16.msra.mxu0 0
        %7616 = vmatprep.subr.bf16.mxu0 0
        %7617 = vmatpush1.bf16.msra.mxu0 0
        %7618 = vmatprep.subr.bf16.mxu0 0
        %7619 = vmatpush1.bf16.msra.mxu0 0
        %7620 = vmatprep.subr.bf16.mxu0 0
        %7621 = vmatpush1.bf16.msra.mxu0 0
        %7622 = vmatprep.subr.bf16.mxu0 0
        %7623 = vmatpush1.bf16.msra.mxu0 0
        %7624 = vmatprep.mubr.bf16.mxu0 0
        %7625 = vmatmul.mubr.bf16.gmra.mrb[0].mxu0 %v7590
        %v7626 = vpop.f32.mrb[0].mxu0
        %v7627 = vadd.f32 0.0, %v7626
        %v7628 = vpop.f32.mrb[0].mxu0
        %v7629 = vpop.f32.mrb[0].mxu0
        %v7630 = vadd.f32 0.0, %v7629
        %v7631 = vpop.f32.mrb[0].mxu0
        %7632 = vdwg.mxu0
        %v7634 = vsel %vm2100, %v7496, 0
        %7636 = vmatprep.subr.bf16.mxu0 0
        %7637 = vmatpush1.bf16.msra.mxu0 %v7500
        %7638 = vmatprep.subr.bf16.mxu0 0
        %7639 = vmatpush1.bf16.msra.mxu0 0
        %7640 = vmatprep.subr.bf16.mxu0 0
        %7641 = vmatpush1.bf16.msra.mxu0 0
        %7642 = vmatprep.subr.bf16.mxu0 0
        %7643 = vmatpush1.bf16.msra.mxu0 0
        %7644 = vmatprep.subr.bf16.mxu0 0
        %7645 = vmatpush1.bf16.msra.mxu0 0
        %7646 = vmatprep.subr.bf16.mxu0 0
        %7647 = vmatpush1.bf16.msra.mxu0 0
        %7648 = vmatprep.subr.bf16.mxu0 0
        %7649 = vmatpush1.bf16.msra.mxu0 0
        %7650 = vmatprep.subr.bf16.mxu0 0
        %7651 = vmatpush1.bf16.msra.mxu0 0
        %7652 = vmatprep.subr.bf16.mxu0 0
        %7653 = vmatpush1.bf16.msra.mxu0 0
        %7654 = vmatprep.subr.bf16.mxu0 0
        %7655 = vmatpush1.bf16.msra.mxu0 0
        %7656 = vmatprep.subr.bf16.mxu0 0
        %7657 = vmatpush1.bf16.msra.mxu0 0
        %7658 = vmatprep.subr.bf16.mxu0 0
        %7659 = vmatpush1.bf16.msra.mxu0 0
        %7660 = vmatprep.subr.bf16.mxu0 0
        %7661 = vmatpush1.bf16.msra.mxu0 0
        %7662 = vmatprep.subr.bf16.mxu0 0
        %7663 = vmatpush1.bf16.msra.mxu0 0
        %7664 = vmatprep.subr.bf16.mxu0 0
        %7665 = vmatpush1.bf16.msra.mxu0 0
        %7666 = vmatprep.subr.bf16.mxu0 0
        %7667 = vmatpush1.bf16.msra.mxu0 0
        %7668 = vmatprep.mubr.bf16.mxu0 0
        %7669 = vmatmul.mubr.bf16.gmra.mrb[0].mxu0 %v7634
        %v7670 = vpop.f32.mrb[0].mxu0
        %v7671 = vadd.f32 0.0, %v7670
        %v7672 = vpop.f32.mrb[0].mxu0
        %v7673 = vpop.f32.mrb[0].mxu0
        %v7674 = vadd.f32 0.0, %v7673
        %v7675 = vpop.f32.mrb[0].mxu0
        %7676 = vdwg.mxu0
        %v7677 = vcombine.low %v7539, %v7627
        %v7678 = vcombine.high %v7539, %v7627
        %v7680 = vunpack.c.l.s4 1983009808
        %v7681 = vunpack.c.0.s8 %v7680
        %v7682 = vlaneseq
        %v7683 = vshrl.u32 %v7682, 7
        %v7684 = vsub.s32 %v7681, %v7683
        %v7685 = vrot.slane %v7677, %v7684
        %v7687 = vunpack.c.l.s4 1983009808
        %v7688 = vunpack.c.0.s8 %v7687
        %v7689 = vlaneseq
        %v7690 = vshrl.u32 %v7689, 7
        %v7691 = vsub.s32 %v7688, %v7690
        %v7692 = vrot.slane %v7678, %v7691
        %v7693 = vcombine.low %v7583, %v7671
        %v7694 = vcombine.high %v7583, %v7671
        %v7696 = vunpack.c.l.s4 1983009808
        %v7697 = vunpack.c.0.s8 %v7696
        %v7698 = vlaneseq
        %v7699 = vshrl.u32 %v7698, 7
        %v7700 = vsub.s32 %v7697, %v7699
        %v7701 = vrot.slane %v7693, %v7700
        %v7703 = vunpack.c.l.s4 1983009808
        %v7704 = vunpack.c.0.s8 %v7703
        %v7705 = vlaneseq
        %v7706 = vshrl.u32 %v7705, 7
        %v7707 = vsub.s32 %v7704, %v7706
        %v7708 = vrot.slane %v7694, %v7707
        %v7709 = vcombine.low %v7685, %v7701
        %v7710 = vcombine.high %v7685, %v7701
        %v7712 = vunpack.c.l.s4 1934713408
        %v7713 = vunpack.c.0.s8 %v7712
        %v7714 = vlaneseq
        %v7715 = vshrl.u32 %v7714, 7
        %v7716 = vsub.s32 %v7713, %v7715
        %v7717 = vrot.slane %v7709, %v7716
        %v7719 = vunpack.c.l.s4 1934713408
        %v7720 = vunpack.c.0.s8 %v7719
        %v7721 = vlaneseq
        %v7722 = vshrl.u32 %v7721, 7
        %v7723 = vsub.s32 %v7720, %v7722
        %v7724 = vrot.slane %v7710, %v7723
        %v7725 = vcombine.low %v7692, %v7708
        %v7726 = vcombine.high %v7692, %v7708
        %v7728 = vunpack.c.l.s4 1934713408
        %v7729 = vunpack.c.0.s8 %v7728
        %v7730 = vlaneseq
        %v7731 = vshrl.u32 %v7730, 7
        %v7732 = vsub.s32 %v7729, %v7731
        %v7733 = vrot.slane %v7725, %v7732
        %v7735 = vunpack.c.l.s4 1934713408
        %v7736 = vunpack.c.0.s8 %v7735
        %v7737 = vlaneseq
        %v7738 = vshrl.u32 %v7737, 7
        %v7739 = vsub.s32 %v7736, %v7738
        %v7740 = vrot.slane %v7726, %v7739
        %v7741 = vcombine.high %v7717, 0.0
        %v7742 = vcombine.high %v7724, 0.0
        %v7743 = vcombine.high %v7733, 0.0
        %v7744 = vcombine.high %v7740, 0.0
        %v7745 = vcombine.low %v7542, %v7630
        %v7746 = vcombine.high %v7542, %v7630
        %v7748 = vunpack.c.l.s4 1983009808
        %v7749 = vunpack.c.0.s8 %v7748
        %v7750 = vlaneseq
        %v7751 = vshrl.u32 %v7750, 7
        %v7752 = vsub.s32 %v7749, %v7751
        %v7753 = vrot.slane %v7745, %v7752
        %v7755 = vunpack.c.l.s4 1983009808
        %v7756 = vunpack.c.0.s8 %v7755
        %v7757 = vlaneseq
        %v7758 = vshrl.u32 %v7757, 7
        %v7759 = vsub.s32 %v7756, %v7758
        %v7760 = vrot.slane %v7746, %v7759
        %v7761 = vcombine.low %v7586, %v7674
        %v7762 = vcombine.high %v7586, %v7674
        %v7764 = vunpack.c.l.s4 1983009808
        %v7765 = vunpack.c.0.s8 %v7764
        %v7766 = vlaneseq
        %v7767 = vshrl.u32 %v7766, 7
        %v7768 = vsub.s32 %v7765, %v7767
        %v7769 = vrot.slane %v7761, %v7768
        %v7771 = vunpack.c.l.s4 1983009808
        %v7772 = vunpack.c.0.s8 %v7771
        %v7773 = vlaneseq
        %v7774 = vshrl.u32 %v7773, 7
        %v7775 = vsub.s32 %v7772, %v7774
        %v7776 = vrot.slane %v7762, %v7775
        %v7777 = vcombine.low %v7753, %v7769
        %v7778 = vcombine.high %v7753, %v7769
        %v7780 = vunpack.c.l.s4 1934713408
        %v7781 = vunpack.c.0.s8 %v7780
        %v7782 = vlaneseq
        %v7783 = vshrl.u32 %v7782, 7
        %v7784 = vsub.s32 %v7781, %v7783
        %v7785 = vrot.slane %v7777, %v7784
        %v7787 = vunpack.c.l.s4 1934713408
        %v7788 = vunpack.c.0.s8 %v7787
        %v7789 = vlaneseq
        %v7790 = vshrl.u32 %v7789, 7
        %v7791 = vsub.s32 %v7788, %v7790
        %v7792 = vrot.slane %v7778, %v7791
        %v7793 = vcombine.low %v7760, %v7776
        %v7794 = vcombine.high %v7760, %v7776
        %v7796 = vunpack.c.l.s4 1934713408
        %v7797 = vunpack.c.0.s8 %v7796
        %v7798 = vlaneseq
        %v7799 = vshrl.u32 %v7798, 7
        %v7800 = vsub.s32 %v7797, %v7799
        %v7801 = vrot.slane %v7793, %v7800
        %v7803 = vunpack.c.l.s4 1934713408
        %v7804 = vunpack.c.0.s8 %v7803
        %v7805 = vlaneseq
        %v7806 = vshrl.u32 %v7805, 7
        %v7807 = vsub.s32 %v7804, %v7806
        %v7808 = vrot.slane %v7794, %v7807
        %v7809 = vcombine.high %v7785, 0.0
        %v7810 = vcombine.high %v7792, 0.0
        %v7811 = vcombine.high %v7801, 0.0
        %v7812 = vcombine.high %v7808, 0.0
        %v7813 = vcombine.low %v7717, %v7724
        %v7815 = vunpack.c.l.s4 1983009808
        %v7816 = vunpack.c.0.s8 %v7815
        %v7817 = vlaneseq
        %v7818 = vshrl.u32 %v7817, 7
        %v7819 = vsub.s32 %v7816, %v7818
        %v7820 = vrot.slane %v7813, %v7819
        %v7821 = vcombine.low %v7741, %v7742
        %v7823 = vunpack.c.l.s4 1983009808
        %v7824 = vunpack.c.0.s8 %v7823
        %v7825 = vlaneseq
        %v7826 = vshrl.u32 %v7825, 7
        %v7827 = vsub.s32 %v7824, %v7826
        %v7828 = vrot.slane %v7821, %v7827
        %v7829 = vcombine.low %v7733, %v7740
        %v7831 = vunpack.c.l.s4 1983009808
        %v7832 = vunpack.c.0.s8 %v7831
        %v7833 = vlaneseq
        %v7834 = vshrl.u32 %v7833, 7
        %v7835 = vsub.s32 %v7832, %v7834
        %v7836 = vrot.slane %v7829, %v7835
        %v7837 = vcombine.low %v7743, %v7744
        %v7839 = vunpack.c.l.s4 1983009808
        %v7840 = vunpack.c.0.s8 %v7839
        %v7841 = vlaneseq
        %v7842 = vshrl.u32 %v7841, 7
        %v7843 = vsub.s32 %v7840, %v7842
        %v7844 = vrot.slane %v7837, %v7843
        %v7845 = vcombine.low %v7820, %v7828
        %v7846 = vcombine.high %v7820, %v7828
        %v7848 = vunpack.c.l.s4 1934713408
        %v7849 = vunpack.c.0.s8 %v7848
        %v7850 = vlaneseq
        %v7851 = vshrl.u32 %v7850, 7
        %v7852 = vsub.s32 %v7849, %v7851
        %v7853 = vrot.slane %v7845, %v7852
        %v7855 = vunpack.c.l.s4 1934713408
        %v7856 = vunpack.c.0.s8 %v7855
        %v7857 = vlaneseq
        %v7858 = vshrl.u32 %v7857, 7
        %v7859 = vsub.s32 %v7856, %v7858
        %v7860 = vrot.slane %v7846, %v7859
        %v7861 = vcombine.low %v7836, %v7844
        %v7862 = vcombine.high %v7836, %v7844
        %v7864 = vunpack.c.l.s4 1934713408
        %v7865 = vunpack.c.0.s8 %v7864
        %v7866 = vlaneseq
        %v7867 = vshrl.u32 %v7866, 7
        %v7868 = vsub.s32 %v7865, %v7867
        %v7869 = vrot.slane %v7861, %v7868
        %v7871 = vunpack.c.l.s4 1934713408
        %v7872 = vunpack.c.0.s8 %v7871
        %v7873 = vlaneseq
        %v7874 = vshrl.u32 %v7873, 7
        %v7875 = vsub.s32 %v7872, %v7874
        %v7876 = vrot.slane %v7862, %v7875
        %v7877 = vcombine.low %v7853, %v7869
        %v7878 = vcombine.high %v7853, %v7869
        %v7879 = vcombine.low %v7860, %v7876
        %v7880 = vcombine.high %v7860, %v7876
        %v7881 = vcombine.low %v7785, %v7792
        %v7883 = vunpack.c.l.s4 1983009808
        %v7884 = vunpack.c.0.s8 %v7883
        %v7885 = vlaneseq
        %v7886 = vshrl.u32 %v7885, 7
        %v7887 = vsub.s32 %v7884, %v7886
        %v7888 = vrot.slane %v7881, %v7887
        %v7889 = vcombine.low %v7809, %v7810
        %v7891 = vunpack.c.l.s4 1983009808
        %v7892 = vunpack.c.0.s8 %v7891
        %v7893 = vlaneseq
        %v7894 = vshrl.u32 %v7893, 7
        %v7895 = vsub.s32 %v7892, %v7894
        %v7896 = vrot.slane %v7889, %v7895
        %v7897 = vcombine.low %v7801, %v7808
        %v7899 = vunpack.c.l.s4 1983009808
        %v7900 = vunpack.c.0.s8 %v7899
        %v7901 = vlaneseq
        %v7902 = vshrl.u32 %v7901, 7
        %v7903 = vsub.s32 %v7900, %v7902
        %v7904 = vrot.slane %v7897, %v7903
        %v7905 = vcombine.low %v7811, %v7812
        %v7907 = vunpack.c.l.s4 1983009808
        %v7908 = vunpack.c.0.s8 %v7907
        %v7909 = vlaneseq
        %v7910 = vshrl.u32 %v7909, 7
        %v7911 = vsub.s32 %v7908, %v7910
        %v7912 = vrot.slane %v7905, %v7911
        %v7913 = vcombine.low %v7888, %v7896
        %v7914 = vcombine.high %v7888, %v7896
        %v7916 = vunpack.c.l.s4 1934713408
        %v7917 = vunpack.c.0.s8 %v7916
        %v7918 = vlaneseq
        %v7919 = vshrl.u32 %v7918, 7
        %v7920 = vsub.s32 %v7917, %v7919
        %v7921 = vrot.slane %v7913, %v7920
        %v7923 = vunpack.c.l.s4 1934713408
        %v7924 = vunpack.c.0.s8 %v7923
        %v7925 = vlaneseq
        %v7926 = vshrl.u32 %v7925, 7
        %v7927 = vsub.s32 %v7924, %v7926
        %v7928 = vrot.slane %v7914, %v7927
        %v7929 = vcombine.low %v7904, %v7912
        %v7930 = vcombine.high %v7904, %v7912
        %v7932 = vunpack.c.l.s4 1934713408
        %v7933 = vunpack.c.0.s8 %v7932
        %v7934 = vlaneseq
        %v7935 = vshrl.u32 %v7934, 7
        %v7936 = vsub.s32 %v7933, %v7935
        %v7937 = vrot.slane %v7929, %v7936
        %v7939 = vunpack.c.l.s4 1934713408
        %v7940 = vunpack.c.0.s8 %v7939
        %v7941 = vlaneseq
        %v7942 = vshrl.u32 %v7941, 7
        %v7943 = vsub.s32 %v7940, %v7942
        %v7944 = vrot.slane %v7930, %v7943
        %v7945 = vcombine.low %v7921, %v7937
        %v7946 = vcombine.high %v7921, %v7937
        %v7947 = vcombine.low %v7928, %v7944
        %v7948 = vcombine.high %v7928, %v7944
        %7951 = vrot.lane.b32.xlu0 %v7878, 32
        %v7952 = vpop.permute.xlu0 %7951
        %7953 = vrot.lane.b32.xlu0 %v7946, 32
        %v7954 = vpop.permute.xlu0 %7953
        %7959 = vrot.lane.b32.xlu0 %v7879, 64
        %v7960 = vpop.permute.xlu0 %7959
        %7961 = vrot.lane.b32.xlu0 %v7947, 64
        %v7962 = vpop.permute.xlu0 %7961
        %7967 = vrot.lane.b32.xlu0 %v7880, 96
        %v7968 = vpop.permute.xlu0 %7967
        %7969 = vrot.lane.b32.xlu0 %v7948, 96
        %v7970 = vpop.permute.xlu0 %7969
        %v7973 = vsel %vm1899, %v7877, %v7952
        %v7974 = vsel %vm1899, %v7945, %v7954
        %v7975 = vsel %vm2671, %v7973, %v7960
        %v7976 = vsel %vm2671, %v7974, %v7962
        %v7977 = vsel %vm2674, %v7975, %v7968
        %v7978 = vsel %vm2674, %v7976, %v7970
        %v7979 = vadd.f32 %v6033, %v7977
        %v7980 = vadd.f32 %v6034, %v7978
        %s7981 = scalar_lea.vmem [#allocation10], 2
        %v7982 = vld [vmem:[%s7981] sm:$0x1]
        %s7983 = scalar_lea.vmem [#allocation11], 2
        %v7984 = vld [vmem:[%s7983] sm:$0x1]
        %v7985 = vadd.f32 %v7979, %v7980
        %v7986 = vrot.slane %v7985, 4
        %v7987 = vadd.f32 %v7985, %v7986
        %v7988 = vrot.slane %v7987, 2
        %v7989 = vadd.f32 %v7987, %v7988
        %v7990 = vrot.slane %v7989, 1
        %v7991 = vadd.f32 %v7989, %v7990
        %v7992 = vmul.f32 %v7991, %v736
        %v7993 = vsub.f32 %v7979, %v7992
        %v7994 = vsub.f32 %v7980, %v7992
        %v7995 = vmul.f32 %v7993, %v7993
        %v7996 = vmul.f32 %v7994, %v7994
        %v7997 = vadd.f32 %v7995, %v7996
        %v7998 = vrot.slane %v7997, 4
        %v7999 = vadd.f32 %v7997, %v7998
        %v8000 = vrot.slane %v7999, 2
        %v8001 = vadd.f32 %v7999, %v8000
        %v8002 = vrot.slane %v8001, 1
        %v8003 = vadd.f32 %v8001, %v8002
        %v8004 = vmul.f32 %v8003, 0.06666667
        %v8006 = vlaneseq
        %v8007 = vshrl.u32 %v8006, 7
        %v8008 = vsub.s32 0, %v8007
        %v8009 = vrot.slane %v7982, %v8008
        %v8011 = vmul.f32 %v8009, %v7993
        %v8012 = vmul.f32 %v8009, %v7994
        %v8013 = vadd.f32 %v8004, 1e-05
        %v8014 = vrsqrt.pop %v8013
        %v8015 = vmul.f32 %v8011, %v8014
        %v8016 = vmul.f32 %v8012, %v8014
        %v8018 = vlaneseq
        %v8019 = vshrl.u32 %v8018, 7
        %v8020 = vsub.s32 0, %v8019
        %v8021 = vrot.slane %v7984, %v8020
        %v8023 = vadd.f32 %v8015, %v8021
        %v8024 = vadd.f32 %v8016, %v8021
        %v8025 = vpack.c.bf16 %v8024, %v8023
        %s8026 = scalar_lea.vmem [#allocation13], 512
        %v8027 = vld [vmem:[%s8026] sm:$0xff]
        %v8028 = vld [vmem:[%s8026 + $0x8] sm:$0xff]
        %v8029 = vld [vmem:[%s8026 + $0x10] sm:$0xff]
        %v8030 = vld [vmem:[%s8026 + $0x18] sm:$0xff]
        %v8031 = vld [vmem:[%s8026 + $0x20] sm:$0xff]
        %v8032 = vld [vmem:[%s8026 + $0x28] sm:$0xff]
        %v8033 = vld [vmem:[%s8026 + $0x30] sm:$0xff]
        %v8034 = vld [vmem:[%s8026 + $0x38] sm:$0xff]
        %v8035 = vld [vmem:[%s8026 + $0x40] sm:$0xff]
        %v8036 = vld [vmem:[%s8026 + $0x48] sm:$0xff]
        %v8037 = vld [vmem:[%s8026 + $0x50] sm:$0xff]
        %v8038 = vld [vmem:[%s8026 + $0x58] sm:$0xff]
        %v8039 = vld [vmem:[%s8026 + $0x60] sm:$0xff]
        %v8040 = vld [vmem:[%s8026 + $0x68] sm:$0xff]
        %v8041 = vld [vmem:[%s8026 + $0x70] sm:$0xff]
        %v8042 = vld [vmem:[%s8026 + $0x78] sm:$0xff]
        %v8043 = vld [vmem:[%s8026 + $0x80] sm:$0xff]
        %v8044 = vld [vmem:[%s8026 + $0x88] sm:$0xff]
        %v8045 = vld [vmem:[%s8026 + $0x90] sm:$0xff]
        %v8046 = vld [vmem:[%s8026 + $0x98] sm:$0xff]
        %v8047 = vld [vmem:[%s8026 + $0xa0] sm:$0xff]
        %v8048 = vld [vmem:[%s8026 + $0xa8] sm:$0xff]
        %v8049 = vld [vmem:[%s8026 + $0xb0] sm:$0xff]
        %v8050 = vld [vmem:[%s8026 + $0xb8] sm:$0xff]
        %v8051 = vld [vmem:[%s8026 + $0xc0] sm:$0xff]
        %v8052 = vld [vmem:[%s8026 + $0xc8] sm:$0xff]
        %v8053 = vld [vmem:[%s8026 + $0xd0] sm:$0xff]
        %v8054 = vld [vmem:[%s8026 + $0xd8] sm:$0xff]
        %v8055 = vld [vmem:[%s8026 + $0xe0] sm:$0xff]
        %v8056 = vld [vmem:[%s8026 + $0xe8] sm:$0xff]
        %v8057 = vld [vmem:[%s8026 + $0xf0] sm:$0xff]
        %v8058 = vld [vmem:[%s8026 + $0xf8] sm:$0xff]
        %s8059 = scalar_lea.vmem %s9, 8
        %v8060 = vld [vmem:[%s8059] sm:$0xf]
        %v8062 = vlaneseq
        %v8063 = vshrl.u32 %v8062, 7
        %v8064 = vsub.s32 0, %v8063
        %v8065 = vrot.slane %v8060, %v8064
        %v8066 = vlaneseq
        %v8067 = vshrl.u32 %v8066, 7
        %v8068 = vsub.s32 1, %v8067
        %v8069 = vrot.slane %v8060, %v8068
        %v8070 = vlaneseq
        %v8071 = vshrl.u32 %v8070, 7
        %v8072 = vsub.s32 2, %v8071
        %v8073 = vrot.slane %v8060, %v8072
        %v8074 = vlaneseq
        %v8075 = vshrl.u32 %v8074, 7
        %v8076 = vsub.s32 3, %v8075
        %v8077 = vrot.slane %v8060, %v8076
        %v8114 = vunpack.c.l.b16 %v8027
        %v8115 = vunpack.c.h.b16 %v8027
        %v8116 = vunpack.c.l.b16 %v8028
        %v8117 = vunpack.c.h.b16 %v8028
        %v8118 = vunpack.c.l.b16 %v8029
        %v8119 = vunpack.c.h.b16 %v8029
        %v8120 = vunpack.c.l.b16 %v8030
        %v8121 = vunpack.c.h.b16 %v8030
        %v8122 = vunpack.c.l.b16 %v8031
        %v8123 = vunpack.c.h.b16 %v8031
        %v8124 = vunpack.c.l.b16 %v8032
        %v8125 = vunpack.c.h.b16 %v8032
        %v8126 = vunpack.c.l.b16 %v8033
        %v8127 = vunpack.c.h.b16 %v8033
        %v8128 = vunpack.c.l.b16 %v8034
        %v8129 = vunpack.c.h.b16 %v8034
        %v8130 = vunpack.c.l.b16 %v8035
        %v8131 = vunpack.c.h.b16 %v8035
        %v8132 = vunpack.c.l.b16 %v8036
        %v8133 = vunpack.c.h.b16 %v8036
        %v8134 = vunpack.c.l.b16 %v8037
        %v8135 = vunpack.c.h.b16 %v8037
        %v8136 = vunpack.c.l.b16 %v8038
        %v8137 = vunpack.c.h.b16 %v8038
        %v8138 = vunpack.c.l.b16 %v8039
        %v8139 = vunpack.c.h.b16 %v8039
        %v8140 = vunpack.c.l.b16 %v8040
        %v8141 = vunpack.c.h.b16 %v8040
        %v8142 = vunpack.c.l.b16 %v8041
        %v8143 = vunpack.c.h.b16 %v8041
        %v8144 = vunpack.c.l.b16 %v8042
        %v8145 = vunpack.c.h.b16 %v8042
        %v8146 = vunpack.c.l.b16 %v8043
        %v8147 = vunpack.c.h.b16 %v8043
        %v8148 = vunpack.c.l.b16 %v8044
        %v8149 = vunpack.c.h.b16 %v8044
        %v8150 = vunpack.c.l.b16 %v8045
        %v8151 = vunpack.c.h.b16 %v8045
        %v8152 = vunpack.c.l.b16 %v8046
        %v8153 = vunpack.c.h.b16 %v8046
        %v8154 = vunpack.c.l.b16 %v8047
        %v8155 = vunpack.c.h.b16 %v8047
        %v8156 = vunpack.c.l.b16 %v8048
        %v8157 = vunpack.c.h.b16 %v8048
        %v8158 = vunpack.c.l.b16 %v8049
        %v8159 = vunpack.c.h.b16 %v8049
        %v8160 = vunpack.c.l.b16 %v8050
        %v8161 = vunpack.c.h.b16 %v8050
        %v8162 = vunpack.c.l.b16 %v8051
        %v8163 = vunpack.c.h.b16 %v8051
        %v8164 = vunpack.c.l.b16 %v8052
        %v8165 = vunpack.c.h.b16 %v8052
        %v8166 = vunpack.c.l.b16 %v8053
        %v8167 = vunpack.c.h.b16 %v8053
        %v8168 = vunpack.c.l.b16 %v8054
        %v8169 = vunpack.c.h.b16 %v8054
        %v8170 = vunpack.c.l.b16 %v8055
        %v8171 = vunpack.c.h.b16 %v8055
        %v8172 = vunpack.c.l.b16 %v8056
        %v8173 = vunpack.c.h.b16 %v8056
        %v8174 = vunpack.c.l.b16 %v8057
        %v8175 = vunpack.c.h.b16 %v8057
        %v8176 = vunpack.c.l.b16 %v8058
        %v8177 = vunpack.c.h.b16 %v8058
        %v8178 = vpack.c.b16 %v8118, %v8114
        %v8179 = vpack.c.b16 %v8119, %v8115
        %v8180 = vpack.c.b16 %v8120, %v8116
        %v8181 = vpack.c.b16 %v8121, %v8117
        %v8182 = vpack.c.b16 %v8126, %v8122
        %v8183 = vpack.c.b16 %v8127, %v8123
        %v8184 = vpack.c.b16 %v8128, %v8124
        %v8185 = vpack.c.b16 %v8129, %v8125
        %v8186 = vpack.c.b16 %v8134, %v8130
        %v8187 = vpack.c.b16 %v8135, %v8131
        %v8188 = vpack.c.b16 %v8136, %v8132
        %v8189 = vpack.c.b16 %v8137, %v8133
        %v8190 = vpack.c.b16 %v8142, %v8138
        %v8191 = vpack.c.b16 %v8143, %v8139
        %v8192 = vpack.c.b16 %v8144, %v8140
        %v8193 = vpack.c.b16 %v8145, %v8141
        %v8194 = vpack.c.b16 %v8150, %v8146
        %v8195 = vpack.c.b16 %v8151, %v8147
        %v8196 = vpack.c.b16 %v8152, %v8148
        %v8197 = vpack.c.b16 %v8153, %v8149
        %v8198 = vpack.c.b16 %v8158, %v8154
        %v8199 = vpack.c.b16 %v8159, %v8155
        %v8200 = vpack.c.b16 %v8160, %v8156
        %v8201 = vpack.c.b16 %v8161, %v8157
        %v8202 = vpack.c.b16 %v8166, %v8162
        %v8203 = vpack.c.b16 %v8167, %v8163
        %v8204 = vpack.c.b16 %v8168, %v8164
        %v8205 = vpack.c.b16 %v8169, %v8165
        %v8206 = vpack.c.b16 %v8174, %v8170
        %v8207 = vpack.c.b16 %v8175, %v8171
        %v8208 = vpack.c.b16 %v8176, %v8172
        %v8209 = vpack.c.b16 %v8177, %v8173
        %8242 = vmatprep.subr.bf16.mxu0 %v8179
        %8243 = vmatpush1.bf16.msra.mxu0 %v8178
        %8244 = vmatprep.subr.bf16.mxu0 %v8183
        %8245 = vmatpush1.bf16.msra.mxu0 %v8182
        %8246 = vmatprep.subr.bf16.mxu0 %v8187
        %8247 = vmatpush1.bf16.msra.mxu0 %v8186
        %8248 = vmatprep.subr.bf16.mxu0 %v8191
        %8249 = vmatpush1.bf16.msra.mxu0 %v8190
        %8250 = vmatprep.subr.bf16.mxu0 %v8195
        %8251 = vmatpush1.bf16.msra.mxu0 %v8194
        %8252 = vmatprep.subr.bf16.mxu0 %v8199
        %8253 = vmatpush1.bf16.msra.mxu0 %v8198
        %8254 = vmatprep.subr.bf16.mxu0 %v8203
        %8255 = vmatpush1.bf16.msra.mxu0 %v8202
        %8256 = vmatprep.subr.bf16.mxu0 %v8207
        %8257 = vmatpush1.bf16.msra.mxu0 %v8206
        %8258 = vmatprep.subr.bf16.mxu0 0
        %8259 = vmatpush1.bf16.msra.mxu0 0
        %8260 = vmatprep.subr.bf16.mxu0 0
        %8261 = vmatpush1.bf16.msra.mxu0 0
        %8262 = vmatprep.subr.bf16.mxu0 0
        %8263 = vmatpush1.bf16.msra.mxu0 0
        %8264 = vmatprep.subr.bf16.mxu0 0
        %8265 = vmatpush1.bf16.msra.mxu0 0
        %8266 = vmatprep.subr.bf16.mxu0 0
        %8267 = vmatpush1.bf16.msra.mxu0 0
        %8268 = vmatprep.subr.bf16.mxu0 0
        %8269 = vmatpush1.bf16.msra.mxu0 0
        %8270 = vmatprep.subr.bf16.mxu0 0
        %8271 = vmatpush1.bf16.msra.mxu0 0
        %8272 = vmatprep.subr.bf16.mxu0 0
        %8273 = vmatpush1.bf16.msra.mxu0 0
        %8274 = vmatprep.mubr.bf16.mxu0 0
        %8275 = vmatmul.mubr.bf16.gmra.mrb[0].mxu0 %v8025
        %v8276 = vpop.f32.mrb[0].mxu0
        %v8277 = vadd.f32 %v8065, %v8276
        %v8278 = vpop.f32.mrb[0].mxu0
        %v8279 = vadd.f32 %v8069, %v8278
        %v8280 = vpop.f32.mrb[0].mxu0
        %v8281 = vadd.f32 %v8065, %v8280
        %v8282 = vpop.f32.mrb[0].mxu0
        %v8283 = vadd.f32 %v8069, %v8282
        %8284 = vdwg.mxu0
        %8285 = vmatprep.subr.bf16.mxu0 %v8181
        %8286 = vmatpush1.bf16.msra.mxu0 %v8180
        %8287 = vmatprep.subr.bf16.mxu0 %v8185
        %8288 = vmatpush1.bf16.msra.mxu0 %v8184
        %8289 = vmatprep.subr.bf16.mxu0 %v8189
        %8290 = vmatpush1.bf16.msra.mxu0 %v8188
        %8291 = vmatprep.subr.bf16.mxu0 %v8193
        %8292 = vmatpush1.bf16.msra.mxu0 %v8192
        %8293 = vmatprep.subr.bf16.mxu0 %v8197
        %8294 = vmatpush1.bf16.msra.mxu0 %v8196
        %8295 = vmatprep.subr.bf16.mxu0 %v8201
        %8296 = vmatpush1.bf16.msra.mxu0 %v8200
        %8297 = vmatprep.subr.bf16.mxu0 %v8205
        %8298 = vmatpush1.bf16.msra.mxu0 %v8204
        %8299 = vmatprep.subr.bf16.mxu0 %v8209
        %8300 = vmatpush1.bf16.msra.mxu0 %v8208
        %8301 = vmatprep.subr.bf16.mxu0 0
        %8302 = vmatpush1.bf16.msra.mxu0 0
        %8303 = vmatprep.subr.bf16.mxu0 0
        %8304 = vmatpush1.bf16.msra.mxu0 0
        %8305 = vmatprep.subr.bf16.mxu0 0
        %8306 = vmatpush1.bf16.msra.mxu0 0
        %8307 = vmatprep.subr.bf16.mxu0 0
        %8308 = vmatpush1.bf16.msra.mxu0 0
        %8309 = vmatprep.subr.bf16.mxu0 0
        %8310 = vmatpush1.bf16.msra.mxu0 0
        %8311 = vmatprep.subr.bf16.mxu0 0
        %8312 = vmatpush1.bf16.msra.mxu0 0
        %8313 = vmatprep.subr.bf16.mxu0 0
        %8314 = vmatpush1.bf16.msra.mxu0 0
        %8315 = vmatprep.subr.bf16.mxu0 0
        %8316 = vmatpush1.bf16.msra.mxu0 0
        %8317 = vmatprep.mubr.bf16.mxu0 0
        %8318 = vmatmul.mubr.bf16.gmra.mrb[0].mxu0 %v8025
        %v8319 = vpop.f32.mrb[0].mxu0
        %v8320 = vadd.f32 %v8073, %v8319
        %v8321 = vpop.f32.mrb[0].mxu0
        %v8322 = vadd.f32 %v8077, %v8321
        %v8323 = vpop.f32.mrb[0].mxu0
        %v8324 = vadd.f32 %v8073, %v8323
        %v8325 = vpop.f32.mrb[0].mxu0
        %v8326 = vadd.f32 %v8077, %v8325
        %8327 = vdwg.mxu0
        %v8328 = vmax.f32 %v8277, 0.0
        %v8329 = vmax.f32 %v8279, 0.0
        %v8330 = vmax.f32 %v8320, 0.0
        %v8331 = vmax.f32 %v8322, 0.0
        %v8332 = vmax.f32 %v8281, 0.0
        %v8333 = vmax.f32 %v8283, 0.0
        %v8334 = vmax.f32 %v8324, 0.0
        %v8335 = vmax.f32 %v8326, 0.0
        %v8336 = vpack.c.bf16 %v8332, %v8328
        %v8337 = vpack.c.bf16 %v8333, %v8329
        %v8338 = vpack.c.bf16 %v8334, %v8330
        %v8339 = vpack.c.bf16 %v8335, %v8331
        %s8340 = scalar_lea.vmem [#allocation14], 512
        %v8341 = vld [vmem:[%s8340] sm:$0xf]
        %v8342 = vld [vmem:[%s8340 + $0x4] sm:$0xf]
        %v8343 = vld [vmem:[%s8340 + $0x8] sm:$0xf]
        %v8344 = vld [vmem:[%s8340 + $0xc] sm:$0xf]
        %v8345 = vld [vmem:[%s8340 + $0x10] sm:$0xf]
        %v8346 = vld [vmem:[%s8340 + $0x14] sm:$0xf]
        %v8347 = vld [vmem:[%s8340 + $0x18] sm:$0xf]
        %v8348 = vld [vmem:[%s8340 + $0x1c] sm:$0xf]
        %v8349 = vld [vmem:[%s8340 + $0x20] sm:$0xf]
        %v8350 = vld [vmem:[%s8340 + $0x24] sm:$0xf]
        %v8351 = vld [vmem:[%s8340 + $0x28] sm:$0xf]
        %v8352 = vld [vmem:[%s8340 + $0x2c] sm:$0xf]
        %v8353 = vld [vmem:[%s8340 + $0x30] sm:$0xf]
        %v8354 = vld [vmem:[%s8340 + $0x34] sm:$0xf]
        %v8355 = vld [vmem:[%s8340 + $0x38] sm:$0xf]
        %v8356 = vld [vmem:[%s8340 + $0x3c] sm:$0xf]
        %v8357 = vld [vmem:[%s8340 + $0x40] sm:$0xf]
        %v8358 = vld [vmem:[%s8340 + $0x44] sm:$0xf]
        %v8359 = vld [vmem:[%s8340 + $0x48] sm:$0xf]
        %v8360 = vld [vmem:[%s8340 + $0x4c] sm:$0xf]
        %v8361 = vld [vmem:[%s8340 + $0x50] sm:$0xf]
        %v8362 = vld [vmem:[%s8340 + $0x54] sm:$0xf]
        %v8363 = vld [vmem:[%s8340 + $0x58] sm:$0xf]
        %v8364 = vld [vmem:[%s8340 + $0x5c] sm:$0xf]
        %v8365 = vld [vmem:[%s8340 + $0x60] sm:$0xf]
        %v8366 = vld [vmem:[%s8340 + $0x64] sm:$0xf]
        %v8367 = vld [vmem:[%s8340 + $0x68] sm:$0xf]
        %v8368 = vld [vmem:[%s8340 + $0x6c] sm:$0xf]
        %v8369 = vld [vmem:[%s8340 + $0x70] sm:$0xf]
        %v8370 = vld [vmem:[%s8340 + $0x74] sm:$0xf]
        %v8371 = vld [vmem:[%s8340 + $0x78] sm:$0xf]
        %v8372 = vld [vmem:[%s8340 + $0x7c] sm:$0xf]
        %v8373 = vld [vmem:[%s8340 + $0x80] sm:$0xf]
        %v8374 = vld [vmem:[%s8340 + $0x84] sm:$0xf]
        %v8375 = vld [vmem:[%s8340 + $0x88] sm:$0xf]
        %v8376 = vld [vmem:[%s8340 + $0x8c] sm:$0xf]
        %v8377 = vld [vmem:[%s8340 + $0x90] sm:$0xf]
        %v8378 = vld [vmem:[%s8340 + $0x94] sm:$0xf]
        %v8379 = vld [vmem:[%s8340 + $0x98] sm:$0xf]
        %v8380 = vld [vmem:[%s8340 + $0x9c] sm:$0xf]
        %v8381 = vld [vmem:[%s8340 + $0xa0] sm:$0xf]
        %v8382 = vld [vmem:[%s8340 + $0xa4] sm:$0xf]
        %v8383 = vld [vmem:[%s8340 + $0xa8] sm:$0xf]
        %v8384 = vld [vmem:[%s8340 + $0xac] sm:$0xf]
        %v8385 = vld [vmem:[%s8340 + $0xb0] sm:$0xf]
        %v8386 = vld [vmem:[%s8340 + $0xb4] sm:$0xf]
        %v8387 = vld [vmem:[%s8340 + $0xb8] sm:$0xf]
        %v8388 = vld [vmem:[%s8340 + $0xbc] sm:$0xf]
        %v8389 = vld [vmem:[%s8340 + $0xc0] sm:$0xf]
        %v8390 = vld [vmem:[%s8340 + $0xc4] sm:$0xf]
        %v8391 = vld [vmem:[%s8340 + $0xc8] sm:$0xf]
        %v8392 = vld [vmem:[%s8340 + $0xcc] sm:$0xf]
        %v8393 = vld [vmem:[%s8340 + $0xd0] sm:$0xf]
        %v8394 = vld [vmem:[%s8340 + $0xd4] sm:$0xf]
        %v8395 = vld [vmem:[%s8340 + $0xd8] sm:$0xf]
        %v8396 = vld [vmem:[%s8340 + $0xdc] sm:$0xf]
        %v8397 = vld [vmem:[%s8340 + $0xe0] sm:$0xf]
        %v8398 = vld [vmem:[%s8340 + $0xe4] sm:$0xf]
        %v8399 = vld [vmem:[%s8340 + $0xe8] sm:$0xf]
        %v8400 = vld [vmem:[%s8340 + $0xec] sm:$0xf]
        %v8401 = vld [vmem:[%s8340 + $0xf0] sm:$0xf]
        %v8402 = vld [vmem:[%s8340 + $0xf4] sm:$0xf]
        %v8403 = vld [vmem:[%s8340 + $0xf8] sm:$0xf]
        %v8404 = vld [vmem:[%s8340 + $0xfc] sm:$0xf]
        %s8405 = scalar_lea.vmem [#allocation16], 2
        %v8406 = vld [vmem:[%s8405] sm:$0x1]
        %v8408 = vlaneseq
        %v8409 = vshrl.u32 %v8408, 7
        %v8410 = vsub.s32 0, %v8409
        %v8411 = vrot.slane %v8406, %v8410
        %v8477 = vunpack.c.l.b16 %v8341
        %v8478 = vunpack.c.l.b16 %v8342
        %v8479 = vunpack.c.l.b16 %v8343
        %v8480 = vunpack.c.l.b16 %v8344
        %v8481 = vunpack.c.l.b16 %v8345
        %v8482 = vunpack.c.l.b16 %v8346
        %v8483 = vunpack.c.l.b16 %v8347
        %v8484 = vunpack.c.l.b16 %v8348
        %v8485 = vunpack.c.l.b16 %v8349
        %v8486 = vunpack.c.l.b16 %v8350
        %v8487 = vunpack.c.l.b16 %v8351
        %v8488 = vunpack.c.l.b16 %v8352
        %v8489 = vunpack.c.l.b16 %v8353
        %v8490 = vunpack.c.l.b16 %v8354
        %v8491 = vunpack.c.l.b16 %v8355
        %v8492 = vunpack.c.l.b16 %v8356
        %v8493 = vunpack.c.l.b16 %v8357
        %v8494 = vunpack.c.l.b16 %v8358
        %v8495 = vunpack.c.l.b16 %v8359
        %v8496 = vunpack.c.l.b16 %v8360
        %v8497 = vunpack.c.l.b16 %v8361
        %v8498 = vunpack.c.l.b16 %v8362
        %v8499 = vunpack.c.l.b16 %v8363
        %v8500 = vunpack.c.l.b16 %v8364
        %v8501 = vunpack.c.l.b16 %v8365
        %v8502 = vunpack.c.l.b16 %v8366
        %v8503 = vunpack.c.l.b16 %v8367
        %v8504 = vunpack.c.l.b16 %v8368
        %v8505 = vunpack.c.l.b16 %v8369
        %v8506 = vunpack.c.l.b16 %v8370
        %v8507 = vunpack.c.l.b16 %v8371
        %v8508 = vunpack.c.l.b16 %v8372
        %v8509 = vunpack.c.l.b16 %v8373
        %v8510 = vunpack.c.l.b16 %v8374
        %v8511 = vunpack.c.l.b16 %v8375
        %v8512 = vunpack.c.l.b16 %v8376
        %v8513 = vunpack.c.l.b16 %v8377
        %v8514 = vunpack.c.l.b16 %v8378
        %v8515 = vunpack.c.l.b16 %v8379
        %v8516 = vunpack.c.l.b16 %v8380
        %v8517 = vunpack.c.l.b16 %v8381
        %v8518 = vunpack.c.l.b16 %v8382
        %v8519 = vunpack.c.l.b16 %v8383
        %v8520 = vunpack.c.l.b16 %v8384
        %v8521 = vunpack.c.l.b16 %v8385
        %v8522 = vunpack.c.l.b16 %v8386
        %v8523 = vunpack.c.l.b16 %v8387
        %v8524 = vunpack.c.l.b16 %v8388
        %v8525 = vunpack.c.l.b16 %v8389
        %v8526 = vunpack.c.l.b16 %v8390
        %v8527 = vunpack.c.l.b16 %v8391
        %v8528 = vunpack.c.l.b16 %v8392
        %v8529 = vunpack.c.l.b16 %v8393
        %v8530 = vunpack.c.l.b16 %v8394
        %v8531 = vunpack.c.l.b16 %v8395
        %v8532 = vunpack.c.l.b16 %v8396
        %v8533 = vunpack.c.l.b16 %v8397
        %v8534 = vunpack.c.l.b16 %v8398
        %v8535 = vunpack.c.l.b16 %v8399
        %v8536 = vunpack.c.l.b16 %v8400
        %v8537 = vunpack.c.l.b16 %v8401
        %v8538 = vunpack.c.l.b16 %v8402
        %v8539 = vunpack.c.l.b16 %v8403
        %v8540 = vunpack.c.l.b16 %v8404
        %v8541 = vpack.c.b16 %v8478, %v8477
        %v8542 = vpack.c.b16 %v8480, %v8479
        %v8543 = vpack.c.b16 %v8482, %v8481
        %v8544 = vpack.c.b16 %v8484, %v8483
        %v8545 = vpack.c.b16 %v8486, %v8485
        %v8546 = vpack.c.b16 %v8488, %v8487
        %v8547 = vpack.c.b16 %v8490, %v8489
        %v8548 = vpack.c.b16 %v8492, %v8491
        %v8549 = vpack.c.b16 %v8494, %v8493
        %v8550 = vpack.c.b16 %v8496, %v8495
        %v8551 = vpack.c.b16 %v8498, %v8497
        %v8552 = vpack.c.b16 %v8500, %v8499
        %v8553 = vpack.c.b16 %v8502, %v8501
        %v8554 = vpack.c.b16 %v8504, %v8503
        %v8555 = vpack.c.b16 %v8506, %v8505
        %v8556 = vpack.c.b16 %v8508, %v8507
        %v8557 = vpack.c.b16 %v8510, %v8509
        %v8558 = vpack.c.b16 %v8512, %v8511
        %v8559 = vpack.c.b16 %v8514, %v8513
        %v8560 = vpack.c.b16 %v8516, %v8515
        %v8561 = vpack.c.b16 %v8518, %v8517
        %v8562 = vpack.c.b16 %v8520, %v8519
        %v8563 = vpack.c.b16 %v8522, %v8521
        %v8564 = vpack.c.b16 %v8524, %v8523
        %v8565 = vpack.c.b16 %v8526, %v8525
        %v8566 = vpack.c.b16 %v8528, %v8527
        %v8567 = vpack.c.b16 %v8530, %v8529
        %v8568 = vpack.c.b16 %v8532, %v8531
        %v8569 = vpack.c.b16 %v8534, %v8533
        %v8570 = vpack.c.b16 %v8536, %v8535
        %v8571 = vpack.c.b16 %v8538, %v8537
        %v8572 = vpack.c.b16 %v8540, %v8539
        %8605 = vmatprep.subr.bf16.mxu0 0
        %8606 = vmatpush1.bf16.msra.mxu0 %v8541
        %8607 = vmatprep.subr.bf16.mxu0 0
        %8608 = vmatpush1.bf16.msra.mxu0 %v8542
        %8609 = vmatprep.subr.bf16.mxu0 0
        %8610 = vmatpush1.bf16.msra.mxu0 %v8543
        %8611 = vmatprep.subr.bf16.mxu0 0
        %8612 = vmatpush1.bf16.msra.mxu0 %v8544
        %8613 = vmatprep.subr.bf16.mxu0 0
        %8614 = vmatpush1.bf16.msra.mxu0 %v8545
        %8615 = vmatprep.subr.bf16.mxu0 0
        %8616 = vmatpush1.bf16.msra.mxu0 %v8546
        %8617 = vmatprep.subr.bf16.mxu0 0
        %8618 = vmatpush1.bf16.msra.mxu0 %v8547
        %8619 = vmatprep.subr.bf16.mxu0 0
        %8620 = vmatpush1.bf16.msra.mxu0 %v8548
        %8621 = vmatprep.subr.bf16.mxu0 0
        %8622 = vmatpush1.bf16.msra.mxu0 %v8549
        %8623 = vmatprep.subr.bf16.mxu0 0
        %8624 = vmatpush1.bf16.msra.mxu0 %v8550
        %8625 = vmatprep.subr.bf16.mxu0 0
        %8626 = vmatpush1.bf16.msra.mxu0 %v8551
        %8627 = vmatprep.subr.bf16.mxu0 0
        %8628 = vmatpush1.bf16.msra.mxu0 %v8552
        %8629 = vmatprep.subr.bf16.mxu0 0
        %8630 = vmatpush1.bf16.msra.mxu0 %v8553
        %8631 = vmatprep.subr.bf16.mxu0 0
        %8632 = vmatpush1.bf16.msra.mxu0 %v8554
        %8633 = vmatprep.subr.bf16.mxu0 0
        %8634 = vmatpush1.bf16.msra.mxu0 %v8555
        %8635 = vmatprep.subr.bf16.mxu0 0
        %8636 = vmatpush1.bf16.msra.mxu0 %v8556
        %8637 = vmatprep.mubr.bf16.mxu0 %v8337
        %8638 = vmatmul.mubr.bf16.gmra.mrb[0].mxu0 %v8336
        %v8639 = vpop.f32.mrb[0].mxu0
        %v8640 = vadd.f32 %v8411, %v8639
        %v8641 = vpop.f32.mrb[0].mxu0
        %v8642 = vpop.f32.mrb[0].mxu0
        %v8643 = vadd.f32 %v8411, %v8642
        %v8644 = vpop.f32.mrb[0].mxu0
        %8645 = vdwg.mxu0
        %8646 = vmatprep.subr.bf16.mxu0 0
        %8647 = vmatpush1.bf16.msra.mxu0 %v8557
        %8648 = vmatprep.subr.bf16.mxu0 0
        %8649 = vmatpush1.bf16.msra.mxu0 %v8558
        %8650 = vmatprep.subr.bf16.mxu0 0
        %8651 = vmatpush1.bf16.msra.mxu0 %v8559
        %8652 = vmatprep.subr.bf16.mxu0 0
        %8653 = vmatpush1.bf16.msra.mxu0 %v8560
        %8654 = vmatprep.subr.bf16.mxu0 0
        %8655 = vmatpush1.bf16.msra.mxu0 %v8561
        %8656 = vmatprep.subr.bf16.mxu0 0
        %8657 = vmatpush1.bf16.msra.mxu0 %v8562
        %8658 = vmatprep.subr.bf16.mxu0 0
        %8659 = vmatpush1.bf16.msra.mxu0 %v8563
        %8660 = vmatprep.subr.bf16.mxu0 0
        %8661 = vmatpush1.bf16.msra.mxu0 %v8564
        %8662 = vmatprep.subr.bf16.mxu0 0
        %8663 = vmatpush1.bf16.msra.mxu0 %v8565
        %8664 = vmatprep.subr.bf16.mxu0 0
        %8665 = vmatpush1.bf16.msra.mxu0 %v8566
        %8666 = vmatprep.subr.bf16.mxu0 0
        %8667 = vmatpush1.bf16.msra.mxu0 %v8567
        %8668 = vmatprep.subr.bf16.mxu0 0
        %8669 = vmatpush1.bf16.msra.mxu0 %v8568
        %8670 = vmatprep.subr.bf16.mxu0 0
        %8671 = vmatpush1.bf16.msra.mxu0 %v8569
        %8672 = vmatprep.subr.bf16.mxu0 0
        %8673 = vmatpush1.bf16.msra.mxu0 %v8570
        %8674 = vmatprep.subr.bf16.mxu0 0
        %8675 = vmatpush1.bf16.msra.mxu0 %v8571
        %8676 = vmatprep.subr.bf16.mxu0 0
        %8677 = vmatpush1.bf16.msra.mxu0 %v8572
        %8678 = vmatprep.mubr.bf16.mxu0 %v8339
        %8679 = vmatmul.mubr.bf16.gmra.mrb[0].mxu0 %v8338
        %v8680 = vpop.f32.mrb[0].mxu0
        %v8681 = vadd.f32 %v8640, %v8680
        %v8682 = vpop.f32.mrb[0].mxu0
        %v8683 = vpop.f32.mrb[0].mxu0
        %v8684 = vadd.f32 %v8643, %v8683
        %v8685 = vpop.f32.mrb[0].mxu0
        %8686 = vdwg.mxu0
        %v8687 = vadd.f32 %v7979, %v8681
        %v8688 = vadd.f32 %v7980, %v8684
        %v8689 = vpack.c.bf16 %v8688, %v8687
        %v8690 = vld [vmem:[%s12] sm:$0xf]
        %v8691 = vld [vmem:[%s12 + $0x4] sm:$0xf]
        %v8692 = vld [vmem:[%s12 + $0x8] sm:$0xf]
        %v8693 = vld [vmem:[%s12 + $0xc] sm:$0xf]
        %v8694 = vld [vmem:[%s12 + $0x10] sm:$0xf]
        %v8695 = vld [vmem:[%s12 + $0x14] sm:$0xf]
        %v8696 = vld [vmem:[%s12 + $0x18] sm:$0xf]
        %v8697 = vld [vmem:[%s12 + $0x1c] sm:$0xf]
        %v8698 = vld [vmem:[%s12 + $0x20] sm:$0xf]
        %v8699 = vld [vmem:[%s12 + $0x24] sm:$0xf]
        %v8700 = vld [vmem:[%s12 + $0x28] sm:$0xf]
        %v8701 = vld [vmem:[%s12 + $0x2c] sm:$0xf]
        %v8702 = vld [vmem:[%s12 + $0x30] sm:$0xf]
        %v8703 = vld [vmem:[%s12 + $0x34] sm:$0xf]
        %v8704 = vld [vmem:[%s12 + $0x38] sm:$0xf]
        %v8705 = vld [vmem:[%s12 + $0x3c] sm:$0xf]
        %v8706 = vld [vmem:[%s13] sm:$0x1]
        %v8708 = vlaneseq
        %v8709 = vshrl.u32 %v8708, 7
        %v8710 = vsub.s32 0, %v8709
        %v8711 = vrot.slane %v8706, %v8710
        %v8729 = vunpack.c.l.b16 %v8690
        %v8730 = vunpack.c.l.b16 %v8691
        %v8731 = vunpack.c.l.b16 %v8692
        %v8732 = vunpack.c.l.b16 %v8693
        %v8733 = vunpack.c.l.b16 %v8694
        %v8734 = vunpack.c.l.b16 %v8695
        %v8735 = vunpack.c.l.b16 %v8696
        %v8736 = vunpack.c.l.b16 %v8697
        %v8737 = vunpack.c.l.b16 %v8698
        %v8738 = vunpack.c.l.b16 %v8699
        %v8739 = vunpack.c.l.b16 %v8700
        %v8740 = vunpack.c.l.b16 %v8701
        %v8741 = vunpack.c.l.b16 %v8702
        %v8742 = vunpack.c.l.b16 %v8703
        %v8743 = vunpack.c.l.b16 %v8704
        %v8744 = vunpack.c.l.b16 %v8705
        %v8745 = vpack.c.b16 %v8730, %v8729
        %v8746 = vpack.c.b16 %v8732, %v8731
        %v8747 = vpack.c.b16 %v8734, %v8733
        %v8748 = vpack.c.b16 %v8736, %v8735
        %v8749 = vpack.c.b16 %v8738, %v8737
        %v8750 = vpack.c.b16 %v8740, %v8739
        %v8751 = vpack.c.b16 %v8742, %v8741
        %v8752 = vpack.c.b16 %v8744, %v8743
        %8761 = vmatprep.subr.bf16.mxu0 0
        %8762 = vmatpush1.bf16.msra.mxu0 %v8745
        %8763 = vmatprep.subr.bf16.mxu0 0
        %8764 = vmatpush1.bf16.msra.mxu0 %v8746
        %8765 = vmatprep.subr.bf16.mxu0 0
        %8766 = vmatpush1.bf16.msra.mxu0 %v8747
        %8767 = vmatprep.subr.bf16.mxu0 0
        %8768 = vmatpush1.bf16.msra.mxu0 %v8748
        %8769 = vmatprep.subr.bf16.mxu0 0
        %8770 = vmatpush1.bf16.msra.mxu0 %v8749
        %8771 = vmatprep.subr.bf16.mxu0 0
        %8772 = vmatpush1.bf16.msra.mxu0 %v8750
        %8773 = vmatprep.subr.bf16.mxu0 0
        %8774 = vmatpush1.bf16.msra.mxu0 %v8751
        %8775 = vmatprep.subr.bf16.mxu0 0
        %8776 = vmatpush1.bf16.msra.mxu0 %v8752
        %8777 = vmatprep.subr.bf16.mxu0 0
        %8778 = vmatpush1.bf16.msra.mxu0 0
        %8779 = vmatprep.subr.bf16.mxu0 0
        %8780 = vmatpush1.bf16.msra.mxu0 0
        %8781 = vmatprep.subr.bf16.mxu0 0
        %8782 = vmatpush1.bf16.msra.mxu0 0
        %8783 = vmatprep.subr.bf16.mxu0 0
        %8784 = vmatpush1.bf16.msra.mxu0 0
        %8785 = vmatprep.subr.bf16.mxu0 0
        %8786 = vmatpush1.bf16.msra.mxu0 0
        %8787 = vmatprep.subr.bf16.mxu0 0
        %8788 = vmatpush1.bf16.msra.mxu0 0
        %8789 = vmatprep.subr.bf16.mxu0 0
        %8790 = vmatpush1.bf16.msra.mxu0 0
        %8791 = vmatprep.subr.bf16.mxu0 0
        %8792 = vmatpush1.bf16.msra.mxu0 0
        %8793 = vmatprep.mubr.bf16.mxu0 0
        %8794 = vmatmul.mubr.bf16.gmra.mrb[0].mxu0 %v8689
        %v8795 = vpop.f32.mrb[0].mxu0
        %v8796 = vadd.f32 %v8711, %v8795
        %v8797 = vpop.f32.mrb[0].mxu0
        %v8798 = vpop.f32.mrb[0].mxu0
        %v8799 = vadd.f32 %v8711, %v8798
        %v8800 = vpop.f32.mrb[0].mxu0
        %8801 = vdwg.mxu0
        %8802 = vst [vmem:[%s591] sm:$0xff] %v8796
        %8803 = vst [vmem:[%s591 + $0x8] sm:$0xff] %v8799
        %s8804 = sand.u32 %s340, 1
        %s8805 = scalar_lea.sflag [#allocation4], %s8804
        %s8806 = sand.u32 %s340, 1
        %s8807 = smul.addr %s8806, 16
        %s8808 = scalar_lea.vmem [#allocation17], %s8807
        // Predicated region
        $region113: #{tpu_custom_call.1} parent=75 // pred_check
          %p8809 = pneg %p350
        $region114: #{tpu_custom_call.1} parent=75 // pred_check_branch
          %8811 = sbr.rel (%p8809) target = $region116
        $region115: #{tpu_custom_call.1} parent=75 // pred_region
          %s8813 = ssub.s32 256, 256
          %8814 = vsyncadd %s8805, %s8813
          %s8815 = smul.addr %s33, 2
          %s8816 = smul.addr %s8815, 128
          %s8817 = scalar_lea.hbm %s14, %s8816
          %s8818 = sshll.u32 %s8808, 4
          %s8819 = int_to_ptr.vmem [resolvable:$true] %s8818
          %8824 = dma.vmem_to_hbm [thread:$0]  %s8819, 256, %s8817, %s8805, 128, 128, 8
        $region116: #{tpu_custom_call.1} parent=75 // pred_fallthru
          _
      $region76: #{tpu_custom_call.1} parent=5 // pred_fallthru
        _
      %p8825 = scmp.le.s32.totalorder 2, %s28
      // Predicated region
      $region117: #{tpu_custom_call.1} parent=5 // pred_check
        %p8826 = pneg %p8825
      $region118: #{tpu_custom_call.1} parent=5 // pred_check_branch
        %8828 = sbr.rel (%p8826) target = $region120
      $region119: #{tpu_custom_call.1} parent=5 // pred_region
        %s8829 = ssub.s32 %s28, 2
        // Predicated region
        $region121: #{tpu_custom_call.1} parent=119 // pred_check
          %p8830 = pneg %p356
        $region122: #{tpu_custom_call.1} parent=119 // pred_check_branch
          %8832 = sbr.rel (%p8830) target = $region124
        $region123: #{tpu_custom_call.1} parent=119 // pred_region
          %s8833 = sand.u32 %s341, 1
          %s8834 = scalar_lea.sflag [#allocation4], %s8833
          %s8835 = sand.u32 %s341, 1
          %s8836 = smul.addr %s8835, 16
          %s8837 = scalar_lea.vmem [#allocation17], %s8836
          %8838 = dma.done %s8834, 256
        $region124: #{tpu_custom_call.1} parent=119 // pred_fallthru
          _
      $region120: #{tpu_custom_call.1} parent=5 // pred_fallthru
        _
    $region6: #{tpu_custom_call.1} parent=1 // loop_footer
      %s32 = sadd.s32 1, %s28
    $region7: #{tpu_custom_call.1} parent=1 // loop_footer_branch
      %27 = sbr.rel target = $region3
    $region8: #{tpu_custom_call.1} parent=1 // loop_exit
      _
    %8839 = vsyncpa [#allocation3], 1
    %s8840 = scalar_lea.sflag [#allocation3], 1
    %8841 = vsyncpa %s8840, 1
    %8842 = vsyncpa [#allocation6], 1
    %8843 = vsyncpa [#allocation9], 1
    %8844 = vsyncpa [#allocation12], 1
    %8845 = vsyncpa [#allocation15], 1
    %8846 = vsyncpa [#allocation4], 1
    %s8847 = scalar_lea.sflag [#allocation4], 1
    %8848 = vsyncpa %s8847, 1

</llo_original>
